<compile_context>
chip_gen: v7x
topology: tpu7x:2x2x1
jax: 0.10.0
libtpu: 0.0.40
codegen_flags: <defaults>
</compile_context>

<pallas_src>
import functools

import jax
import jax.numpy as jnp
from jax.experimental import pallas as pl
from jax.experimental.pallas import tpu as pltpu


# ----------------------------------------------------------------------------
# Fused kernel: 4x (conv3x3 + BN + ReLU) -> conv1x1 -> soft-argmax (tl & br)
# ----------------------------------------------------------------------------
def corner_head_kernel(
    x_ref, coords_ref,
    w1_ref, s1_ref, w2_ref, s2_ref, w3_ref, s3_ref, w4_ref, s4_ref,
    w5_ref, b5_ref,
    o_ref,
    pad1, pad2, pad3, pad4,
    *, feat_sz, prefix, b_blk, inv_img_sz,
):
    W = feat_sz
    HW = W * W
    P = HW + prefix              # per-image period inside every padded scratch
    M = b_blk * P - prefix       # rows of every batched conv matmul (periodic layout)
    base = prefix - (W + 1)      # scratch-row offset of tap (dy=0, dx=0)

    # x-boundary masks over the periodic layout (depend only on the output row).
    r = jax.lax.broadcasted_iota(jnp.int32, (M, 1), 0)
    col = (r % P) % W
    mx0_f = (col != 0).astype(jnp.float32)        # kill dx=0 tap where ox == 0
    mx2_f = (col != W - 1).astype(jnp.float32)    # kill dx=2 tap where ox == W-1
    mx0_b = mx0_f.astype(jnp.bfloat16)
    mx2_b = mx2_f.astype(jnp.bfloat16)

    def zero_pads(pad_ref):
        # Re-zero only the (b_blk + 1) * prefix pad rows (bf16, a few KiB per step).
        # Not guarded by program_id == 0: under "parallel" sharding each TensorCore
        # has a private scratch, so an init-once guard is unsafe on v7x megacore.
        z = jnp.zeros((prefix, pad_ref.shape[1]), jnp.bfloat16)
        for blk in range(b_blk + 1):
            pad_ref[pl.ds(blk * P, prefix), :] = z

    def store_images(pad_ref, act_f32):
        # Write only the HW valid rows of every image (single bf16 cast per layer);
        # pad rows stay zero, so no row-validity masking of the output is needed.
        for blk in range(b_blk):
            pad_ref[pl.ds(prefix + blk * P, HW), :] = (
                act_f32[blk * P:blk * P + HW, :].astype(jnp.bfloat16))

    def conv3x3(pad_ref, w_ref, s_ref):
        cin = pad_ref.shape[1]
        n_out = w_ref.shape[2]
        mask_patch = cin <= n_out      # mask the narrower operand (static choice)
        acc = None
        for dy in range(3):
            for dx in range(3):
                patch = pad_ref[pl.ds(base + dy * W + dx, M), :]   # bf16, no cast
                if mask_patch:
                    if dx == 0:
                        patch = patch * mx0_b
                    elif dx == 2:
                        patch = patch * mx2_b
                d = jnp.dot(patch, w_ref[3 * dy + dx],
                            preferred_element_type=jnp.float32)
                if not mask_patch:
                    if dx == 0:
                        d = d * mx0_f
                    elif dx == 2:
                        d = d * mx2_f
                acc = d if acc is None else acc + d
        return jnp.maximum(acc + s_ref[...], 0.0)      # folded-BN shift + ReLU

    # ---- drop the b_blk input images into the periodic padded layout ----
    zero_pads(pad1); zero_pads(pad2); zero_pads(pad3); zero_pads(pad4)
    for blk in range(b_blk):
        pad1[pl.ds(prefix + blk * P, HW), :] = x_ref[blk]

    # ---- both branches fused (layer1 concat, layers 2-5 block-diagonal) ----
    a1 = conv3x3(pad1, w1_ref, s1_ref)      # (M, 2*channel)
    store_images(pad2, a1)
    a2 = conv3x3(pad2, w2_ref, s2_ref)      # (M, channel)
    store_images(pad3, a2)
    a3 = conv3x3(pad3, w3_ref, s3_ref)      # (M, channel // 2)
    store_images(pad4, a3)
    a4 = conv3x3(pad4, w4_ref, s4_ref)      # (M, channel // 4)

    # final 1x1 conv -> column 0 = tl score map, column 1 = br score map
    scores = jnp.dot(a4.astype(jnp.bfloat16), w5_ref[...],
                     preferred_element_type=jnp.float32) + b5_ref[...]

    # ---- per-image soft-argmax; all b_blk results written in ONE store ----
    coords = coords_ref[...]                 # (HW, 4) = [cx_tl, cy_tl, cx_br, cy_br]
    rows = []
    for blk in range(b_blk):
        s_b = scores[blk * P:blk * P + HW, :]                     # (HW, 2)
        m = jnp.max(s_b, axis=0, keepdims=True)
        p = jnp.exp(s_b - m)
        inv = 1.0 / jnp.sum(p, axis=0, keepdims=True)             # exact reciprocal
        e_tl = jnp.sum(coords[:, 0:2] * p[:, 0:1], axis=0, keepdims=True)   # (1, 2)
        e_br = jnp.sum(coords[:, 2:4] * p[:, 1:2], axis=0, keepdims=True)   # (1, 2)
        rows.append(jnp.concatenate([e_tl * inv[:, 0:1],
                                     e_br * inv[:, 1:2]], axis=1) * inv_img_sz)
    o_ref[...] = jnp.concatenate(rows, axis=0)          # single (b_blk, 4) store


# ----------------------------------------------------------------------------
# Wrapper
# ----------------------------------------------------------------------------
def make_coords(feat_sz, stride):
    # Matches the PyTorch buffers exactly: x varies fastest, y slowest;
    # indice_br = indice_tl + (feat_sz - 1) in PIXELS (not stride-scaled).
    idx = jnp.arange(feat_sz, dtype=jnp.float32) * stride
    cx_tl = jnp.tile(idx, feat_sz)
    cy_tl = jnp.repeat(idx, feat_sz)
    cx_br = cx_tl + (feat_sz - 1)
    cy_br = cy_tl + (feat_sz - 1)
    return jnp.stack([cx_tl, cy_tl, cx_br, cy_br], axis=1)    # (HW, 4)


def corner_predictor_v3_forward(x_nchw, params, *, feat_sz, stride, batch_block=2):
    B, cin, H, Wd = x_nchw.shape
    assert H == feat_sz and Wd == feat_sz
    HW = feat_sz * feat_sz
    img_sz = feat_sz * stride
    b_blk = min(batch_block, B)
    assert B % b_blk == 0
    G = B // b_blk

    # NCHW -> NHWC -> (B, H*W, C), bf16 into the MXU (epilogue stays f32 in-kernel).
    x2d = jnp.transpose(x_nchw, (0, 2, 3, 1)).reshape(B, HW, cin).astype(jnp.bfloat16)
    coords = make_coords(feat_sz, stride)

    (w1, s1), (w2, s2), (w3, s3), (w4, s4) = params["convs"]
    w5, b5 = params["final"]

    prefix = ((feat_sz + 1 + 15) // 16) * 16   # >= feat_sz+1, mult of 16 (bf16 sublanes)
    P = HW + prefix
    pad_rows = prefix + b_blk * P

    def full_spec(a):
        nd = a.ndim
        return pl.BlockSpec(a.shape, lambda g: (0,) * nd)

    kernel = functools.partial(
        corner_head_kernel,
        feat_sz=feat_sz, prefix=prefix, b_blk=b_blk,
        inv_img_sz=1.0 / float(img_sz))

    out = pl.pallas_call(
        kernel,
        out_shape=jax.ShapeDtypeStruct((G, b_blk, 4), jnp.float32),
        grid=(G,),
        in_specs=[
            pl.BlockSpec((b_blk, HW, cin), lambda g: (g, 0, 0)),   # b_blk images / step
            full_spec(coords),
            full_spec(w1), full_spec(s1),
            full_spec(w2), full_spec(s2),
            full_spec(w3), full_spec(s3),
            full_spec(w4), full_spec(s4),
            full_spec(w5), full_spec(b5),
        ],
        out_specs=pl.BlockSpec((None, b_blk, 4), lambda g: (g, 0, 0)),
        scratch_shapes=[
            pltpu.VMEM((pad_rows, w1.shape[1]), jnp.bfloat16),
            pltpu.VMEM((pad_rows, w2.shape[1]), jnp.bfloat16),
            pltpu.VMEM((pad_rows, w3.shape[1]), jnp.bfloat16),
            pltpu.VMEM((pad_rows, w4.shape[1]), jnp.bfloat16),
        ],
        compiler_params=pltpu.CompilerParams(
            dimension_semantics=("parallel",),
            vmem_limit_bytes=32 * 1024 * 1024,   # plenty at demo shapes on all gens
        ),
    )(x2d, coords, w1, s1, w2, s2, w3, s3, w4, s4, w5, b5)
    return out.reshape(B, 4)


# ----------------------------------------------------------------------------
# Parameter construction (deterministic, synthetic; BN in eval mode, folded)
# ----------------------------------------------------------------------------
def init_conv_bn(key, cin, cout, eps=1e-5):
    k_w, k_b, k_g, k_be, k_m, k_v = jax.random.split(key, 6)
    w = jax.random.normal(k_w, (cout, cin, 3, 3), jnp.float32) * 0.1   # PyTorch OIHW
    b = jax.random.normal(k_b, (cout,), jnp.float32) * 0.1
    gamma = 1.0 + 0.1 * jax.random.normal(k_g, (cout,), jnp.float32)
    beta = 0.1 * jax.random.normal(k_be, (cout,), jnp.float32)
    r_mean = 0.1 * jax.random.normal(k_m, (cout,), jnp.float32)
    r_var = jax.random.uniform(k_v, (cout,), jnp.float32, 0.5, 1.5)
    s = gamma / jnp.sqrt(r_var + eps)
    w_eff = w * s[:, None, None, None]          # BN scale folded into the weights
    shift = s * (b - r_mean) + beta             # remaining per-channel shift
    # OIHW -> (kh, kw, cin, cout) -> (tap = 3*kh + kw, cin, cout)
    w9 = jnp.transpose(w_eff, (2, 3, 1, 0)).reshape(9, cin, cout)
    return w9, shift


def init_conv1x1(key, cin):
    k_w, k_b = jax.random.split(key, 2)
    w = jax.random.normal(k_w, (1, cin, 1, 1), jnp.float32) * 0.1       # OIHW, cout=1
    b = jax.random.normal(k_b, (1,), jnp.float32) * 0.1
    return jnp.transpose(w.reshape(1, cin), (1, 0)), b                  # (cin, 1), (1,)


def _fuse_shared_input(tl, br):
    # Layer 1: both branches read the same input -> concat along output channels.
    return (jnp.concatenate([tl[0], br[0]], axis=2),
            jnp.concatenate([tl[1], br[1]], axis=0))


def _fuse_block_diag(tl, br):
    # Layers 2-4: inputs are already [tl | br] channels -> block-diagonal weights.
    wa, sa = tl
    wb, sb = br
    t, cin, cout = wa.shape
    z = jnp.zeros((t, cin, cout), jnp.float32)
    w = jnp.concatenate(
        [jnp.concatenate([wa, z], axis=2), jnp.concatenate([z, wb], axis=2)], axis=1)
    return w, jnp.concatenate([sa, sb], axis=0)


def _fuse_final(tl, br):
    wa, ba = tl
    wb, bb = br
    cin = wa.shape[0]
    z = jnp.zeros((cin, 1), jnp.float32)
    w = jnp.concatenate(
        [jnp.concatenate([wa, z], axis=1), jnp.concatenate([z, wb], axis=1)], axis=0)
    return w, jnp.concatenate([ba, bb], axis=0)


def build_params(key, inplanes, channel):
    k_tl, k_br = jax.random.split(key)
    ks_tl = jax.random.split(k_tl, 5)
    ks_br = jax.random.split(k_br, 5)
    dims = [(inplanes, channel), (channel, channel // 2),
            (channel // 2, channel // 4), (channel // 4, channel // 8)]
    tl = [init_conv_bn(ks_tl[i], *dims[i]) for i in range(4)]
    br = [init_conv_bn(ks_br[i], *dims[i]) for i in range(4)]
    tl5 = init_conv1x1(ks_tl[4], channel // 8)
    br5 = init_conv1x1(ks_br[4], channel // 8)

    fused = [_fuse_shared_input(tl[0], br[0])]
    fused += [_fuse_block_diag(tl[i], br[i]) for i in range(1, 4)]
    convs = [(w.astype(jnp.bfloat16), s.reshape(1, -1).astype(jnp.float32))
             for (w, s) in fused]
    w5, b5 = _fuse_final(tl5, br5)
    final = (w5.astype(jnp.bfloat16), b5.reshape(1, -1).astype(jnp.float32))
    return {"convs": convs, "final": final}


# ----------------------------------------------------------------------------
# Pure-JAX reference on the fused / folded parameters (f32 activations)
# ----------------------------------------------------------------------------
def reference_forward(x_nchw, params, *, feat_sz, stride):
    img_sz = feat_sz * stride
    h = jnp.transpose(x_nchw, (0, 2, 3, 1)).astype(jnp.float32)   # NHWC

    def conv_bn_relu(h, w9, shift):
        w = w9.astype(jnp.float32).reshape(3, 3, w9.shape[1], w9.shape[2])
        y = jax.lax.conv_general_dilated(
            h, w, (1, 1), "SAME", dimension_numbers=("NHWC", "HWIO", "NHWC"))
        return jax.nn.relu(y + shift.reshape(1, 1, 1, -1))

    for (w9, s) in params["convs"]:
        h = conv_bn_relu(h, w9, s)
    w5, b5 = params["final"]
    w5f = w5.astype(jnp.float32).reshape(1, 1, w5.shape[0], 2)
    scores = jax.lax.conv_general_dilated(
        h, w5f, (1, 1), "SAME",
        dimension_numbers=("NHWC", "HWIO", "NHWC")) + b5.reshape(1, 1, 1, -1)

    B = x_nchw.shape[0]
    HW = feat_sz * feat_sz
    sv = scores.reshape(B, HW, 2)
    prob = jax.nn.softmax(sv, axis=1)
    coords = make_coords(feat_sz, stride)                         # (HW, 4)
    e_tl = jnp.einsum("bh,hc->bc", prob[:, :, 0], coords[:, 0:2])
    e_br = jnp.einsum("bh,hc->bc", prob[:, :, 1], coords[:, 2:4])
    return jnp.concatenate([e_tl, e_br], axis=1) / img_sz


# ----------------------------------------------------------------------------
# Main
# ----------------------------------------------------------------------------
if __name__ == "__main__":
    B = 4                 # 2 grid steps x 2 images folded into each conv matmul
    inplanes = 4
    channel = 16          # per-branch channels: 16 -> 8 -> 4 -> 2 -> 1
    feat_sz = 8
    stride = 16
    batch_block = 2

    key = jax.random.PRNGKey(0)
    k_x, k_p = jax.random.split(key)
    x = jax.random.normal(k_x, (B, inplanes, feat_sz, feat_sz), jnp.float32)
    params = build_params(k_p, inplanes, channel)

    fwd = jax.jit(functools.partial(corner_predictor_v3_forward,
                                    feat_sz=feat_sz, stride=stride,
                                    batch_block=batch_block))
    out = jax.block_until_ready(fwd(x, params))
    assert out.shape == (B, 4)
    assert bool(jnp.all(jnp.isfinite(out)))

    ref = reference_forward(x, params, feat_sz=feat_sz, stride=stride)
    assert bool(jnp.allclose(out, ref, atol=5e-2)), (out, ref)

    print("KERNEL_OK")
</pallas_src>

<mosaic_0001>
module attributes {stable_mosaic.version = 11 : i64} {
  func.func @corner_head_kernel(%arg0: i32, %arg1: memref<2x64x4xbf16, #tpu.memory_space<vmem>>, %arg2: memref<64x4xf32, #tpu.memory_space<vmem>>, %arg3: memref<9x4x32xbf16, #tpu.memory_space<vmem>>, %arg4: memref<1x32xf32, #tpu.memory_space<vmem>>, %arg5: memref<9x32x16xbf16, #tpu.memory_space<vmem>>, %arg6: memref<1x16xf32, #tpu.memory_space<vmem>>, %arg7: memref<9x16x8xbf16, #tpu.memory_space<vmem>>, %arg8: memref<1x8xf32, #tpu.memory_space<vmem>>, %arg9: memref<9x8x4xbf16, #tpu.memory_space<vmem>>, %arg10: memref<1x4xf32, #tpu.memory_space<vmem>>, %arg11: memref<4x2xbf16, #tpu.memory_space<vmem>>, %arg12: memref<1x2xf32, #tpu.memory_space<vmem>>, %arg13: memref<1x2x4xf32, #tpu.memory_space<vmem>>, %arg14: memref<176x4xbf16, #tpu.memory_space<vmem>>, %arg15: memref<176x32xbf16, #tpu.memory_space<vmem>>, %arg16: memref<176x16xbf16, #tpu.memory_space<vmem>>, %arg17: memref<176x8xbf16, #tpu.memory_space<vmem>>) attributes {dimension_semantics = [#tpu.dimension_semantics<parallel>], iteration_bounds = array<i64: 2>, scalar_prefetch = 0 : i64, scratch_operands = 4 : i64, tpu.core_type = #tpu.core_type<tc>, window_params = [{transform_indices = @transform_0, window_bounds = array<i64: 2, 64, 4>}, {pipeline_mode = #tpu.pipeline_mode<synchronous>, transform_indices = @transform_1, window_bounds = array<i64: 64, 4>}, {pipeline_mode = #tpu.pipeline_mode<synchronous>, transform_indices = @transform_2, window_bounds = array<i64: 9, 4, 32>}, {pipeline_mode = #tpu.pipeline_mode<synchronous>, transform_indices = @transform_3, window_bounds = array<i64: 1, 32>}, {pipeline_mode = #tpu.pipeline_mode<synchronous>, transform_indices = @transform_4, window_bounds = array<i64: 9, 32, 16>}, {pipeline_mode = #tpu.pipeline_mode<synchronous>, transform_indices = @transform_5, window_bounds = array<i64: 1, 16>}, {pipeline_mode = #tpu.pipeline_mode<synchronous>, transform_indices = @transform_6, window_bounds = array<i64: 9, 16, 8>}, {pipeline_mode = #tpu.pipeline_mode<synchronous>, transform_indices = @transform_7, window_bounds = array<i64: 1, 8>}, {pipeline_mode = #tpu.pipeline_mode<synchronous>, transform_indices = @transform_8, window_bounds = array<i64: 9, 8, 4>}, {pipeline_mode = #tpu.pipeline_mode<synchronous>, transform_indices = @transform_9, window_bounds = array<i64: 1, 4>}, {pipeline_mode = #tpu.pipeline_mode<synchronous>, transform_indices = @transform_10, window_bounds = array<i64: 4, 2>}, {pipeline_mode = #tpu.pipeline_mode<synchronous>, transform_indices = @transform_11, window_bounds = array<i64: 1, 2>}, {transform_indices = @transform_12, window_bounds = array<i64: 1, 2, 4>}]} {
    %0 = tpu.iota {dimensions = array<i32: 0>} : vector<144x1xi32>
    %c80_i32 = arith.constant 80 : i32
    %c0_i32 = arith.constant 0 : i32
    %1 = arith.cmpi eq, %c80_i32, %c0_i32 : i32
    %c1_i32 = arith.constant 1 : i32
    %2 = arith.select %1, %c1_i32, %c80_i32 : i32
    %3 = vector.broadcast %2 : i32 to vector<144x1xi32>
    %4 = arith.remsi %0, %3 : vector<144x1xi32>
    %c0_i32_0 = arith.constant 0 : i32
    %5 = vector.broadcast %c0_i32_0 : i32 to vector<144x1xi32>
    %6 = arith.cmpi ne, %4, %5 : vector<144x1xi32>
    %c0_i32_1 = arith.constant 0 : i32
    %7 = vector.broadcast %c0_i32_1 : i32 to vector<144x1xi32>
    %8 = arith.cmpi slt, %4, %7 : vector<144x1xi32>
    %c0_i32_2 = arith.constant 0 : i32
    %9 = arith.cmpi slt, %2, %c0_i32_2 : i32
    %10 = vector.broadcast %9 : i1 to vector<144x1xi1>
    %11 = vector.broadcast %10 : vector<144x1xi1> to vector<144x1xi1>
    %12 = arith.xori %8, %11 : vector<144x1xi1>
    %13 = arith.andi %12, %6 : vector<144x1xi1>
    %14 = vector.broadcast %2 : i32 to vector<144x1xi32>
    %15 = arith.addi %4, %14 : vector<144x1xi32>
    %16 = arith.select %13, %15, %4 : vector<144x1xi1>, vector<144x1xi32>
    %c8_i32 = arith.constant 8 : i32
    %c0_i32_3 = arith.constant 0 : i32
    %17 = arith.cmpi eq, %c8_i32, %c0_i32_3 : i32
    %c1_i32_4 = arith.constant 1 : i32
    %18 = arith.select %17, %c1_i32_4, %c8_i32 : i32
    %19 = vector.broadcast %18 : i32 to vector<144x1xi32>
    %20 = arith.remsi %16, %19 : vector<144x1xi32>
    %c0_i32_5 = arith.constant 0 : i32
    %21 = vector.broadcast %c0_i32_5 : i32 to vector<144x1xi32>
    %22 = arith.cmpi ne, %20, %21 : vector<144x1xi32>
    %c0_i32_6 = arith.constant 0 : i32
    %23 = vector.broadcast %c0_i32_6 : i32 to vector<144x1xi32>
    %24 = arith.cmpi slt, %20, %23 : vector<144x1xi32>
    %c0_i32_7 = arith.constant 0 : i32
    %25 = arith.cmpi slt, %18, %c0_i32_7 : i32
    %26 = vector.broadcast %25 : i1 to vector<144x1xi1>
    %27 = vector.broadcast %26 : vector<144x1xi1> to vector<144x1xi1>
    %28 = arith.xori %24, %27 : vector<144x1xi1>
    %29 = arith.andi %28, %22 : vector<144x1xi1>
    %30 = vector.broadcast %18 : i32 to vector<144x1xi32>
    %31 = arith.addi %20, %30 : vector<144x1xi32>
    %32 = arith.select %29, %31, %20 : vector<144x1xi1>, vector<144x1xi32>
    %c0_i32_8 = arith.constant 0 : i32
    %33 = vector.broadcast %c0_i32_8 : i32 to vector<144x1xi32>
    %34 = arith.cmpi ne, %32, %33 : vector<144x1xi32>
    %35 = arith.extui %34 : vector<144x1xi1> to vector<144x1xi32>
    %36 = arith.sitofp %35 : vector<144x1xi32> to vector<144x1xf32>
    %c7_i32 = arith.constant 7 : i32
    %37 = vector.broadcast %c7_i32 : i32 to vector<144x1xi32>
    %38 = arith.cmpi ne, %32, %37 : vector<144x1xi32>
    %39 = arith.extui %38 : vector<144x1xi1> to vector<144x1xi32>
    %40 = arith.sitofp %39 : vector<144x1xi32> to vector<144x1xf32>
    %41 = arith.truncf %36 : vector<144x1xf32> to vector<144x1xbf16>
    %42 = arith.truncf %40 : vector<144x1xf32> to vector<144x1xbf16>
    %cst = arith.constant 0.000000e+00 : bf16
    %43 = vector.broadcast %cst : bf16 to vector<16x4xbf16>
    %c0 = arith.constant 0 : index
    %c0_9 = arith.constant 0 : index
    %44 = vector.load %arg14[%c0, %c0_9] : memref<176x4xbf16, #tpu.memory_space<vmem>>, vector<16x4xbf16>
    tpu.vector_store %arg14[%c0, %c0_9], %43 {strides = array<i32>} : memref<176x4xbf16, #tpu.memory_space<vmem>>, vector<16x4xbf16>,
    %c80 = arith.constant 80 : index
    %c0_10 = arith.constant 0 : index
    %45 = vector.load %arg14[%c80, %c0_10] : memref<176x4xbf16, #tpu.memory_space<vmem>>, vector<16x4xbf16>
    tpu.vector_store %arg14[%c80, %c0_10], %43 {strides = array<i32>} : memref<176x4xbf16, #tpu.memory_space<vmem>>, vector<16x4xbf16>,
    %c160 = arith.constant 160 : index
    %c0_11 = arith.constant 0 : index
    %46 = vector.load %arg14[%c160, %c0_11] : memref<176x4xbf16, #tpu.memory_space<vmem>>, vector<16x4xbf16>
    tpu.vector_store %arg14[%c160, %c0_11], %43 {strides = array<i32>} : memref<176x4xbf16, #tpu.memory_space<vmem>>, vector<16x4xbf16>,
    %cst_12 = arith.constant 0.000000e+00 : bf16
    %47 = vector.broadcast %cst_12 : bf16 to vector<16x32xbf16>
    %c0_13 = arith.constant 0 : index
    %c0_14 = arith.constant 0 : index
    %48 = vector.load %arg15[%c0_13, %c0_14] : memref<176x32xbf16, #tpu.memory_space<vmem>>, vector<16x32xbf16>
    tpu.vector_store %arg15[%c0_13, %c0_14], %47 {strides = array<i32>} : memref<176x32xbf16, #tpu.memory_space<vmem>>, vector<16x32xbf16>,
    %c80_15 = arith.constant 80 : index
    %c0_16 = arith.constant 0 : index
    %49 = vector.load %arg15[%c80_15, %c0_16] : memref<176x32xbf16, #tpu.memory_space<vmem>>, vector<16x32xbf16>
    tpu.vector_store %arg15[%c80_15, %c0_16], %47 {strides = array<i32>} : memref<176x32xbf16, #tpu.memory_space<vmem>>, vector<16x32xbf16>,
    %c160_17 = arith.constant 160 : index
    %c0_18 = arith.constant 0 : index
    %50 = vector.load %arg15[%c160_17, %c0_18] : memref<176x32xbf16, #tpu.memory_space<vmem>>, vector<16x32xbf16>
    tpu.vector_store %arg15[%c160_17, %c0_18], %47 {strides = array<i32>} : memref<176x32xbf16, #tpu.memory_space<vmem>>, vector<16x32xbf16>,
    %cst_19 = arith.constant 0.000000e+00 : bf16
    %51 = vector.broadcast %cst_19 : bf16 to vector<16x16xbf16>
    %c0_20 = arith.constant 0 : index
    %c0_21 = arith.constant 0 : index
    %52 = vector.load %arg16[%c0_20, %c0_21] : memref<176x16xbf16, #tpu.memory_space<vmem>>, vector<16x16xbf16>
    tpu.vector_store %arg16[%c0_20, %c0_21], %51 {strides = array<i32>} : memref<176x16xbf16, #tpu.memory_space<vmem>>, vector<16x16xbf16>,
    %c80_22 = arith.constant 80 : index
    %c0_23 = arith.constant 0 : index
    %53 = vector.load %arg16[%c80_22, %c0_23] : memref<176x16xbf16, #tpu.memory_space<vmem>>, vector<16x16xbf16>
    tpu.vector_store %arg16[%c80_22, %c0_23], %51 {strides = array<i32>} : memref<176x16xbf16, #tpu.memory_space<vmem>>, vector<16x16xbf16>,
    %c160_24 = arith.constant 160 : index
    %c0_25 = arith.constant 0 : index
    %54 = vector.load %arg16[%c160_24, %c0_25] : memref<176x16xbf16, #tpu.memory_space<vmem>>, vector<16x16xbf16>
    tpu.vector_store %arg16[%c160_24, %c0_25], %51 {strides = array<i32>} : memref<176x16xbf16, #tpu.memory_space<vmem>>, vector<16x16xbf16>,
    %cst_26 = arith.constant 0.000000e+00 : bf16
    %55 = vector.broadcast %cst_26 : bf16 to vector<16x8xbf16>
    %c0_27 = arith.constant 0 : index
    %c0_28 = arith.constant 0 : index
    %56 = vector.load %arg17[%c0_27, %c0_28] : memref<176x8xbf16, #tpu.memory_space<vmem>>, vector<16x8xbf16>
    tpu.vector_store %arg17[%c0_27, %c0_28], %55 {strides = array<i32>} : memref<176x8xbf16, #tpu.memory_space<vmem>>, vector<16x8xbf16>,
    %c80_29 = arith.constant 80 : index
    %c0_30 = arith.constant 0 : index
    %57 = vector.load %arg17[%c80_29, %c0_30] : memref<176x8xbf16, #tpu.memory_space<vmem>>, vector<16x8xbf16>
    tpu.vector_store %arg17[%c80_29, %c0_30], %55 {strides = array<i32>} : memref<176x8xbf16, #tpu.memory_space<vmem>>, vector<16x8xbf16>,
    %c160_31 = arith.constant 160 : index
    %c0_32 = arith.constant 0 : index
    %58 = vector.load %arg17[%c160_31, %c0_32] : memref<176x8xbf16, #tpu.memory_space<vmem>>, vector<16x8xbf16>
    tpu.vector_store %arg17[%c160_31, %c0_32], %55 {strides = array<i32>} : memref<176x8xbf16, #tpu.memory_space<vmem>>, vector<16x8xbf16>,
    %c0_33 = arith.constant 0 : index
    %c0_34 = arith.constant 0 : index
    %c0_35 = arith.constant 0 : index
    %59 = vector.load %arg1[%c0_33, %c0_34, %c0_35] : memref<2x64x4xbf16, #tpu.memory_space<vmem>>, vector<1x64x4xbf16>
    %60 = vector.shape_cast %59 : vector<1x64x4xbf16> to vector<64x4xbf16>
    %c16 = arith.constant 16 : index
    %c0_36 = arith.constant 0 : index
    %61 = vector.load %arg14[%c16, %c0_36] : memref<176x4xbf16, #tpu.memory_space<vmem>>, vector<64x4xbf16>
    tpu.vector_store %arg14[%c16, %c0_36], %60 {strides = array<i32>} : memref<176x4xbf16, #tpu.memory_space<vmem>>, vector<64x4xbf16>,
    %c1 = arith.constant 1 : index
    %c0_37 = arith.constant 0 : index
    %c0_38 = arith.constant 0 : index
    %62 = vector.load %arg1[%c1, %c0_37, %c0_38] : memref<2x64x4xbf16, #tpu.memory_space<vmem>>, vector<1x64x4xbf16>
    %63 = vector.shape_cast %62 : vector<1x64x4xbf16> to vector<64x4xbf16>
    %c96 = arith.constant 96 : index
    %c0_39 = arith.constant 0 : index
    %64 = vector.load %arg14[%c96, %c0_39] : memref<176x4xbf16, #tpu.memory_space<vmem>>, vector<64x4xbf16>
    tpu.vector_store %arg14[%c96, %c0_39], %63 {strides = array<i32>} : memref<176x4xbf16, #tpu.memory_space<vmem>>, vector<64x4xbf16>,
    %c7 = arith.constant 7 : index
    %c0_40 = arith.constant 0 : index
    %65 = vector.load %arg14[%c7, %c0_40] : memref<176x4xbf16, #tpu.memory_space<vmem>>, vector<144x4xbf16>
    %66 = vector.broadcast %41 : vector<144x1xbf16> to vector<144x4xbf16>
    %67 = arith.mulf %65, %66 : vector<144x4xbf16>
    %c0_41 = arith.constant 0 : index
    %c0_42 = arith.constant 0 : index
    %c0_43 = arith.constant 0 : index
    %68 = vector.load %arg3[%c0_41, %c0_42, %c0_43] : memref<9x4x32xbf16, #tpu.memory_space<vmem>>, vector<1x4x32xbf16>
    %69 = vector.shape_cast %68 : vector<1x4x32xbf16> to vector<4x32xbf16>
    %cst_44 = arith.constant dense<0.000000e+00> : vector<144x32xf32>
    %70 = tpu.matmul %67, %69, %cst_44 {dimension_numbers = #tpu.dot_dimension_numbers<[1], [0], [0], [1], [0, 0, 1, 1], [], []>} : vector<144x4xbf16>, vector<4x32xbf16>, vector<144x32xf32> -> vector<144x32xf32>
    %c8 = arith.constant 8 : index
    %c0_45 = arith.constant 0 : index
    %71 = vector.load %arg14[%c8, %c0_45] : memref<176x4xbf16, #tpu.memory_space<vmem>>, vector<144x4xbf16>
    %c1_46 = arith.constant 1 : index
    %c0_47 = arith.constant 0 : index
    %c0_48 = arith.constant 0 : index
    %72 = vector.load %arg3[%c1_46, %c0_47, %c0_48] : memref<9x4x32xbf16, #tpu.memory_space<vmem>>, vector<1x4x32xbf16>
    %73 = vector.shape_cast %72 : vector<1x4x32xbf16> to vector<4x32xbf16>
    %cst_49 = arith.constant dense<0.000000e+00> : vector<144x32xf32>
    %74 = tpu.matmul %71, %73, %cst_49 {dimension_numbers = #tpu.dot_dimension_numbers<[1], [0], [0], [1], [0, 0, 1, 1], [], []>} : vector<144x4xbf16>, vector<4x32xbf16>, vector<144x32xf32> -> vector<144x32xf32>
    %75 = arith.addf %70, %74 : vector<144x32xf32>
    %c9 = arith.constant 9 : index
    %c0_50 = arith.constant 0 : index
    %76 = vector.load %arg14[%c9, %c0_50] : memref<176x4xbf16, #tpu.memory_space<vmem>>, vector<144x4xbf16>
    %77 = vector.broadcast %42 : vector<144x1xbf16> to vector<144x4xbf16>
    %78 = arith.mulf %76, %77 : vector<144x4xbf16>
    %c2 = arith.constant 2 : index
    %c0_51 = arith.constant 0 : index
    %c0_52 = arith.constant 0 : index
    %79 = vector.load %arg3[%c2, %c0_51, %c0_52] : memref<9x4x32xbf16, #tpu.memory_space<vmem>>, vector<1x4x32xbf16>
    %80 = vector.shape_cast %79 : vector<1x4x32xbf16> to vector<4x32xbf16>
    %cst_53 = arith.constant dense<0.000000e+00> : vector<144x32xf32>
    %81 = tpu.matmul %78, %80, %cst_53 {dimension_numbers = #tpu.dot_dimension_numbers<[1], [0], [0], [1], [0, 0, 1, 1], [], []>} : vector<144x4xbf16>, vector<4x32xbf16>, vector<144x32xf32> -> vector<144x32xf32>
    %82 = arith.addf %75, %81 : vector<144x32xf32>
    %c15 = arith.constant 15 : index
    %c0_54 = arith.constant 0 : index
    %83 = vector.load %arg14[%c15, %c0_54] : memref<176x4xbf16, #tpu.memory_space<vmem>>, vector<144x4xbf16>
    %84 = vector.broadcast %41 : vector<144x1xbf16> to vector<144x4xbf16>
    %85 = arith.mulf %83, %84 : vector<144x4xbf16>
    %c3 = arith.constant 3 : index
    %c0_55 = arith.constant 0 : index
    %c0_56 = arith.constant 0 : index
    %86 = vector.load %arg3[%c3, %c0_55, %c0_56] : memref<9x4x32xbf16, #tpu.memory_space<vmem>>, vector<1x4x32xbf16>
    %87 = vector.shape_cast %86 : vector<1x4x32xbf16> to vector<4x32xbf16>
    %cst_57 = arith.constant dense<0.000000e+00> : vector<144x32xf32>
    %88 = tpu.matmul %85, %87, %cst_57 {dimension_numbers = #tpu.dot_dimension_numbers<[1], [0], [0], [1], [0, 0, 1, 1], [], []>} : vector<144x4xbf16>, vector<4x32xbf16>, vector<144x32xf32> -> vector<144x32xf32>
    %89 = arith.addf %82, %88 : vector<144x32xf32>
    %c16_58 = arith.constant 16 : index
    %c0_59 = arith.constant 0 : index
    %90 = vector.load %arg14[%c16_58, %c0_59] : memref<176x4xbf16, #tpu.memory_space<vmem>>, vector<144x4xbf16>
    %c4 = arith.constant 4 : index
    %c0_60 = arith.constant 0 : index
    %c0_61 = arith.constant 0 : index
    %91 = vector.load %arg3[%c4, %c0_60, %c0_61] : memref<9x4x32xbf16, #tpu.memory_space<vmem>>, vector<1x4x32xbf16>
    %92 = vector.shape_cast %91 : vector<1x4x32xbf16> to vector<4x32xbf16>
    %cst_62 = arith.constant dense<0.000000e+00> : vector<144x32xf32>
    %93 = tpu.matmul %90, %92, %cst_62 {dimension_numbers = #tpu.dot_dimension_numbers<[1], [0], [0], [1], [0, 0, 1, 1], [], []>} : vector<144x4xbf16>, vector<4x32xbf16>, vector<144x32xf32> -> vector<144x32xf32>
    %94 = arith.addf %89, %93 : vector<144x32xf32>
    %c17 = arith.constant 17 : index
    %c0_63 = arith.constant 0 : index
    %95 = vector.load %arg14[%c17, %c0_63] : memref<176x4xbf16, #tpu.memory_space<vmem>>, vector<144x4xbf16>
    %96 = vector.broadcast %42 : vector<144x1xbf16> to vector<144x4xbf16>
    %97 = arith.mulf %95, %96 : vector<144x4xbf16>
    %c5 = arith.constant 5 : index
    %c0_64 = arith.constant 0 : index
    %c0_65 = arith.constant 0 : index
    %98 = vector.load %arg3[%c5, %c0_64, %c0_65] : memref<9x4x32xbf16, #tpu.memory_space<vmem>>, vector<1x4x32xbf16>
    %99 = vector.shape_cast %98 : vector<1x4x32xbf16> to vector<4x32xbf16>
    %cst_66 = arith.constant dense<0.000000e+00> : vector<144x32xf32>
    %100 = tpu.matmul %97, %99, %cst_66 {dimension_numbers = #tpu.dot_dimension_numbers<[1], [0], [0], [1], [0, 0, 1, 1], [], []>} : vector<144x4xbf16>, vector<4x32xbf16>, vector<144x32xf32> -> vector<144x32xf32>
    %101 = arith.addf %94, %100 : vector<144x32xf32>
    %c23 = arith.constant 23 : index
    %c0_67 = arith.constant 0 : index
    %102 = vector.load %arg14[%c23, %c0_67] : memref<176x4xbf16, #tpu.memory_space<vmem>>, vector<144x4xbf16>
    %103 = vector.broadcast %41 : vector<144x1xbf16> to vector<144x4xbf16>
    %104 = arith.mulf %102, %103 : vector<144x4xbf16>
    %c6 = arith.constant 6 : index
    %c0_68 = arith.constant 0 : index
    %c0_69 = arith.constant 0 : index
    %105 = vector.load %arg3[%c6, %c0_68, %c0_69] : memref<9x4x32xbf16, #tpu.memory_space<vmem>>, vector<1x4x32xbf16>
    %106 = vector.shape_cast %105 : vector<1x4x32xbf16> to vector<4x32xbf16>
    %cst_70 = arith.constant dense<0.000000e+00> : vector<144x32xf32>
    %107 = tpu.matmul %104, %106, %cst_70 {dimension_numbers = #tpu.dot_dimension_numbers<[1], [0], [0], [1], [0, 0, 1, 1], [], []>} : vector<144x4xbf16>, vector<4x32xbf16>, vector<144x32xf32> -> vector<144x32xf32>
    %108 = arith.addf %101, %107 : vector<144x32xf32>
    %c24 = arith.constant 24 : index
    %c0_71 = arith.constant 0 : index
    %109 = vector.load %arg14[%c24, %c0_71] : memref<176x4xbf16, #tpu.memory_space<vmem>>, vector<144x4xbf16>
    %c7_72 = arith.constant 7 : index
    %c0_73 = arith.constant 0 : index
    %c0_74 = arith.constant 0 : index
    %110 = vector.load %arg3[%c7_72, %c0_73, %c0_74] : memref<9x4x32xbf16, #tpu.memory_space<vmem>>, vector<1x4x32xbf16>
    %111 = vector.shape_cast %110 : vector<1x4x32xbf16> to vector<4x32xbf16>
    %cst_75 = arith.constant dense<0.000000e+00> : vector<144x32xf32>
    %112 = tpu.matmul %109, %111, %cst_75 {dimension_numbers = #tpu.dot_dimension_numbers<[1], [0], [0], [1], [0, 0, 1, 1], [], []>} : vector<144x4xbf16>, vector<4x32xbf16>, vector<144x32xf32> -> vector<144x32xf32>
    %113 = arith.addf %108, %112 : vector<144x32xf32>
    %c25 = arith.constant 25 : index
    %c0_76 = arith.constant 0 : index
    %114 = vector.load %arg14[%c25, %c0_76] : memref<176x4xbf16, #tpu.memory_space<vmem>>, vector<144x4xbf16>
    %115 = vector.broadcast %42 : vector<144x1xbf16> to vector<144x4xbf16>
    %116 = arith.mulf %114, %115 : vector<144x4xbf16>
    %c8_77 = arith.constant 8 : index
    %c0_78 = arith.constant 0 : index
    %c0_79 = arith.constant 0 : index
    %117 = vector.load %arg3[%c8_77, %c0_78, %c0_79] : memref<9x4x32xbf16, #tpu.memory_space<vmem>>, vector<1x4x32xbf16>
    %118 = vector.shape_cast %117 : vector<1x4x32xbf16> to vector<4x32xbf16>
    %cst_80 = arith.constant dense<0.000000e+00> : vector<144x32xf32>
    %119 = tpu.matmul %116, %118, %cst_80 {dimension_numbers = #tpu.dot_dimension_numbers<[1], [0], [0], [1], [0, 0, 1, 1], [], []>} : vector<144x4xbf16>, vector<4x32xbf16>, vector<144x32xf32> -> vector<144x32xf32>
    %120 = arith.addf %113, %119 : vector<144x32xf32>
    %c0_81 = arith.constant 0 : index
    %c0_82 = arith.constant 0 : index
    %121 = vector.load %arg4[%c0_81, %c0_82] : memref<1x32xf32, #tpu.memory_space<vmem>>, vector<1x32xf32>
    %122 = vector.broadcast %121 : vector<1x32xf32> to vector<144x32xf32>
    %123 = arith.addf %120, %122 : vector<144x32xf32>
    %cst_83 = arith.constant 0.000000e+00 : f32
    %124 = vector.broadcast %cst_83 : f32 to vector<144x32xf32>
    %125 = arith.maximumf %123, %124 : vector<144x32xf32>
    %126 = vector.extract_strided_slice %125 {offsets = [0, 0], sizes = [64, 32], strides = [1, 1]} : vector<144x32xf32> to vector<64x32xf32>
    %127 = arith.truncf %126 : vector<64x32xf32> to vector<64x32xbf16>
    %c16_84 = arith.constant 16 : index
    %c0_85 = arith.constant 0 : index
    %128 = vector.load %arg15[%c16_84, %c0_85] : memref<176x32xbf16, #tpu.memory_space<vmem>>, vector<64x32xbf16>
    tpu.vector_store %arg15[%c16_84, %c0_85], %127 {strides = array<i32>} : memref<176x32xbf16, #tpu.memory_space<vmem>>, vector<64x32xbf16>,
    %129 = vector.extract_strided_slice %125 {offsets = [80, 0], sizes = [64, 32], strides = [1, 1]} : vector<144x32xf32> to vector<64x32xf32>
    %130 = arith.truncf %129 : vector<64x32xf32> to vector<64x32xbf16>
    %c96_86 = arith.constant 96 : index
    %c0_87 = arith.constant 0 : index
    %131 = vector.load %arg15[%c96_86, %c0_87] : memref<176x32xbf16, #tpu.memory_space<vmem>>, vector<64x32xbf16>
    tpu.vector_store %arg15[%c96_86, %c0_87], %130 {strides = array<i32>} : memref<176x32xbf16, #tpu.memory_space<vmem>>, vector<64x32xbf16>,
    %c7_88 = arith.constant 7 : index
    %c0_89 = arith.constant 0 : index
    %132 = vector.load %arg15[%c7_88, %c0_89] : memref<176x32xbf16, #tpu.memory_space<vmem>>, vector<144x32xbf16>
    %c0_90 = arith.constant 0 : index
    %c0_91 = arith.constant 0 : index
    %c0_92 = arith.constant 0 : index
    %133 = vector.load %arg5[%c0_90, %c0_91, %c0_92] : memref<9x32x16xbf16, #tpu.memory_space<vmem>>, vector<1x32x16xbf16>
    %134 = vector.shape_cast %133 : vector<1x32x16xbf16> to vector<32x16xbf16>
    %cst_93 = arith.constant dense<0.000000e+00> : vector<144x16xf32>
    %135 = tpu.matmul %132, %134, %cst_93 {dimension_numbers = #tpu.dot_dimension_numbers<[1], [0], [0], [1], [0, 0, 1, 1], [], []>} : vector<144x32xbf16>, vector<32x16xbf16>, vector<144x16xf32> -> vector<144x16xf32>
    %136 = vector.broadcast %36 : vector<144x1xf32> to vector<144x16xf32>
    %137 = arith.mulf %135, %136 : vector<144x16xf32>
    %c8_94 = arith.constant 8 : index
    %c0_95 = arith.constant 0 : index
    %138 = vector.load %arg15[%c8_94, %c0_95] : memref<176x32xbf16, #tpu.memory_space<vmem>>, vector<144x32xbf16>
    %c1_96 = arith.constant 1 : index
    %c0_97 = arith.constant 0 : index
    %c0_98 = arith.constant 0 : index
    %139 = vector.load %arg5[%c1_96, %c0_97, %c0_98] : memref<9x32x16xbf16, #tpu.memory_space<vmem>>, vector<1x32x16xbf16>
    %140 = vector.shape_cast %139 : vector<1x32x16xbf16> to vector<32x16xbf16>
    %cst_99 = arith.constant dense<0.000000e+00> : vector<144x16xf32>
    %141 = tpu.matmul %138, %140, %cst_99 {dimension_numbers = #tpu.dot_dimension_numbers<[1], [0], [0], [1], [0, 0, 1, 1], [], []>} : vector<144x32xbf16>, vector<32x16xbf16>, vector<144x16xf32> -> vector<144x16xf32>
    %142 = arith.addf %137, %141 : vector<144x16xf32>
    %c9_100 = arith.constant 9 : index
    %c0_101 = arith.constant 0 : index
    %143 = vector.load %arg15[%c9_100, %c0_101] : memref<176x32xbf16, #tpu.memory_space<vmem>>, vector<144x32xbf16>
    %c2_102 = arith.constant 2 : index
    %c0_103 = arith.constant 0 : index
    %c0_104 = arith.constant 0 : index
    %144 = vector.load %arg5[%c2_102, %c0_103, %c0_104] : memref<9x32x16xbf16, #tpu.memory_space<vmem>>, vector<1x32x16xbf16>
    %145 = vector.shape_cast %144 : vector<1x32x16xbf16> to vector<32x16xbf16>
    %cst_105 = arith.constant dense<0.000000e+00> : vector<144x16xf32>
    %146 = tpu.matmul %143, %145, %cst_105 {dimension_numbers = #tpu.dot_dimension_numbers<[1], [0], [0], [1], [0, 0, 1, 1], [], []>} : vector<144x32xbf16>, vector<32x16xbf16>, vector<144x16xf32> -> vector<144x16xf32>
    %147 = vector.broadcast %40 : vector<144x1xf32> to vector<144x16xf32>
    %148 = arith.mulf %146, %147 : vector<144x16xf32>
    %149 = arith.addf %142, %148 : vector<144x16xf32>
    %c15_106 = arith.constant 15 : index
    %c0_107 = arith.constant 0 : index
    %150 = vector.load %arg15[%c15_106, %c0_107] : memref<176x32xbf16, #tpu.memory_space<vmem>>, vector<144x32xbf16>
    %c3_108 = arith.constant 3 : index
    %c0_109 = arith.constant 0 : index
    %c0_110 = arith.constant 0 : index
    %151 = vector.load %arg5[%c3_108, %c0_109, %c0_110] : memref<9x32x16xbf16, #tpu.memory_space<vmem>>, vector<1x32x16xbf16>
    %152 = vector.shape_cast %151 : vector<1x32x16xbf16> to vector<32x16xbf16>
    %cst_111 = arith.constant dense<0.000000e+00> : vector<144x16xf32>
    %153 = tpu.matmul %150, %152, %cst_111 {dimension_numbers = #tpu.dot_dimension_numbers<[1], [0], [0], [1], [0, 0, 1, 1], [], []>} : vector<144x32xbf16>, vector<32x16xbf16>, vector<144x16xf32> -> vector<144x16xf32>
    %154 = vector.broadcast %36 : vector<144x1xf32> to vector<144x16xf32>
    %155 = arith.mulf %153, %154 : vector<144x16xf32>
    %156 = arith.addf %149, %155 : vector<144x16xf32>
    %c16_112 = arith.constant 16 : index
    %c0_113 = arith.constant 0 : index
    %157 = vector.load %arg15[%c16_112, %c0_113] : memref<176x32xbf16, #tpu.memory_space<vmem>>, vector<144x32xbf16>
    %c4_114 = arith.constant 4 : index
    %c0_115 = arith.constant 0 : index
    %c0_116 = arith.constant 0 : index
    %158 = vector.load %arg5[%c4_114, %c0_115, %c0_116] : memref<9x32x16xbf16, #tpu.memory_space<vmem>>, vector<1x32x16xbf16>
    %159 = vector.shape_cast %158 : vector<1x32x16xbf16> to vector<32x16xbf16>
    %cst_117 = arith.constant dense<0.000000e+00> : vector<144x16xf32>
    %160 = tpu.matmul %157, %159, %cst_117 {dimension_numbers = #tpu.dot_dimension_numbers<[1], [0], [0], [1], [0, 0, 1, 1], [], []>} : vector<144x32xbf16>, vector<32x16xbf16>, vector<144x16xf32> -> vector<144x16xf32>
    %161 = arith.addf %156, %160 : vector<144x16xf32>
    %c17_118 = arith.constant 17 : index
    %c0_119 = arith.constant 0 : index
    %162 = vector.load %arg15[%c17_118, %c0_119] : memref<176x32xbf16, #tpu.memory_space<vmem>>, vector<144x32xbf16>
    %c5_120 = arith.constant 5 : index
    %c0_121 = arith.constant 0 : index
    %c0_122 = arith.constant 0 : index
    %163 = vector.load %arg5[%c5_120, %c0_121, %c0_122] : memref<9x32x16xbf16, #tpu.memory_space<vmem>>, vector<1x32x16xbf16>
    %164 = vector.shape_cast %163 : vector<1x32x16xbf16> to vector<32x16xbf16>
    %cst_123 = arith.constant dense<0.000000e+00> : vector<144x16xf32>
    %165 = tpu.matmul %162, %164, %cst_123 {dimension_numbers = #tpu.dot_dimension_numbers<[1], [0], [0], [1], [0, 0, 1, 1], [], []>} : vector<144x32xbf16>, vector<32x16xbf16>, vector<144x16xf32> -> vector<144x16xf32>
    %166 = vector.broadcast %40 : vector<144x1xf32> to vector<144x16xf32>
    %167 = arith.mulf %165, %166 : vector<144x16xf32>
    %168 = arith.addf %161, %167 : vector<144x16xf32>
    %c23_124 = arith.constant 23 : index
    %c0_125 = arith.constant 0 : index
    %169 = vector.load %arg15[%c23_124, %c0_125] : memref<176x32xbf16, #tpu.memory_space<vmem>>, vector<144x32xbf16>
    %c6_126 = arith.constant 6 : index
    %c0_127 = arith.constant 0 : index
    %c0_128 = arith.constant 0 : index
    %170 = vector.load %arg5[%c6_126, %c0_127, %c0_128] : memref<9x32x16xbf16, #tpu.memory_space<vmem>>, vector<1x32x16xbf16>
    %171 = vector.shape_cast %170 : vector<1x32x16xbf16> to vector<32x16xbf16>
    %cst_129 = arith.constant dense<0.000000e+00> : vector<144x16xf32>
    %172 = tpu.matmul %169, %171, %cst_129 {dimension_numbers = #tpu.dot_dimension_numbers<[1], [0], [0], [1], [0, 0, 1, 1], [], []>} : vector<144x32xbf16>, vector<32x16xbf16>, vector<144x16xf32> -> vector<144x16xf32>
    %173 = vector.broadcast %36 : vector<144x1xf32> to vector<144x16xf32>
    %174 = arith.mulf %172, %173 : vector<144x16xf32>
    %175 = arith.addf %168, %174 : vector<144x16xf32>
    %c24_130 = arith.constant 24 : index
    %c0_131 = arith.constant 0 : index
    %176 = vector.load %arg15[%c24_130, %c0_131] : memref<176x32xbf16, #tpu.memory_space<vmem>>, vector<144x32xbf16>
    %c7_132 = arith.constant 7 : index
    %c0_133 = arith.constant 0 : index
    %c0_134 = arith.constant 0 : index
    %177 = vector.load %arg5[%c7_132, %c0_133, %c0_134] : memref<9x32x16xbf16, #tpu.memory_space<vmem>>, vector<1x32x16xbf16>
    %178 = vector.shape_cast %177 : vector<1x32x16xbf16> to vector<32x16xbf16>
    %cst_135 = arith.constant dense<0.000000e+00> : vector<144x16xf32>
    %179 = tpu.matmul %176, %178, %cst_135 {dimension_numbers = #tpu.dot_dimension_numbers<[1], [0], [0], [1], [0, 0, 1, 1], [], []>} : vector<144x32xbf16>, vector<32x16xbf16>, vector<144x16xf32> -> vector<144x16xf32>
    %180 = arith.addf %175, %179 : vector<144x16xf32>
    %c25_136 = arith.constant 25 : index
    %c0_137 = arith.constant 0 : index
    %181 = vector.load %arg15[%c25_136, %c0_137] : memref<176x32xbf16, #tpu.memory_space<vmem>>, vector<144x32xbf16>
    %c8_138 = arith.constant 8 : index
    %c0_139 = arith.constant 0 : index
    %c0_140 = arith.constant 0 : index
    %182 = vector.load %arg5[%c8_138, %c0_139, %c0_140] : memref<9x32x16xbf16, #tpu.memory_space<vmem>>, vector<1x32x16xbf16>
    %183 = vector.shape_cast %182 : vector<1x32x16xbf16> to vector<32x16xbf16>
    %cst_141 = arith.constant dense<0.000000e+00> : vector<144x16xf32>
    %184 = tpu.matmul %181, %183, %cst_141 {dimension_numbers = #tpu.dot_dimension_numbers<[1], [0], [0], [1], [0, 0, 1, 1], [], []>} : vector<144x32xbf16>, vector<32x16xbf16>, vector<144x16xf32> -> vector<144x16xf32>
    %185 = vector.broadcast %40 : vector<144x1xf32> to vector<144x16xf32>
    %186 = arith.mulf %184, %185 : vector<144x16xf32>
    %187 = arith.addf %180, %186 : vector<144x16xf32>
    %c0_142 = arith.constant 0 : index
    %c0_143 = arith.constant 0 : index
    %188 = vector.load %arg6[%c0_142, %c0_143] : memref<1x16xf32, #tpu.memory_space<vmem>>, vector<1x16xf32>
    %189 = vector.broadcast %188 : vector<1x16xf32> to vector<144x16xf32>
    %190 = arith.addf %187, %189 : vector<144x16xf32>
    %cst_144 = arith.constant 0.000000e+00 : f32
    %191 = vector.broadcast %cst_144 : f32 to vector<144x16xf32>
    %192 = arith.maximumf %190, %191 : vector<144x16xf32>
    %193 = vector.extract_strided_slice %192 {offsets = [0, 0], sizes = [64, 16], strides = [1, 1]} : vector<144x16xf32> to vector<64x16xf32>
    %194 = arith.truncf %193 : vector<64x16xf32> to vector<64x16xbf16>
    %c16_145 = arith.constant 16 : index
    %c0_146 = arith.constant 0 : index
    %195 = vector.load %arg16[%c16_145, %c0_146] : memref<176x16xbf16, #tpu.memory_space<vmem>>, vector<64x16xbf16>
    tpu.vector_store %arg16[%c16_145, %c0_146], %194 {strides = array<i32>} : memref<176x16xbf16, #tpu.memory_space<vmem>>, vector<64x16xbf16>,
    %196 = vector.extract_strided_slice %192 {offsets = [80, 0], sizes = [64, 16], strides = [1, 1]} : vector<144x16xf32> to vector<64x16xf32>
    %197 = arith.truncf %196 : vector<64x16xf32> to vector<64x16xbf16>
    %c96_147 = arith.constant 96 : index
    %c0_148 = arith.constant 0 : index
    %198 = vector.load %arg16[%c96_147, %c0_148] : memref<176x16xbf16, #tpu.memory_space<vmem>>, vector<64x16xbf16>
    tpu.vector_store %arg16[%c96_147, %c0_148], %197 {strides = array<i32>} : memref<176x16xbf16, #tpu.memory_space<vmem>>, vector<64x16xbf16>,
    %c7_149 = arith.constant 7 : index
    %c0_150 = arith.constant 0 : index
    %199 = vector.load %arg16[%c7_149, %c0_150] : memref<176x16xbf16, #tpu.memory_space<vmem>>, vector<144x16xbf16>
    %c0_151 = arith.constant 0 : index
    %c0_152 = arith.constant 0 : index
    %c0_153 = arith.constant 0 : index
    %200 = vector.load %arg7[%c0_151, %c0_152, %c0_153] : memref<9x16x8xbf16, #tpu.memory_space<vmem>>, vector<1x16x8xbf16>
    %201 = vector.shape_cast %200 : vector<1x16x8xbf16> to vector<16x8xbf16>
    %cst_154 = arith.constant dense<0.000000e+00> : vector<144x8xf32>
    %202 = tpu.matmul %199, %201, %cst_154 {dimension_numbers = #tpu.dot_dimension_numbers<[1], [0], [0], [1], [0, 0, 1, 1], [], []>} : vector<144x16xbf16>, vector<16x8xbf16>, vector<144x8xf32> -> vector<144x8xf32>
    %203 = vector.broadcast %36 : vector<144x1xf32> to vector<144x8xf32>
    %204 = arith.mulf %202, %203 : vector<144x8xf32>
    %c8_155 = arith.constant 8 : index
    %c0_156 = arith.constant 0 : index
    %205 = vector.load %arg16[%c8_155, %c0_156] : memref<176x16xbf16, #tpu.memory_space<vmem>>, vector<144x16xbf16>
    %c1_157 = arith.constant 1 : index
    %c0_158 = arith.constant 0 : index
    %c0_159 = arith.constant 0 : index
    %206 = vector.load %arg7[%c1_157, %c0_158, %c0_159] : memref<9x16x8xbf16, #tpu.memory_space<vmem>>, vector<1x16x8xbf16>
    %207 = vector.shape_cast %206 : vector<1x16x8xbf16> to vector<16x8xbf16>
    %cst_160 = arith.constant dense<0.000000e+00> : vector<144x8xf32>
    %208 = tpu.matmul %205, %207, %cst_160 {dimension_numbers = #tpu.dot_dimension_numbers<[1], [0], [0], [1], [0, 0, 1, 1], [], []>} : vector<144x16xbf16>, vector<16x8xbf16>, vector<144x8xf32> -> vector<144x8xf32>
    %209 = arith.addf %204, %208 : vector<144x8xf32>
    %c9_161 = arith.constant 9 : index
    %c0_162 = arith.constant 0 : index
    %210 = vector.load %arg16[%c9_161, %c0_162] : memref<176x16xbf16, #tpu.memory_space<vmem>>, vector<144x16xbf16>
    %c2_163 = arith.constant 2 : index
    %c0_164 = arith.constant 0 : index
    %c0_165 = arith.constant 0 : index
    %211 = vector.load %arg7[%c2_163, %c0_164, %c0_165] : memref<9x16x8xbf16, #tpu.memory_space<vmem>>, vector<1x16x8xbf16>
    %212 = vector.shape_cast %211 : vector<1x16x8xbf16> to vector<16x8xbf16>
    %cst_166 = arith.constant dense<0.000000e+00> : vector<144x8xf32>
    %213 = tpu.matmul %210, %212, %cst_166 {dimension_numbers = #tpu.dot_dimension_numbers<[1], [0], [0], [1], [0, 0, 1, 1], [], []>} : vector<144x16xbf16>, vector<16x8xbf16>, vector<144x8xf32> -> vector<144x8xf32>
    %214 = vector.broadcast %40 : vector<144x1xf32> to vector<144x8xf32>
    %215 = arith.mulf %213, %214 : vector<144x8xf32>
    %216 = arith.addf %209, %215 : vector<144x8xf32>
    %c15_167 = arith.constant 15 : index
    %c0_168 = arith.constant 0 : index
    %217 = vector.load %arg16[%c15_167, %c0_168] : memref<176x16xbf16, #tpu.memory_space<vmem>>, vector<144x16xbf16>
    %c3_169 = arith.constant 3 : index
    %c0_170 = arith.constant 0 : index
    %c0_171 = arith.constant 0 : index
    %218 = vector.load %arg7[%c3_169, %c0_170, %c0_171] : memref<9x16x8xbf16, #tpu.memory_space<vmem>>, vector<1x16x8xbf16>
    %219 = vector.shape_cast %218 : vector<1x16x8xbf16> to vector<16x8xbf16>
    %cst_172 = arith.constant dense<0.000000e+00> : vector<144x8xf32>
    %220 = tpu.matmul %217, %219, %cst_172 {dimension_numbers = #tpu.dot_dimension_numbers<[1], [0], [0], [1], [0, 0, 1, 1], [], []>} : vector<144x16xbf16>, vector<16x8xbf16>, vector<144x8xf32> -> vector<144x8xf32>
    %221 = vector.broadcast %36 : vector<144x1xf32> to vector<144x8xf32>
    %222 = arith.mulf %220, %221 : vector<144x8xf32>
    %223 = arith.addf %216, %222 : vector<144x8xf32>
    %c16_173 = arith.constant 16 : index
    %c0_174 = arith.constant 0 : index
    %224 = vector.load %arg16[%c16_173, %c0_174] : memref<176x16xbf16, #tpu.memory_space<vmem>>, vector<144x16xbf16>
    %c4_175 = arith.constant 4 : index
    %c0_176 = arith.constant 0 : index
    %c0_177 = arith.constant 0 : index
    %225 = vector.load %arg7[%c4_175, %c0_176, %c0_177] : memref<9x16x8xbf16, #tpu.memory_space<vmem>>, vector<1x16x8xbf16>
    %226 = vector.shape_cast %225 : vector<1x16x8xbf16> to vector<16x8xbf16>
    %cst_178 = arith.constant dense<0.000000e+00> : vector<144x8xf32>
    %227 = tpu.matmul %224, %226, %cst_178 {dimension_numbers = #tpu.dot_dimension_numbers<[1], [0], [0], [1], [0, 0, 1, 1], [], []>} : vector<144x16xbf16>, vector<16x8xbf16>, vector<144x8xf32> -> vector<144x8xf32>
    %228 = arith.addf %223, %227 : vector<144x8xf32>
    %c17_179 = arith.constant 17 : index
    %c0_180 = arith.constant 0 : index
    %229 = vector.load %arg16[%c17_179, %c0_180] : memref<176x16xbf16, #tpu.memory_space<vmem>>, vector<144x16xbf16>
    %c5_181 = arith.constant 5 : index
    %c0_182 = arith.constant 0 : index
    %c0_183 = arith.constant 0 : index
    %230 = vector.load %arg7[%c5_181, %c0_182, %c0_183] : memref<9x16x8xbf16, #tpu.memory_space<vmem>>, vector<1x16x8xbf16>
    %231 = vector.shape_cast %230 : vector<1x16x8xbf16> to vector<16x8xbf16>
    %cst_184 = arith.constant dense<0.000000e+00> : vector<144x8xf32>
    %232 = tpu.matmul %229, %231, %cst_184 {dimension_numbers = #tpu.dot_dimension_numbers<[1], [0], [0], [1], [0, 0, 1, 1], [], []>} : vector<144x16xbf16>, vector<16x8xbf16>, vector<144x8xf32> -> vector<144x8xf32>
    %233 = vector.broadcast %40 : vector<144x1xf32> to vector<144x8xf32>
    %234 = arith.mulf %232, %233 : vector<144x8xf32>
    %235 = arith.addf %228, %234 : vector<144x8xf32>
    %c23_185 = arith.constant 23 : index
    %c0_186 = arith.constant 0 : index
    %236 = vector.load %arg16[%c23_185, %c0_186] : memref<176x16xbf16, #tpu.memory_space<vmem>>, vector<144x16xbf16>
    %c6_187 = arith.constant 6 : index
    %c0_188 = arith.constant 0 : index
    %c0_189 = arith.constant 0 : index
    %237 = vector.load %arg7[%c6_187, %c0_188, %c0_189] : memref<9x16x8xbf16, #tpu.memory_space<vmem>>, vector<1x16x8xbf16>
    %238 = vector.shape_cast %237 : vector<1x16x8xbf16> to vector<16x8xbf16>
    %cst_190 = arith.constant dense<0.000000e+00> : vector<144x8xf32>
    %239 = tpu.matmul %236, %238, %cst_190 {dimension_numbers = #tpu.dot_dimension_numbers<[1], [0], [0], [1], [0, 0, 1, 1], [], []>} : vector<144x16xbf16>, vector<16x8xbf16>, vector<144x8xf32> -> vector<144x8xf32>
    %240 = vector.broadcast %36 : vector<144x1xf32> to vector<144x8xf32>
    %241 = arith.mulf %239, %240 : vector<144x8xf32>
    %242 = arith.addf %235, %241 : vector<144x8xf32>
    %c24_191 = arith.constant 24 : index
    %c0_192 = arith.constant 0 : index
    %243 = vector.load %arg16[%c24_191, %c0_192] : memref<176x16xbf16, #tpu.memory_space<vmem>>, vector<144x16xbf16>
    %c7_193 = arith.constant 7 : index
    %c0_194 = arith.constant 0 : index
    %c0_195 = arith.constant 0 : index
    %244 = vector.load %arg7[%c7_193, %c0_194, %c0_195] : memref<9x16x8xbf16, #tpu.memory_space<vmem>>, vector<1x16x8xbf16>
    %245 = vector.shape_cast %244 : vector<1x16x8xbf16> to vector<16x8xbf16>
    %cst_196 = arith.constant dense<0.000000e+00> : vector<144x8xf32>
    %246 = tpu.matmul %243, %245, %cst_196 {dimension_numbers = #tpu.dot_dimension_numbers<[1], [0], [0], [1], [0, 0, 1, 1], [], []>} : vector<144x16xbf16>, vector<16x8xbf16>, vector<144x8xf32> -> vector<144x8xf32>
    %247 = arith.addf %242, %246 : vector<144x8xf32>
    %c25_197 = arith.constant 25 : index
    %c0_198 = arith.constant 0 : index
    %248 = vector.load %arg16[%c25_197, %c0_198] : memref<176x16xbf16, #tpu.memory_space<vmem>>, vector<144x16xbf16>
    %c8_199 = arith.constant 8 : index
    %c0_200 = arith.constant 0 : index
    %c0_201 = arith.constant 0 : index
    %249 = vector.load %arg7[%c8_199, %c0_200, %c0_201] : memref<9x16x8xbf16, #tpu.memory_space<vmem>>, vector<1x16x8xbf16>
    %250 = vector.shape_cast %249 : vector<1x16x8xbf16> to vector<16x8xbf16>
    %cst_202 = arith.constant dense<0.000000e+00> : vector<144x8xf32>
    %251 = tpu.matmul %248, %250, %cst_202 {dimension_numbers = #tpu.dot_dimension_numbers<[1], [0], [0], [1], [0, 0, 1, 1], [], []>} : vector<144x16xbf16>, vector<16x8xbf16>, vector<144x8xf32> -> vector<144x8xf32>
    %252 = vector.broadcast %40 : vector<144x1xf32> to vector<144x8xf32>
    %253 = arith.mulf %251, %252 : vector<144x8xf32>
    %254 = arith.addf %247, %253 : vector<144x8xf32>
    %c0_203 = arith.constant 0 : index
    %c0_204 = arith.constant 0 : index
    %255 = vector.load %arg8[%c0_203, %c0_204] : memref<1x8xf32, #tpu.memory_space<vmem>>, vector<1x8xf32>
    %256 = vector.broadcast %255 : vector<1x8xf32> to vector<144x8xf32>
    %257 = arith.addf %254, %256 : vector<144x8xf32>
    %cst_205 = arith.constant 0.000000e+00 : f32
    %258 = vector.broadcast %cst_205 : f32 to vector<144x8xf32>
    %259 = arith.maximumf %257, %258 : vector<144x8xf32>
    %260 = vector.extract_strided_slice %259 {offsets = [0, 0], sizes = [64, 8], strides = [1, 1]} : vector<144x8xf32> to vector<64x8xf32>
    %261 = arith.truncf %260 : vector<64x8xf32> to vector<64x8xbf16>
    %c16_206 = arith.constant 16 : index
    %c0_207 = arith.constant 0 : index
    %262 = vector.load %arg17[%c16_206, %c0_207] : memref<176x8xbf16, #tpu.memory_space<vmem>>, vector<64x8xbf16>
    tpu.vector_store %arg17[%c16_206, %c0_207], %261 {strides = array<i32>} : memref<176x8xbf16, #tpu.memory_space<vmem>>, vector<64x8xbf16>,
    %263 = vector.extract_strided_slice %259 {offsets = [80, 0], sizes = [64, 8], strides = [1, 1]} : vector<144x8xf32> to vector<64x8xf32>
    %264 = arith.truncf %263 : vector<64x8xf32> to vector<64x8xbf16>
    %c96_208 = arith.constant 96 : index
    %c0_209 = arith.constant 0 : index
    %265 = vector.load %arg17[%c96_208, %c0_209] : memref<176x8xbf16, #tpu.memory_space<vmem>>, vector<64x8xbf16>
    tpu.vector_store %arg17[%c96_208, %c0_209], %264 {strides = array<i32>} : memref<176x8xbf16, #tpu.memory_space<vmem>>, vector<64x8xbf16>,
    %c7_210 = arith.constant 7 : index
    %c0_211 = arith.constant 0 : index
    %266 = vector.load %arg17[%c7_210, %c0_211] : memref<176x8xbf16, #tpu.memory_space<vmem>>, vector<144x8xbf16>
    %c0_212 = arith.constant 0 : index
    %c0_213 = arith.constant 0 : index
    %c0_214 = arith.constant 0 : index
    %267 = vector.load %arg9[%c0_212, %c0_213, %c0_214] : memref<9x8x4xbf16, #tpu.memory_space<vmem>>, vector<1x8x4xbf16>
    %268 = vector.shape_cast %267 : vector<1x8x4xbf16> to vector<8x4xbf16>
    %cst_215 = arith.constant dense<0.000000e+00> : vector<144x4xf32>
    %269 = tpu.matmul %266, %268, %cst_215 {dimension_numbers = #tpu.dot_dimension_numbers<[1], [0], [0], [1], [0, 0, 1, 1], [], []>} : vector<144x8xbf16>, vector<8x4xbf16>, vector<144x4xf32> -> vector<144x4xf32>
    %270 = vector.broadcast %36 : vector<144x1xf32> to vector<144x4xf32>
    %271 = arith.mulf %269, %270 : vector<144x4xf32>
    %c8_216 = arith.constant 8 : index
    %c0_217 = arith.constant 0 : index
    %272 = vector.load %arg17[%c8_216, %c0_217] : memref<176x8xbf16, #tpu.memory_space<vmem>>, vector<144x8xbf16>
    %c1_218 = arith.constant 1 : index
    %c0_219 = arith.constant 0 : index
    %c0_220 = arith.constant 0 : index
    %273 = vector.load %arg9[%c1_218, %c0_219, %c0_220] : memref<9x8x4xbf16, #tpu.memory_space<vmem>>, vector<1x8x4xbf16>
    %274 = vector.shape_cast %273 : vector<1x8x4xbf16> to vector<8x4xbf16>
    %cst_221 = arith.constant dense<0.000000e+00> : vector<144x4xf32>
    %275 = tpu.matmul %272, %274, %cst_221 {dimension_numbers = #tpu.dot_dimension_numbers<[1], [0], [0], [1], [0, 0, 1, 1], [], []>} : vector<144x8xbf16>, vector<8x4xbf16>, vector<144x4xf32> -> vector<144x4xf32>
    %276 = arith.addf %271, %275 : vector<144x4xf32>
    %c9_222 = arith.constant 9 : index
    %c0_223 = arith.constant 0 : index
    %277 = vector.load %arg17[%c9_222, %c0_223] : memref<176x8xbf16, #tpu.memory_space<vmem>>, vector<144x8xbf16>
    %c2_224 = arith.constant 2 : index
    %c0_225 = arith.constant 0 : index
    %c0_226 = arith.constant 0 : index
    %278 = vector.load %arg9[%c2_224, %c0_225, %c0_226] : memref<9x8x4xbf16, #tpu.memory_space<vmem>>, vector<1x8x4xbf16>
    %279 = vector.shape_cast %278 : vector<1x8x4xbf16> to vector<8x4xbf16>
    %cst_227 = arith.constant dense<0.000000e+00> : vector<144x4xf32>
    %280 = tpu.matmul %277, %279, %cst_227 {dimension_numbers = #tpu.dot_dimension_numbers<[1], [0], [0], [1], [0, 0, 1, 1], [], []>} : vector<144x8xbf16>, vector<8x4xbf16>, vector<144x4xf32> -> vector<144x4xf32>
    %281 = vector.broadcast %40 : vector<144x1xf32> to vector<144x4xf32>
    %282 = arith.mulf %280, %281 : vector<144x4xf32>
    %283 = arith.addf %276, %282 : vector<144x4xf32>
    %c15_228 = arith.constant 15 : index
    %c0_229 = arith.constant 0 : index
    %284 = vector.load %arg17[%c15_228, %c0_229] : memref<176x8xbf16, #tpu.memory_space<vmem>>, vector<144x8xbf16>
    %c3_230 = arith.constant 3 : index
    %c0_231 = arith.constant 0 : index
    %c0_232 = arith.constant 0 : index
    %285 = vector.load %arg9[%c3_230, %c0_231, %c0_232] : memref<9x8x4xbf16, #tpu.memory_space<vmem>>, vector<1x8x4xbf16>
    %286 = vector.shape_cast %285 : vector<1x8x4xbf16> to vector<8x4xbf16>
    %cst_233 = arith.constant dense<0.000000e+00> : vector<144x4xf32>
    %287 = tpu.matmul %284, %286, %cst_233 {dimension_numbers = #tpu.dot_dimension_numbers<[1], [0], [0], [1], [0, 0, 1, 1], [], []>} : vector<144x8xbf16>, vector<8x4xbf16>, vector<144x4xf32> -> vector<144x4xf32>
    %288 = vector.broadcast %36 : vector<144x1xf32> to vector<144x4xf32>
    %289 = arith.mulf %287, %288 : vector<144x4xf32>
    %290 = arith.addf %283, %289 : vector<144x4xf32>
    %c16_234 = arith.constant 16 : index
    %c0_235 = arith.constant 0 : index
    %291 = vector.load %arg17[%c16_234, %c0_235] : memref<176x8xbf16, #tpu.memory_space<vmem>>, vector<144x8xbf16>
    %c4_236 = arith.constant 4 : index
    %c0_237 = arith.constant 0 : index
    %c0_238 = arith.constant 0 : index
    %292 = vector.load %arg9[%c4_236, %c0_237, %c0_238] : memref<9x8x4xbf16, #tpu.memory_space<vmem>>, vector<1x8x4xbf16>
    %293 = vector.shape_cast %292 : vector<1x8x4xbf16> to vector<8x4xbf16>
    %cst_239 = arith.constant dense<0.000000e+00> : vector<144x4xf32>
    %294 = tpu.matmul %291, %293, %cst_239 {dimension_numbers = #tpu.dot_dimension_numbers<[1], [0], [0], [1], [0, 0, 1, 1], [], []>} : vector<144x8xbf16>, vector<8x4xbf16>, vector<144x4xf32> -> vector<144x4xf32>
    %295 = arith.addf %290, %294 : vector<144x4xf32>
    %c17_240 = arith.constant 17 : index
    %c0_241 = arith.constant 0 : index
    %296 = vector.load %arg17[%c17_240, %c0_241] : memref<176x8xbf16, #tpu.memory_space<vmem>>, vector<144x8xbf16>
    %c5_242 = arith.constant 5 : index
    %c0_243 = arith.constant 0 : index
    %c0_244 = arith.constant 0 : index
    %297 = vector.load %arg9[%c5_242, %c0_243, %c0_244] : memref<9x8x4xbf16, #tpu.memory_space<vmem>>, vector<1x8x4xbf16>
    %298 = vector.shape_cast %297 : vector<1x8x4xbf16> to vector<8x4xbf16>
    %cst_245 = arith.constant dense<0.000000e+00> : vector<144x4xf32>
    %299 = tpu.matmul %296, %298, %cst_245 {dimension_numbers = #tpu.dot_dimension_numbers<[1], [0], [0], [1], [0, 0, 1, 1], [], []>} : vector<144x8xbf16>, vector<8x4xbf16>, vector<144x4xf32> -> vector<144x4xf32>
    %300 = vector.broadcast %40 : vector<144x1xf32> to vector<144x4xf32>
    %301 = arith.mulf %299, %300 : vector<144x4xf32>
    %302 = arith.addf %295, %301 : vector<144x4xf32>
    %c23_246 = arith.constant 23 : index
    %c0_247 = arith.constant 0 : index
    %303 = vector.load %arg17[%c23_246, %c0_247] : memref<176x8xbf16, #tpu.memory_space<vmem>>, vector<144x8xbf16>
    %c6_248 = arith.constant 6 : index
    %c0_249 = arith.constant 0 : index
    %c0_250 = arith.constant 0 : index
    %304 = vector.load %arg9[%c6_248, %c0_249, %c0_250] : memref<9x8x4xbf16, #tpu.memory_space<vmem>>, vector<1x8x4xbf16>
    %305 = vector.shape_cast %304 : vector<1x8x4xbf16> to vector<8x4xbf16>
    %cst_251 = arith.constant dense<0.000000e+00> : vector<144x4xf32>
    %306 = tpu.matmul %303, %305, %cst_251 {dimension_numbers = #tpu.dot_dimension_numbers<[1], [0], [0], [1], [0, 0, 1, 1], [], []>} : vector<144x8xbf16>, vector<8x4xbf16>, vector<144x4xf32> -> vector<144x4xf32>
    %307 = vector.broadcast %36 : vector<144x1xf32> to vector<144x4xf32>
    %308 = arith.mulf %306, %307 : vector<144x4xf32>
    %309 = arith.addf %302, %308 : vector<144x4xf32>
    %c24_252 = arith.constant 24 : index
    %c0_253 = arith.constant 0 : index
    %310 = vector.load %arg17[%c24_252, %c0_253] : memref<176x8xbf16, #tpu.memory_space<vmem>>, vector<144x8xbf16>
    %c7_254 = arith.constant 7 : index
    %c0_255 = arith.constant 0 : index
    %c0_256 = arith.constant 0 : index
    %311 = vector.load %arg9[%c7_254, %c0_255, %c0_256] : memref<9x8x4xbf16, #tpu.memory_space<vmem>>, vector<1x8x4xbf16>
    %312 = vector.shape_cast %311 : vector<1x8x4xbf16> to vector<8x4xbf16>
    %cst_257 = arith.constant dense<0.000000e+00> : vector<144x4xf32>
    %313 = tpu.matmul %310, %312, %cst_257 {dimension_numbers = #tpu.dot_dimension_numbers<[1], [0], [0], [1], [0, 0, 1, 1], [], []>} : vector<144x8xbf16>, vector<8x4xbf16>, vector<144x4xf32> -> vector<144x4xf32>
    %314 = arith.addf %309, %313 : vector<144x4xf32>
    %c25_258 = arith.constant 25 : index
    %c0_259 = arith.constant 0 : index
    %315 = vector.load %arg17[%c25_258, %c0_259] : memref<176x8xbf16, #tpu.memory_space<vmem>>, vector<144x8xbf16>
    %c8_260 = arith.constant 8 : index
    %c0_261 = arith.constant 0 : index
    %c0_262 = arith.constant 0 : index
    %316 = vector.load %arg9[%c8_260, %c0_261, %c0_262] : memref<9x8x4xbf16, #tpu.memory_space<vmem>>, vector<1x8x4xbf16>
    %317 = vector.shape_cast %316 : vector<1x8x4xbf16> to vector<8x4xbf16>
    %cst_263 = arith.constant dense<0.000000e+00> : vector<144x4xf32>
    %318 = tpu.matmul %315, %317, %cst_263 {dimension_numbers = #tpu.dot_dimension_numbers<[1], [0], [0], [1], [0, 0, 1, 1], [], []>} : vector<144x8xbf16>, vector<8x4xbf16>, vector<144x4xf32> -> vector<144x4xf32>
    %319 = vector.broadcast %40 : vector<144x1xf32> to vector<144x4xf32>
    %320 = arith.mulf %318, %319 : vector<144x4xf32>
    %321 = arith.addf %314, %320 : vector<144x4xf32>
    %c0_264 = arith.constant 0 : index
    %c0_265 = arith.constant 0 : index
    %322 = vector.load %arg10[%c0_264, %c0_265] : memref<1x4xf32, #tpu.memory_space<vmem>>, vector<1x4xf32>
    %323 = vector.broadcast %322 : vector<1x4xf32> to vector<144x4xf32>
    %324 = arith.addf %321, %323 : vector<144x4xf32>
    %cst_266 = arith.constant 0.000000e+00 : f32
    %325 = vector.broadcast %cst_266 : f32 to vector<144x4xf32>
    %326 = arith.maximumf %324, %325 : vector<144x4xf32>
    %327 = arith.truncf %326 : vector<144x4xf32> to vector<144x4xbf16>
    %c0_267 = arith.constant 0 : index
    %c0_268 = arith.constant 0 : index
    %328 = vector.load %arg11[%c0_267, %c0_268] : memref<4x2xbf16, #tpu.memory_space<vmem>>, vector<4x2xbf16>
    %cst_269 = arith.constant dense<0.000000e+00> : vector<144x2xf32>
    %329 = tpu.matmul %327, %328, %cst_269 {dimension_numbers = #tpu.dot_dimension_numbers<[1], [0], [0], [1], [0, 0, 1, 1], [], []>} : vector<144x4xbf16>, vector<4x2xbf16>, vector<144x2xf32> -> vector<144x2xf32>
    %c0_270 = arith.constant 0 : index
    %c0_271 = arith.constant 0 : index
    %330 = vector.load %arg12[%c0_270, %c0_271] : memref<1x2xf32, #tpu.memory_space<vmem>>, vector<1x2xf32>
    %331 = vector.broadcast %330 : vector<1x2xf32> to vector<144x2xf32>
    %332 = arith.addf %329, %331 : vector<144x2xf32>
    %c0_272 = arith.constant 0 : index
    %c0_273 = arith.constant 0 : index
    %333 = vector.load %arg2[%c0_272, %c0_273] : memref<64x4xf32, #tpu.memory_space<vmem>>, vector<64x4xf32>
    %334 = vector.extract_strided_slice %332 {offsets = [0, 0], sizes = [64, 2], strides = [1, 1]} : vector<144x2xf32> to vector<64x2xf32>
    %cst_274 = arith.constant dense<0xFF800000> : vector<2xf32>
    %335 = vector.multi_reduction <maximumf>, %334, %cst_274 [0] : vector<64x2xf32> to vector<2xf32>
    %336 = vector.shape_cast %335 : vector<2xf32> to vector<1x2xf32>
    %337 = vector.broadcast %336 : vector<1x2xf32> to vector<64x2xf32>
    %338 = arith.subf %334, %337 : vector<64x2xf32>
    %339 = math.exp %338 : vector<64x2xf32>
    %cst_275 = arith.constant dense<0.000000e+00> : vector<2xf32>
    %340 = vector.multi_reduction <add>, %339, %cst_275 [0] : vector<64x2xf32> to vector<2xf32>
    %341 = vector.shape_cast %340 : vector<2xf32> to vector<1x2xf32>
    %cst_276 = arith.constant 1.000000e+00 : f32
    %342 = vector.broadcast %cst_276 : f32 to vector<1x2xf32>
    %343 = arith.divf %342, %341 : vector<1x2xf32>
    %344 = vector.extract_strided_slice %333 {offsets = [0, 0], sizes = [64, 2], strides = [1, 1]} : vector<64x4xf32> to vector<64x2xf32>
    %345 = vector.extract_strided_slice %339 {offsets = [0, 0], sizes = [64, 1], strides = [1, 1]} : vector<64x2xf32> to vector<64x1xf32>
    %346 = vector.broadcast %345 : vector<64x1xf32> to vector<64x2xf32>
    %347 = arith.mulf %344, %346 : vector<64x2xf32>
    %cst_277 = arith.constant dense<0.000000e+00> : vector<2xf32>
    %348 = vector.multi_reduction <add>, %347, %cst_277 [0] : vector<64x2xf32> to vector<2xf32>
    %349 = vector.shape_cast %348 : vector<2xf32> to vector<1x2xf32>
    %350 = vector.extract_strided_slice %333 {offsets = [0, 2], sizes = [64, 2], strides = [1, 1]} : vector<64x4xf32> to vector<64x2xf32>
    %351 = vector.extract_strided_slice %339 {offsets = [0, 1], sizes = [64, 1], strides = [1, 1]} : vector<64x2xf32> to vector<64x1xf32>
    %352 = vector.broadcast %351 : vector<64x1xf32> to vector<64x2xf32>
    %353 = arith.mulf %350, %352 : vector<64x2xf32>
    %cst_278 = arith.constant dense<0.000000e+00> : vector<2xf32>
    %354 = vector.multi_reduction <add>, %353, %cst_278 [0] : vector<64x2xf32> to vector<2xf32>
    %355 = vector.shape_cast %354 : vector<2xf32> to vector<1x2xf32>
    %356 = vector.extract_strided_slice %343 {offsets = [0, 0], sizes = [1, 1], strides = [1, 1]} : vector<1x2xf32> to vector<1x1xf32>
    %357 = vector.broadcast %356 : vector<1x1xf32> to vector<1x2xf32>
    %358 = arith.mulf %349, %357 : vector<1x2xf32>
    %359 = vector.extract_strided_slice %343 {offsets = [0, 1], sizes = [1, 1], strides = [1, 1]} : vector<1x2xf32> to vector<1x1xf32>
    %360 = vector.broadcast %359 : vector<1x1xf32> to vector<1x2xf32>
    %361 = arith.mulf %355, %360 : vector<1x2xf32>
    %362 = tpu.concatenate %358, %361 in 1 : vector<1x2xf32>, vector<1x2xf32> -> vector<1x4xf32>
    %cst_279 = arith.constant 7.812500e-03 : f32
    %363 = vector.broadcast %cst_279 : f32 to vector<1x4xf32>
    %364 = arith.mulf %362, %363 : vector<1x4xf32>
    %365 = vector.extract_strided_slice %332 {offsets = [80, 0], sizes = [64, 2], strides = [1, 1]} : vector<144x2xf32> to vector<64x2xf32>
    %cst_280 = arith.constant dense<0xFF800000> : vector<2xf32>
    %366 = vector.multi_reduction <maximumf>, %365, %cst_280 [0] : vector<64x2xf32> to vector<2xf32>
    %367 = vector.shape_cast %366 : vector<2xf32> to vector<1x2xf32>
    %368 = vector.broadcast %367 : vector<1x2xf32> to vector<64x2xf32>
    %369 = arith.subf %365, %368 : vector<64x2xf32>
    %370 = math.exp %369 : vector<64x2xf32>
    %cst_281 = arith.constant dense<0.000000e+00> : vector<2xf32>
    %371 = vector.multi_reduction <add>, %370, %cst_281 [0] : vector<64x2xf32> to vector<2xf32>
    %372 = vector.shape_cast %371 : vector<2xf32> to vector<1x2xf32>
    %cst_282 = arith.constant 1.000000e+00 : f32
    %373 = vector.broadcast %cst_282 : f32 to vector<1x2xf32>
    %374 = arith.divf %373, %372 : vector<1x2xf32>
    %375 = vector.extract_strided_slice %333 {offsets = [0, 0], sizes = [64, 2], strides = [1, 1]} : vector<64x4xf32> to vector<64x2xf32>
    %376 = vector.extract_strided_slice %370 {offsets = [0, 0], sizes = [64, 1], strides = [1, 1]} : vector<64x2xf32> to vector<64x1xf32>
    %377 = vector.broadcast %376 : vector<64x1xf32> to vector<64x2xf32>
    %378 = arith.mulf %375, %377 : vector<64x2xf32>
    %cst_283 = arith.constant dense<0.000000e+00> : vector<2xf32>
    %379 = vector.multi_reduction <add>, %378, %cst_283 [0] : vector<64x2xf32> to vector<2xf32>
    %380 = vector.shape_cast %379 : vector<2xf32> to vector<1x2xf32>
    %381 = vector.extract_strided_slice %333 {offsets = [0, 2], sizes = [64, 2], strides = [1, 1]} : vector<64x4xf32> to vector<64x2xf32>
    %382 = vector.extract_strided_slice %370 {offsets = [0, 1], sizes = [64, 1], strides = [1, 1]} : vector<64x2xf32> to vector<64x1xf32>
    %383 = vector.broadcast %382 : vector<64x1xf32> to vector<64x2xf32>
    %384 = arith.mulf %381, %383 : vector<64x2xf32>
    %cst_284 = arith.constant dense<0.000000e+00> : vector<2xf32>
    %385 = vector.multi_reduction <add>, %384, %cst_284 [0] : vector<64x2xf32> to vector<2xf32>
    %386 = vector.shape_cast %385 : vector<2xf32> to vector<1x2xf32>
    %387 = vector.extract_strided_slice %374 {offsets = [0, 0], sizes = [1, 1], strides = [1, 1]} : vector<1x2xf32> to vector<1x1xf32>
    %388 = vector.broadcast %387 : vector<1x1xf32> to vector<1x2xf32>
    %389 = arith.mulf %380, %388 : vector<1x2xf32>
    %390 = vector.extract_strided_slice %374 {offsets = [0, 1], sizes = [1, 1], strides = [1, 1]} : vector<1x2xf32> to vector<1x1xf32>
    %391 = vector.broadcast %390 : vector<1x1xf32> to vector<1x2xf32>
    %392 = arith.mulf %386, %391 : vector<1x2xf32>
    %393 = tpu.concatenate %389, %392 in 1 : vector<1x2xf32>, vector<1x2xf32> -> vector<1x4xf32>
    %cst_285 = arith.constant 7.812500e-03 : f32
    %394 = vector.broadcast %cst_285 : f32 to vector<1x4xf32>
    %395 = arith.mulf %393, %394 : vector<1x4xf32>
    %396 = tpu.concatenate %364, %395 in 0 : vector<1x4xf32>, vector<1x4xf32> -> vector<2x4xf32>
    %c0_286 = arith.constant 0 : index
    %c0_287 = arith.constant 0 : index
    %c0_288 = arith.constant 0 : index
    %397 = vector.load %arg13[%c0_286, %c0_287, %c0_288] : memref<1x2x4xf32, #tpu.memory_space<vmem>>, vector<1x2x4xf32>
    %398 = vector.shape_cast %397 : vector<1x2x4xf32> to vector<2x4xf32>
    %399 = vector.shape_cast %396 : vector<2x4xf32> to vector<1x2x4xf32>
    tpu.vector_store %arg13[%c0_286, %c0_287, %c0_288], %399 {strides = array<i32>} : memref<1x2x4xf32, #tpu.memory_space<vmem>>, vector<1x2x4xf32>,
    return
  }
  func.func @transform_0(%arg0: i32) -> (i32, i32, i32) {
    %c0_i32 = arith.constant 0 : i32
    %c0_i32_0 = arith.constant 0 : i32
    %c0_i32_1 = arith.constant 0 : i32
    return %arg0, %c0_i32, %c0_i32_0 : i32, i32, i32
  }
  func.func @transform_1(%arg0: i32) -> (i32, i32) {
    %c0_i32 = arith.constant 0 : i32
    %c0_i32_0 = arith.constant 0 : i32
    %c0_i32_1 = arith.constant 0 : i32
    return %c0_i32, %c0_i32_0 : i32, i32
  }
  func.func @transform_2(%arg0: i32) -> (i32, i32, i32) {
    %c0_i32 = arith.constant 0 : i32
    %c0_i32_0 = arith.constant 0 : i32
    %c0_i32_1 = arith.constant 0 : i32
    %c0_i32_2 = arith.constant 0 : i32
    return %c0_i32, %c0_i32_0, %c0_i32_1 : i32, i32, i32
  }
  func.func @transform_3(%arg0: i32) -> (i32, i32) {
    %c0_i32 = arith.constant 0 : i32
    %c0_i32_0 = arith.constant 0 : i32
    %c0_i32_1 = arith.constant 0 : i32
    return %c0_i32, %c0_i32_0 : i32, i32
  }
  func.func @transform_4(%arg0: i32) -> (i32, i32, i32) {
    %c0_i32 = arith.constant 0 : i32
    %c0_i32_0 = arith.constant 0 : i32
    %c0_i32_1 = arith.constant 0 : i32
    %c0_i32_2 = arith.constant 0 : i32
    return %c0_i32, %c0_i32_0, %c0_i32_1 : i32, i32, i32
  }
  func.func @transform_5(%arg0: i32) -> (i32, i32) {
    %c0_i32 = arith.constant 0 : i32
    %c0_i32_0 = arith.constant 0 : i32
    %c0_i32_1 = arith.constant 0 : i32
    return %c0_i32, %c0_i32_0 : i32, i32
  }
  func.func @transform_6(%arg0: i32) -> (i32, i32, i32) {
    %c0_i32 = arith.constant 0 : i32
    %c0_i32_0 = arith.constant 0 : i32
    %c0_i32_1 = arith.constant 0 : i32
    %c0_i32_2 = arith.constant 0 : i32
    return %c0_i32, %c0_i32_0, %c0_i32_1 : i32, i32, i32
  }
  func.func @transform_7(%arg0: i32) -> (i32, i32) {
    %c0_i32 = arith.constant 0 : i32
    %c0_i32_0 = arith.constant 0 : i32
    %c0_i32_1 = arith.constant 0 : i32
    return %c0_i32, %c0_i32_0 : i32, i32
  }
  func.func @transform_8(%arg0: i32) -> (i32, i32, i32) {
    %c0_i32 = arith.constant 0 : i32
    %c0_i32_0 = arith.constant 0 : i32
    %c0_i32_1 = arith.constant 0 : i32
    %c0_i32_2 = arith.constant 0 : i32
    return %c0_i32, %c0_i32_0, %c0_i32_1 : i32, i32, i32
  }
  func.func @transform_9(%arg0: i32) -> (i32, i32) {
    %c0_i32 = arith.constant 0 : i32
    %c0_i32_0 = arith.constant 0 : i32
    %c0_i32_1 = arith.constant 0 : i32
    return %c0_i32, %c0_i32_0 : i32, i32
  }
  func.func @transform_10(%arg0: i32) -> (i32, i32) {
    %c0_i32 = arith.constant 0 : i32
    %c0_i32_0 = arith.constant 0 : i32
    %c0_i32_1 = arith.constant 0 : i32
    return %c0_i32, %c0_i32_0 : i32, i32
  }
  func.func @transform_11(%arg0: i32) -> (i32, i32) {
    %c0_i32 = arith.constant 0 : i32
    %c0_i32_0 = arith.constant 0 : i32
    %c0_i32_1 = arith.constant 0 : i32
    return %c0_i32, %c0_i32_0 : i32, i32
  }
  func.func @transform_12(%arg0: i32) -> (i32, i32, i32) {
    %c0_i32 = arith.constant 0 : i32
    %c0_i32_0 = arith.constant 0 : i32
    %c0_i32_1 = arith.constant 0 : i32
    return %arg0, %c0_i32, %c0_i32_0 : i32, i32, i32
  }
}

</mosaic_0001>

<llo_original>
// kernel: tile.9
$region0: #{tile.9}
  #allocation0 [shape = 's32[1]{0}', space=sflag, size = 0x4, scoped, tag = 'scoped memory for tile.9']
  %s0 = inlined_call_operand.vmem [shape: f32[8], index: 0, kind: input, shape index: {}]
  %s1 = inlined_call_operand.vmem [shape: f32[8,8], index: 1, kind: output, shape index: {}]
  // Predicated region
  $region2: #{tile.9} parent=0 // pred_check
    _
  $region3: #{tile.9} parent=0 // pred_check_branch
    %3 = sbr.rel (0) target = $region5
  $region4: #{tile.9} parent=0 // pred_region
    _
  $region5: #{tile.9} parent=0 // pred_fallthru
    _
  %v4 = vld [vmem:[%s0] ss:$0 sm:$0xff]
  %5 = vst [vmem:[%s1] sm:$0xff] %v4

// kernel: corner_predictor_v3_forward.1
$region0: #{corner_predictor_v3_forward.1}
  #allocation0 [shape = 'u32[]', space=smem, size = 0x4, offset = 0x4, fixed_abs, tag = 'smem constant byte address 0x4 - core index']
  #allocation1 [shape = 'u32[144,128]{1,0:T(1,128)}', space=vmem, size = 0x12000, scoped, tag = 'internal scratch']
  #allocation2 [shape = 'bf16[176,4]{1,0:T(16,128)(2,1)}', space=vmem, size = 0xb000, scoped, tag = 'scratch operand']
  #allocation3 [shape = 'bf16[176,32]{1,0:T(16,128)(2,1)}', space=vmem, size = 0xb000, scoped, tag = 'scratch operand']
  #allocation4 [shape = 'bf16[176,16]{1,0:T(16,128)(2,1)}', space=vmem, size = 0xb000, scoped, tag = 'scratch operand']
  #allocation5 [shape = 'bf16[176,8]{1,0:T(16,128)(2,1)}', space=vmem, size = 0xb000, scoped, tag = 'scratch operand']
  %s0 = inlined_call_operand.vmem [shape: bf16[4,64,4], index: 0, kind: input, shape index: {}]
  %s1 = inlined_call_operand.vmem [shape: f32[64,4], index: 1, kind: input, shape index: {}]
  %s2 = inlined_call_operand.vmem [shape: bf16[9,4,32], index: 2, kind: input, shape index: {}]
  %s3 = inlined_call_operand.vmem [shape: f32[1,32], index: 3, kind: input, shape index: {}]
  %s4 = inlined_call_operand.vmem [shape: bf16[9,32,16], index: 4, kind: input, shape index: {}]
  %s5 = inlined_call_operand.vmem [shape: f32[1,16], index: 5, kind: input, shape index: {}]
  %s6 = inlined_call_operand.vmem [shape: bf16[9,16,8], index: 6, kind: input, shape index: {}]
  %s7 = inlined_call_operand.vmem [shape: f32[1,8], index: 7, kind: input, shape index: {}]
  %s8 = inlined_call_operand.vmem [shape: bf16[9,8,4], index: 8, kind: input, shape index: {}]
  %s9 = inlined_call_operand.vmem [shape: f32[1,4], index: 9, kind: input, shape index: {}]
  %s10 = inlined_call_operand.vmem [shape: bf16[4,2], index: 10, kind: input, shape index: {}]
  %s11 = inlined_call_operand.vmem [shape: f32[1,2], index: 11, kind: input, shape index: {}]
  %s12 = inlined_call_operand.hbm [shape: f32[2,2,4], index: 12, kind: output, shape index: {}]
  %s13 = sld [smem:[#allocation0]]
  $region81: #{corner_predictor_v3_forward.1} parent=0
    _
  %s15 = ssub.s32 1, %s13
  %s16 = scalar_select 0, %s15, %s13
  $region1: #{corner_predictor_v3_forward.1} parent=0
    #allocation6 [shape = 'u8[2048]{0}', space=vmem, size = 0x800, scoped, tag = 'output window, operand 0']
    #allocation7 [shape = 's32[2]{0}', space=sflag, size = 0x8, scoped, tag = 'scoped memory for corner_predictor_v3_forward.1']
    %17 = vsyncpa [#allocation7], 0
    %s18 = scalar_lea.sflag [#allocation7], 1
    %19 = vsyncpa %s18, 0
    loop: start=0, step=1, limit=4
    $region2: #{corner_predictor_v3_forward.1} parent=1 // loop_pre_header
      _
    $region3: #{corner_predictor_v3_forward.1} parent=1 // loop_header
      %s21 = sphi 0, %s25
      %p22 = scmp.ge.s32.totalorder %s21, 4
      %s31 = sphi 0, %s33
      %s34 = sphi 0, %s31
      %s35 = sphi 0, %s34
      %s51 = sphi 0, %s35
      %s55 = sphi 0, %s55
      %s57 = sphi 0, %s55
      %s58 = sphi 0, %s57
      %s72 = sphi 0, %s58
      %s76 = sphi 0, %s76
      %s78 = sphi 0, %s76
      %s79 = sphi 0, %s78
      %s93 = sphi 0, %s79
      %s97 = sphi 0, %s97
      %s99 = sphi 0, %s97
      %s100 = sphi 0, %s99
      %s114 = sphi 0, %s100
      %s118 = sphi 0, %s118
      %s120 = sphi 0, %s118
      %s121 = sphi 0, %s120
      %s135 = sphi 0, %s121
      %s139 = sphi 0, %s139
      %s141 = sphi 0, %s139
      %s142 = sphi 0, %s141
      %s156 = sphi 0, %s142
      %s160 = sphi 0, %s160
      %s162 = sphi 0, %s160
      %s163 = sphi 0, %s162
      %s177 = sphi 0, %s163
      %s181 = sphi 0, %s181
      %s183 = sphi 0, %s181
      %s184 = sphi 0, %s183
      %s198 = sphi 0, %s184
      %s202 = sphi 0, %s202
      %s204 = sphi 0, %s202
      %s205 = sphi 0, %s204
      %s219 = sphi 0, %s205
      %s223 = sphi 0, %s223
      %s225 = sphi 0, %s223
      %s226 = sphi 0, %s225
      %s240 = sphi 0, %s226
      %s244 = sphi 0, %s244
      %s246 = sphi 0, %s244
      %s247 = sphi 0, %s246
      %s261 = sphi 0, %s247
      %s265 = sphi 0, %s265
      %s267 = sphi 0, %s265
      %s268 = sphi 0, %s267
      %s282 = sphi 0, %s268
      %s288 = sphi 0, %s290
      %s291 = sphi 0, %s288
      %s292 = sphi 0, %s291
      %s308 = sphi 0, %s292
    $region4: #{corner_predictor_v3_forward.1} parent=1 // loop_header_branch
      %24 = sbr.rel (%p22) target = $region8
    $region5: #{corner_predictor_v3_forward.1} parent=1 // loop_body
      %s26 = ssub.s32 %s21, 1
      %s27 = ssub.s32 %s21, 2
      %s28 = sadd.s32 %s21, 1
      %s29 = ssub.s32 %s21, %s28
      %p30 = scmp.eq.s32.totalorder %s29, 0
      %s32 = sadd.s32 %s31, 1
      %s33 = scalar_select %p30, %s31, %s32
      %p36 = pneg %p30
      %p37 = scmp.eq.s32.totalorder %s21, 1
      %p38 = por %p36, %p37
      %p39 = scmp.ne.s32.totalorder %s31, %s34
      %p40 = scmp.eq.s32.totalorder %s21, 0
      %p41 = por %p39, %p40
      %p42 = scmp.ne.s32.totalorder %s31, %s34
      %p43 = scmp.eq.s32.totalorder %s26, 1
      %p44 = por %p42, %p43
      %p45 = scmp.ne.s32.totalorder %s34, %s35
      %p46 = scmp.eq.s32.totalorder %s26, 0
      %p47 = por %p45, %p46
      %p48 = scmp.ne.s32.totalorder %s34, %s35
      %p49 = scmp.eq.s32.totalorder %s27, 1
      %p50 = por %p48, %p49
      %p52 = scmp.ne.s32.totalorder %s35, %s51
      %p53 = scmp.eq.s32.totalorder %s27, 0
      %p54 = por %p52, %p53
      %s56 = sadd.s32 %s55, 1
      %p59 = scmp.eq.s32.totalorder %s21, 1
      %p60 = scmp.ne.s32.totalorder %s55, %s57
      %p61 = scmp.eq.s32.totalorder %s21, 0
      %p62 = por %p60, %p61
      %p63 = scmp.ne.s32.totalorder %s55, %s57
      %p64 = scmp.eq.s32.totalorder %s26, 1
      %p65 = por %p63, %p64
      %p66 = scmp.ne.s32.totalorder %s57, %s58
      %p67 = scmp.eq.s32.totalorder %s26, 0
      %p68 = por %p66, %p67
      %p69 = scmp.ne.s32.totalorder %s57, %s58
      %p70 = scmp.eq.s32.totalorder %s27, 1
      %p71 = por %p69, %p70
      %p73 = scmp.ne.s32.totalorder %s58, %s72
      %p74 = scmp.eq.s32.totalorder %s27, 0
      %p75 = por %p73, %p74
      %s77 = sadd.s32 %s76, 1
      %p80 = scmp.eq.s32.totalorder %s21, 1
      %p81 = scmp.ne.s32.totalorder %s76, %s78
      %p82 = scmp.eq.s32.totalorder %s21, 0
      %p83 = por %p81, %p82
      %p84 = scmp.ne.s32.totalorder %s76, %s78
      %p85 = scmp.eq.s32.totalorder %s26, 1
      %p86 = por %p84, %p85
      %p87 = scmp.ne.s32.totalorder %s78, %s79
      %p88 = scmp.eq.s32.totalorder %s26, 0
      %p89 = por %p87, %p88
      %p90 = scmp.ne.s32.totalorder %s78, %s79
      %p91 = scmp.eq.s32.totalorder %s27, 1
      %p92 = por %p90, %p91
      %p94 = scmp.ne.s32.totalorder %s79, %s93
      %p95 = scmp.eq.s32.totalorder %s27, 0
      %p96 = por %p94, %p95
      %s98 = sadd.s32 %s97, 1
      %p101 = scmp.eq.s32.totalorder %s21, 1
      %p102 = scmp.ne.s32.totalorder %s97, %s99
      %p103 = scmp.eq.s32.totalorder %s21, 0
      %p104 = por %p102, %p103
      %p105 = scmp.ne.s32.totalorder %s97, %s99
      %p106 = scmp.eq.s32.totalorder %s26, 1
      %p107 = por %p105, %p106
      %p108 = scmp.ne.s32.totalorder %s99, %s100
      %p109 = scmp.eq.s32.totalorder %s26, 0
      %p110 = por %p108, %p109
      %p111 = scmp.ne.s32.totalorder %s99, %s100
      %p112 = scmp.eq.s32.totalorder %s27, 1
      %p113 = por %p111, %p112
      %p115 = scmp.ne.s32.totalorder %s100, %s114
      %p116 = scmp.eq.s32.totalorder %s27, 0
      %p117 = por %p115, %p116
      %s119 = sadd.s32 %s118, 1
      %p122 = scmp.eq.s32.totalorder %s21, 1
      %p123 = scmp.ne.s32.totalorder %s118, %s120
      %p124 = scmp.eq.s32.totalorder %s21, 0
      %p125 = por %p123, %p124
      %p126 = scmp.ne.s32.totalorder %s118, %s120
      %p127 = scmp.eq.s32.totalorder %s26, 1
      %p128 = por %p126, %p127
      %p129 = scmp.ne.s32.totalorder %s120, %s121
      %p130 = scmp.eq.s32.totalorder %s26, 0
      %p131 = por %p129, %p130
      %p132 = scmp.ne.s32.totalorder %s120, %s121
      %p133 = scmp.eq.s32.totalorder %s27, 1
      %p134 = por %p132, %p133
      %p136 = scmp.ne.s32.totalorder %s121, %s135
      %p137 = scmp.eq.s32.totalorder %s27, 0
      %p138 = por %p136, %p137
      %s140 = sadd.s32 %s139, 1
      %p143 = scmp.eq.s32.totalorder %s21, 1
      %p144 = scmp.ne.s32.totalorder %s139, %s141
      %p145 = scmp.eq.s32.totalorder %s21, 0
      %p146 = por %p144, %p145
      %p147 = scmp.ne.s32.totalorder %s139, %s141
      %p148 = scmp.eq.s32.totalorder %s26, 1
      %p149 = por %p147, %p148
      %p150 = scmp.ne.s32.totalorder %s141, %s142
      %p151 = scmp.eq.s32.totalorder %s26, 0
      %p152 = por %p150, %p151
      %p153 = scmp.ne.s32.totalorder %s141, %s142
      %p154 = scmp.eq.s32.totalorder %s27, 1
      %p155 = por %p153, %p154
      %p157 = scmp.ne.s32.totalorder %s142, %s156
      %p158 = scmp.eq.s32.totalorder %s27, 0
      %p159 = por %p157, %p158
      %s161 = sadd.s32 %s160, 1
      %p164 = scmp.eq.s32.totalorder %s21, 1
      %p165 = scmp.ne.s32.totalorder %s160, %s162
      %p166 = scmp.eq.s32.totalorder %s21, 0
      %p167 = por %p165, %p166
      %p168 = scmp.ne.s32.totalorder %s160, %s162
      %p169 = scmp.eq.s32.totalorder %s26, 1
      %p170 = por %p168, %p169
      %p171 = scmp.ne.s32.totalorder %s162, %s163
      %p172 = scmp.eq.s32.totalorder %s26, 0
      %p173 = por %p171, %p172
      %p174 = scmp.ne.s32.totalorder %s162, %s163
      %p175 = scmp.eq.s32.totalorder %s27, 1
      %p176 = por %p174, %p175
      %p178 = scmp.ne.s32.totalorder %s163, %s177
      %p179 = scmp.eq.s32.totalorder %s27, 0
      %p180 = por %p178, %p179
      %s182 = sadd.s32 %s181, 1
      %p185 = scmp.eq.s32.totalorder %s21, 1
      %p186 = scmp.ne.s32.totalorder %s181, %s183
      %p187 = scmp.eq.s32.totalorder %s21, 0
      %p188 = por %p186, %p187
      %p189 = scmp.ne.s32.totalorder %s181, %s183
      %p190 = scmp.eq.s32.totalorder %s26, 1
      %p191 = por %p189, %p190
      %p192 = scmp.ne.s32.totalorder %s183, %s184
      %p193 = scmp.eq.s32.totalorder %s26, 0
      %p194 = por %p192, %p193
      %p195 = scmp.ne.s32.totalorder %s183, %s184
      %p196 = scmp.eq.s32.totalorder %s27, 1
      %p197 = por %p195, %p196
      %p199 = scmp.ne.s32.totalorder %s184, %s198
      %p200 = scmp.eq.s32.totalorder %s27, 0
      %p201 = por %p199, %p200
      %s203 = sadd.s32 %s202, 1
      %p206 = scmp.eq.s32.totalorder %s21, 1
      %p207 = scmp.ne.s32.totalorder %s202, %s204
      %p208 = scmp.eq.s32.totalorder %s21, 0
      %p209 = por %p207, %p208
      %p210 = scmp.ne.s32.totalorder %s202, %s204
      %p211 = scmp.eq.s32.totalorder %s26, 1
      %p212 = por %p210, %p211
      %p213 = scmp.ne.s32.totalorder %s204, %s205
      %p214 = scmp.eq.s32.totalorder %s26, 0
      %p215 = por %p213, %p214
      %p216 = scmp.ne.s32.totalorder %s204, %s205
      %p217 = scmp.eq.s32.totalorder %s27, 1
      %p218 = por %p216, %p217
      %p220 = scmp.ne.s32.totalorder %s205, %s219
      %p221 = scmp.eq.s32.totalorder %s27, 0
      %p222 = por %p220, %p221
      %s224 = sadd.s32 %s223, 1
      %p227 = scmp.eq.s32.totalorder %s21, 1
      %p228 = scmp.ne.s32.totalorder %s223, %s225
      %p229 = scmp.eq.s32.totalorder %s21, 0
      %p230 = por %p228, %p229
      %p231 = scmp.ne.s32.totalorder %s223, %s225
      %p232 = scmp.eq.s32.totalorder %s26, 1
      %p233 = por %p231, %p232
      %p234 = scmp.ne.s32.totalorder %s225, %s226
      %p235 = scmp.eq.s32.totalorder %s26, 0
      %p236 = por %p234, %p235
      %p237 = scmp.ne.s32.totalorder %s225, %s226
      %p238 = scmp.eq.s32.totalorder %s27, 1
      %p239 = por %p237, %p238
      %p241 = scmp.ne.s32.totalorder %s226, %s240
      %p242 = scmp.eq.s32.totalorder %s27, 0
      %p243 = por %p241, %p242
      %s245 = sadd.s32 %s244, 1
      %p248 = scmp.eq.s32.totalorder %s21, 1
      %p249 = scmp.ne.s32.totalorder %s244, %s246
      %p250 = scmp.eq.s32.totalorder %s21, 0
      %p251 = por %p249, %p250
      %p252 = scmp.ne.s32.totalorder %s244, %s246
      %p253 = scmp.eq.s32.totalorder %s26, 1
      %p254 = por %p252, %p253
      %p255 = scmp.ne.s32.totalorder %s246, %s247
      %p256 = scmp.eq.s32.totalorder %s26, 0
      %p257 = por %p255, %p256
      %p258 = scmp.ne.s32.totalorder %s246, %s247
      %p259 = scmp.eq.s32.totalorder %s27, 1
      %p260 = por %p258, %p259
      %p262 = scmp.ne.s32.totalorder %s247, %s261
      %p263 = scmp.eq.s32.totalorder %s27, 0
      %p264 = por %p262, %p263
      %s266 = sadd.s32 %s265, 1
      %p269 = scmp.eq.s32.totalorder %s21, 1
      %p270 = scmp.ne.s32.totalorder %s265, %s267
      %p271 = scmp.eq.s32.totalorder %s21, 0
      %p272 = por %p270, %p271
      %p273 = scmp.ne.s32.totalorder %s265, %s267
      %p274 = scmp.eq.s32.totalorder %s26, 1
      %p275 = por %p273, %p274
      %p276 = scmp.ne.s32.totalorder %s267, %s268
      %p277 = scmp.eq.s32.totalorder %s26, 0
      %p278 = por %p276, %p277
      %p279 = scmp.ne.s32.totalorder %s267, %s268
      %p280 = scmp.eq.s32.totalorder %s27, 1
      %p281 = por %p279, %p280
      %p283 = scmp.ne.s32.totalorder %s268, %s282
      %p284 = scmp.eq.s32.totalorder %s27, 0
      %p285 = por %p283, %p284
      %s286 = ssub.s32 %s21, %s28
      %p287 = scmp.eq.s32.totalorder %s286, 0
      %s289 = sadd.s32 %s288, 1
      %s290 = scalar_select %p287, %s288, %s289
      %p293 = pneg %p287
      %p294 = scmp.eq.s32.totalorder %s21, 1
      %p295 = por %p293, %p294
      %p296 = scmp.ne.s32.totalorder %s288, %s291
      %p297 = scmp.eq.s32.totalorder %s21, 0
      %p298 = por %p296, %p297
      %p299 = scmp.ne.s32.totalorder %s288, %s291
      %p300 = scmp.eq.s32.totalorder %s26, 1
      %p301 = por %p299, %p300
      %p302 = scmp.ne.s32.totalorder %s291, %s292
      %p303 = scmp.eq.s32.totalorder %s26, 0
      %p304 = por %p302, %p303
      %p305 = scmp.ne.s32.totalorder %s291, %s292
      %p306 = scmp.eq.s32.totalorder %s27, 1
      %p307 = por %p305, %p306
      %p309 = scmp.ne.s32.totalorder %s292, %s308
      %p310 = scmp.eq.s32.totalorder %s27, 0
      %p311 = por %p309, %p310
      %p312 = scmp.le.s32.totalorder 1, %s21
      %p313 = scmp.lt.s32.totalorder %s21, 3
      %p314 = pnand %p312, %p313
      %p315 = pneg %p314
      // Predicated region
      $region9: #{corner_predictor_v3_forward.1} parent=5 // pred_check
        _
      $region10: #{corner_predictor_v3_forward.1} parent=5 // pred_check_branch
        %317 = sbr.rel (%p314) target = $region12
      $region11: #{corner_predictor_v3_forward.1} parent=5 // pred_region
        %s318 = ssub.s32 %s21, 1
        // Predicated region
        $region13: #{corner_predictor_v3_forward.1} parent=11 // pred_check
          %p319 = pneg %p68
        $region14: #{corner_predictor_v3_forward.1} parent=11 // pred_check_branch
          %321 = sbr.rel (%p319) target = $region16
        $region15: #{corner_predictor_v3_forward.1} parent=11 // pred_region
          _
        $region16: #{corner_predictor_v3_forward.1} parent=11 // pred_fallthru
          _
        // Predicated region
        $region17: #{corner_predictor_v3_forward.1} parent=11 // pred_check
          %p322 = pneg %p89
        $region18: #{corner_predictor_v3_forward.1} parent=11 // pred_check_branch
          %324 = sbr.rel (%p322) target = $region20
        $region19: #{corner_predictor_v3_forward.1} parent=11 // pred_region
          _
        $region20: #{corner_predictor_v3_forward.1} parent=11 // pred_fallthru
          _
        // Predicated region
        $region21: #{corner_predictor_v3_forward.1} parent=11 // pred_check
          %p325 = pneg %p110
        $region22: #{corner_predictor_v3_forward.1} parent=11 // pred_check_branch
          %327 = sbr.rel (%p325) target = $region24
        $region23: #{corner_predictor_v3_forward.1} parent=11 // pred_region
          _
        $region24: #{corner_predictor_v3_forward.1} parent=11 // pred_fallthru
          _
        // Predicated region
        $region25: #{corner_predictor_v3_forward.1} parent=11 // pred_check
          %p328 = pneg %p131
        $region26: #{corner_predictor_v3_forward.1} parent=11 // pred_check_branch
          %330 = sbr.rel (%p328) target = $region28
        $region27: #{corner_predictor_v3_forward.1} parent=11 // pred_region
          _
        $region28: #{corner_predictor_v3_forward.1} parent=11 // pred_fallthru
          _
        // Predicated region
        $region29: #{corner_predictor_v3_forward.1} parent=11 // pred_check
          %p331 = pneg %p152
        $region30: #{corner_predictor_v3_forward.1} parent=11 // pred_check_branch
          %333 = sbr.rel (%p331) target = $region32
        $region31: #{corner_predictor_v3_forward.1} parent=11 // pred_region
          _
        $region32: #{corner_predictor_v3_forward.1} parent=11 // pred_fallthru
          _
        // Predicated region
        $region33: #{corner_predictor_v3_forward.1} parent=11 // pred_check
          %p334 = pneg %p173
        $region34: #{corner_predictor_v3_forward.1} parent=11 // pred_check_branch
          %336 = sbr.rel (%p334) target = $region36
        $region35: #{corner_predictor_v3_forward.1} parent=11 // pred_region
          _
        $region36: #{corner_predictor_v3_forward.1} parent=11 // pred_fallthru
          _
        // Predicated region
        $region37: #{corner_predictor_v3_forward.1} parent=11 // pred_check
          %p337 = pneg %p194
        $region38: #{corner_predictor_v3_forward.1} parent=11 // pred_check_branch
          %339 = sbr.rel (%p337) target = $region40
        $region39: #{corner_predictor_v3_forward.1} parent=11 // pred_region
          _
        $region40: #{corner_predictor_v3_forward.1} parent=11 // pred_fallthru
          _
        // Predicated region
        $region41: #{corner_predictor_v3_forward.1} parent=11 // pred_check
          %p340 = pneg %p215
        $region42: #{corner_predictor_v3_forward.1} parent=11 // pred_check_branch
          %342 = sbr.rel (%p340) target = $region44
        $region43: #{corner_predictor_v3_forward.1} parent=11 // pred_region
          _
        $region44: #{corner_predictor_v3_forward.1} parent=11 // pred_fallthru
          _
        // Predicated region
        $region45: #{corner_predictor_v3_forward.1} parent=11 // pred_check
          %p343 = pneg %p236
        $region46: #{corner_predictor_v3_forward.1} parent=11 // pred_check_branch
          %345 = sbr.rel (%p343) target = $region48
        $region47: #{corner_predictor_v3_forward.1} parent=11 // pred_region
          _
        $region48: #{corner_predictor_v3_forward.1} parent=11 // pred_fallthru
          _
        // Predicated region
        $region49: #{corner_predictor_v3_forward.1} parent=11 // pred_check
          %p346 = pneg %p257
        $region50: #{corner_predictor_v3_forward.1} parent=11 // pred_check_branch
          %348 = sbr.rel (%p346) target = $region52
        $region51: #{corner_predictor_v3_forward.1} parent=11 // pred_region
          _
        $region52: #{corner_predictor_v3_forward.1} parent=11 // pred_fallthru
          _
        // Predicated region
        $region53: #{corner_predictor_v3_forward.1} parent=11 // pred_check
          %p349 = pneg %p278
        $region54: #{corner_predictor_v3_forward.1} parent=11 // pred_check_branch
          %351 = sbr.rel (%p349) target = $region56
        $region55: #{corner_predictor_v3_forward.1} parent=11 // pred_region
          _
        $region56: #{corner_predictor_v3_forward.1} parent=11 // pred_fallthru
          _
      $region12: #{corner_predictor_v3_forward.1} parent=5 // pred_fallthru
        _
      %p352 = scmp.lt.s32.totalorder %s21, 2
      // Predicated region
      $region57: #{corner_predictor_v3_forward.1} parent=5 // pred_check
        %p353 = pneg %p352
      $region58: #{corner_predictor_v3_forward.1} parent=5 // pred_check_branch
        %355 = sbr.rel (%p353) target = $region60
      $region59: #{corner_predictor_v3_forward.1} parent=5 // pred_region
        // Predicated region
        $region61: #{corner_predictor_v3_forward.1} parent=59 // pred_check
          %p356 = pneg %p41
        $region62: #{corner_predictor_v3_forward.1} parent=59 // pred_check_branch
          %358 = sbr.rel (%p356) target = $region64
        $region63: #{corner_predictor_v3_forward.1} parent=59 // pred_region
          %s359 = smul.u32 2, %s21
          %p360 = scmp.lt.s32.totalorder %s359, 3
          %s361 = scalar_select %p360, %s359, 3
          %s362 = smul.addr %s361, 8
          %s363 = smul.addr %s362, 4
          %s364 = scalar_lea.vmem %s0, %s363
          %s365 = smul.u32 2, %s21
        $region64: #{corner_predictor_v3_forward.1} parent=59 // pred_fallthru
          _
      $region60: #{corner_predictor_v3_forward.1} parent=5 // pred_fallthru
        _
      %p366 = scmp.le.s32.totalorder 1, %s21
      %p367 = scmp.lt.s32.totalorder %s21, 3
      %p368 = pnand %p366, %p367
      %p369 = pneg %p368
      // Predicated region
      $region65: #{corner_predictor_v3_forward.1} parent=5 // pred_check
        _
      $region66: #{corner_predictor_v3_forward.1} parent=5 // pred_check_branch
        %371 = sbr.rel (%p368) target = $region68
      $region67: #{corner_predictor_v3_forward.1} parent=5 // pred_region
        %s372 = ssub.s32 %s21, 1
        %s373 = smul.u32 2, %s26
        %p374 = scmp.lt.s32.totalorder %s373, 3
        %s375 = scalar_select %p374, %s373, 3
        %s376 = smul.addr %s375, 8
        %s377 = smul.addr %s376, 4
        %s378 = scalar_lea.vmem %s0, %s377
        %p379 = pneg %p47
        %p380 = pneg %p44
        %p381 = pneg %p68
        %p382 = pneg %p65
        %p383 = pneg %p89
        %p384 = pneg %p86
        %p385 = pneg %p110
        %p386 = pneg %p107
        %p387 = pneg %p131
        %p388 = pneg %p128
        %p389 = pneg %p152
        %p390 = pneg %p149
        %p391 = pneg %p173
        %p392 = pneg %p170
        %p393 = pneg %p194
        %p394 = pneg %p191
        %p395 = pneg %p215
        %p396 = pneg %p212
        %p397 = pneg %p236
        %p398 = pneg %p233
        %p399 = pneg %p257
        %p400 = pneg %p254
        %p401 = pneg %p278
        %p402 = pneg %p275
        %p403 = pneg %p304
        %p404 = pneg %p301
        %s405 = sand.u32 %s291, 1
        %s406 = scalar_lea.sflag [#allocation7], %s405
        %s407 = sand.u32 %s291, 1
        %s408 = smul.addr %s407, 2
        %s409 = scalar_lea.vmem [#allocation6], %s408
        %s410 = smul.u32 2, %s26
        %p411 = scmp.lt.s32.totalorder %s410, 3
        %s412 = scalar_select %p411, %s410, 3
        %s413 = smul.addr %s412, 8
        %s414 = smul.addr %s413, 4
        %s415 = scalar_lea.vmem %s0, %s414
        %s416 = smul.u32 2, %s26
        %v418 = vlaneseq
        %v419 = vshrl.u32 %v418, 7
        %v420 = vadd.s32 %v419, 8
        %v421 = vadd.s32 %v419, 16
        %v422 = vadd.s32 %v419, 24
        %v423 = vadd.s32 %v419, 32
        %v424 = vadd.s32 %v419, 40
        %v425 = vadd.s32 %v419, 48
        %v426 = vadd.s32 %v419, 56
        %v427 = vadd.s32 %v419, 64
        %v428 = vadd.s32 %v419, 72
        %v429 = vadd.s32 %v419, 80
        %v430 = vadd.s32 %v419, 88
        %v431 = vadd.s32 %v419, 96
        %v432 = vadd.s32 %v419, 104
        %v433 = vadd.s32 %v419, 112
        %v434 = vadd.s32 %v419, 120
        %v435 = vadd.s32 %v419, 128
        %v436 = vadd.s32 %v419, 136
        %vm437 = vcmp.lt.s32.totalorder %v419, 0
        %v438 = vsub.s32 0, %v419
        %v439 = vsel %vm437, %v438, %v419
        %v440 = vmul.u32.u64.compose %v439, 3435973837
        %v441 = vextract.low.u32 %v440
        %v442 = vextract.high.u32 %v440
        %v443 = vshrl.u32 %v442, 6
        %v444 = vmul.u32 %v443, 80
        %v445 = vsub.s32 %v439, %v444
        %v446 = vsub.s32 0, %v445
        %v447 = vsel %vm437, %v446, %v445
        %vm448 = vcmp.lt.s32.totalorder %v420, 0
        %v449 = vsub.s32 0, %v420
        %v450 = vsel %vm448, %v449, %v420
        %v451 = vmul.u32.u64.compose %v450, 3435973837
        %v452 = vextract.low.u32 %v451
        %v453 = vextract.high.u32 %v451
        %v454 = vshrl.u32 %v453, 6
        %v455 = vmul.u32 %v454, 80
        %v456 = vsub.s32 %v450, %v455
        %v457 = vsub.s32 0, %v456
        %v458 = vsel %vm448, %v457, %v456
        %vm459 = vcmp.lt.s32.totalorder %v421, 0
        %v460 = vsub.s32 0, %v421
        %v461 = vsel %vm459, %v460, %v421
        %v462 = vmul.u32.u64.compose %v461, 3435973837
        %v463 = vextract.low.u32 %v462
        %v464 = vextract.high.u32 %v462
        %v465 = vshrl.u32 %v464, 6
        %v466 = vmul.u32 %v465, 80
        %v467 = vsub.s32 %v461, %v466
        %v468 = vsub.s32 0, %v467
        %v469 = vsel %vm459, %v468, %v467
        %vm470 = vcmp.lt.s32.totalorder %v422, 0
        %v471 = vsub.s32 0, %v422
        %v472 = vsel %vm470, %v471, %v422
        %v473 = vmul.u32.u64.compose %v472, 3435973837
        %v474 = vextract.low.u32 %v473
        %v475 = vextract.high.u32 %v473
        %v476 = vshrl.u32 %v475, 6
        %v477 = vmul.u32 %v476, 80
        %v478 = vsub.s32 %v472, %v477
        %v479 = vsub.s32 0, %v478
        %v480 = vsel %vm470, %v479, %v478
        %vm481 = vcmp.lt.s32.totalorder %v423, 0
        %v482 = vsub.s32 0, %v423
        %v483 = vsel %vm481, %v482, %v423
        %v484 = vmul.u32.u64.compose %v483, 3435973837
        %v485 = vextract.low.u32 %v484
        %v486 = vextract.high.u32 %v484
        %v487 = vshrl.u32 %v486, 6
        %v488 = vmul.u32 %v487, 80
        %v489 = vsub.s32 %v483, %v488
        %v490 = vsub.s32 0, %v489
        %v491 = vsel %vm481, %v490, %v489
        %vm492 = vcmp.lt.s32.totalorder %v424, 0
        %v493 = vsub.s32 0, %v424
        %v494 = vsel %vm492, %v493, %v424
        %v495 = vmul.u32.u64.compose %v494, 3435973837
        %v496 = vextract.low.u32 %v495
        %v497 = vextract.high.u32 %v495
        %v498 = vshrl.u32 %v497, 6
        %v499 = vmul.u32 %v498, 80
        %v500 = vsub.s32 %v494, %v499
        %v501 = vsub.s32 0, %v500
        %v502 = vsel %vm492, %v501, %v500
        %vm503 = vcmp.lt.s32.totalorder %v425, 0
        %v504 = vsub.s32 0, %v425
        %v505 = vsel %vm503, %v504, %v425
        %v506 = vmul.u32.u64.compose %v505, 3435973837
        %v507 = vextract.low.u32 %v506
        %v508 = vextract.high.u32 %v506
        %v509 = vshrl.u32 %v508, 6
        %v510 = vmul.u32 %v509, 80
        %v511 = vsub.s32 %v505, %v510
        %v512 = vsub.s32 0, %v511
        %v513 = vsel %vm503, %v512, %v511
        %vm514 = vcmp.lt.s32.totalorder %v426, 0
        %v515 = vsub.s32 0, %v426
        %v516 = vsel %vm514, %v515, %v426
        %v517 = vmul.u32.u64.compose %v516, 3435973837
        %v518 = vextract.low.u32 %v517
        %v519 = vextract.high.u32 %v517
        %v520 = vshrl.u32 %v519, 6
        %v521 = vmul.u32 %v520, 80
        %v522 = vsub.s32 %v516, %v521
        %v523 = vsub.s32 0, %v522
        %v524 = vsel %vm514, %v523, %v522
        %vm525 = vcmp.lt.s32.totalorder %v427, 0
        %v526 = vsub.s32 0, %v427
        %v527 = vsel %vm525, %v526, %v427
        %v528 = vmul.u32.u64.compose %v527, 3435973837
        %v529 = vextract.low.u32 %v528
        %v530 = vextract.high.u32 %v528
        %v531 = vshrl.u32 %v530, 6
        %v532 = vmul.u32 %v531, 80
        %v533 = vsub.s32 %v527, %v532
        %v534 = vsub.s32 0, %v533
        %v535 = vsel %vm525, %v534, %v533
        %vm536 = vcmp.lt.s32.totalorder %v428, 0
        %v537 = vsub.s32 0, %v428
        %v538 = vsel %vm536, %v537, %v428
        %v539 = vmul.u32.u64.compose %v538, 3435973837
        %v540 = vextract.low.u32 %v539
        %v541 = vextract.high.u32 %v539
        %v542 = vshrl.u32 %v541, 6
        %v543 = vmul.u32 %v542, 80
        %v544 = vsub.s32 %v538, %v543
        %v545 = vsub.s32 0, %v544
        %v546 = vsel %vm536, %v545, %v544
        %vm547 = vcmp.lt.s32.totalorder %v429, 0
        %v548 = vsub.s32 0, %v429
        %v549 = vsel %vm547, %v548, %v429
        %v550 = vmul.u32.u64.compose %v549, 3435973837
        %v551 = vextract.low.u32 %v550
        %v552 = vextract.high.u32 %v550
        %v553 = vshrl.u32 %v552, 6
        %v554 = vmul.u32 %v553, 80
        %v555 = vsub.s32 %v549, %v554
        %v556 = vsub.s32 0, %v555
        %v557 = vsel %vm547, %v556, %v555
        %vm558 = vcmp.lt.s32.totalorder %v430, 0
        %v559 = vsub.s32 0, %v430
        %v560 = vsel %vm558, %v559, %v430
        %v561 = vmul.u32.u64.compose %v560, 3435973837
        %v562 = vextract.low.u32 %v561
        %v563 = vextract.high.u32 %v561
        %v564 = vshrl.u32 %v563, 6
        %v565 = vmul.u32 %v564, 80
        %v566 = vsub.s32 %v560, %v565
        %v567 = vsub.s32 0, %v566
        %v568 = vsel %vm558, %v567, %v566
        %vm569 = vcmp.lt.s32.totalorder %v431, 0
        %v570 = vsub.s32 0, %v431
        %v571 = vsel %vm569, %v570, %v431
        %v572 = vmul.u32.u64.compose %v571, 3435973837
        %v573 = vextract.low.u32 %v572
        %v574 = vextract.high.u32 %v572
        %v575 = vshrl.u32 %v574, 6
        %v576 = vmul.u32 %v575, 80
        %v577 = vsub.s32 %v571, %v576
        %v578 = vsub.s32 0, %v577
        %v579 = vsel %vm569, %v578, %v577
        %vm580 = vcmp.lt.s32.totalorder %v432, 0
        %v581 = vsub.s32 0, %v432
        %v582 = vsel %vm580, %v581, %v432
        %v583 = vmul.u32.u64.compose %v582, 3435973837
        %v584 = vextract.low.u32 %v583
        %v585 = vextract.high.u32 %v583
        %v586 = vshrl.u32 %v585, 6
        %v587 = vmul.u32 %v586, 80
        %v588 = vsub.s32 %v582, %v587
        %v589 = vsub.s32 0, %v588
        %v590 = vsel %vm580, %v589, %v588
        %vm591 = vcmp.lt.s32.totalorder %v433, 0
        %v592 = vsub.s32 0, %v433
        %v593 = vsel %vm591, %v592, %v433
        %v594 = vmul.u32.u64.compose %v593, 3435973837
        %v595 = vextract.low.u32 %v594
        %v596 = vextract.high.u32 %v594
        %v597 = vshrl.u32 %v596, 6
        %v598 = vmul.u32 %v597, 80
        %v599 = vsub.s32 %v593, %v598
        %v600 = vsub.s32 0, %v599
        %v601 = vsel %vm591, %v600, %v599
        %vm602 = vcmp.lt.s32.totalorder %v434, 0
        %v603 = vsub.s32 0, %v434
        %v604 = vsel %vm602, %v603, %v434
        %v605 = vmul.u32.u64.compose %v604, 3435973837
        %v606 = vextract.low.u32 %v605
        %v607 = vextract.high.u32 %v605
        %v608 = vshrl.u32 %v607, 6
        %v609 = vmul.u32 %v608, 80
        %v610 = vsub.s32 %v604, %v609
        %v611 = vsub.s32 0, %v610
        %v612 = vsel %vm602, %v611, %v610
        %vm613 = vcmp.lt.s32.totalorder %v435, 0
        %v614 = vsub.s32 0, %v435
        %v615 = vsel %vm613, %v614, %v435
        %v616 = vmul.u32.u64.compose %v615, 3435973837
        %v617 = vextract.low.u32 %v616
        %v618 = vextract.high.u32 %v616
        %v619 = vshrl.u32 %v618, 6
        %v620 = vmul.u32 %v619, 80
        %v621 = vsub.s32 %v615, %v620
        %v622 = vsub.s32 0, %v621
        %v623 = vsel %vm613, %v622, %v621
        %vm624 = vcmp.lt.s32.totalorder %v436, 0
        %v625 = vsub.s32 0, %v436
        %v626 = vsel %vm624, %v625, %v436
        %v627 = vmul.u32.u64.compose %v626, 3435973837
        %v628 = vextract.low.u32 %v627
        %v629 = vextract.high.u32 %v627
        %v630 = vshrl.u32 %v629, 6
        %v631 = vmul.u32 %v630, 80
        %v632 = vsub.s32 %v626, %v631
        %v633 = vsub.s32 0, %v632
        %v634 = vsel %vm624, %v633, %v632
        %vm635 = vcmp.ne.s32.totalorder %v447, 0
        %vm636 = vcmp.ne.s32.totalorder %v458, 0
        %vm637 = vcmp.ne.s32.totalorder %v469, 0
        %vm638 = vcmp.ne.s32.totalorder %v480, 0
        %vm639 = vcmp.ne.s32.totalorder %v491, 0
        %vm640 = vcmp.ne.s32.totalorder %v502, 0
        %vm641 = vcmp.ne.s32.totalorder %v513, 0
        %vm642 = vcmp.ne.s32.totalorder %v524, 0
        %vm643 = vcmp.ne.s32.totalorder %v535, 0
        %vm644 = vcmp.ne.s32.totalorder %v546, 0
        %vm645 = vcmp.ne.s32.totalorder %v557, 0
        %vm646 = vcmp.ne.s32.totalorder %v568, 0
        %vm647 = vcmp.ne.s32.totalorder %v579, 0
        %vm648 = vcmp.ne.s32.totalorder %v590, 0
        %vm649 = vcmp.ne.s32.totalorder %v601, 0
        %vm650 = vcmp.ne.s32.totalorder %v612, 0
        %vm651 = vcmp.ne.s32.totalorder %v623, 0
        %vm652 = vcmp.ne.s32.totalorder %v634, 0
        %vm653 = vcmp.lt.s32.totalorder %v447, 0
        %vm654 = vcmp.lt.s32.totalorder %v458, 0
        %vm655 = vcmp.lt.s32.totalorder %v469, 0
        %vm656 = vcmp.lt.s32.totalorder %v480, 0
        %vm657 = vcmp.lt.s32.totalorder %v491, 0
        %vm658 = vcmp.lt.s32.totalorder %v502, 0
        %vm659 = vcmp.lt.s32.totalorder %v513, 0
        %vm660 = vcmp.lt.s32.totalorder %v524, 0
        %vm661 = vcmp.lt.s32.totalorder %v535, 0
        %vm662 = vcmp.lt.s32.totalorder %v546, 0
        %vm663 = vcmp.lt.s32.totalorder %v557, 0
        %vm664 = vcmp.lt.s32.totalorder %v568, 0
        %vm665 = vcmp.lt.s32.totalorder %v579, 0
        %vm666 = vcmp.lt.s32.totalorder %v590, 0
        %vm667 = vcmp.lt.s32.totalorder %v601, 0
        %vm668 = vcmp.lt.s32.totalorder %v612, 0
        %vm669 = vcmp.lt.s32.totalorder %v623, 0
        %vm670 = vcmp.lt.s32.totalorder %v634, 0
        %vm671 = vmand %vm653, %vm635
        %vm672 = vmand %vm654, %vm636
        %vm673 = vmand %vm655, %vm637
        %vm674 = vmand %vm656, %vm638
        %vm675 = vmand %vm657, %vm639
        %vm676 = vmand %vm658, %vm640
        %vm677 = vmand %vm659, %vm641
        %vm678 = vmand %vm660, %vm642
        %vm679 = vmand %vm661, %vm643
        %vm680 = vmand %vm662, %vm644
        %vm681 = vmand %vm663, %vm645
        %vm682 = vmand %vm664, %vm646
        %vm683 = vmand %vm665, %vm647
        %vm684 = vmand %vm666, %vm648
        %vm685 = vmand %vm667, %vm649
        %vm686 = vmand %vm668, %vm650
        %vm687 = vmand %vm669, %vm651
        %vm688 = vmand %vm670, %vm652
        %v689 = vadd.s32 %v447, 80
        %v690 = vadd.s32 %v458, 80
        %v691 = vadd.s32 %v469, 80
        %v692 = vadd.s32 %v480, 80
        %v693 = vadd.s32 %v491, 80
        %v694 = vadd.s32 %v502, 80
        %v695 = vadd.s32 %v513, 80
        %v696 = vadd.s32 %v524, 80
        %v697 = vadd.s32 %v535, 80
        %v698 = vadd.s32 %v546, 80
        %v699 = vadd.s32 %v557, 80
        %v700 = vadd.s32 %v568, 80
        %v701 = vadd.s32 %v579, 80
        %v702 = vadd.s32 %v590, 80
        %v703 = vadd.s32 %v601, 80
        %v704 = vadd.s32 %v612, 80
        %v705 = vadd.s32 %v623, 80
        %v706 = vadd.s32 %v634, 80
        %v707 = vsel %vm671, %v689, %v447
        %v708 = vsel %vm672, %v690, %v458
        %v709 = vsel %vm673, %v691, %v469
        %v710 = vsel %vm674, %v692, %v480
        %v711 = vsel %vm675, %v693, %v491
        %v712 = vsel %vm676, %v694, %v502
        %v713 = vsel %vm677, %v695, %v513
        %v714 = vsel %vm678, %v696, %v524
        %v715 = vsel %vm679, %v697, %v535
        %v716 = vsel %vm680, %v698, %v546
        %v717 = vsel %vm681, %v699, %v557
        %v718 = vsel %vm682, %v700, %v568
        %v719 = vsel %vm683, %v701, %v579
        %v720 = vsel %vm684, %v702, %v590
        %v721 = vsel %vm685, %v703, %v601
        %v722 = vsel %vm686, %v704, %v612
        %v723 = vsel %vm687, %v705, %v623
        %v724 = vsel %vm688, %v706, %v634
        %vm725 = vcmp.lt.s32.totalorder %v707, 0
        %v726 = vsub.s32 0, %v707
        %v727 = vsel %vm725, %v726, %v707
        %v728 = vshrl.u32 %v727, 3
        %v729 = vand.u32 %v727, 7
        %v730 = vsub.s32 0, %v729
        %v731 = vsel %vm725, %v730, %v729
        %vm732 = vcmp.lt.s32.totalorder %v708, 0
        %v733 = vsub.s32 0, %v708
        %v734 = vsel %vm732, %v733, %v708
        %v735 = vshrl.u32 %v734, 3
        %v736 = vand.u32 %v734, 7
        %v737 = vsub.s32 0, %v736
        %v738 = vsel %vm732, %v737, %v736
        %vm739 = vcmp.lt.s32.totalorder %v709, 0
        %v740 = vsub.s32 0, %v709
        %v741 = vsel %vm739, %v740, %v709
        %v742 = vshrl.u32 %v741, 3
        %v743 = vand.u32 %v741, 7
        %v744 = vsub.s32 0, %v743
        %v745 = vsel %vm739, %v744, %v743
        %vm746 = vcmp.lt.s32.totalorder %v710, 0
        %v747 = vsub.s32 0, %v710
        %v748 = vsel %vm746, %v747, %v710
        %v749 = vshrl.u32 %v748, 3
        %v750 = vand.u32 %v748, 7
        %v751 = vsub.s32 0, %v750
        %v752 = vsel %vm746, %v751, %v750
        %vm753 = vcmp.lt.s32.totalorder %v711, 0
        %v754 = vsub.s32 0, %v711
        %v755 = vsel %vm753, %v754, %v711
        %v756 = vshrl.u32 %v755, 3
        %v757 = vand.u32 %v755, 7
        %v758 = vsub.s32 0, %v757
        %v759 = vsel %vm753, %v758, %v757
        %vm760 = vcmp.lt.s32.totalorder %v712, 0
        %v761 = vsub.s32 0, %v712
        %v762 = vsel %vm760, %v761, %v712
        %v763 = vshrl.u32 %v762, 3
        %v764 = vand.u32 %v762, 7
        %v765 = vsub.s32 0, %v764
        %v766 = vsel %vm760, %v765, %v764
        %vm767 = vcmp.lt.s32.totalorder %v713, 0
        %v768 = vsub.s32 0, %v713
        %v769 = vsel %vm767, %v768, %v713
        %v770 = vshrl.u32 %v769, 3
        %v771 = vand.u32 %v769, 7
        %v772 = vsub.s32 0, %v771
        %v773 = vsel %vm767, %v772, %v771
        %vm774 = vcmp.lt.s32.totalorder %v714, 0
        %v775 = vsub.s32 0, %v714
        %v776 = vsel %vm774, %v775, %v714
        %v777 = vshrl.u32 %v776, 3
        %v778 = vand.u32 %v776, 7
        %v779 = vsub.s32 0, %v778
        %v780 = vsel %vm774, %v779, %v778
        %vm781 = vcmp.lt.s32.totalorder %v715, 0
        %v782 = vsub.s32 0, %v715
        %v783 = vsel %vm781, %v782, %v715
        %v784 = vshrl.u32 %v783, 3
        %v785 = vand.u32 %v783, 7
        %v786 = vsub.s32 0, %v785
        %v787 = vsel %vm781, %v786, %v785
        %vm788 = vcmp.lt.s32.totalorder %v716, 0
        %v789 = vsub.s32 0, %v716
        %v790 = vsel %vm788, %v789, %v716
        %v791 = vshrl.u32 %v790, 3
        %v792 = vand.u32 %v790, 7
        %v793 = vsub.s32 0, %v792
        %v794 = vsel %vm788, %v793, %v792
        %vm795 = vcmp.lt.s32.totalorder %v717, 0
        %v796 = vsub.s32 0, %v717
        %v797 = vsel %vm795, %v796, %v717
        %v798 = vshrl.u32 %v797, 3
        %v799 = vand.u32 %v797, 7
        %v800 = vsub.s32 0, %v799
        %v801 = vsel %vm795, %v800, %v799
        %vm802 = vcmp.lt.s32.totalorder %v718, 0
        %v803 = vsub.s32 0, %v718
        %v804 = vsel %vm802, %v803, %v718
        %v805 = vshrl.u32 %v804, 3
        %v806 = vand.u32 %v804, 7
        %v807 = vsub.s32 0, %v806
        %v808 = vsel %vm802, %v807, %v806
        %vm809 = vcmp.lt.s32.totalorder %v719, 0
        %v810 = vsub.s32 0, %v719
        %v811 = vsel %vm809, %v810, %v719
        %v812 = vshrl.u32 %v811, 3
        %v813 = vand.u32 %v811, 7
        %v814 = vsub.s32 0, %v813
        %v815 = vsel %vm809, %v814, %v813
        %vm816 = vcmp.lt.s32.totalorder %v720, 0
        %v817 = vsub.s32 0, %v720
        %v818 = vsel %vm816, %v817, %v720
        %v819 = vshrl.u32 %v818, 3
        %v820 = vand.u32 %v818, 7
        %v821 = vsub.s32 0, %v820
        %v822 = vsel %vm816, %v821, %v820
        %vm823 = vcmp.lt.s32.totalorder %v721, 0
        %v824 = vsub.s32 0, %v721
        %v825 = vsel %vm823, %v824, %v721
        %v826 = vshrl.u32 %v825, 3
        %v827 = vand.u32 %v825, 7
        %v828 = vsub.s32 0, %v827
        %v829 = vsel %vm823, %v828, %v827
        %vm830 = vcmp.lt.s32.totalorder %v722, 0
        %v831 = vsub.s32 0, %v722
        %v832 = vsel %vm830, %v831, %v722
        %v833 = vshrl.u32 %v832, 3
        %v834 = vand.u32 %v832, 7
        %v835 = vsub.s32 0, %v834
        %v836 = vsel %vm830, %v835, %v834
        %vm837 = vcmp.lt.s32.totalorder %v723, 0
        %v838 = vsub.s32 0, %v723
        %v839 = vsel %vm837, %v838, %v723
        %v840 = vshrl.u32 %v839, 3
        %v841 = vand.u32 %v839, 7
        %v842 = vsub.s32 0, %v841
        %v843 = vsel %vm837, %v842, %v841
        %vm844 = vcmp.lt.s32.totalorder %v724, 0
        %v845 = vsub.s32 0, %v724
        %v846 = vsel %vm844, %v845, %v724
        %v847 = vshrl.u32 %v846, 3
        %v848 = vand.u32 %v846, 7
        %v849 = vsub.s32 0, %v848
        %v850 = vsel %vm844, %v849, %v848
        %vm851 = vcmp.ne.s32.totalorder %v731, 0
        %vm852 = vcmp.ne.s32.totalorder %v738, 0
        %vm853 = vcmp.ne.s32.totalorder %v745, 0
        %vm854 = vcmp.ne.s32.totalorder %v752, 0
        %vm855 = vcmp.ne.s32.totalorder %v759, 0
        %vm856 = vcmp.ne.s32.totalorder %v766, 0
        %vm857 = vcmp.ne.s32.totalorder %v773, 0
        %vm858 = vcmp.ne.s32.totalorder %v780, 0
        %vm859 = vcmp.ne.s32.totalorder %v787, 0
        %vm860 = vcmp.ne.s32.totalorder %v794, 0
        %vm861 = vcmp.ne.s32.totalorder %v801, 0
        %vm862 = vcmp.ne.s32.totalorder %v808, 0
        %vm863 = vcmp.ne.s32.totalorder %v815, 0
        %vm864 = vcmp.ne.s32.totalorder %v822, 0
        %vm865 = vcmp.ne.s32.totalorder %v829, 0
        %vm866 = vcmp.ne.s32.totalorder %v836, 0
        %vm867 = vcmp.ne.s32.totalorder %v843, 0
        %vm868 = vcmp.ne.s32.totalorder %v850, 0
        %vm869 = vcmp.lt.s32.totalorder %v731, 0
        %vm870 = vcmp.lt.s32.totalorder %v738, 0
        %vm871 = vcmp.lt.s32.totalorder %v745, 0
        %vm872 = vcmp.lt.s32.totalorder %v752, 0
        %vm873 = vcmp.lt.s32.totalorder %v759, 0
        %vm874 = vcmp.lt.s32.totalorder %v766, 0
        %vm875 = vcmp.lt.s32.totalorder %v773, 0
        %vm876 = vcmp.lt.s32.totalorder %v780, 0
        %vm877 = vcmp.lt.s32.totalorder %v787, 0
        %vm878 = vcmp.lt.s32.totalorder %v794, 0
        %vm879 = vcmp.lt.s32.totalorder %v801, 0
        %vm880 = vcmp.lt.s32.totalorder %v808, 0
        %vm881 = vcmp.lt.s32.totalorder %v815, 0
        %vm882 = vcmp.lt.s32.totalorder %v822, 0
        %vm883 = vcmp.lt.s32.totalorder %v829, 0
        %vm884 = vcmp.lt.s32.totalorder %v836, 0
        %vm885 = vcmp.lt.s32.totalorder %v843, 0
        %vm886 = vcmp.lt.s32.totalorder %v850, 0
        %vm887 = vmand %vm869, %vm851
        %vm888 = vmand %vm870, %vm852
        %vm889 = vmand %vm871, %vm853
        %vm890 = vmand %vm872, %vm854
        %vm891 = vmand %vm873, %vm855
        %vm892 = vmand %vm874, %vm856
        %vm893 = vmand %vm875, %vm857
        %vm894 = vmand %vm876, %vm858
        %vm895 = vmand %vm877, %vm859
        %vm896 = vmand %vm878, %vm860
        %vm897 = vmand %vm879, %vm861
        %vm898 = vmand %vm880, %vm862
        %vm899 = vmand %vm881, %vm863
        %vm900 = vmand %vm882, %vm864
        %vm901 = vmand %vm883, %vm865
        %vm902 = vmand %vm884, %vm866
        %vm903 = vmand %vm885, %vm867
        %vm904 = vmand %vm886, %vm868
        %v905 = vadd.s32 %v731, 8
        %v906 = vadd.s32 %v738, 8
        %v907 = vadd.s32 %v745, 8
        %v908 = vadd.s32 %v752, 8
        %v909 = vadd.s32 %v759, 8
        %v910 = vadd.s32 %v766, 8
        %v911 = vadd.s32 %v773, 8
        %v912 = vadd.s32 %v780, 8
        %v913 = vadd.s32 %v787, 8
        %v914 = vadd.s32 %v794, 8
        %v915 = vadd.s32 %v801, 8
        %v916 = vadd.s32 %v808, 8
        %v917 = vadd.s32 %v815, 8
        %v918 = vadd.s32 %v822, 8
        %v919 = vadd.s32 %v829, 8
        %v920 = vadd.s32 %v836, 8
        %v921 = vadd.s32 %v843, 8
        %v922 = vadd.s32 %v850, 8
        %v923 = vsel %vm887, %v905, %v731
        %v924 = vsel %vm888, %v906, %v738
        %v925 = vsel %vm889, %v907, %v745
        %v926 = vsel %vm890, %v908, %v752
        %v927 = vsel %vm891, %v909, %v759
        %v928 = vsel %vm892, %v910, %v766
        %v929 = vsel %vm893, %v911, %v773
        %v930 = vsel %vm894, %v912, %v780
        %v931 = vsel %vm895, %v913, %v787
        %v932 = vsel %vm896, %v914, %v794
        %v933 = vsel %vm897, %v915, %v801
        %v934 = vsel %vm898, %v916, %v808
        %v935 = vsel %vm899, %v917, %v815
        %v936 = vsel %vm900, %v918, %v822
        %v937 = vsel %vm901, %v919, %v829
        %v938 = vsel %vm902, %v920, %v836
        %v939 = vsel %vm903, %v921, %v843
        %v940 = vsel %vm904, %v922, %v850
        %vm941 = vcmp.ne.s32.totalorder %v923, 0
        %vm942 = vcmp.ne.s32.totalorder %v924, 0
        %vm943 = vcmp.ne.s32.totalorder %v925, 0
        %vm944 = vcmp.ne.s32.totalorder %v926, 0
        %vm945 = vcmp.ne.s32.totalorder %v927, 0
        %vm946 = vcmp.ne.s32.totalorder %v928, 0
        %vm947 = vcmp.ne.s32.totalorder %v929, 0
        %vm948 = vcmp.ne.s32.totalorder %v930, 0
        %vm949 = vcmp.ne.s32.totalorder %v931, 0
        %vm950 = vcmp.ne.s32.totalorder %v932, 0
        %vm951 = vcmp.ne.s32.totalorder %v933, 0
        %vm952 = vcmp.ne.s32.totalorder %v934, 0
        %vm953 = vcmp.ne.s32.totalorder %v935, 0
        %vm954 = vcmp.ne.s32.totalorder %v936, 0
        %vm955 = vcmp.ne.s32.totalorder %v937, 0
        %vm956 = vcmp.ne.s32.totalorder %v938, 0
        %vm957 = vcmp.ne.s32.totalorder %v939, 0
        %vm958 = vcmp.ne.s32.totalorder %v940, 0
        %v959 = vsel %vm941, 1, 0
        %v960 = vsel %vm942, 1, 0
        %v961 = vsel %vm943, 1, 0
        %v962 = vsel %vm944, 1, 0
        %v963 = vsel %vm945, 1, 0
        %v964 = vsel %vm946, 1, 0
        %v965 = vsel %vm947, 1, 0
        %v966 = vsel %vm948, 1, 0
        %v967 = vsel %vm949, 1, 0
        %v968 = vsel %vm950, 1, 0
        %v969 = vsel %vm951, 1, 0
        %v970 = vsel %vm952, 1, 0
        %v971 = vsel %vm953, 1, 0
        %v972 = vsel %vm954, 1, 0
        %v973 = vsel %vm955, 1, 0
        %v974 = vsel %vm956, 1, 0
        %v975 = vsel %vm957, 1, 0
        %v976 = vsel %vm958, 1, 0
        %v977 = vcvt.s32.f32 %v959
        %v978 = vcvt.s32.f32 %v960
        %v979 = vcvt.s32.f32 %v961
        %v980 = vcvt.s32.f32 %v962
        %v981 = vcvt.s32.f32 %v963
        %v982 = vcvt.s32.f32 %v964
        %v983 = vcvt.s32.f32 %v965
        %v984 = vcvt.s32.f32 %v966
        %v985 = vcvt.s32.f32 %v967
        %v986 = vcvt.s32.f32 %v968
        %v987 = vcvt.s32.f32 %v969
        %v988 = vcvt.s32.f32 %v970
        %v989 = vcvt.s32.f32 %v971
        %v990 = vcvt.s32.f32 %v972
        %v991 = vcvt.s32.f32 %v973
        %v992 = vcvt.s32.f32 %v974
        %v993 = vcvt.s32.f32 %v975
        %v994 = vcvt.s32.f32 %v976
        %vm995 = vcmp.ne.s32.totalorder %v923, 7
        %vm996 = vcmp.ne.s32.totalorder %v924, 7
        %vm997 = vcmp.ne.s32.totalorder %v925, 7
        %vm998 = vcmp.ne.s32.totalorder %v926, 7
        %vm999 = vcmp.ne.s32.totalorder %v927, 7
        %vm1000 = vcmp.ne.s32.totalorder %v928, 7
        %vm1001 = vcmp.ne.s32.totalorder %v929, 7
        %vm1002 = vcmp.ne.s32.totalorder %v930, 7
        %vm1003 = vcmp.ne.s32.totalorder %v931, 7
        %vm1004 = vcmp.ne.s32.totalorder %v932, 7
        %vm1005 = vcmp.ne.s32.totalorder %v933, 7
        %vm1006 = vcmp.ne.s32.totalorder %v934, 7
        %vm1007 = vcmp.ne.s32.totalorder %v935, 7
        %vm1008 = vcmp.ne.s32.totalorder %v936, 7
        %vm1009 = vcmp.ne.s32.totalorder %v937, 7
        %vm1010 = vcmp.ne.s32.totalorder %v938, 7
        %vm1011 = vcmp.ne.s32.totalorder %v939, 7
        %vm1012 = vcmp.ne.s32.totalorder %v940, 7
        %v1013 = vsel %vm995, 1, 0
        %v1014 = vsel %vm996, 1, 0
        %v1015 = vsel %vm997, 1, 0
        %v1016 = vsel %vm998, 1, 0
        %v1017 = vsel %vm999, 1, 0
        %v1018 = vsel %vm1000, 1, 0
        %v1019 = vsel %vm1001, 1, 0
        %v1020 = vsel %vm1002, 1, 0
        %v1021 = vsel %vm1003, 1, 0
        %v1022 = vsel %vm1004, 1, 0
        %v1023 = vsel %vm1005, 1, 0
        %v1024 = vsel %vm1006, 1, 0
        %v1025 = vsel %vm1007, 1, 0
        %v1026 = vsel %vm1008, 1, 0
        %v1027 = vsel %vm1009, 1, 0
        %v1028 = vsel %vm1010, 1, 0
        %v1029 = vsel %vm1011, 1, 0
        %v1030 = vsel %vm1012, 1, 0
        %v1031 = vcvt.s32.f32 %v1013
        %v1032 = vcvt.s32.f32 %v1014
        %v1033 = vcvt.s32.f32 %v1015
        %v1034 = vcvt.s32.f32 %v1016
        %v1035 = vcvt.s32.f32 %v1017
        %v1036 = vcvt.s32.f32 %v1018
        %v1037 = vcvt.s32.f32 %v1019
        %v1038 = vcvt.s32.f32 %v1020
        %v1039 = vcvt.s32.f32 %v1021
        %v1040 = vcvt.s32.f32 %v1022
        %v1041 = vcvt.s32.f32 %v1023
        %v1042 = vcvt.s32.f32 %v1024
        %v1043 = vcvt.s32.f32 %v1025
        %v1044 = vcvt.s32.f32 %v1026
        %v1045 = vcvt.s32.f32 %v1027
        %v1046 = vcvt.s32.f32 %v1028
        %v1047 = vcvt.s32.f32 %v1029
        %v1048 = vcvt.s32.f32 %v1030
        %v1049 = vpack.c.bf16 %v978, %v977
        %v1050 = vpack.c.bf16 %v980, %v979
        %v1051 = vpack.c.bf16 %v982, %v981
        %v1052 = vpack.c.bf16 %v984, %v983
        %v1053 = vpack.c.bf16 %v986, %v985
        %v1054 = vpack.c.bf16 %v988, %v987
        %v1055 = vpack.c.bf16 %v990, %v989
        %v1056 = vpack.c.bf16 %v992, %v991
        %v1057 = vpack.c.bf16 %v994, %v993
        %v1058 = vpack.c.bf16 %v1032, %v1031
        %v1059 = vpack.c.bf16 %v1034, %v1033
        %v1060 = vpack.c.bf16 %v1036, %v1035
        %v1061 = vpack.c.bf16 %v1038, %v1037
        %v1062 = vpack.c.bf16 %v1040, %v1039
        %v1063 = vpack.c.bf16 %v1042, %v1041
        %v1064 = vpack.c.bf16 %v1044, %v1043
        %v1065 = vpack.c.bf16 %v1046, %v1045
        %v1066 = vpack.c.bf16 %v1048, %v1047
        %vm1067 = vcmask 31744
        %1068 = vst.msk [vmem:[#allocation2] sm:$0xff] %vm1067, 0
        %1069 = vst.msk [vmem:[#allocation2 + $0x28] sm:$0xff] %vm1067, 0
        %1070 = vst.msk [vmem:[#allocation2 + $0x50] sm:$0xff] %vm1067, 0
        %vm1071 = vcmask 261120
        %1072 = vst.msk [vmem:[#allocation3] sm:$0xff] %vm1071, 0
        %1073 = vst.msk [vmem:[#allocation3 + $0x28] sm:$0xff] %vm1071, 0
        %1074 = vst.msk [vmem:[#allocation3 + $0x50] sm:$0xff] %vm1071, 0
        %vm1075 = vcmask 130048
        %1076 = vst.msk [vmem:[#allocation4] sm:$0xff] %vm1075, 0
        %1077 = vst.msk [vmem:[#allocation4 + $0x28] sm:$0xff] %vm1075, 0
        %1078 = vst.msk [vmem:[#allocation4 + $0x50] sm:$0xff] %vm1075, 0
        %vm1079 = vcmask 64512
        %1080 = vst.msk [vmem:[#allocation5] sm:$0xff] %vm1079, 0
        %1081 = vst.msk [vmem:[#allocation5 + $0x28] sm:$0xff] %vm1079, 0
        %1082 = vst.msk [vmem:[#allocation5 + $0x50] sm:$0xff] %vm1079, 0
        %v1083 = vld [vmem:[%s415] sm:$0xf]
        %v1084 = vld [vmem:[%s415 + $0x4] sm:$0xf]
        %v1085 = vld [vmem:[%s415 + $0x8] sm:$0xf]
        %v1086 = vld [vmem:[%s415 + $0xc] sm:$0xf]
        %v1087 = vld [vmem:[%s415 + $0x10] sm:$0xf]
        %v1088 = vld [vmem:[%s415 + $0x14] sm:$0xf]
        %v1089 = vld [vmem:[%s415 + $0x18] sm:$0xf]
        %v1090 = vld [vmem:[%s415 + $0x1c] sm:$0xf]
        %v1099 = vunpack.c.l.b16 %v1083
        %v1100 = vunpack.c.l.b16 %v1084
        %v1101 = vunpack.c.l.b16 %v1085
        %v1102 = vunpack.c.l.b16 %v1086
        %v1103 = vunpack.c.l.b16 %v1087
        %v1104 = vunpack.c.l.b16 %v1088
        %v1105 = vunpack.c.l.b16 %v1089
        %v1106 = vunpack.c.l.b16 %v1090
        %v1107 = vpack.c.b16 %v1100, %v1099
        %v1108 = vpack.c.b16 %v1102, %v1101
        %v1109 = vpack.c.b16 %v1104, %v1103
        %v1110 = vpack.c.b16 %v1106, %v1105
        %1115 = vst.msk [vmem:[#allocation2 + $0x8] sm:$0xff] %vm1067, %v1107
        %1116 = vst.msk [vmem:[#allocation2 + $0x10] sm:$0xff] %vm1067, %v1108
        %1117 = vst.msk [vmem:[#allocation2 + $0x18] sm:$0xff] %vm1067, %v1109
        %1118 = vst.msk [vmem:[#allocation2 + $0x20] sm:$0xff] %vm1067, %v1110
        %s1119 = scalar_lea.vmem %s415, 32
        %v1120 = vld [vmem:[%s1119] sm:$0xf]
        %v1121 = vld [vmem:[%s1119 + $0x4] sm:$0xf]
        %v1122 = vld [vmem:[%s1119 + $0x8] sm:$0xf]
        %v1123 = vld [vmem:[%s1119 + $0xc] sm:$0xf]
        %v1124 = vld [vmem:[%s1119 + $0x10] sm:$0xf]
        %v1125 = vld [vmem:[%s1119 + $0x14] sm:$0xf]
        %v1126 = vld [vmem:[%s1119 + $0x18] sm:$0xf]
        %v1127 = vld [vmem:[%s1119 + $0x1c] sm:$0xf]
        %v1136 = vunpack.c.l.b16 %v1120
        %v1137 = vunpack.c.l.b16 %v1121
        %v1138 = vunpack.c.l.b16 %v1122
        %v1139 = vunpack.c.l.b16 %v1123
        %v1140 = vunpack.c.l.b16 %v1124
        %v1141 = vunpack.c.l.b16 %v1125
        %v1142 = vunpack.c.l.b16 %v1126
        %v1143 = vunpack.c.l.b16 %v1127
        %v1144 = vpack.c.b16 %v1137, %v1136
        %v1145 = vpack.c.b16 %v1139, %v1138
        %v1146 = vpack.c.b16 %v1141, %v1140
        %v1147 = vpack.c.b16 %v1143, %v1142
        %1152 = vst.msk [vmem:[#allocation2 + $0x30] sm:$0xff] %vm1067, %v1144
        %1153 = vst.msk [vmem:[#allocation2 + $0x38] sm:$0xff] %vm1067, %v1145
        %1154 = vst.msk [vmem:[#allocation2 + $0x40] sm:$0xff] %vm1067, %v1146
        %1155 = vst.msk [vmem:[#allocation2 + $0x48] sm:$0xff] %vm1067, %v1147
        %v1156 = vld [vmem:[#allocation2] sm:$0xf8]
        %v1157 = vld [vmem:[#allocation2 + $0x8] sm:$0xff]
        %v1158 = vld [vmem:[#allocation2 + $0x10] sm:$0xff]
        %v1159 = vld [vmem:[#allocation2 + $0x18] sm:$0xff]
        %v1160 = vld [vmem:[#allocation2 + $0x20] sm:$0xff]
        %v1161 = vld [vmem:[#allocation2 + $0x28] sm:$0xff]
        %v1162 = vld [vmem:[#allocation2 + $0x30] sm:$0xff]
        %v1163 = vld [vmem:[#allocation2 + $0x38] sm:$0xff]
        %v1164 = vld [vmem:[#allocation2 + $0x40] sm:$0xff]
        %v1165 = vld [vmem:[#allocation2 + $0x48] sm:$0xf]
        %vm1166 = vsmask.f32 3328
        %v1168 = vshrl.u32 %v1049, 16
        %v1170 = vrot.slane %v1168, 4
        %v1171 = vshll.u32 %v1049, 16
        %v1173 = vrot.slane %v1171, 5
        %v1174 = vor.u32 %v1170, %v1173
        %v1176 = vshrl.u32 %v1050, 16
        %v1178 = vrot.slane %v1176, 4
        %v1179 = vshll.u32 %v1050, 16
        %v1181 = vrot.slane %v1179, 5
        %v1182 = vor.u32 %v1178, %v1181
        %v1183 = vsel %vm1166, %v1174, %v1182
        %v1185 = vshrl.u32 %v1051, 16
        %v1187 = vrot.slane %v1185, 4
        %v1188 = vshll.u32 %v1051, 16
        %v1190 = vrot.slane %v1188, 5
        %v1191 = vor.u32 %v1187, %v1190
        %v1192 = vsel %vm1166, %v1182, %v1191
        %v1194 = vshrl.u32 %v1052, 16
        %v1196 = vrot.slane %v1194, 4
        %v1197 = vshll.u32 %v1052, 16
        %v1199 = vrot.slane %v1197, 5
        %v1200 = vor.u32 %v1196, %v1199
        %v1201 = vsel %vm1166, %v1191, %v1200
        %v1203 = vshrl.u32 %v1053, 16
        %v1205 = vrot.slane %v1203, 4
        %v1206 = vshll.u32 %v1053, 16
        %v1208 = vrot.slane %v1206, 5
        %v1209 = vor.u32 %v1205, %v1208
        %v1210 = vsel %vm1166, %v1200, %v1209
        %v1212 = vshrl.u32 %v1054, 16
        %v1214 = vrot.slane %v1212, 4
        %v1215 = vshll.u32 %v1054, 16
        %v1217 = vrot.slane %v1215, 5
        %v1218 = vor.u32 %v1214, %v1217
        %v1219 = vsel %vm1166, %v1209, %v1218
        %v1221 = vshrl.u32 %v1055, 16
        %v1223 = vrot.slane %v1221, 4
        %v1224 = vshll.u32 %v1055, 16
        %v1226 = vrot.slane %v1224, 5
        %v1227 = vor.u32 %v1223, %v1226
        %v1228 = vsel %vm1166, %v1218, %v1227
        %v1230 = vshrl.u32 %v1056, 16
        %v1232 = vrot.slane %v1230, 4
        %v1233 = vshll.u32 %v1056, 16
        %v1235 = vrot.slane %v1233, 5
        %v1236 = vor.u32 %v1232, %v1235
        %v1237 = vsel %vm1166, %v1227, %v1236
        %v1239 = vshrl.u32 %v1057, 16
        %v1241 = vrot.slane %v1239, 4
        %v1242 = vshll.u32 %v1057, 16
        %v1244 = vrot.slane %v1242, 5
        %v1245 = vor.u32 %v1241, %v1244
        %v1246 = vsel %vm1166, %v1236, %v1245
        %v1257 = vmul.bf16 %v1156, %v1174
        %v1258 = vmul.bf16 %v1157, %v1183
        %v1259 = vmul.bf16 %v1158, %v1192
        %v1260 = vmul.bf16 %v1159, %v1201
        %v1261 = vmul.bf16 %v1160, %v1210
        %v1262 = vmul.bf16 %v1161, %v1219
        %v1263 = vmul.bf16 %v1162, %v1228
        %v1264 = vmul.bf16 %v1163, %v1237
        %v1265 = vmul.bf16 %v1164, %v1246
        %v1266 = vmul.bf16 %v1165, %v1245
        %v1267 = vld [vmem:[%s2] sm:$0x3]
        %v1268 = vld [vmem:[#allocation2] sm:$0xf0]
        %s1269 = scalar_lea.vmem %s2, 2
        %v1270 = vld [vmem:[%s1269] sm:$0x3]
        %vm1281 = vcmask 1043456
        %v1282 = vrot.slane %v1268, 4
        %v1283 = vrot.slane %v1157, 4
        %v1284 = vsel %vm1281, %v1282, %v1283
        %v1285 = vrot.slane %v1158, 4
        %v1286 = vsel %vm1281, %v1283, %v1285
        %v1287 = vrot.slane %v1159, 4
        %v1288 = vsel %vm1281, %v1285, %v1287
        %v1289 = vrot.slane %v1160, 4
        %v1290 = vsel %vm1281, %v1287, %v1289
        %v1291 = vrot.slane %v1161, 4
        %v1292 = vsel %vm1281, %v1289, %v1291
        %v1293 = vrot.slane %v1162, 4
        %v1294 = vsel %vm1281, %v1291, %v1293
        %v1295 = vrot.slane %v1163, 4
        %v1296 = vsel %vm1281, %v1293, %v1295
        %v1297 = vrot.slane %v1164, 4
        %v1298 = vsel %vm1281, %v1295, %v1297
        %v1299 = vrot.slane %v1165, 4
        %v1300 = vsel %vm1281, %v1297, %v1299
        %v1302 = vsel %vm1067, %v1284, 0
        %v1305 = vsel %vm1067, %v1286, 0
        %v1308 = vsel %vm1067, %v1288, 0
        %v1311 = vsel %vm1067, %v1290, 0
        %v1314 = vsel %vm1067, %v1292, 0
        %v1317 = vsel %vm1067, %v1294, 0
        %v1320 = vsel %vm1067, %v1296, 0
        %v1323 = vsel %vm1067, %v1298, 0
        %v1326 = vsel %vm1067, %v1300, 0
        %vm1328 = vcmask 1041408
        %v1330 = vsel %vm1328, %v1270, 0
        %1332 = vmatprep.subr.bf16.mxu0 0
        %1333 = vmatpush1.bf16.msra.mxu0 %v1330
        %1334 = vmatprep.subr.bf16.mxu0 0
        %1335 = vmatpush1.bf16.msra.mxu0 0
        %1336 = vmatprep.subr.bf16.mxu0 0
        %1337 = vmatpush1.bf16.msra.mxu0 0
        %1338 = vmatprep.subr.bf16.mxu0 0
        %1339 = vmatpush1.bf16.msra.mxu0 0
        %1340 = vmatprep.subr.bf16.mxu0 0
        %1341 = vmatpush1.bf16.msra.mxu0 0
        %1342 = vmatprep.subr.bf16.mxu0 0
        %1343 = vmatpush1.bf16.msra.mxu0 0
        %1344 = vmatprep.subr.bf16.mxu0 0
        %1345 = vmatpush1.bf16.msra.mxu0 0
        %1346 = vmatprep.subr.bf16.mxu0 0
        %1347 = vmatpush1.bf16.msra.mxu0 0
        %1348 = vmatprep.subr.bf16.mxu0 0
        %1349 = vmatpush1.bf16.msra.mxu0 0
        %1350 = vmatprep.subr.bf16.mxu0 0
        %1351 = vmatpush1.bf16.msra.mxu0 0
        %1352 = vmatprep.subr.bf16.mxu0 0
        %1353 = vmatpush1.bf16.msra.mxu0 0
        %1354 = vmatprep.subr.bf16.mxu0 0
        %1355 = vmatpush1.bf16.msra.mxu0 0
        %1356 = vmatprep.subr.bf16.mxu0 0
        %1357 = vmatpush1.bf16.msra.mxu0 0
        %1358 = vmatprep.subr.bf16.mxu0 0
        %1359 = vmatpush1.bf16.msra.mxu0 0
        %1360 = vmatprep.subr.bf16.mxu0 0
        %1361 = vmatpush1.bf16.msra.mxu0 0
        %1362 = vmatprep.subr.bf16.mxu0 0
        %1363 = vmatpush1.bf16.msra.mxu0 0
        %1364 = vmatprep.mubr.bf16.mxu0 0
        %1365 = vmatmul.mubr.bf16.gmra.mrb[0].mxu0 %v1302
        %v1366 = vpop.f32.mrb[0].mxu0
        %v1367 = vadd.f32 0.0, %v1366
        %v1368 = vpop.f32.mrb[0].mxu0
        %v1369 = vpop.f32.mrb[0].mxu0
        %v1370 = vadd.f32 0.0, %v1369
        %v1371 = vpop.f32.mrb[0].mxu0
        %1372 = vmatprep.mubr.bf16.mxu0 0
        %1373 = vmatmul.mubr.bf16.gmra.mrb[0].mxu0 %v1305
        %v1374 = vpop.f32.mrb[0].mxu0
        %v1375 = vadd.f32 0.0, %v1374
        %v1376 = vpop.f32.mrb[0].mxu0
        %v1377 = vpop.f32.mrb[0].mxu0
        %v1378 = vadd.f32 0.0, %v1377
        %v1379 = vpop.f32.mrb[0].mxu0
        %1380 = vmatprep.mubr.bf16.mxu0 0
        %1381 = vmatmul.mubr.bf16.gmra.mrb[0].mxu0 %v1308
        %v1382 = vpop.f32.mrb[0].mxu0
        %v1383 = vadd.f32 0.0, %v1382
        %v1384 = vpop.f32.mrb[0].mxu0
        %v1385 = vpop.f32.mrb[0].mxu0
        %v1386 = vadd.f32 0.0, %v1385
        %v1387 = vpop.f32.mrb[0].mxu0
        %1388 = vmatprep.mubr.bf16.mxu0 0
        %1389 = vmatmul.mubr.bf16.gmra.mrb[0].mxu0 %v1311
        %v1390 = vpop.f32.mrb[0].mxu0
        %v1391 = vadd.f32 0.0, %v1390
        %v1392 = vpop.f32.mrb[0].mxu0
        %v1393 = vpop.f32.mrb[0].mxu0
        %v1394 = vadd.f32 0.0, %v1393
        %v1395 = vpop.f32.mrb[0].mxu0
        %1396 = vmatprep.mubr.bf16.mxu0 0
        %1397 = vmatmul.mubr.bf16.gmra.mrb[0].mxu0 %v1314
        %v1398 = vpop.f32.mrb[0].mxu0
        %v1399 = vpop.f32.mrb[0].mxu0
        %v1400 = vpop.f32.mrb[0].mxu0
        %v1401 = vpop.f32.mrb[0].mxu0
        %1402 = vmatprep.mubr.bf16.mxu0 0
        %1403 = vmatmul.mubr.bf16.gmra.mrb[0].mxu0 %v1317
        %v1404 = vpop.f32.mrb[0].mxu0
        %v1405 = vadd.f32 0.0, %v1404
        %v1406 = vpop.f32.mrb[0].mxu0
        %v1407 = vpop.f32.mrb[0].mxu0
        %v1408 = vadd.f32 0.0, %v1407
        %v1409 = vpop.f32.mrb[0].mxu0
        %1410 = vmatprep.mubr.bf16.mxu0 0
        %1411 = vmatmul.mubr.bf16.gmra.mrb[0].mxu0 %v1320
        %v1412 = vpop.f32.mrb[0].mxu0
        %v1413 = vadd.f32 0.0, %v1412
        %v1414 = vpop.f32.mrb[0].mxu0
        %v1415 = vpop.f32.mrb[0].mxu0
        %v1416 = vadd.f32 0.0, %v1415
        %v1417 = vpop.f32.mrb[0].mxu0
        %1418 = vmatprep.mubr.bf16.mxu0 0
        %1419 = vmatmul.mubr.bf16.gmra.mrb[0].mxu0 %v1323
        %v1420 = vpop.f32.mrb[0].mxu0
        %v1421 = vadd.f32 0.0, %v1420
        %v1422 = vpop.f32.mrb[0].mxu0
        %v1423 = vpop.f32.mrb[0].mxu0
        %v1424 = vadd.f32 0.0, %v1423
        %v1425 = vpop.f32.mrb[0].mxu0
        %1426 = vmatprep.mubr.bf16.mxu0 0
        %1427 = vmatmul.mubr.bf16.gmra.mrb[0].mxu0 %v1326
        %v1428 = vpop.f32.mrb[0].mxu0
        %v1429 = vadd.f32 0.0, %v1428
        %v1430 = vpop.f32.mrb[0].mxu0
        %v1431 = vpop.f32.mrb[0].mxu0
        %v1432 = vadd.f32 0.0, %v1431
        %v1433 = vpop.f32.mrb[0].mxu0
        %1434 = vdwg.mxu0
        %vm1435 = vsmask.f32 4352
        %v1437 = vshrl.u32 %v1257, 16
        %v1439 = vrot.slane %v1437, 3
        %v1440 = vshll.u32 %v1257, 16
        %v1442 = vrot.slane %v1440, 4
        %v1443 = vor.u32 %v1439, %v1442
        %v1445 = vshrl.u32 %v1258, 16
        %v1447 = vrot.slane %v1445, 3
        %v1448 = vshll.u32 %v1258, 16
        %v1450 = vrot.slane %v1448, 4
        %v1451 = vor.u32 %v1447, %v1450
        %v1452 = vsel %vm1435, %v1443, %v1451
        %v1454 = vshrl.u32 %v1259, 16
        %v1456 = vrot.slane %v1454, 3
        %v1457 = vshll.u32 %v1259, 16
        %v1459 = vrot.slane %v1457, 4
        %v1460 = vor.u32 %v1456, %v1459
        %v1461 = vsel %vm1435, %v1451, %v1460
        %v1463 = vshrl.u32 %v1260, 16
        %v1465 = vrot.slane %v1463, 3
        %v1466 = vshll.u32 %v1260, 16
        %v1468 = vrot.slane %v1466, 4
        %v1469 = vor.u32 %v1465, %v1468
        %v1470 = vsel %vm1435, %v1460, %v1469
        %v1472 = vshrl.u32 %v1261, 16
        %v1474 = vrot.slane %v1472, 3
        %v1475 = vshll.u32 %v1261, 16
        %v1477 = vrot.slane %v1475, 4
        %v1478 = vor.u32 %v1474, %v1477
        %v1479 = vsel %vm1435, %v1469, %v1478
        %v1481 = vshrl.u32 %v1262, 16
        %v1483 = vrot.slane %v1481, 3
        %v1484 = vshll.u32 %v1262, 16
        %v1486 = vrot.slane %v1484, 4
        %v1487 = vor.u32 %v1483, %v1486
        %v1488 = vsel %vm1435, %v1478, %v1487
        %v1490 = vshrl.u32 %v1263, 16
        %v1492 = vrot.slane %v1490, 3
        %v1493 = vshll.u32 %v1263, 16
        %v1495 = vrot.slane %v1493, 4
        %v1496 = vor.u32 %v1492, %v1495
        %v1497 = vsel %vm1435, %v1487, %v1496
        %v1499 = vshrl.u32 %v1264, 16
        %v1501 = vrot.slane %v1499, 3
        %v1502 = vshll.u32 %v1264, 16
        %v1504 = vrot.slane %v1502, 4
        %v1505 = vor.u32 %v1501, %v1504
        %v1506 = vsel %vm1435, %v1496, %v1505
        %v1508 = vshrl.u32 %v1265, 16
        %v1510 = vrot.slane %v1508, 3
        %v1511 = vshll.u32 %v1265, 16
        %v1513 = vrot.slane %v1511, 4
        %v1514 = vor.u32 %v1510, %v1513
        %v1515 = vsel %vm1435, %v1505, %v1514
        %v1517 = vshrl.u32 %v1266, 16
        %v1519 = vrot.slane %v1517, 3
        %v1520 = vshll.u32 %v1266, 16
        %v1522 = vrot.slane %v1520, 4
        %v1523 = vor.u32 %v1519, %v1522
        %v1524 = vsel %vm1435, %v1514, %v1523
        %v1526 = vsel %vm1067, %v1452, 0
        %v1529 = vsel %vm1067, %v1461, 0
        %v1532 = vsel %vm1067, %v1470, 0
        %v1535 = vsel %vm1067, %v1479, 0
        %v1538 = vsel %vm1067, %v1488, 0
        %v1541 = vsel %vm1067, %v1497, 0
        %v1544 = vsel %vm1067, %v1506, 0
        %v1547 = vsel %vm1067, %v1515, 0
        %v1550 = vsel %vm1067, %v1524, 0
        %v1553 = vsel %vm1328, %v1267, 0
        %1555 = vmatprep.subr.bf16.mxu0 0
        %1556 = vmatpush1.bf16.msra.mxu0 %v1553
        %1557 = vmatprep.subr.bf16.mxu0 0
        %1558 = vmatpush1.bf16.msra.mxu0 0
        %1559 = vmatprep.subr.bf16.mxu0 0
        %1560 = vmatpush1.bf16.msra.mxu0 0
        %1561 = vmatprep.subr.bf16.mxu0 0
        %1562 = vmatpush1.bf16.msra.mxu0 0
        %1563 = vmatprep.subr.bf16.mxu0 0
        %1564 = vmatpush1.bf16.msra.mxu0 0
        %1565 = vmatprep.subr.bf16.mxu0 0
        %1566 = vmatpush1.bf16.msra.mxu0 0
        %1567 = vmatprep.subr.bf16.mxu0 0
        %1568 = vmatpush1.bf16.msra.mxu0 0
        %1569 = vmatprep.subr.bf16.mxu0 0
        %1570 = vmatpush1.bf16.msra.mxu0 0
        %1571 = vmatprep.subr.bf16.mxu0 0
        %1572 = vmatpush1.bf16.msra.mxu0 0
        %1573 = vmatprep.subr.bf16.mxu0 0
        %1574 = vmatpush1.bf16.msra.mxu0 0
        %1575 = vmatprep.subr.bf16.mxu0 0
        %1576 = vmatpush1.bf16.msra.mxu0 0
        %1577 = vmatprep.subr.bf16.mxu0 0
        %1578 = vmatpush1.bf16.msra.mxu0 0
        %1579 = vmatprep.subr.bf16.mxu0 0
        %1580 = vmatpush1.bf16.msra.mxu0 0
        %1581 = vmatprep.subr.bf16.mxu0 0
        %1582 = vmatpush1.bf16.msra.mxu0 0
        %1583 = vmatprep.subr.bf16.mxu0 0
        %1584 = vmatpush1.bf16.msra.mxu0 0
        %1585 = vmatprep.subr.bf16.mxu0 0
        %1586 = vmatpush1.bf16.msra.mxu0 0
        %1587 = vmatprep.mubr.bf16.mxu0 0
        %1588 = vmatmul.mubr.bf16.gmra.mrb[0].mxu0 %v1526
        %v1589 = vpop.f32.mrb[0].mxu0
        %v1590 = vadd.f32 %v1367, %v1589
        %v1591 = vpop.f32.mrb[0].mxu0
        %v1592 = vpop.f32.mrb[0].mxu0
        %v1593 = vadd.f32 %v1370, %v1592
        %v1594 = vpop.f32.mrb[0].mxu0
        %1595 = vmatprep.mubr.bf16.mxu0 0
        %1596 = vmatmul.mubr.bf16.gmra.mrb[0].mxu0 %v1529
        %v1597 = vpop.f32.mrb[0].mxu0
        %v1598 = vadd.f32 %v1375, %v1597
        %v1599 = vpop.f32.mrb[0].mxu0
        %v1600 = vpop.f32.mrb[0].mxu0
        %v1601 = vadd.f32 %v1378, %v1600
        %v1602 = vpop.f32.mrb[0].mxu0
        %1603 = vmatprep.mubr.bf16.mxu0 0
        %1604 = vmatmul.mubr.bf16.gmra.mrb[0].mxu0 %v1532
        %v1605 = vpop.f32.mrb[0].mxu0
        %v1606 = vadd.f32 %v1383, %v1605
        %v1607 = vpop.f32.mrb[0].mxu0
        %v1608 = vpop.f32.mrb[0].mxu0
        %v1609 = vadd.f32 %v1386, %v1608
        %v1610 = vpop.f32.mrb[0].mxu0
        %1611 = vmatprep.mubr.bf16.mxu0 0
        %1612 = vmatmul.mubr.bf16.gmra.mrb[0].mxu0 %v1535
        %v1613 = vpop.f32.mrb[0].mxu0
        %v1614 = vadd.f32 %v1391, %v1613
        %v1615 = vpop.f32.mrb[0].mxu0
        %v1616 = vpop.f32.mrb[0].mxu0
        %v1617 = vadd.f32 %v1394, %v1616
        %v1618 = vpop.f32.mrb[0].mxu0
        %1619 = vmatprep.mubr.bf16.mxu0 0
        %1620 = vmatmul.mubr.bf16.gmra.mrb[0].mxu0 %v1538
        %v1621 = vpop.f32.mrb[0].mxu0
        %v1622 = vpop.f32.mrb[0].mxu0
        %v1623 = vpop.f32.mrb[0].mxu0
        %v1624 = vpop.f32.mrb[0].mxu0
        %1625 = vmatprep.mubr.bf16.mxu0 0
        %1626 = vmatmul.mubr.bf16.gmra.mrb[0].mxu0 %v1541
        %v1627 = vpop.f32.mrb[0].mxu0
        %v1628 = vadd.f32 %v1405, %v1627
        %v1629 = vpop.f32.mrb[0].mxu0
        %v1630 = vpop.f32.mrb[0].mxu0
        %v1631 = vadd.f32 %v1408, %v1630
        %v1632 = vpop.f32.mrb[0].mxu0
        %1633 = vmatprep.mubr.bf16.mxu0 0
        %1634 = vmatmul.mubr.bf16.gmra.mrb[0].mxu0 %v1544
        %v1635 = vpop.f32.mrb[0].mxu0
        %v1636 = vadd.f32 %v1413, %v1635
        %v1637 = vpop.f32.mrb[0].mxu0
        %v1638 = vpop.f32.mrb[0].mxu0
        %v1639 = vadd.f32 %v1416, %v1638
        %v1640 = vpop.f32.mrb[0].mxu0
        %1641 = vmatprep.mubr.bf16.mxu0 0
        %1642 = vmatmul.mubr.bf16.gmra.mrb[0].mxu0 %v1547
        %v1643 = vpop.f32.mrb[0].mxu0
        %v1644 = vadd.f32 %v1421, %v1643
        %v1645 = vpop.f32.mrb[0].mxu0
        %v1646 = vpop.f32.mrb[0].mxu0
        %v1647 = vadd.f32 %v1424, %v1646
        %v1648 = vpop.f32.mrb[0].mxu0
        %1649 = vmatprep.mubr.bf16.mxu0 0
        %1650 = vmatmul.mubr.bf16.gmra.mrb[0].mxu0 %v1550
        %v1651 = vpop.f32.mrb[0].mxu0
        %v1652 = vadd.f32 %v1429, %v1651
        %v1653 = vpop.f32.mrb[0].mxu0
        %v1654 = vpop.f32.mrb[0].mxu0
        %v1655 = vadd.f32 %v1432, %v1654
        %v1656 = vpop.f32.mrb[0].mxu0
        %1657 = vdwg.mxu0
        %v1658 = vld [vmem:[#allocation2 + $0x48] sm:$0x1f]
        %v1660 = vshrl.u32 %v1058, 16
        %v1662 = vrot.slane %v1660, 3
        %v1663 = vshll.u32 %v1058, 16
        %v1665 = vrot.slane %v1663, 4
        %v1666 = vor.u32 %v1662, %v1665
        %v1668 = vshrl.u32 %v1059, 16
        %v1670 = vrot.slane %v1668, 3
        %v1671 = vshll.u32 %v1059, 16
        %v1673 = vrot.slane %v1671, 4
        %v1674 = vor.u32 %v1670, %v1673
        %v1675 = vsel %vm1435, %v1666, %v1674
        %v1677 = vshrl.u32 %v1060, 16
        %v1679 = vrot.slane %v1677, 3
        %v1680 = vshll.u32 %v1060, 16
        %v1682 = vrot.slane %v1680, 4
        %v1683 = vor.u32 %v1679, %v1682
        %v1684 = vsel %vm1435, %v1674, %v1683
        %v1686 = vshrl.u32 %v1061, 16
        %v1688 = vrot.slane %v1686, 3
        %v1689 = vshll.u32 %v1061, 16
        %v1691 = vrot.slane %v1689, 4
        %v1692 = vor.u32 %v1688, %v1691
        %v1693 = vsel %vm1435, %v1683, %v1692
        %v1695 = vshrl.u32 %v1062, 16
        %v1697 = vrot.slane %v1695, 3
        %v1698 = vshll.u32 %v1062, 16
        %v1700 = vrot.slane %v1698, 4
        %v1701 = vor.u32 %v1697, %v1700
        %v1702 = vsel %vm1435, %v1692, %v1701
        %v1704 = vshrl.u32 %v1063, 16
        %v1706 = vrot.slane %v1704, 3
        %v1707 = vshll.u32 %v1063, 16
        %v1709 = vrot.slane %v1707, 4
        %v1710 = vor.u32 %v1706, %v1709
        %v1711 = vsel %vm1435, %v1701, %v1710
        %v1713 = vshrl.u32 %v1064, 16
        %v1715 = vrot.slane %v1713, 3
        %v1716 = vshll.u32 %v1064, 16
        %v1718 = vrot.slane %v1716, 4
        %v1719 = vor.u32 %v1715, %v1718
        %v1720 = vsel %vm1435, %v1710, %v1719
        %v1722 = vshrl.u32 %v1065, 16
        %v1724 = vrot.slane %v1722, 3
        %v1725 = vshll.u32 %v1065, 16
        %v1727 = vrot.slane %v1725, 4
        %v1728 = vor.u32 %v1724, %v1727
        %v1729 = vsel %vm1435, %v1719, %v1728
        %v1731 = vshrl.u32 %v1066, 16
        %v1733 = vrot.slane %v1731, 3
        %v1734 = vshll.u32 %v1066, 16
        %v1736 = vrot.slane %v1734, 4
        %v1737 = vor.u32 %v1733, %v1736
        %v1738 = vsel %vm1435, %v1728, %v1737
        %v1749 = vmul.bf16 %v1268, %v1666
        %v1750 = vmul.bf16 %v1157, %v1675
        %v1751 = vmul.bf16 %v1158, %v1684
        %v1752 = vmul.bf16 %v1159, %v1693
        %v1753 = vmul.bf16 %v1160, %v1702
        %v1754 = vmul.bf16 %v1161, %v1711
        %v1755 = vmul.bf16 %v1162, %v1720
        %v1756 = vmul.bf16 %v1163, %v1729
        %v1757 = vmul.bf16 %v1164, %v1738
        %v1758 = vmul.bf16 %v1658, %v1737
        %s1759 = scalar_lea.vmem %s2, 4
        %v1760 = vld [vmem:[%s1759] sm:$0x3]
        %v1762 = vshrl.u32 %v1749, 16
        %v1764 = vrot.slane %v1762, 4
        %v1765 = vshll.u32 %v1749, 16
        %v1767 = vrot.slane %v1765, 5
        %v1768 = vor.u32 %v1764, %v1767
        %v1770 = vshrl.u32 %v1750, 16
        %v1772 = vrot.slane %v1770, 4
        %v1773 = vshll.u32 %v1750, 16
        %v1775 = vrot.slane %v1773, 5
        %v1776 = vor.u32 %v1772, %v1775
        %v1777 = vsel %vm1166, %v1768, %v1776
        %v1779 = vshrl.u32 %v1751, 16
        %v1781 = vrot.slane %v1779, 4
        %v1782 = vshll.u32 %v1751, 16
        %v1784 = vrot.slane %v1782, 5
        %v1785 = vor.u32 %v1781, %v1784
        %v1786 = vsel %vm1166, %v1776, %v1785
        %v1788 = vshrl.u32 %v1752, 16
        %v1790 = vrot.slane %v1788, 4
        %v1791 = vshll.u32 %v1752, 16
        %v1793 = vrot.slane %v1791, 5
        %v1794 = vor.u32 %v1790, %v1793
        %v1795 = vsel %vm1166, %v1785, %v1794
        %v1797 = vshrl.u32 %v1753, 16
        %v1799 = vrot.slane %v1797, 4
        %v1800 = vshll.u32 %v1753, 16
        %v1802 = vrot.slane %v1800, 5
        %v1803 = vor.u32 %v1799, %v1802
        %v1804 = vsel %vm1166, %v1794, %v1803
        %v1806 = vshrl.u32 %v1754, 16
        %v1808 = vrot.slane %v1806, 4
        %v1809 = vshll.u32 %v1754, 16
        %v1811 = vrot.slane %v1809, 5
        %v1812 = vor.u32 %v1808, %v1811
        %v1813 = vsel %vm1166, %v1803, %v1812
        %v1815 = vshrl.u32 %v1755, 16
        %v1817 = vrot.slane %v1815, 4
        %v1818 = vshll.u32 %v1755, 16
        %v1820 = vrot.slane %v1818, 5
        %v1821 = vor.u32 %v1817, %v1820
        %v1822 = vsel %vm1166, %v1812, %v1821
        %v1824 = vshrl.u32 %v1756, 16
        %v1826 = vrot.slane %v1824, 4
        %v1827 = vshll.u32 %v1756, 16
        %v1829 = vrot.slane %v1827, 5
        %v1830 = vor.u32 %v1826, %v1829
        %v1831 = vsel %vm1166, %v1821, %v1830
        %v1833 = vshrl.u32 %v1757, 16
        %v1835 = vrot.slane %v1833, 4
        %v1836 = vshll.u32 %v1757, 16
        %v1838 = vrot.slane %v1836, 5
        %v1839 = vor.u32 %v1835, %v1838
        %v1840 = vsel %vm1166, %v1830, %v1839
        %v1842 = vshrl.u32 %v1758, 16
        %v1844 = vrot.slane %v1842, 4
        %v1845 = vshll.u32 %v1758, 16
        %v1847 = vrot.slane %v1845, 5
        %v1848 = vor.u32 %v1844, %v1847
        %v1849 = vsel %vm1166, %v1839, %v1848
        %v1851 = vsel %vm1067, %v1777, 0
        %v1854 = vsel %vm1067, %v1786, 0
        %v1857 = vsel %vm1067, %v1795, 0
        %v1860 = vsel %vm1067, %v1804, 0
        %v1863 = vsel %vm1067, %v1813, 0
        %v1866 = vsel %vm1067, %v1822, 0
        %v1869 = vsel %vm1067, %v1831, 0
        %v1872 = vsel %vm1067, %v1840, 0
        %v1875 = vsel %vm1067, %v1849, 0
        %v1878 = vsel %vm1328, %v1760, 0
        %1880 = vmatprep.subr.bf16.mxu0 0
        %1881 = vmatpush1.bf16.msra.mxu0 %v1878
        %1882 = vmatprep.subr.bf16.mxu0 0
        %1883 = vmatpush1.bf16.msra.mxu0 0
        %1884 = vmatprep.subr.bf16.mxu0 0
        %1885 = vmatpush1.bf16.msra.mxu0 0
        %1886 = vmatprep.subr.bf16.mxu0 0
        %1887 = vmatpush1.bf16.msra.mxu0 0
        %1888 = vmatprep.subr.bf16.mxu0 0
        %1889 = vmatpush1.bf16.msra.mxu0 0
        %1890 = vmatprep.subr.bf16.mxu0 0
        %1891 = vmatpush1.bf16.msra.mxu0 0
        %1892 = vmatprep.subr.bf16.mxu0 0
        %1893 = vmatpush1.bf16.msra.mxu0 0
        %1894 = vmatprep.subr.bf16.mxu0 0
        %1895 = vmatpush1.bf16.msra.mxu0 0
        %1896 = vmatprep.subr.bf16.mxu0 0
        %1897 = vmatpush1.bf16.msra.mxu0 0
        %1898 = vmatprep.subr.bf16.mxu0 0
        %1899 = vmatpush1.bf16.msra.mxu0 0
        %1900 = vmatprep.subr.bf16.mxu0 0
        %1901 = vmatpush1.bf16.msra.mxu0 0
        %1902 = vmatprep.subr.bf16.mxu0 0
        %1903 = vmatpush1.bf16.msra.mxu0 0
        %1904 = vmatprep.subr.bf16.mxu0 0
        %1905 = vmatpush1.bf16.msra.mxu0 0
        %1906 = vmatprep.subr.bf16.mxu0 0
        %1907 = vmatpush1.bf16.msra.mxu0 0
        %1908 = vmatprep.subr.bf16.mxu0 0
        %1909 = vmatpush1.bf16.msra.mxu0 0
        %1910 = vmatprep.subr.bf16.mxu0 0
        %1911 = vmatpush1.bf16.msra.mxu0 0
        %1912 = vmatprep.mubr.bf16.mxu0 0
        %1913 = vmatmul.mubr.bf16.gmra.mrb[0].mxu0 %v1851
        %v1914 = vpop.f32.mrb[0].mxu0
        %v1915 = vadd.f32 0.0, %v1914
        %v1916 = vpop.f32.mrb[0].mxu0
        %v1917 = vpop.f32.mrb[0].mxu0
        %v1918 = vadd.f32 0.0, %v1917
        %v1919 = vpop.f32.mrb[0].mxu0
        %1920 = vmatprep.mubr.bf16.mxu0 0
        %1921 = vmatmul.mubr.bf16.gmra.mrb[0].mxu0 %v1854
        %v1922 = vpop.f32.mrb[0].mxu0
        %v1923 = vadd.f32 0.0, %v1922
        %v1924 = vpop.f32.mrb[0].mxu0
        %v1925 = vpop.f32.mrb[0].mxu0
        %v1926 = vadd.f32 0.0, %v1925
        %v1927 = vpop.f32.mrb[0].mxu0
        %1928 = vmatprep.mubr.bf16.mxu0 0
        %1929 = vmatmul.mubr.bf16.gmra.mrb[0].mxu0 %v1857
        %v1930 = vpop.f32.mrb[0].mxu0
        %v1931 = vadd.f32 0.0, %v1930
        %v1932 = vpop.f32.mrb[0].mxu0
        %v1933 = vpop.f32.mrb[0].mxu0
        %v1934 = vadd.f32 0.0, %v1933
        %v1935 = vpop.f32.mrb[0].mxu0
        %1936 = vmatprep.mubr.bf16.mxu0 0
        %1937 = vmatmul.mubr.bf16.gmra.mrb[0].mxu0 %v1860
        %v1938 = vpop.f32.mrb[0].mxu0
        %v1939 = vadd.f32 0.0, %v1938
        %v1940 = vpop.f32.mrb[0].mxu0
        %v1941 = vpop.f32.mrb[0].mxu0
        %v1942 = vadd.f32 0.0, %v1941
        %v1943 = vpop.f32.mrb[0].mxu0
        %1944 = vmatprep.mubr.bf16.mxu0 0
        %1945 = vmatmul.mubr.bf16.gmra.mrb[0].mxu0 %v1863
        %v1946 = vpop.f32.mrb[0].mxu0
        %v1947 = vpop.f32.mrb[0].mxu0
        %v1948 = vpop.f32.mrb[0].mxu0
        %v1949 = vpop.f32.mrb[0].mxu0
        %1950 = vmatprep.mubr.bf16.mxu0 0
        %1951 = vmatmul.mubr.bf16.gmra.mrb[0].mxu0 %v1866
        %v1952 = vpop.f32.mrb[0].mxu0
        %v1953 = vadd.f32 0.0, %v1952
        %v1954 = vpop.f32.mrb[0].mxu0
        %v1955 = vpop.f32.mrb[0].mxu0
        %v1956 = vadd.f32 0.0, %v1955
        %v1957 = vpop.f32.mrb[0].mxu0
        %1958 = vmatprep.mubr.bf16.mxu0 0
        %1959 = vmatmul.mubr.bf16.gmra.mrb[0].mxu0 %v1869
        %v1960 = vpop.f32.mrb[0].mxu0
        %v1961 = vadd.f32 0.0, %v1960
        %v1962 = vpop.f32.mrb[0].mxu0
        %v1963 = vpop.f32.mrb[0].mxu0
        %v1964 = vadd.f32 0.0, %v1963
        %v1965 = vpop.f32.mrb[0].mxu0
        %1966 = vmatprep.mubr.bf16.mxu0 0
        %1967 = vmatmul.mubr.bf16.gmra.mrb[0].mxu0 %v1872
        %v1968 = vpop.f32.mrb[0].mxu0
        %v1969 = vadd.f32 0.0, %v1968
        %v1970 = vpop.f32.mrb[0].mxu0
        %v1971 = vpop.f32.mrb[0].mxu0
        %v1972 = vadd.f32 0.0, %v1971
        %v1973 = vpop.f32.mrb[0].mxu0
        %1974 = vmatprep.mubr.bf16.mxu0 0
        %1975 = vmatmul.mubr.bf16.gmra.mrb[0].mxu0 %v1875
        %v1976 = vpop.f32.mrb[0].mxu0
        %v1977 = vadd.f32 0.0, %v1976
        %v1978 = vpop.f32.mrb[0].mxu0
        %v1979 = vpop.f32.mrb[0].mxu0
        %v1980 = vadd.f32 0.0, %v1979
        %v1981 = vpop.f32.mrb[0].mxu0
        %1982 = vdwg.mxu0
        %v1983 = vadd.f32 %v1590, %v1915
        %v1984 = vadd.f32 %v1593, %v1918
        %v1985 = vadd.f32 %v1598, %v1923
        %v1986 = vadd.f32 %v1601, %v1926
        %v1987 = vadd.f32 %v1606, %v1931
        %v1988 = vadd.f32 %v1609, %v1934
        %v1989 = vadd.f32 %v1614, %v1939
        %v1990 = vadd.f32 %v1617, %v1942
        %v1991 = vadd.f32 %v1628, %v1953
        %v1992 = vadd.f32 %v1631, %v1956
        %v1993 = vadd.f32 %v1636, %v1961
        %v1994 = vadd.f32 %v1639, %v1964
        %v1995 = vadd.f32 %v1644, %v1969
        %v1996 = vadd.f32 %v1647, %v1972
        %v1997 = vadd.f32 %v1652, %v1977
        %v1998 = vadd.f32 %v1655, %v1980
        %v1999 = vld [vmem:[#allocation2] sm:$0x80]
        %v2000 = vld [vmem:[#allocation2 + $0x48] sm:$0xff]
        %vm2001 = vsmask.f32 7424
        %v2002 = vrot.slane %v1171, 1
        %v2003 = vor.u32 %v1168, %v2002
        %v2004 = vrot.slane %v1179, 1
        %v2005 = vsel %vm2001, %v2003, %v2004
        %v2006 = vor.u32 %v1176, %v2004
        %v2007 = vrot.slane %v1188, 1
        %v2008 = vsel %vm2001, %v2006, %v2007
        %v2009 = vor.u32 %v1185, %v2007
        %v2010 = vrot.slane %v1197, 1
        %v2011 = vsel %vm2001, %v2009, %v2010
        %v2012 = vor.u32 %v1194, %v2010
        %v2013 = vrot.slane %v1206, 1
        %v2014 = vsel %vm2001, %v2012, %v2013
        %v2015 = vor.u32 %v1203, %v2013
        %v2016 = vrot.slane %v1215, 1
        %v2017 = vsel %vm2001, %v2015, %v2016
        %v2018 = vor.u32 %v1212, %v2016
        %v2019 = vrot.slane %v1224, 1
        %v2020 = vsel %vm2001, %v2018, %v2019
        %v2021 = vor.u32 %v1221, %v2019
        %v2022 = vrot.slane %v1233, 1
        %v2023 = vsel %vm2001, %v2021, %v2022
        %v2024 = vor.u32 %v1230, %v2022
        %v2025 = vrot.slane %v1242, 1
        %v2026 = vsel %vm2001, %v2024, %v2025
        %v2027 = vor.u32 %v1239, %v2025
        %v2038 = vmul.bf16 %v1999, %v2002
        %v2039 = vmul.bf16 %v1157, %v2005
        %v2040 = vmul.bf16 %v1158, %v2008
        %v2041 = vmul.bf16 %v1159, %v2011
        %v2042 = vmul.bf16 %v1160, %v2014
        %v2043 = vmul.bf16 %v1161, %v2017
        %v2044 = vmul.bf16 %v1162, %v2020
        %v2045 = vmul.bf16 %v1163, %v2023
        %v2046 = vmul.bf16 %v1164, %v2026
        %v2047 = vmul.bf16 %v2000, %v2027
        %s2048 = scalar_lea.vmem %s2, 6
        %v2049 = vld [vmem:[%s2048] sm:$0x3]
        %vm2050 = vsmask.f32 256
        %v2052 = vshrl.u32 %v2038, 16
        %v2054 = vrot.slane %v2052, 7
        %v2056 = vshrl.u32 %v2039, 16
        %v2058 = vrot.slane %v2056, 7
        %v2059 = vshll.u32 %v2039, 16
        %v2061 = vor.u32 %v2058, %v2059
        %v2062 = vsel %vm2050, %v2054, %v2061
        %v2064 = vshrl.u32 %v2040, 16
        %v2066 = vrot.slane %v2064, 7
        %v2067 = vshll.u32 %v2040, 16
        %v2069 = vor.u32 %v2066, %v2067
        %v2070 = vsel %vm2050, %v2058, %v2069
        %v2072 = vshrl.u32 %v2041, 16
        %v2074 = vrot.slane %v2072, 7
        %v2075 = vshll.u32 %v2041, 16
        %v2077 = vor.u32 %v2074, %v2075
        %v2078 = vsel %vm2050, %v2066, %v2077
        %v2080 = vshrl.u32 %v2042, 16
        %v2082 = vrot.slane %v2080, 7
        %v2083 = vshll.u32 %v2042, 16
        %v2085 = vor.u32 %v2082, %v2083
        %v2086 = vsel %vm2050, %v2074, %v2085
        %v2088 = vshrl.u32 %v2043, 16
        %v2090 = vrot.slane %v2088, 7
        %v2091 = vshll.u32 %v2043, 16
        %v2093 = vor.u32 %v2090, %v2091
        %v2094 = vsel %vm2050, %v2082, %v2093
        %v2096 = vshrl.u32 %v2044, 16
        %v2098 = vrot.slane %v2096, 7
        %v2099 = vshll.u32 %v2044, 16
        %v2101 = vor.u32 %v2098, %v2099
        %v2102 = vsel %vm2050, %v2090, %v2101
        %v2104 = vshrl.u32 %v2045, 16
        %v2106 = vrot.slane %v2104, 7
        %v2107 = vshll.u32 %v2045, 16
        %v2109 = vor.u32 %v2106, %v2107
        %v2110 = vsel %vm2050, %v2098, %v2109
        %v2112 = vshrl.u32 %v2046, 16
        %v2114 = vrot.slane %v2112, 7
        %v2115 = vshll.u32 %v2046, 16
        %v2117 = vor.u32 %v2114, %v2115
        %v2118 = vsel %vm2050, %v2106, %v2117
        %v2120 = vshrl.u32 %v2047, 16
        %v2122 = vrot.slane %v2120, 7
        %v2123 = vshll.u32 %v2047, 16
        %v2125 = vor.u32 %v2122, %v2123
        %v2126 = vsel %vm2050, %v2114, %v2125
        %v2128 = vsel %vm1067, %v2062, 0
        %v2131 = vsel %vm1067, %v2070, 0
        %v2134 = vsel %vm1067, %v2078, 0
        %v2137 = vsel %vm1067, %v2086, 0
        %v2140 = vsel %vm1067, %v2094, 0
        %v2143 = vsel %vm1067, %v2102, 0
        %v2146 = vsel %vm1067, %v2110, 0
        %v2149 = vsel %vm1067, %v2118, 0
        %v2152 = vsel %vm1067, %v2126, 0
        %v2155 = vsel %vm1328, %v2049, 0
        %2157 = vmatprep.subr.bf16.mxu0 0
        %2158 = vmatpush1.bf16.msra.mxu0 %v2155
        %2159 = vmatprep.subr.bf16.mxu0 0
        %2160 = vmatpush1.bf16.msra.mxu0 0
        %2161 = vmatprep.subr.bf16.mxu0 0
        %2162 = vmatpush1.bf16.msra.mxu0 0
        %2163 = vmatprep.subr.bf16.mxu0 0
        %2164 = vmatpush1.bf16.msra.mxu0 0
        %2165 = vmatprep.subr.bf16.mxu0 0
        %2166 = vmatpush1.bf16.msra.mxu0 0
        %2167 = vmatprep.subr.bf16.mxu0 0
        %2168 = vmatpush1.bf16.msra.mxu0 0
        %2169 = vmatprep.subr.bf16.mxu0 0
        %2170 = vmatpush1.bf16.msra.mxu0 0
        %2171 = vmatprep.subr.bf16.mxu0 0
        %2172 = vmatpush1.bf16.msra.mxu0 0
        %2173 = vmatprep.subr.bf16.mxu0 0
        %2174 = vmatpush1.bf16.msra.mxu0 0
        %2175 = vmatprep.subr.bf16.mxu0 0
        %2176 = vmatpush1.bf16.msra.mxu0 0
        %2177 = vmatprep.subr.bf16.mxu0 0
        %2178 = vmatpush1.bf16.msra.mxu0 0
        %2179 = vmatprep.subr.bf16.mxu0 0
        %2180 = vmatpush1.bf16.msra.mxu0 0
        %2181 = vmatprep.subr.bf16.mxu0 0
        %2182 = vmatpush1.bf16.msra.mxu0 0
        %2183 = vmatprep.subr.bf16.mxu0 0
        %2184 = vmatpush1.bf16.msra.mxu0 0
        %2185 = vmatprep.subr.bf16.mxu0 0
        %2186 = vmatpush1.bf16.msra.mxu0 0
        %2187 = vmatprep.subr.bf16.mxu0 0
        %2188 = vmatpush1.bf16.msra.mxu0 0
        %2189 = vmatprep.mubr.bf16.mxu0 0
        %2190 = vmatmul.mubr.bf16.gmra.mrb[0].mxu0 %v2128
        %v2191 = vpop.f32.mrb[0].mxu0
        %v2192 = vadd.f32 0.0, %v2191
        %v2193 = vpop.f32.mrb[0].mxu0
        %v2194 = vpop.f32.mrb[0].mxu0
        %v2195 = vadd.f32 0.0, %v2194
        %v2196 = vpop.f32.mrb[0].mxu0
        %2197 = vmatprep.mubr.bf16.mxu0 0
        %2198 = vmatmul.mubr.bf16.gmra.mrb[0].mxu0 %v2131
        %v2199 = vpop.f32.mrb[0].mxu0
        %v2200 = vadd.f32 0.0, %v2199
        %v2201 = vpop.f32.mrb[0].mxu0
        %v2202 = vpop.f32.mrb[0].mxu0
        %v2203 = vadd.f32 0.0, %v2202
        %v2204 = vpop.f32.mrb[0].mxu0
        %2205 = vmatprep.mubr.bf16.mxu0 0
        %2206 = vmatmul.mubr.bf16.gmra.mrb[0].mxu0 %v2134
        %v2207 = vpop.f32.mrb[0].mxu0
        %v2208 = vadd.f32 0.0, %v2207
        %v2209 = vpop.f32.mrb[0].mxu0
        %v2210 = vpop.f32.mrb[0].mxu0
        %v2211 = vadd.f32 0.0, %v2210
        %v2212 = vpop.f32.mrb[0].mxu0
        %2213 = vmatprep.mubr.bf16.mxu0 0
        %2214 = vmatmul.mubr.bf16.gmra.mrb[0].mxu0 %v2137
        %v2215 = vpop.f32.mrb[0].mxu0
        %v2216 = vadd.f32 0.0, %v2215
        %v2217 = vpop.f32.mrb[0].mxu0
        %v2218 = vpop.f32.mrb[0].mxu0
        %v2219 = vadd.f32 0.0, %v2218
        %v2220 = vpop.f32.mrb[0].mxu0
        %2221 = vmatprep.mubr.bf16.mxu0 0
        %2222 = vmatmul.mubr.bf16.gmra.mrb[0].mxu0 %v2140
        %v2223 = vpop.f32.mrb[0].mxu0
        %v2224 = vpop.f32.mrb[0].mxu0
        %v2225 = vpop.f32.mrb[0].mxu0
        %v2226 = vpop.f32.mrb[0].mxu0
        %2227 = vmatprep.mubr.bf16.mxu0 0
        %2228 = vmatmul.mubr.bf16.gmra.mrb[0].mxu0 %v2143
        %v2229 = vpop.f32.mrb[0].mxu0
        %v2230 = vadd.f32 0.0, %v2229
        %v2231 = vpop.f32.mrb[0].mxu0
        %v2232 = vpop.f32.mrb[0].mxu0
        %v2233 = vadd.f32 0.0, %v2232
        %v2234 = vpop.f32.mrb[0].mxu0
        %2235 = vmatprep.mubr.bf16.mxu0 0
        %2236 = vmatmul.mubr.bf16.gmra.mrb[0].mxu0 %v2146
        %v2237 = vpop.f32.mrb[0].mxu0
        %v2238 = vadd.f32 0.0, %v2237
        %v2239 = vpop.f32.mrb[0].mxu0
        %v2240 = vpop.f32.mrb[0].mxu0
        %v2241 = vadd.f32 0.0, %v2240
        %v2242 = vpop.f32.mrb[0].mxu0
        %2243 = vmatprep.mubr.bf16.mxu0 0
        %2244 = vmatmul.mubr.bf16.gmra.mrb[0].mxu0 %v2149
        %v2245 = vpop.f32.mrb[0].mxu0
        %v2246 = vadd.f32 0.0, %v2245
        %v2247 = vpop.f32.mrb[0].mxu0
        %v2248 = vpop.f32.mrb[0].mxu0
        %v2249 = vadd.f32 0.0, %v2248
        %v2250 = vpop.f32.mrb[0].mxu0
        %2251 = vmatprep.mubr.bf16.mxu0 0
        %2252 = vmatmul.mubr.bf16.gmra.mrb[0].mxu0 %v2152
        %v2253 = vpop.f32.mrb[0].mxu0
        %v2254 = vadd.f32 0.0, %v2253
        %v2255 = vpop.f32.mrb[0].mxu0
        %v2256 = vpop.f32.mrb[0].mxu0
        %v2257 = vadd.f32 0.0, %v2256
        %v2258 = vpop.f32.mrb[0].mxu0
        %2259 = vdwg.mxu0
        %v2260 = vadd.f32 %v1983, %v2192
        %v2261 = vadd.f32 %v1984, %v2195
        %v2262 = vadd.f32 %v1985, %v2200
        %v2263 = vadd.f32 %v1986, %v2203
        %v2264 = vadd.f32 %v1987, %v2208
        %v2265 = vadd.f32 %v1988, %v2211
        %v2266 = vadd.f32 %v1989, %v2216
        %v2267 = vadd.f32 %v1990, %v2219
        %v2268 = vadd.f32 %v1991, %v2230
        %v2269 = vadd.f32 %v1992, %v2233
        %v2270 = vadd.f32 %v1993, %v2238
        %v2271 = vadd.f32 %v1994, %v2241
        %v2272 = vadd.f32 %v1995, %v2246
        %v2273 = vadd.f32 %v1996, %v2249
        %v2274 = vadd.f32 %v1997, %v2254
        %v2275 = vadd.f32 %v1998, %v2257
        %s2276 = scalar_lea.vmem %s2, 8
        %v2277 = vld [vmem:[%s2276] sm:$0x3]
        %v2279 = vsel %vm1067, %v1157, 0
        %v2282 = vsel %vm1067, %v1158, 0
        %v2285 = vsel %vm1067, %v1159, 0
        %v2288 = vsel %vm1067, %v1160, 0
        %v2291 = vsel %vm1067, %v1161, 0
        %v2294 = vsel %vm1067, %v1162, 0
        %v2297 = vsel %vm1067, %v1163, 0
        %v2300 = vsel %vm1067, %v1164, 0
        %v2303 = vsel %vm1067, %v2000, 0
        %v2306 = vsel %vm1328, %v2277, 0
        %2308 = vmatprep.subr.bf16.mxu0 0
        %2309 = vmatpush1.bf16.msra.mxu0 %v2306
        %2310 = vmatprep.subr.bf16.mxu0 0
        %2311 = vmatpush1.bf16.msra.mxu0 0
        %2312 = vmatprep.subr.bf16.mxu0 0
        %2313 = vmatpush1.bf16.msra.mxu0 0
        %2314 = vmatprep.subr.bf16.mxu0 0
        %2315 = vmatpush1.bf16.msra.mxu0 0
        %2316 = vmatprep.subr.bf16.mxu0 0
        %2317 = vmatpush1.bf16.msra.mxu0 0
        %2318 = vmatprep.subr.bf16.mxu0 0
        %2319 = vmatpush1.bf16.msra.mxu0 0
        %2320 = vmatprep.subr.bf16.mxu0 0
        %2321 = vmatpush1.bf16.msra.mxu0 0
        %2322 = vmatprep.subr.bf16.mxu0 0
        %2323 = vmatpush1.bf16.msra.mxu0 0
        %2324 = vmatprep.subr.bf16.mxu0 0
        %2325 = vmatpush1.bf16.msra.mxu0 0
        %2326 = vmatprep.subr.bf16.mxu0 0
        %2327 = vmatpush1.bf16.msra.mxu0 0
        %2328 = vmatprep.subr.bf16.mxu0 0
        %2329 = vmatpush1.bf16.msra.mxu0 0
        %2330 = vmatprep.subr.bf16.mxu0 0
        %2331 = vmatpush1.bf16.msra.mxu0 0
        %2332 = vmatprep.subr.bf16.mxu0 0
        %2333 = vmatpush1.bf16.msra.mxu0 0
        %2334 = vmatprep.subr.bf16.mxu0 0
        %2335 = vmatpush1.bf16.msra.mxu0 0
        %2336 = vmatprep.subr.bf16.mxu0 0
        %2337 = vmatpush1.bf16.msra.mxu0 0
        %2338 = vmatprep.subr.bf16.mxu0 0
        %2339 = vmatpush1.bf16.msra.mxu0 0
        %2340 = vmatprep.mubr.bf16.mxu0 0
        %2341 = vmatmul.mubr.bf16.gmra.mrb[0].mxu0 %v2279
        %v2342 = vpop.f32.mrb[0].mxu0
        %v2343 = vadd.f32 0.0, %v2342
        %v2344 = vpop.f32.mrb[0].mxu0
        %v2345 = vpop.f32.mrb[0].mxu0
        %v2346 = vadd.f32 0.0, %v2345
        %v2347 = vpop.f32.mrb[0].mxu0
        %2348 = vmatprep.mubr.bf16.mxu0 0
        %2349 = vmatmul.mubr.bf16.gmra.mrb[0].mxu0 %v2282
        %v2350 = vpop.f32.mrb[0].mxu0
        %v2351 = vadd.f32 0.0, %v2350
        %v2352 = vpop.f32.mrb[0].mxu0
        %v2353 = vpop.f32.mrb[0].mxu0
        %v2354 = vadd.f32 0.0, %v2353
        %v2355 = vpop.f32.mrb[0].mxu0
        %2356 = vmatprep.mubr.bf16.mxu0 0
        %2357 = vmatmul.mubr.bf16.gmra.mrb[0].mxu0 %v2285
        %v2358 = vpop.f32.mrb[0].mxu0
        %v2359 = vadd.f32 0.0, %v2358
        %v2360 = vpop.f32.mrb[0].mxu0
        %v2361 = vpop.f32.mrb[0].mxu0
        %v2362 = vadd.f32 0.0, %v2361
        %v2363 = vpop.f32.mrb[0].mxu0
        %2364 = vmatprep.mubr.bf16.mxu0 0
        %2365 = vmatmul.mubr.bf16.gmra.mrb[0].mxu0 %v2288
        %v2366 = vpop.f32.mrb[0].mxu0
        %v2367 = vadd.f32 0.0, %v2366
        %v2368 = vpop.f32.mrb[0].mxu0
        %v2369 = vpop.f32.mrb[0].mxu0
        %v2370 = vadd.f32 0.0, %v2369
        %v2371 = vpop.f32.mrb[0].mxu0
        %2372 = vmatprep.mubr.bf16.mxu0 0
        %2373 = vmatmul.mubr.bf16.gmra.mrb[0].mxu0 %v2291
        %v2374 = vpop.f32.mrb[0].mxu0
        %v2375 = vpop.f32.mrb[0].mxu0
        %v2376 = vpop.f32.mrb[0].mxu0
        %v2377 = vpop.f32.mrb[0].mxu0
        %2378 = vmatprep.mubr.bf16.mxu0 0
        %2379 = vmatmul.mubr.bf16.gmra.mrb[0].mxu0 %v2294
        %v2380 = vpop.f32.mrb[0].mxu0
        %v2381 = vadd.f32 0.0, %v2380
        %v2382 = vpop.f32.mrb[0].mxu0
        %v2383 = vpop.f32.mrb[0].mxu0
        %v2384 = vadd.f32 0.0, %v2383
        %v2385 = vpop.f32.mrb[0].mxu0
        %2386 = vmatprep.mubr.bf16.mxu0 0
        %2387 = vmatmul.mubr.bf16.gmra.mrb[0].mxu0 %v2297
        %v2388 = vpop.f32.mrb[0].mxu0
        %v2389 = vadd.f32 0.0, %v2388
        %v2390 = vpop.f32.mrb[0].mxu0
        %v2391 = vpop.f32.mrb[0].mxu0
        %v2392 = vadd.f32 0.0, %v2391
        %v2393 = vpop.f32.mrb[0].mxu0
        %2394 = vmatprep.mubr.bf16.mxu0 0
        %2395 = vmatmul.mubr.bf16.gmra.mrb[0].mxu0 %v2300
        %v2396 = vpop.f32.mrb[0].mxu0
        %v2397 = vadd.f32 0.0, %v2396
        %v2398 = vpop.f32.mrb[0].mxu0
        %v2399 = vpop.f32.mrb[0].mxu0
        %v2400 = vadd.f32 0.0, %v2399
        %v2401 = vpop.f32.mrb[0].mxu0
        %2402 = vmatprep.mubr.bf16.mxu0 0
        %2403 = vmatmul.mubr.bf16.gmra.mrb[0].mxu0 %v2303
        %v2404 = vpop.f32.mrb[0].mxu0
        %v2405 = vadd.f32 0.0, %v2404
        %v2406 = vpop.f32.mrb[0].mxu0
        %v2407 = vpop.f32.mrb[0].mxu0
        %v2408 = vadd.f32 0.0, %v2407
        %v2409 = vpop.f32.mrb[0].mxu0
        %2410 = vdwg.mxu0
        %v2411 = vadd.f32 %v2260, %v2343
        %v2412 = vadd.f32 %v2261, %v2346
        %v2413 = vadd.f32 %v2262, %v2351
        %v2414 = vadd.f32 %v2263, %v2354
        %v2415 = vadd.f32 %v2264, %v2359
        %v2416 = vadd.f32 %v2265, %v2362
        %v2417 = vadd.f32 %v2266, %v2367
        %v2418 = vadd.f32 %v2267, %v2370
        %v2419 = vadd.f32 %v2268, %v2381
        %v2420 = vadd.f32 %v2269, %v2384
        %v2421 = vadd.f32 %v2270, %v2389
        %v2422 = vadd.f32 %v2271, %v2392
        %v2423 = vadd.f32 %v2272, %v2397
        %v2424 = vadd.f32 %v2273, %v2400
        %v2425 = vadd.f32 %v2274, %v2405
        %v2426 = vadd.f32 %v2275, %v2408
        %v2427 = vld [vmem:[#allocation2 + $0x8] sm:$0xff]
        %v2428 = vld [vmem:[#allocation2 + $0x10] sm:$0xff]
        %v2429 = vld [vmem:[#allocation2 + $0x18] sm:$0xff]
        %v2430 = vld [vmem:[#allocation2 + $0x20] sm:$0xff]
        %v2431 = vld [vmem:[#allocation2 + $0x28] sm:$0xff]
        %v2432 = vld [vmem:[#allocation2 + $0x30] sm:$0xff]
        %v2433 = vld [vmem:[#allocation2 + $0x38] sm:$0xff]
        %v2434 = vld [vmem:[#allocation2 + $0x40] sm:$0xff]
        %v2435 = vld [vmem:[#allocation2 + $0x48] sm:$0xff]
        %v2436 = vld [vmem:[#allocation2 + $0x50] sm:$0x1]
        %v2437 = vrot.slane %v1660, 7
        %v2438 = vor.u32 %v2437, %v1663
        %v2439 = vrot.slane %v1668, 7
        %v2440 = vor.u32 %v2439, %v1671
        %v2441 = vsel %vm2050, %v2437, %v2440
        %v2442 = vrot.slane %v1677, 7
        %v2443 = vor.u32 %v2442, %v1680
        %v2444 = vsel %vm2050, %v2439, %v2443
        %v2445 = vrot.slane %v1686, 7
        %v2446 = vor.u32 %v2445, %v1689
        %v2447 = vsel %vm2050, %v2442, %v2446
        %v2448 = vrot.slane %v1695, 7
        %v2449 = vor.u32 %v2448, %v1698
        %v2450 = vsel %vm2050, %v2445, %v2449
        %v2451 = vrot.slane %v1704, 7
        %v2452 = vor.u32 %v2451, %v1707
        %v2453 = vsel %vm2050, %v2448, %v2452
        %v2454 = vrot.slane %v1713, 7
        %v2455 = vor.u32 %v2454, %v1716
        %v2456 = vsel %vm2050, %v2451, %v2455
        %v2457 = vrot.slane %v1722, 7
        %v2458 = vor.u32 %v2457, %v1725
        %v2459 = vsel %vm2050, %v2454, %v2458
        %v2460 = vrot.slane %v1731, 7
        %v2461 = vor.u32 %v2460, %v1734
        %v2462 = vsel %vm2050, %v2457, %v2461
        %v2473 = vmul.bf16 %v2427, %v2438
        %v2474 = vmul.bf16 %v2428, %v2441
        %v2475 = vmul.bf16 %v2429, %v2444
        %v2476 = vmul.bf16 %v2430, %v2447
        %v2477 = vmul.bf16 %v2431, %v2450
        %v2478 = vmul.bf16 %v2432, %v2453
        %v2479 = vmul.bf16 %v2433, %v2456
        %v2480 = vmul.bf16 %v2434, %v2459
        %v2481 = vmul.bf16 %v2435, %v2462
        %v2482 = vmul.bf16 %v2436, %v2460
        %s2483 = scalar_lea.vmem %s2, 10
        %v2484 = vld [vmem:[%s2483] sm:$0x3]
        %v2486 = vshrl.u32 %v2473, 16
        %v2488 = vshll.u32 %v2473, 16
        %v2490 = vrot.slane %v2488, 1
        %v2491 = vor.u32 %v2486, %v2490
        %v2493 = vshll.u32 %v2474, 16
        %v2495 = vrot.slane %v2493, 1
        %v2496 = vsel %vm2001, %v2491, %v2495
        %v2497 = vshrl.u32 %v2474, 16
        %v2499 = vor.u32 %v2497, %v2495
        %v2501 = vshll.u32 %v2475, 16
        %v2503 = vrot.slane %v2501, 1
        %v2504 = vsel %vm2001, %v2499, %v2503
        %v2505 = vshrl.u32 %v2475, 16
        %v2507 = vor.u32 %v2505, %v2503
        %v2509 = vshll.u32 %v2476, 16
        %v2511 = vrot.slane %v2509, 1
        %v2512 = vsel %vm2001, %v2507, %v2511
        %v2513 = vshrl.u32 %v2476, 16
        %v2515 = vor.u32 %v2513, %v2511
        %v2517 = vshll.u32 %v2477, 16
        %v2519 = vrot.slane %v2517, 1
        %v2520 = vsel %vm2001, %v2515, %v2519
        %v2521 = vshrl.u32 %v2477, 16
        %v2523 = vor.u32 %v2521, %v2519
        %v2525 = vshll.u32 %v2478, 16
        %v2527 = vrot.slane %v2525, 1
        %v2528 = vsel %vm2001, %v2523, %v2527
        %v2529 = vshrl.u32 %v2478, 16
        %v2531 = vor.u32 %v2529, %v2527
        %v2533 = vshll.u32 %v2479, 16
        %v2535 = vrot.slane %v2533, 1
        %v2536 = vsel %vm2001, %v2531, %v2535
        %v2537 = vshrl.u32 %v2479, 16
        %v2539 = vor.u32 %v2537, %v2535
        %v2541 = vshll.u32 %v2480, 16
        %v2543 = vrot.slane %v2541, 1
        %v2544 = vsel %vm2001, %v2539, %v2543
        %v2545 = vshrl.u32 %v2480, 16
        %v2547 = vor.u32 %v2545, %v2543
        %v2549 = vshll.u32 %v2481, 16
        %v2551 = vrot.slane %v2549, 1
        %v2552 = vsel %vm2001, %v2547, %v2551
        %v2553 = vshrl.u32 %v2481, 16
        %v2555 = vor.u32 %v2553, %v2551
        %v2557 = vshll.u32 %v2482, 16
        %v2559 = vrot.slane %v2557, 1
        %v2560 = vsel %vm2001, %v2555, %v2559
        %v2562 = vsel %vm1067, %v2496, 0
        %v2565 = vsel %vm1067, %v2504, 0
        %v2568 = vsel %vm1067, %v2512, 0
        %v2571 = vsel %vm1067, %v2520, 0
        %v2574 = vsel %vm1067, %v2528, 0
        %v2577 = vsel %vm1067, %v2536, 0
        %v2580 = vsel %vm1067, %v2544, 0
        %v2583 = vsel %vm1067, %v2552, 0
        %v2586 = vsel %vm1067, %v2560, 0
        %v2589 = vsel %vm1328, %v2484, 0
        %2591 = vmatprep.subr.bf16.mxu0 0
        %2592 = vmatpush1.bf16.msra.mxu0 %v2589
        %2593 = vmatprep.subr.bf16.mxu0 0
        %2594 = vmatpush1.bf16.msra.mxu0 0
        %2595 = vmatprep.subr.bf16.mxu0 0
        %2596 = vmatpush1.bf16.msra.mxu0 0
        %2597 = vmatprep.subr.bf16.mxu0 0
        %2598 = vmatpush1.bf16.msra.mxu0 0
        %2599 = vmatprep.subr.bf16.mxu0 0
        %2600 = vmatpush1.bf16.msra.mxu0 0
        %2601 = vmatprep.subr.bf16.mxu0 0
        %2602 = vmatpush1.bf16.msra.mxu0 0
        %2603 = vmatprep.subr.bf16.mxu0 0
        %2604 = vmatpush1.bf16.msra.mxu0 0
        %2605 = vmatprep.subr.bf16.mxu0 0
        %2606 = vmatpush1.bf16.msra.mxu0 0
        %2607 = vmatprep.subr.bf16.mxu0 0
        %2608 = vmatpush1.bf16.msra.mxu0 0
        %2609 = vmatprep.subr.bf16.mxu0 0
        %2610 = vmatpush1.bf16.msra.mxu0 0
        %2611 = vmatprep.subr.bf16.mxu0 0
        %2612 = vmatpush1.bf16.msra.mxu0 0
        %2613 = vmatprep.subr.bf16.mxu0 0
        %2614 = vmatpush1.bf16.msra.mxu0 0
        %2615 = vmatprep.subr.bf16.mxu0 0
        %2616 = vmatpush1.bf16.msra.mxu0 0
        %2617 = vmatprep.subr.bf16.mxu0 0
        %2618 = vmatpush1.bf16.msra.mxu0 0
        %2619 = vmatprep.subr.bf16.mxu0 0
        %2620 = vmatpush1.bf16.msra.mxu0 0
        %2621 = vmatprep.subr.bf16.mxu0 0
        %2622 = vmatpush1.bf16.msra.mxu0 0
        %2623 = vmatprep.mubr.bf16.mxu0 0
        %2624 = vmatmul.mubr.bf16.gmra.mrb[0].mxu0 %v2562
        %v2625 = vpop.f32.mrb[0].mxu0
        %v2626 = vadd.f32 0.0, %v2625
        %v2627 = vpop.f32.mrb[0].mxu0
        %v2628 = vpop.f32.mrb[0].mxu0
        %v2629 = vadd.f32 0.0, %v2628
        %v2630 = vpop.f32.mrb[0].mxu0
        %2631 = vmatprep.mubr.bf16.mxu0 0
        %2632 = vmatmul.mubr.bf16.gmra.mrb[0].mxu0 %v2565
        %v2633 = vpop.f32.mrb[0].mxu0
        %v2634 = vadd.f32 0.0, %v2633
        %v2635 = vpop.f32.mrb[0].mxu0
        %v2636 = vpop.f32.mrb[0].mxu0
        %v2637 = vadd.f32 0.0, %v2636
        %v2638 = vpop.f32.mrb[0].mxu0
        %2639 = vmatprep.mubr.bf16.mxu0 0
        %2640 = vmatmul.mubr.bf16.gmra.mrb[0].mxu0 %v2568
        %v2641 = vpop.f32.mrb[0].mxu0
        %v2642 = vadd.f32 0.0, %v2641
        %v2643 = vpop.f32.mrb[0].mxu0
        %v2644 = vpop.f32.mrb[0].mxu0
        %v2645 = vadd.f32 0.0, %v2644
        %v2646 = vpop.f32.mrb[0].mxu0
        %2647 = vmatprep.mubr.bf16.mxu0 0
        %2648 = vmatmul.mubr.bf16.gmra.mrb[0].mxu0 %v2571
        %v2649 = vpop.f32.mrb[0].mxu0
        %v2650 = vadd.f32 0.0, %v2649
        %v2651 = vpop.f32.mrb[0].mxu0
        %v2652 = vpop.f32.mrb[0].mxu0
        %v2653 = vadd.f32 0.0, %v2652
        %v2654 = vpop.f32.mrb[0].mxu0
        %2655 = vmatprep.mubr.bf16.mxu0 0
        %2656 = vmatmul.mubr.bf16.gmra.mrb[0].mxu0 %v2574
        %v2657 = vpop.f32.mrb[0].mxu0
        %v2658 = vpop.f32.mrb[0].mxu0
        %v2659 = vpop.f32.mrb[0].mxu0
        %v2660 = vpop.f32.mrb[0].mxu0
        %2661 = vmatprep.mubr.bf16.mxu0 0
        %2662 = vmatmul.mubr.bf16.gmra.mrb[0].mxu0 %v2577
        %v2663 = vpop.f32.mrb[0].mxu0
        %v2664 = vadd.f32 0.0, %v2663
        %v2665 = vpop.f32.mrb[0].mxu0
        %v2666 = vpop.f32.mrb[0].mxu0
        %v2667 = vadd.f32 0.0, %v2666
        %v2668 = vpop.f32.mrb[0].mxu0
        %2669 = vmatprep.mubr.bf16.mxu0 0
        %2670 = vmatmul.mubr.bf16.gmra.mrb[0].mxu0 %v2580
        %v2671 = vpop.f32.mrb[0].mxu0
        %v2672 = vadd.f32 0.0, %v2671
        %v2673 = vpop.f32.mrb[0].mxu0
        %v2674 = vpop.f32.mrb[0].mxu0
        %v2675 = vadd.f32 0.0, %v2674
        %v2676 = vpop.f32.mrb[0].mxu0
        %2677 = vmatprep.mubr.bf16.mxu0 0
        %2678 = vmatmul.mubr.bf16.gmra.mrb[0].mxu0 %v2583
        %v2679 = vpop.f32.mrb[0].mxu0
        %v2680 = vadd.f32 0.0, %v2679
        %v2681 = vpop.f32.mrb[0].mxu0
        %v2682 = vpop.f32.mrb[0].mxu0
        %v2683 = vadd.f32 0.0, %v2682
        %v2684 = vpop.f32.mrb[0].mxu0
        %2685 = vmatprep.mubr.bf16.mxu0 0
        %2686 = vmatmul.mubr.bf16.gmra.mrb[0].mxu0 %v2586
        %v2687 = vpop.f32.mrb[0].mxu0
        %v2688 = vadd.f32 0.0, %v2687
        %v2689 = vpop.f32.mrb[0].mxu0
        %v2690 = vpop.f32.mrb[0].mxu0
        %v2691 = vadd.f32 0.0, %v2690
        %v2692 = vpop.f32.mrb[0].mxu0
        %2693 = vdwg.mxu0
        %v2694 = vadd.f32 %v2411, %v2626
        %v2695 = vadd.f32 %v2412, %v2629
        %v2696 = vadd.f32 %v2413, %v2634
        %v2697 = vadd.f32 %v2414, %v2637
        %v2698 = vadd.f32 %v2415, %v2642
        %v2699 = vadd.f32 %v2416, %v2645
        %v2700 = vadd.f32 %v2417, %v2650
        %v2701 = vadd.f32 %v2418, %v2653
        %v2702 = vadd.f32 %v2419, %v2664
        %v2703 = vadd.f32 %v2420, %v2667
        %v2704 = vadd.f32 %v2421, %v2672
        %v2705 = vadd.f32 %v2422, %v2675
        %v2706 = vadd.f32 %v2423, %v2680
        %v2707 = vadd.f32 %v2424, %v2683
        %v2708 = vadd.f32 %v2425, %v2688
        %v2709 = vadd.f32 %v2426, %v2691
        %v2710 = vld [vmem:[#allocation2 + $0x8] sm:$0xf8]
        %v2711 = vld [vmem:[#allocation2 + $0x50] sm:$0xf]
        %v2712 = vmul.bf16 %v2710, %v1174
        %v2713 = vmul.bf16 %v2428, %v1183
        %v2714 = vmul.bf16 %v2429, %v1192
        %v2715 = vmul.bf16 %v2430, %v1201
        %v2716 = vmul.bf16 %v2431, %v1210
        %v2717 = vmul.bf16 %v2432, %v1219
        %v2718 = vmul.bf16 %v2433, %v1228
        %v2719 = vmul.bf16 %v2434, %v1237
        %v2720 = vmul.bf16 %v2435, %v1246
        %v2721 = vmul.bf16 %v2711, %v1245
        %s2722 = scalar_lea.vmem %s2, 12
        %v2723 = vld [vmem:[%s2722] sm:$0x3]
        %v2725 = vshrl.u32 %v2712, 16
        %v2727 = vrot.slane %v2725, 3
        %v2728 = vshll.u32 %v2712, 16
        %v2730 = vrot.slane %v2728, 4
        %v2731 = vor.u32 %v2727, %v2730
        %v2733 = vshrl.u32 %v2713, 16
        %v2735 = vrot.slane %v2733, 3
        %v2736 = vshll.u32 %v2713, 16
        %v2738 = vrot.slane %v2736, 4
        %v2739 = vor.u32 %v2735, %v2738
        %v2740 = vsel %vm1435, %v2731, %v2739
        %v2742 = vshrl.u32 %v2714, 16
        %v2744 = vrot.slane %v2742, 3
        %v2745 = vshll.u32 %v2714, 16
        %v2747 = vrot.slane %v2745, 4
        %v2748 = vor.u32 %v2744, %v2747
        %v2749 = vsel %vm1435, %v2739, %v2748
        %v2751 = vshrl.u32 %v2715, 16
        %v2753 = vrot.slane %v2751, 3
        %v2754 = vshll.u32 %v2715, 16
        %v2756 = vrot.slane %v2754, 4
        %v2757 = vor.u32 %v2753, %v2756
        %v2758 = vsel %vm1435, %v2748, %v2757
        %v2760 = vshrl.u32 %v2716, 16
        %v2762 = vrot.slane %v2760, 3
        %v2763 = vshll.u32 %v2716, 16
        %v2765 = vrot.slane %v2763, 4
        %v2766 = vor.u32 %v2762, %v2765
        %v2767 = vsel %vm1435, %v2757, %v2766
        %v2769 = vshrl.u32 %v2717, 16
        %v2771 = vrot.slane %v2769, 3
        %v2772 = vshll.u32 %v2717, 16
        %v2774 = vrot.slane %v2772, 4
        %v2775 = vor.u32 %v2771, %v2774
        %v2776 = vsel %vm1435, %v2766, %v2775
        %v2778 = vshrl.u32 %v2718, 16
        %v2780 = vrot.slane %v2778, 3
        %v2781 = vshll.u32 %v2718, 16
        %v2783 = vrot.slane %v2781, 4
        %v2784 = vor.u32 %v2780, %v2783
        %v2785 = vsel %vm1435, %v2775, %v2784
        %v2787 = vshrl.u32 %v2719, 16
        %v2789 = vrot.slane %v2787, 3
        %v2790 = vshll.u32 %v2719, 16
        %v2792 = vrot.slane %v2790, 4
        %v2793 = vor.u32 %v2789, %v2792
        %v2794 = vsel %vm1435, %v2784, %v2793
        %v2796 = vshrl.u32 %v2720, 16
        %v2798 = vrot.slane %v2796, 3
        %v2799 = vshll.u32 %v2720, 16
        %v2801 = vrot.slane %v2799, 4
        %v2802 = vor.u32 %v2798, %v2801
        %v2803 = vsel %vm1435, %v2793, %v2802
        %v2805 = vshrl.u32 %v2721, 16
        %v2807 = vrot.slane %v2805, 3
        %v2808 = vshll.u32 %v2721, 16
        %v2810 = vrot.slane %v2808, 4
        %v2811 = vor.u32 %v2807, %v2810
        %v2812 = vsel %vm1435, %v2802, %v2811
        %v2814 = vsel %vm1067, %v2740, 0
        %v2817 = vsel %vm1067, %v2749, 0
        %v2820 = vsel %vm1067, %v2758, 0
        %v2823 = vsel %vm1067, %v2767, 0
        %v2826 = vsel %vm1067, %v2776, 0
        %v2829 = vsel %vm1067, %v2785, 0
        %v2832 = vsel %vm1067, %v2794, 0
        %v2835 = vsel %vm1067, %v2803, 0
        %v2838 = vsel %vm1067, %v2812, 0
        %v2841 = vsel %vm1328, %v2723, 0
        %2843 = vmatprep.subr.bf16.mxu0 0
        %2844 = vmatpush1.bf16.msra.mxu0 %v2841
        %2845 = vmatprep.subr.bf16.mxu0 0
        %2846 = vmatpush1.bf16.msra.mxu0 0
        %2847 = vmatprep.subr.bf16.mxu0 0
        %2848 = vmatpush1.bf16.msra.mxu0 0
        %2849 = vmatprep.subr.bf16.mxu0 0
        %2850 = vmatpush1.bf16.msra.mxu0 0
        %2851 = vmatprep.subr.bf16.mxu0 0
        %2852 = vmatpush1.bf16.msra.mxu0 0
        %2853 = vmatprep.subr.bf16.mxu0 0
        %2854 = vmatpush1.bf16.msra.mxu0 0
        %2855 = vmatprep.subr.bf16.mxu0 0
        %2856 = vmatpush1.bf16.msra.mxu0 0
        %2857 = vmatprep.subr.bf16.mxu0 0
        %2858 = vmatpush1.bf16.msra.mxu0 0
        %2859 = vmatprep.subr.bf16.mxu0 0
        %2860 = vmatpush1.bf16.msra.mxu0 0
        %2861 = vmatprep.subr.bf16.mxu0 0
        %2862 = vmatpush1.bf16.msra.mxu0 0
        %2863 = vmatprep.subr.bf16.mxu0 0
        %2864 = vmatpush1.bf16.msra.mxu0 0
        %2865 = vmatprep.subr.bf16.mxu0 0
        %2866 = vmatpush1.bf16.msra.mxu0 0
        %2867 = vmatprep.subr.bf16.mxu0 0
        %2868 = vmatpush1.bf16.msra.mxu0 0
        %2869 = vmatprep.subr.bf16.mxu0 0
        %2870 = vmatpush1.bf16.msra.mxu0 0
        %2871 = vmatprep.subr.bf16.mxu0 0
        %2872 = vmatpush1.bf16.msra.mxu0 0
        %2873 = vmatprep.subr.bf16.mxu0 0
        %2874 = vmatpush1.bf16.msra.mxu0 0
        %2875 = vmatprep.mubr.bf16.mxu0 0
        %2876 = vmatmul.mubr.bf16.gmra.mrb[0].mxu0 %v2814
        %v2877 = vpop.f32.mrb[0].mxu0
        %v2878 = vadd.f32 0.0, %v2877
        %v2879 = vpop.f32.mrb[0].mxu0
        %v2880 = vpop.f32.mrb[0].mxu0
        %v2881 = vadd.f32 0.0, %v2880
        %v2882 = vpop.f32.mrb[0].mxu0
        %2883 = vmatprep.mubr.bf16.mxu0 0
        %2884 = vmatmul.mubr.bf16.gmra.mrb[0].mxu0 %v2817
        %v2885 = vpop.f32.mrb[0].mxu0
        %v2886 = vadd.f32 0.0, %v2885
        %v2887 = vpop.f32.mrb[0].mxu0
        %v2888 = vpop.f32.mrb[0].mxu0
        %v2889 = vadd.f32 0.0, %v2888
        %v2890 = vpop.f32.mrb[0].mxu0
        %2891 = vmatprep.mubr.bf16.mxu0 0
        %2892 = vmatmul.mubr.bf16.gmra.mrb[0].mxu0 %v2820
        %v2893 = vpop.f32.mrb[0].mxu0
        %v2894 = vadd.f32 0.0, %v2893
        %v2895 = vpop.f32.mrb[0].mxu0
        %v2896 = vpop.f32.mrb[0].mxu0
        %v2897 = vadd.f32 0.0, %v2896
        %v2898 = vpop.f32.mrb[0].mxu0
        %2899 = vmatprep.mubr.bf16.mxu0 0
        %2900 = vmatmul.mubr.bf16.gmra.mrb[0].mxu0 %v2823
        %v2901 = vpop.f32.mrb[0].mxu0
        %v2902 = vadd.f32 0.0, %v2901
        %v2903 = vpop.f32.mrb[0].mxu0
        %v2904 = vpop.f32.mrb[0].mxu0
        %v2905 = vadd.f32 0.0, %v2904
        %v2906 = vpop.f32.mrb[0].mxu0
        %2907 = vmatprep.mubr.bf16.mxu0 0
        %2908 = vmatmul.mubr.bf16.gmra.mrb[0].mxu0 %v2826
        %v2909 = vpop.f32.mrb[0].mxu0
        %v2910 = vpop.f32.mrb[0].mxu0
        %v2911 = vpop.f32.mrb[0].mxu0
        %v2912 = vpop.f32.mrb[0].mxu0
        %2913 = vmatprep.mubr.bf16.mxu0 0
        %2914 = vmatmul.mubr.bf16.gmra.mrb[0].mxu0 %v2829
        %v2915 = vpop.f32.mrb[0].mxu0
        %v2916 = vadd.f32 0.0, %v2915
        %v2917 = vpop.f32.mrb[0].mxu0
        %v2918 = vpop.f32.mrb[0].mxu0
        %v2919 = vadd.f32 0.0, %v2918
        %v2920 = vpop.f32.mrb[0].mxu0
        %2921 = vmatprep.mubr.bf16.mxu0 0
        %2922 = vmatmul.mubr.bf16.gmra.mrb[0].mxu0 %v2832
        %v2923 = vpop.f32.mrb[0].mxu0
        %v2924 = vadd.f32 0.0, %v2923
        %v2925 = vpop.f32.mrb[0].mxu0
        %v2926 = vpop.f32.mrb[0].mxu0
        %v2927 = vadd.f32 0.0, %v2926
        %v2928 = vpop.f32.mrb[0].mxu0
        %2929 = vmatprep.mubr.bf16.mxu0 0
        %2930 = vmatmul.mubr.bf16.gmra.mrb[0].mxu0 %v2835
        %v2931 = vpop.f32.mrb[0].mxu0
        %v2932 = vadd.f32 0.0, %v2931
        %v2933 = vpop.f32.mrb[0].mxu0
        %v2934 = vpop.f32.mrb[0].mxu0
        %v2935 = vadd.f32 0.0, %v2934
        %v2936 = vpop.f32.mrb[0].mxu0
        %2937 = vmatprep.mubr.bf16.mxu0 0
        %2938 = vmatmul.mubr.bf16.gmra.mrb[0].mxu0 %v2838
        %v2939 = vpop.f32.mrb[0].mxu0
        %v2940 = vadd.f32 0.0, %v2939
        %v2941 = vpop.f32.mrb[0].mxu0
        %v2942 = vpop.f32.mrb[0].mxu0
        %v2943 = vadd.f32 0.0, %v2942
        %v2944 = vpop.f32.mrb[0].mxu0
        %2945 = vdwg.mxu0
        %v2946 = vadd.f32 %v2694, %v2878
        %v2947 = vadd.f32 %v2695, %v2881
        %v2948 = vadd.f32 %v2696, %v2886
        %v2949 = vadd.f32 %v2697, %v2889
        %v2950 = vadd.f32 %v2698, %v2894
        %v2951 = vadd.f32 %v2699, %v2897
        %v2952 = vadd.f32 %v2700, %v2902
        %v2953 = vadd.f32 %v2701, %v2905
        %v2954 = vadd.f32 %v2702, %v2916
        %v2955 = vadd.f32 %v2703, %v2919
        %v2956 = vadd.f32 %v2704, %v2924
        %v2957 = vadd.f32 %v2705, %v2927
        %v2958 = vadd.f32 %v2706, %v2932
        %v2959 = vadd.f32 %v2707, %v2935
        %v2960 = vadd.f32 %v2708, %v2940
        %v2961 = vadd.f32 %v2709, %v2943
        %v2962 = vld [vmem:[#allocation2 + $0x8] sm:$0xf0]
        %s2963 = scalar_lea.vmem %s2, 14
        %v2964 = vld [vmem:[%s2963] sm:$0x3]
        %v2975 = vrot.slane %v2962, 4
        %v2976 = vrot.slane %v2428, 4
        %v2977 = vsel %vm1281, %v2975, %v2976
        %v2978 = vrot.slane %v2429, 4
        %v2979 = vsel %vm1281, %v2976, %v2978
        %v2980 = vrot.slane %v2430, 4
        %v2981 = vsel %vm1281, %v2978, %v2980
        %v2982 = vrot.slane %v2431, 4
        %v2983 = vsel %vm1281, %v2980, %v2982
        %v2984 = vrot.slane %v2432, 4
        %v2985 = vsel %vm1281, %v2982, %v2984
        %v2986 = vrot.slane %v2433, 4
        %v2987 = vsel %vm1281, %v2984, %v2986
        %v2988 = vrot.slane %v2434, 4
        %v2989 = vsel %vm1281, %v2986, %v2988
        %v2990 = vrot.slane %v2435, 4
        %v2991 = vsel %vm1281, %v2988, %v2990
        %v2992 = vrot.slane %v2711, 4
        %v2993 = vsel %vm1281, %v2990, %v2992
        %v2995 = vsel %vm1067, %v2977, 0
        %v2998 = vsel %vm1067, %v2979, 0
        %v3001 = vsel %vm1067, %v2981, 0
        %v3004 = vsel %vm1067, %v2983, 0
        %v3007 = vsel %vm1067, %v2985, 0
        %v3010 = vsel %vm1067, %v2987, 0
        %v3013 = vsel %vm1067, %v2989, 0
        %v3016 = vsel %vm1067, %v2991, 0
        %v3019 = vsel %vm1067, %v2993, 0
        %v3022 = vsel %vm1328, %v2964, 0
        %3024 = vmatprep.subr.bf16.mxu0 0
        %3025 = vmatpush1.bf16.msra.mxu0 %v3022
        %3026 = vmatprep.subr.bf16.mxu0 0
        %3027 = vmatpush1.bf16.msra.mxu0 0
        %3028 = vmatprep.subr.bf16.mxu0 0
        %3029 = vmatpush1.bf16.msra.mxu0 0
        %3030 = vmatprep.subr.bf16.mxu0 0
        %3031 = vmatpush1.bf16.msra.mxu0 0
        %3032 = vmatprep.subr.bf16.mxu0 0
        %3033 = vmatpush1.bf16.msra.mxu0 0
        %3034 = vmatprep.subr.bf16.mxu0 0
        %3035 = vmatpush1.bf16.msra.mxu0 0
        %3036 = vmatprep.subr.bf16.mxu0 0
        %3037 = vmatpush1.bf16.msra.mxu0 0
        %3038 = vmatprep.subr.bf16.mxu0 0
        %3039 = vmatpush1.bf16.msra.mxu0 0
        %3040 = vmatprep.subr.bf16.mxu0 0
        %3041 = vmatpush1.bf16.msra.mxu0 0
        %3042 = vmatprep.subr.bf16.mxu0 0
        %3043 = vmatpush1.bf16.msra.mxu0 0
        %3044 = vmatprep.subr.bf16.mxu0 0
        %3045 = vmatpush1.bf16.msra.mxu0 0
        %3046 = vmatprep.subr.bf16.mxu0 0
        %3047 = vmatpush1.bf16.msra.mxu0 0
        %3048 = vmatprep.subr.bf16.mxu0 0
        %3049 = vmatpush1.bf16.msra.mxu0 0
        %3050 = vmatprep.subr.bf16.mxu0 0
        %3051 = vmatpush1.bf16.msra.mxu0 0
        %3052 = vmatprep.subr.bf16.mxu0 0
        %3053 = vmatpush1.bf16.msra.mxu0 0
        %3054 = vmatprep.subr.bf16.mxu0 0
        %3055 = vmatpush1.bf16.msra.mxu0 0
        %3056 = vmatprep.mubr.bf16.mxu0 0
        %3057 = vmatmul.mubr.bf16.gmra.mrb[0].mxu0 %v2995
        %v3058 = vpop.f32.mrb[0].mxu0
        %v3059 = vadd.f32 0.0, %v3058
        %v3060 = vpop.f32.mrb[0].mxu0
        %v3061 = vpop.f32.mrb[0].mxu0
        %v3062 = vadd.f32 0.0, %v3061
        %v3063 = vpop.f32.mrb[0].mxu0
        %3064 = vmatprep.mubr.bf16.mxu0 0
        %3065 = vmatmul.mubr.bf16.gmra.mrb[0].mxu0 %v2998
        %v3066 = vpop.f32.mrb[0].mxu0
        %v3067 = vadd.f32 0.0, %v3066
        %v3068 = vpop.f32.mrb[0].mxu0
        %v3069 = vpop.f32.mrb[0].mxu0
        %v3070 = vadd.f32 0.0, %v3069
        %v3071 = vpop.f32.mrb[0].mxu0
        %3072 = vmatprep.mubr.bf16.mxu0 0
        %3073 = vmatmul.mubr.bf16.gmra.mrb[0].mxu0 %v3001
        %v3074 = vpop.f32.mrb[0].mxu0
        %v3075 = vadd.f32 0.0, %v3074
        %v3076 = vpop.f32.mrb[0].mxu0
        %v3077 = vpop.f32.mrb[0].mxu0
        %v3078 = vadd.f32 0.0, %v3077
        %v3079 = vpop.f32.mrb[0].mxu0
        %3080 = vmatprep.mubr.bf16.mxu0 0
        %3081 = vmatmul.mubr.bf16.gmra.mrb[0].mxu0 %v3004
        %v3082 = vpop.f32.mrb[0].mxu0
        %v3083 = vadd.f32 0.0, %v3082
        %v3084 = vpop.f32.mrb[0].mxu0
        %v3085 = vpop.f32.mrb[0].mxu0
        %v3086 = vadd.f32 0.0, %v3085
        %v3087 = vpop.f32.mrb[0].mxu0
        %3088 = vmatprep.mubr.bf16.mxu0 0
        %3089 = vmatmul.mubr.bf16.gmra.mrb[0].mxu0 %v3007
        %v3090 = vpop.f32.mrb[0].mxu0
        %v3091 = vpop.f32.mrb[0].mxu0
        %v3092 = vpop.f32.mrb[0].mxu0
        %v3093 = vpop.f32.mrb[0].mxu0
        %3094 = vmatprep.mubr.bf16.mxu0 0
        %3095 = vmatmul.mubr.bf16.gmra.mrb[0].mxu0 %v3010
        %v3096 = vpop.f32.mrb[0].mxu0
        %v3097 = vadd.f32 0.0, %v3096
        %v3098 = vpop.f32.mrb[0].mxu0
        %v3099 = vpop.f32.mrb[0].mxu0
        %v3100 = vadd.f32 0.0, %v3099
        %v3101 = vpop.f32.mrb[0].mxu0
        %3102 = vmatprep.mubr.bf16.mxu0 0
        %3103 = vmatmul.mubr.bf16.gmra.mrb[0].mxu0 %v3013
        %v3104 = vpop.f32.mrb[0].mxu0
        %v3105 = vadd.f32 0.0, %v3104
        %v3106 = vpop.f32.mrb[0].mxu0
        %v3107 = vpop.f32.mrb[0].mxu0
        %v3108 = vadd.f32 0.0, %v3107
        %v3109 = vpop.f32.mrb[0].mxu0
        %3110 = vmatprep.mubr.bf16.mxu0 0
        %3111 = vmatmul.mubr.bf16.gmra.mrb[0].mxu0 %v3016
        %v3112 = vpop.f32.mrb[0].mxu0
        %v3113 = vadd.f32 0.0, %v3112
        %v3114 = vpop.f32.mrb[0].mxu0
        %v3115 = vpop.f32.mrb[0].mxu0
        %v3116 = vadd.f32 0.0, %v3115
        %v3117 = vpop.f32.mrb[0].mxu0
        %3118 = vmatprep.mubr.bf16.mxu0 0
        %3119 = vmatmul.mubr.bf16.gmra.mrb[0].mxu0 %v3019
        %v3120 = vpop.f32.mrb[0].mxu0
        %v3121 = vadd.f32 0.0, %v3120
        %v3122 = vpop.f32.mrb[0].mxu0
        %v3123 = vpop.f32.mrb[0].mxu0
        %v3124 = vadd.f32 0.0, %v3123
        %v3125 = vpop.f32.mrb[0].mxu0
        %3126 = vdwg.mxu0
        %v3127 = vadd.f32 %v2946, %v3059
        %v3128 = vadd.f32 %v2947, %v3062
        %v3129 = vadd.f32 %v2948, %v3067
        %v3130 = vadd.f32 %v2949, %v3070
        %v3131 = vadd.f32 %v2950, %v3075
        %v3132 = vadd.f32 %v2951, %v3078
        %v3133 = vadd.f32 %v2952, %v3083
        %v3134 = vadd.f32 %v2953, %v3086
        %v3135 = vadd.f32 %v2954, %v3097
        %v3136 = vadd.f32 %v2955, %v3100
        %v3137 = vadd.f32 %v2956, %v3105
        %v3138 = vadd.f32 %v2957, %v3108
        %v3139 = vadd.f32 %v2958, %v3113
        %v3140 = vadd.f32 %v2959, %v3116
        %v3141 = vadd.f32 %v2960, %v3121
        %v3142 = vadd.f32 %v2961, %v3124
        %v3143 = vld [vmem:[#allocation2 + $0x50] sm:$0x1f]
        %v3144 = vmul.bf16 %v2962, %v1666
        %v3145 = vmul.bf16 %v2428, %v1675
        %v3146 = vmul.bf16 %v2429, %v1684
        %v3147 = vmul.bf16 %v2430, %v1693
        %v3148 = vmul.bf16 %v2431, %v1702
        %v3149 = vmul.bf16 %v2432, %v1711
        %v3150 = vmul.bf16 %v2433, %v1720
        %v3151 = vmul.bf16 %v2434, %v1729
        %v3152 = vmul.bf16 %v2435, %v1738
        %v3153 = vmul.bf16 %v3143, %v1737
        %s3154 = scalar_lea.vmem %s2, 16
        %v3155 = vld [vmem:[%s3154] sm:$0x3]
        %v3157 = vshrl.u32 %v3144, 16
        %v3159 = vrot.slane %v3157, 4
        %v3160 = vshll.u32 %v3144, 16
        %v3162 = vrot.slane %v3160, 5
        %v3163 = vor.u32 %v3159, %v3162
        %v3165 = vshrl.u32 %v3145, 16
        %v3167 = vrot.slane %v3165, 4
        %v3168 = vshll.u32 %v3145, 16
        %v3170 = vrot.slane %v3168, 5
        %v3171 = vor.u32 %v3167, %v3170
        %v3172 = vsel %vm1166, %v3163, %v3171
        %v3174 = vshrl.u32 %v3146, 16
        %v3176 = vrot.slane %v3174, 4
        %v3177 = vshll.u32 %v3146, 16
        %v3179 = vrot.slane %v3177, 5
        %v3180 = vor.u32 %v3176, %v3179
        %v3181 = vsel %vm1166, %v3171, %v3180
        %v3183 = vshrl.u32 %v3147, 16
        %v3185 = vrot.slane %v3183, 4
        %v3186 = vshll.u32 %v3147, 16
        %v3188 = vrot.slane %v3186, 5
        %v3189 = vor.u32 %v3185, %v3188
        %v3190 = vsel %vm1166, %v3180, %v3189
        %v3192 = vshrl.u32 %v3148, 16
        %v3194 = vrot.slane %v3192, 4
        %v3195 = vshll.u32 %v3148, 16
        %v3197 = vrot.slane %v3195, 5
        %v3198 = vor.u32 %v3194, %v3197
        %v3199 = vsel %vm1166, %v3189, %v3198
        %v3201 = vshrl.u32 %v3149, 16
        %v3203 = vrot.slane %v3201, 4
        %v3204 = vshll.u32 %v3149, 16
        %v3206 = vrot.slane %v3204, 5
        %v3207 = vor.u32 %v3203, %v3206
        %v3208 = vsel %vm1166, %v3198, %v3207
        %v3210 = vshrl.u32 %v3150, 16
        %v3212 = vrot.slane %v3210, 4
        %v3213 = vshll.u32 %v3150, 16
        %v3215 = vrot.slane %v3213, 5
        %v3216 = vor.u32 %v3212, %v3215
        %v3217 = vsel %vm1166, %v3207, %v3216
        %v3219 = vshrl.u32 %v3151, 16
        %v3221 = vrot.slane %v3219, 4
        %v3222 = vshll.u32 %v3151, 16
        %v3224 = vrot.slane %v3222, 5
        %v3225 = vor.u32 %v3221, %v3224
        %v3226 = vsel %vm1166, %v3216, %v3225
        %v3228 = vshrl.u32 %v3152, 16
        %v3230 = vrot.slane %v3228, 4
        %v3231 = vshll.u32 %v3152, 16
        %v3233 = vrot.slane %v3231, 5
        %v3234 = vor.u32 %v3230, %v3233
        %v3235 = vsel %vm1166, %v3225, %v3234
        %v3237 = vshrl.u32 %v3153, 16
        %v3239 = vrot.slane %v3237, 4
        %v3240 = vshll.u32 %v3153, 16
        %v3242 = vrot.slane %v3240, 5
        %v3243 = vor.u32 %v3239, %v3242
        %v3244 = vsel %vm1166, %v3234, %v3243
        %v3246 = vsel %vm1067, %v3172, 0
        %v3249 = vsel %vm1067, %v3181, 0
        %v3252 = vsel %vm1067, %v3190, 0
        %v3255 = vsel %vm1067, %v3199, 0
        %v3258 = vsel %vm1067, %v3208, 0
        %v3261 = vsel %vm1067, %v3217, 0
        %v3264 = vsel %vm1067, %v3226, 0
        %v3267 = vsel %vm1067, %v3235, 0
        %v3270 = vsel %vm1067, %v3244, 0
        %v3273 = vsel %vm1328, %v3155, 0
        %3275 = vmatprep.subr.bf16.mxu0 0
        %3276 = vmatpush1.bf16.msra.mxu0 %v3273
        %3277 = vmatprep.subr.bf16.mxu0 0
        %3278 = vmatpush1.bf16.msra.mxu0 0
        %3279 = vmatprep.subr.bf16.mxu0 0
        %3280 = vmatpush1.bf16.msra.mxu0 0
        %3281 = vmatprep.subr.bf16.mxu0 0
        %3282 = vmatpush1.bf16.msra.mxu0 0
        %3283 = vmatprep.subr.bf16.mxu0 0
        %3284 = vmatpush1.bf16.msra.mxu0 0
        %3285 = vmatprep.subr.bf16.mxu0 0
        %3286 = vmatpush1.bf16.msra.mxu0 0
        %3287 = vmatprep.subr.bf16.mxu0 0
        %3288 = vmatpush1.bf16.msra.mxu0 0
        %3289 = vmatprep.subr.bf16.mxu0 0
        %3290 = vmatpush1.bf16.msra.mxu0 0
        %3291 = vmatprep.subr.bf16.mxu0 0
        %3292 = vmatpush1.bf16.msra.mxu0 0
        %3293 = vmatprep.subr.bf16.mxu0 0
        %3294 = vmatpush1.bf16.msra.mxu0 0
        %3295 = vmatprep.subr.bf16.mxu0 0
        %3296 = vmatpush1.bf16.msra.mxu0 0
        %3297 = vmatprep.subr.bf16.mxu0 0
        %3298 = vmatpush1.bf16.msra.mxu0 0
        %3299 = vmatprep.subr.bf16.mxu0 0
        %3300 = vmatpush1.bf16.msra.mxu0 0
        %3301 = vmatprep.subr.bf16.mxu0 0
        %3302 = vmatpush1.bf16.msra.mxu0 0
        %3303 = vmatprep.subr.bf16.mxu0 0
        %3304 = vmatpush1.bf16.msra.mxu0 0
        %3305 = vmatprep.subr.bf16.mxu0 0
        %3306 = vmatpush1.bf16.msra.mxu0 0
        %3307 = vmatprep.mubr.bf16.mxu0 0
        %3308 = vmatmul.mubr.bf16.gmra.mrb[0].mxu0 %v3246
        %v3309 = vpop.f32.mrb[0].mxu0
        %v3310 = vadd.f32 0.0, %v3309
        %v3311 = vpop.f32.mrb[0].mxu0
        %v3312 = vpop.f32.mrb[0].mxu0
        %v3313 = vadd.f32 0.0, %v3312
        %v3314 = vpop.f32.mrb[0].mxu0
        %3315 = vmatprep.mubr.bf16.mxu0 0
        %3316 = vmatmul.mubr.bf16.gmra.mrb[0].mxu0 %v3249
        %v3317 = vpop.f32.mrb[0].mxu0
        %v3318 = vadd.f32 0.0, %v3317
        %v3319 = vpop.f32.mrb[0].mxu0
        %v3320 = vpop.f32.mrb[0].mxu0
        %v3321 = vadd.f32 0.0, %v3320
        %v3322 = vpop.f32.mrb[0].mxu0
        %3323 = vmatprep.mubr.bf16.mxu0 0
        %3324 = vmatmul.mubr.bf16.gmra.mrb[0].mxu0 %v3252
        %v3325 = vpop.f32.mrb[0].mxu0
        %v3326 = vadd.f32 0.0, %v3325
        %v3327 = vpop.f32.mrb[0].mxu0
        %v3328 = vpop.f32.mrb[0].mxu0
        %v3329 = vadd.f32 0.0, %v3328
        %v3330 = vpop.f32.mrb[0].mxu0
        %3331 = vmatprep.mubr.bf16.mxu0 0
        %3332 = vmatmul.mubr.bf16.gmra.mrb[0].mxu0 %v3255
        %v3333 = vpop.f32.mrb[0].mxu0
        %v3334 = vadd.f32 0.0, %v3333
        %v3335 = vpop.f32.mrb[0].mxu0
        %v3336 = vpop.f32.mrb[0].mxu0
        %v3337 = vadd.f32 0.0, %v3336
        %v3338 = vpop.f32.mrb[0].mxu0
        %3339 = vmatprep.mubr.bf16.mxu0 0
        %3340 = vmatmul.mubr.bf16.gmra.mrb[0].mxu0 %v3258
        %v3341 = vpop.f32.mrb[0].mxu0
        %v3342 = vpop.f32.mrb[0].mxu0
        %v3343 = vpop.f32.mrb[0].mxu0
        %v3344 = vpop.f32.mrb[0].mxu0
        %3345 = vmatprep.mubr.bf16.mxu0 0
        %3346 = vmatmul.mubr.bf16.gmra.mrb[0].mxu0 %v3261
        %v3347 = vpop.f32.mrb[0].mxu0
        %v3348 = vadd.f32 0.0, %v3347
        %v3349 = vpop.f32.mrb[0].mxu0
        %v3350 = vpop.f32.mrb[0].mxu0
        %v3351 = vadd.f32 0.0, %v3350
        %v3352 = vpop.f32.mrb[0].mxu0
        %3353 = vmatprep.mubr.bf16.mxu0 0
        %3354 = vmatmul.mubr.bf16.gmra.mrb[0].mxu0 %v3264
        %v3355 = vpop.f32.mrb[0].mxu0
        %v3356 = vadd.f32 0.0, %v3355
        %v3357 = vpop.f32.mrb[0].mxu0
        %v3358 = vpop.f32.mrb[0].mxu0
        %v3359 = vadd.f32 0.0, %v3358
        %v3360 = vpop.f32.mrb[0].mxu0
        %3361 = vmatprep.mubr.bf16.mxu0 0
        %3362 = vmatmul.mubr.bf16.gmra.mrb[0].mxu0 %v3267
        %v3363 = vpop.f32.mrb[0].mxu0
        %v3364 = vadd.f32 0.0, %v3363
        %v3365 = vpop.f32.mrb[0].mxu0
        %v3366 = vpop.f32.mrb[0].mxu0
        %v3367 = vadd.f32 0.0, %v3366
        %v3368 = vpop.f32.mrb[0].mxu0
        %3369 = vmatprep.mubr.bf16.mxu0 0
        %3370 = vmatmul.mubr.bf16.gmra.mrb[0].mxu0 %v3270
        %v3371 = vpop.f32.mrb[0].mxu0
        %v3372 = vadd.f32 0.0, %v3371
        %v3373 = vpop.f32.mrb[0].mxu0
        %v3374 = vpop.f32.mrb[0].mxu0
        %v3375 = vadd.f32 0.0, %v3374
        %v3376 = vpop.f32.mrb[0].mxu0
        %3377 = vdwg.mxu0
        %v3378 = vadd.f32 %v3127, %v3310
        %v3379 = vadd.f32 %v3128, %v3313
        %v3380 = vadd.f32 %v3129, %v3318
        %v3381 = vadd.f32 %v3130, %v3321
        %v3382 = vadd.f32 %v3131, %v3326
        %v3383 = vadd.f32 %v3132, %v3329
        %v3384 = vadd.f32 %v3133, %v3334
        %v3385 = vadd.f32 %v3134, %v3337
        %v3386 = vadd.f32 %v3135, %v3348
        %v3387 = vadd.f32 %v3136, %v3351
        %v3388 = vadd.f32 %v3137, %v3356
        %v3389 = vadd.f32 %v3138, %v3359
        %v3390 = vadd.f32 %v3139, %v3364
        %v3391 = vadd.f32 %v3140, %v3367
        %v3392 = vadd.f32 %v3141, %v3372
        %v3393 = vadd.f32 %v3142, %v3375
        %v3394 = vld [vmem:[%s3] sm:$0x1]
        %v3396 = vlaneseq
        %v3397 = vshrl.u32 %v3396, 7
        %v3398 = vsub.s32 0, %v3397
        %v3399 = vrot.slane %v3394, %v3398
        %v3401 = vadd.f32 %v3378, %v3399
        %v3402 = vadd.f32 %v3379, %v3399
        %v3403 = vadd.f32 %v3380, %v3399
        %v3404 = vadd.f32 %v3381, %v3399
        %v3405 = vadd.f32 %v3382, %v3399
        %v3406 = vadd.f32 %v3383, %v3399
        %v3407 = vadd.f32 %v3384, %v3399
        %v3408 = vadd.f32 %v3385, %v3399
        %v3409 = vadd.f32 %v3386, %v3399
        %v3410 = vadd.f32 %v3387, %v3399
        %v3411 = vadd.f32 %v3388, %v3399
        %v3412 = vadd.f32 %v3389, %v3399
        %v3413 = vadd.f32 %v3390, %v3399
        %v3414 = vadd.f32 %v3391, %v3399
        %v3415 = vadd.f32 %v3392, %v3399
        %v3416 = vadd.f32 %v3393, %v3399
        %v3417 = vmax.f32 %v3401, 0.0
        %v3418 = vmax.f32 %v3402, 0.0
        %v3419 = vmax.f32 %v3403, 0.0
        %v3420 = vmax.f32 %v3404, 0.0
        %v3421 = vmax.f32 %v3405, 0.0
        %v3422 = vmax.f32 %v3406, 0.0
        %v3423 = vmax.f32 %v3407, 0.0
        %v3424 = vmax.f32 %v3408, 0.0
        %v3425 = vmax.f32 %v3409, 0.0
        %v3426 = vmax.f32 %v3410, 0.0
        %v3427 = vmax.f32 %v3411, 0.0
        %v3428 = vmax.f32 %v3412, 0.0
        %v3429 = vmax.f32 %v3413, 0.0
        %v3430 = vmax.f32 %v3414, 0.0
        %v3431 = vmax.f32 %v3415, 0.0
        %v3432 = vmax.f32 %v3416, 0.0
        %v3433 = vpack.c.bf16 %v3418, %v3417
        %v3434 = vpack.c.bf16 %v3420, %v3419
        %v3435 = vpack.c.bf16 %v3422, %v3421
        %v3436 = vpack.c.bf16 %v3424, %v3423
        %3437 = vst.msk [vmem:[#allocation3 + $0x8] sm:$0xff] %vm1071, %v3433
        %3438 = vst.msk [vmem:[#allocation3 + $0x10] sm:$0xff] %vm1071, %v3434
        %3439 = vst.msk [vmem:[#allocation3 + $0x18] sm:$0xff] %vm1071, %v3435
        %3440 = vst.msk [vmem:[#allocation3 + $0x20] sm:$0xff] %vm1071, %v3436
        %v3441 = vpack.c.bf16 %v3426, %v3425
        %v3442 = vpack.c.bf16 %v3428, %v3427
        %v3443 = vpack.c.bf16 %v3430, %v3429
        %v3444 = vpack.c.bf16 %v3432, %v3431
        %3445 = vst.msk [vmem:[#allocation3 + $0x30] sm:$0xff] %vm1071, %v3441
        %3446 = vst.msk [vmem:[#allocation3 + $0x38] sm:$0xff] %vm1071, %v3442
        %3447 = vst.msk [vmem:[#allocation3 + $0x40] sm:$0xff] %vm1071, %v3443
        %3448 = vst.msk [vmem:[#allocation3 + $0x48] sm:$0xff] %vm1071, %v3444
        %v3449 = vld [vmem:[#allocation3] sm:$0xf8]
        %v3450 = vld [vmem:[#allocation3 + $0x8] sm:$0xff]
        %v3451 = vld [vmem:[#allocation3 + $0x10] sm:$0xff]
        %v3452 = vld [vmem:[#allocation3 + $0x18] sm:$0xff]
        %v3453 = vld [vmem:[#allocation3 + $0x20] sm:$0xff]
        %v3454 = vld [vmem:[#allocation3 + $0x28] sm:$0xff]
        %v3455 = vld [vmem:[#allocation3 + $0x30] sm:$0xff]
        %v3456 = vld [vmem:[#allocation3 + $0x38] sm:$0xff]
        %v3457 = vld [vmem:[#allocation3 + $0x40] sm:$0xff]
        %v3458 = vld [vmem:[#allocation3 + $0x48] sm:$0xf]
        %v3459 = vld [vmem:[%s4] sm:$0xf]
        %v3460 = vld [vmem:[%s4 + $0x4] sm:$0xf]
        %v3461 = vld [vmem:[%s4 + $0x8] sm:$0xf]
        %v3462 = vld [vmem:[%s4 + $0xc] sm:$0xf]
        %v3464 = vshrl.u32 %v3449, 16
        %v3466 = vrot.slane %v3464, 3
        %v3467 = vshll.u32 %v3449, 16
        %v3469 = vrot.slane %v3467, 4
        %v3470 = vor.u32 %v3466, %v3469
        %v3472 = vshrl.u32 %v3450, 16
        %v3474 = vrot.slane %v3472, 3
        %v3475 = vshll.u32 %v3450, 16
        %v3477 = vrot.slane %v3475, 4
        %v3478 = vor.u32 %v3474, %v3477
        %v3479 = vsel %vm1435, %v3470, %v3478
        %v3481 = vshrl.u32 %v3451, 16
        %v3483 = vrot.slane %v3481, 3
        %v3484 = vshll.u32 %v3451, 16
        %v3486 = vrot.slane %v3484, 4
        %v3487 = vor.u32 %v3483, %v3486
        %v3488 = vsel %vm1435, %v3478, %v3487
        %v3490 = vshrl.u32 %v3452, 16
        %v3492 = vrot.slane %v3490, 3
        %v3493 = vshll.u32 %v3452, 16
        %v3495 = vrot.slane %v3493, 4
        %v3496 = vor.u32 %v3492, %v3495
        %v3497 = vsel %vm1435, %v3487, %v3496
        %v3499 = vshrl.u32 %v3453, 16
        %v3501 = vrot.slane %v3499, 3
        %v3502 = vshll.u32 %v3453, 16
        %v3504 = vrot.slane %v3502, 4
        %v3505 = vor.u32 %v3501, %v3504
        %v3506 = vsel %vm1435, %v3496, %v3505
        %v3508 = vshrl.u32 %v3454, 16
        %v3510 = vrot.slane %v3508, 3
        %v3511 = vshll.u32 %v3454, 16
        %v3513 = vrot.slane %v3511, 4
        %v3514 = vor.u32 %v3510, %v3513
        %v3515 = vsel %vm1435, %v3505, %v3514
        %v3517 = vshrl.u32 %v3455, 16
        %v3519 = vrot.slane %v3517, 3
        %v3520 = vshll.u32 %v3455, 16
        %v3522 = vrot.slane %v3520, 4
        %v3523 = vor.u32 %v3519, %v3522
        %v3524 = vsel %vm1435, %v3514, %v3523
        %v3526 = vshrl.u32 %v3456, 16
        %v3528 = vrot.slane %v3526, 3
        %v3529 = vshll.u32 %v3456, 16
        %v3531 = vrot.slane %v3529, 4
        %v3532 = vor.u32 %v3528, %v3531
        %v3533 = vsel %vm1435, %v3523, %v3532
        %v3535 = vshrl.u32 %v3457, 16
        %v3537 = vrot.slane %v3535, 3
        %v3538 = vshll.u32 %v3457, 16
        %v3540 = vrot.slane %v3538, 4
        %v3541 = vor.u32 %v3537, %v3540
        %v3542 = vsel %vm1435, %v3532, %v3541
        %v3544 = vshrl.u32 %v3458, 16
        %v3546 = vrot.slane %v3544, 3
        %v3547 = vshll.u32 %v3458, 16
        %v3549 = vrot.slane %v3547, 4
        %v3550 = vor.u32 %v3546, %v3549
        %v3551 = vsel %vm1435, %v3541, %v3550
        %v3556 = vunpack.c.l.b16 %v3459
        %v3557 = vunpack.c.l.b16 %v3460
        %v3558 = vunpack.c.l.b16 %v3461
        %v3559 = vunpack.c.l.b16 %v3462
        %v3560 = vpack.c.b16 %v3557, %v3556
        %v3561 = vpack.c.b16 %v3559, %v3558
        %v3565 = vsel %vm1071, %v3479, 0
        %v3568 = vsel %vm1071, %v3488, 0
        %v3571 = vsel %vm1071, %v3497, 0
        %v3574 = vsel %vm1071, %v3506, 0
        %v3577 = vsel %vm1071, %v3515, 0
        %v3580 = vsel %vm1071, %v3524, 0
        %v3583 = vsel %vm1071, %v3533, 0
        %v3586 = vsel %vm1071, %v3542, 0
        %v3589 = vsel %vm1071, %v3551, 0
        %3591 = vmatprep.subr.bf16.mxu0 0
        %3592 = vmatpush1.bf16.msra.mxu0 %v3560
        %3593 = vmatprep.subr.bf16.mxu0 0
        %3594 = vmatpush1.bf16.msra.mxu0 %v3561
        %3595 = vmatprep.subr.bf16.mxu0 0
        %3596 = vmatpush1.bf16.msra.mxu0 0
        %3597 = vmatprep.subr.bf16.mxu0 0
        %3598 = vmatpush1.bf16.msra.mxu0 0
        %3599 = vmatprep.subr.bf16.mxu0 0
        %3600 = vmatpush1.bf16.msra.mxu0 0
        %3601 = vmatprep.subr.bf16.mxu0 0
        %3602 = vmatpush1.bf16.msra.mxu0 0
        %3603 = vmatprep.subr.bf16.mxu0 0
        %3604 = vmatpush1.bf16.msra.mxu0 0
        %3605 = vmatprep.subr.bf16.mxu0 0
        %3606 = vmatpush1.bf16.msra.mxu0 0
        %3607 = vmatprep.subr.bf16.mxu0 0
        %3608 = vmatpush1.bf16.msra.mxu0 0
        %3609 = vmatprep.subr.bf16.mxu0 0
        %3610 = vmatpush1.bf16.msra.mxu0 0
        %3611 = vmatprep.subr.bf16.mxu0 0
        %3612 = vmatpush1.bf16.msra.mxu0 0
        %3613 = vmatprep.subr.bf16.mxu0 0
        %3614 = vmatpush1.bf16.msra.mxu0 0
        %3615 = vmatprep.subr.bf16.mxu0 0
        %3616 = vmatpush1.bf16.msra.mxu0 0
        %3617 = vmatprep.subr.bf16.mxu0 0
        %3618 = vmatpush1.bf16.msra.mxu0 0
        %3619 = vmatprep.subr.bf16.mxu0 0
        %3620 = vmatpush1.bf16.msra.mxu0 0
        %3621 = vmatprep.subr.bf16.mxu0 0
        %3622 = vmatpush1.bf16.msra.mxu0 0
        %3623 = vmatprep.mubr.bf16.mxu0 0
        %3624 = vmatmul.mubr.bf16.gmra.mrb[0].mxu0 %v3565
        %v3625 = vpop.f32.mrb[0].mxu0
        %v3626 = vadd.f32 0.0, %v3625
        %v3627 = vpop.f32.mrb[0].mxu0
        %v3628 = vpop.f32.mrb[0].mxu0
        %v3629 = vadd.f32 0.0, %v3628
        %v3630 = vpop.f32.mrb[0].mxu0
        %3631 = vmatprep.mubr.bf16.mxu0 0
        %3632 = vmatmul.mubr.bf16.gmra.mrb[0].mxu0 %v3568
        %v3633 = vpop.f32.mrb[0].mxu0
        %v3634 = vadd.f32 0.0, %v3633
        %v3635 = vpop.f32.mrb[0].mxu0
        %v3636 = vpop.f32.mrb[0].mxu0
        %v3637 = vadd.f32 0.0, %v3636
        %v3638 = vpop.f32.mrb[0].mxu0
        %3639 = vmatprep.mubr.bf16.mxu0 0
        %3640 = vmatmul.mubr.bf16.gmra.mrb[0].mxu0 %v3571
        %v3641 = vpop.f32.mrb[0].mxu0
        %v3642 = vadd.f32 0.0, %v3641
        %v3643 = vpop.f32.mrb[0].mxu0
        %v3644 = vpop.f32.mrb[0].mxu0
        %v3645 = vadd.f32 0.0, %v3644
        %v3646 = vpop.f32.mrb[0].mxu0
        %3647 = vmatprep.mubr.bf16.mxu0 0
        %3648 = vmatmul.mubr.bf16.gmra.mrb[0].mxu0 %v3574
        %v3649 = vpop.f32.mrb[0].mxu0
        %v3650 = vadd.f32 0.0, %v3649
        %v3651 = vpop.f32.mrb[0].mxu0
        %v3652 = vpop.f32.mrb[0].mxu0
        %v3653 = vadd.f32 0.0, %v3652
        %v3654 = vpop.f32.mrb[0].mxu0
        %3655 = vmatprep.mubr.bf16.mxu0 0
        %3656 = vmatmul.mubr.bf16.gmra.mrb[0].mxu0 %v3577
        %v3657 = vpop.f32.mrb[0].mxu0
        %v3658 = vpop.f32.mrb[0].mxu0
        %v3659 = vpop.f32.mrb[0].mxu0
        %v3660 = vpop.f32.mrb[0].mxu0
        %3661 = vmatprep.mubr.bf16.mxu0 0
        %3662 = vmatmul.mubr.bf16.gmra.mrb[0].mxu0 %v3580
        %v3663 = vpop.f32.mrb[0].mxu0
        %v3664 = vadd.f32 0.0, %v3663
        %v3665 = vpop.f32.mrb[0].mxu0
        %v3666 = vpop.f32.mrb[0].mxu0
        %v3667 = vadd.f32 0.0, %v3666
        %v3668 = vpop.f32.mrb[0].mxu0
        %3669 = vmatprep.mubr.bf16.mxu0 0
        %3670 = vmatmul.mubr.bf16.gmra.mrb[0].mxu0 %v3583
        %v3671 = vpop.f32.mrb[0].mxu0
        %v3672 = vadd.f32 0.0, %v3671
        %v3673 = vpop.f32.mrb[0].mxu0
        %v3674 = vpop.f32.mrb[0].mxu0
        %v3675 = vadd.f32 0.0, %v3674
        %v3676 = vpop.f32.mrb[0].mxu0
        %3677 = vmatprep.mubr.bf16.mxu0 0
        %3678 = vmatmul.mubr.bf16.gmra.mrb[0].mxu0 %v3586
        %v3679 = vpop.f32.mrb[0].mxu0
        %v3680 = vadd.f32 0.0, %v3679
        %v3681 = vpop.f32.mrb[0].mxu0
        %v3682 = vpop.f32.mrb[0].mxu0
        %v3683 = vadd.f32 0.0, %v3682
        %v3684 = vpop.f32.mrb[0].mxu0
        %3685 = vmatprep.mubr.bf16.mxu0 0
        %3686 = vmatmul.mubr.bf16.gmra.mrb[0].mxu0 %v3589
        %v3687 = vpop.f32.mrb[0].mxu0
        %v3688 = vadd.f32 0.0, %v3687
        %v3689 = vpop.f32.mrb[0].mxu0
        %v3690 = vpop.f32.mrb[0].mxu0
        %v3691 = vadd.f32 0.0, %v3690
        %v3692 = vpop.f32.mrb[0].mxu0
        %3693 = vdwg.mxu0
        %v3694 = vmul.f32 %v3626, %v977
        %v3695 = vmul.f32 %v3629, %v978
        %v3696 = vmul.f32 %v3634, %v979
        %v3697 = vmul.f32 %v3637, %v980
        %v3698 = vmul.f32 %v3642, %v981
        %v3699 = vmul.f32 %v3645, %v982
        %v3700 = vmul.f32 %v3650, %v983
        %v3701 = vmul.f32 %v3653, %v984
        %v3702 = vmul.f32 %v3664, %v987
        %v3703 = vmul.f32 %v3667, %v988
        %v3704 = vmul.f32 %v3672, %v989
        %v3705 = vmul.f32 %v3675, %v990
        %v3706 = vmul.f32 %v3680, %v991
        %v3707 = vmul.f32 %v3683, %v992
        %v3708 = vmul.f32 %v3688, %v993
        %v3709 = vmul.f32 %v3691, %v994
        %v3710 = vld [vmem:[#allocation3] sm:$0xf0]
        %s3711 = scalar_lea.vmem %s4, 16
        %v3712 = vld [vmem:[%s3711] sm:$0xf]
        %v3713 = vld [vmem:[%s3711 + $0x4] sm:$0xf]
        %v3714 = vld [vmem:[%s3711 + $0x8] sm:$0xf]
        %v3715 = vld [vmem:[%s3711 + $0xc] sm:$0xf]
        %v3726 = vrot.slane %v3710, 4
        %v3727 = vrot.slane %v3450, 4
        %v3728 = vsel %vm1281, %v3726, %v3727
        %v3729 = vrot.slane %v3451, 4
        %v3730 = vsel %vm1281, %v3727, %v3729
        %v3731 = vrot.slane %v3452, 4
        %v3732 = vsel %vm1281, %v3729, %v3731
        %v3733 = vrot.slane %v3453, 4
        %v3734 = vsel %vm1281, %v3731, %v3733
        %v3735 = vrot.slane %v3454, 4
        %v3736 = vsel %vm1281, %v3733, %v3735
        %v3737 = vrot.slane %v3455, 4
        %v3738 = vsel %vm1281, %v3735, %v3737
        %v3739 = vrot.slane %v3456, 4
        %v3740 = vsel %vm1281, %v3737, %v3739
        %v3741 = vrot.slane %v3457, 4
        %v3742 = vsel %vm1281, %v3739, %v3741
        %v3743 = vrot.slane %v3458, 4
        %v3744 = vsel %vm1281, %v3741, %v3743
        %v3749 = vunpack.c.l.b16 %v3712
        %v3750 = vunpack.c.l.b16 %v3713
        %v3751 = vunpack.c.l.b16 %v3714
        %v3752 = vunpack.c.l.b16 %v3715
        %v3753 = vpack.c.b16 %v3750, %v3749
        %v3754 = vpack.c.b16 %v3752, %v3751
        %v3758 = vsel %vm1071, %v3728, 0
        %v3761 = vsel %vm1071, %v3730, 0
        %v3764 = vsel %vm1071, %v3732, 0
        %v3767 = vsel %vm1071, %v3734, 0
        %v3770 = vsel %vm1071, %v3736, 0
        %v3773 = vsel %vm1071, %v3738, 0
        %v3776 = vsel %vm1071, %v3740, 0
        %v3779 = vsel %vm1071, %v3742, 0
        %v3782 = vsel %vm1071, %v3744, 0
        %3784 = vmatprep.subr.bf16.mxu0 0
        %3785 = vmatpush1.bf16.msra.mxu0 %v3753
        %3786 = vmatprep.subr.bf16.mxu0 0
        %3787 = vmatpush1.bf16.msra.mxu0 %v3754
        %3788 = vmatprep.subr.bf16.mxu0 0
        %3789 = vmatpush1.bf16.msra.mxu0 0
        %3790 = vmatprep.subr.bf16.mxu0 0
        %3791 = vmatpush1.bf16.msra.mxu0 0
        %3792 = vmatprep.subr.bf16.mxu0 0
        %3793 = vmatpush1.bf16.msra.mxu0 0
        %3794 = vmatprep.subr.bf16.mxu0 0
        %3795 = vmatpush1.bf16.msra.mxu0 0
        %3796 = vmatprep.subr.bf16.mxu0 0
        %3797 = vmatpush1.bf16.msra.mxu0 0
        %3798 = vmatprep.subr.bf16.mxu0 0
        %3799 = vmatpush1.bf16.msra.mxu0 0
        %3800 = vmatprep.subr.bf16.mxu0 0
        %3801 = vmatpush1.bf16.msra.mxu0 0
        %3802 = vmatprep.subr.bf16.mxu0 0
        %3803 = vmatpush1.bf16.msra.mxu0 0
        %3804 = vmatprep.subr.bf16.mxu0 0
        %3805 = vmatpush1.bf16.msra.mxu0 0
        %3806 = vmatprep.subr.bf16.mxu0 0
        %3807 = vmatpush1.bf16.msra.mxu0 0
        %3808 = vmatprep.subr.bf16.mxu0 0
        %3809 = vmatpush1.bf16.msra.mxu0 0
        %3810 = vmatprep.subr.bf16.mxu0 0
        %3811 = vmatpush1.bf16.msra.mxu0 0
        %3812 = vmatprep.subr.bf16.mxu0 0
        %3813 = vmatpush1.bf16.msra.mxu0 0
        %3814 = vmatprep.subr.bf16.mxu0 0
        %3815 = vmatpush1.bf16.msra.mxu0 0
        %3816 = vmatprep.mubr.bf16.mxu0 0
        %3817 = vmatmul.mubr.bf16.gmra.mrb[0].mxu0 %v3758
        %v3818 = vpop.f32.mrb[0].mxu0
        %v3819 = vadd.f32 0.0, %v3818
        %v3820 = vpop.f32.mrb[0].mxu0
        %v3821 = vpop.f32.mrb[0].mxu0
        %v3822 = vadd.f32 0.0, %v3821
        %v3823 = vpop.f32.mrb[0].mxu0
        %3824 = vmatprep.mubr.bf16.mxu0 0
        %3825 = vmatmul.mubr.bf16.gmra.mrb[0].mxu0 %v3761
        %v3826 = vpop.f32.mrb[0].mxu0
        %v3827 = vadd.f32 0.0, %v3826
        %v3828 = vpop.f32.mrb[0].mxu0
        %v3829 = vpop.f32.mrb[0].mxu0
        %v3830 = vadd.f32 0.0, %v3829
        %v3831 = vpop.f32.mrb[0].mxu0
        %3832 = vmatprep.mubr.bf16.mxu0 0
        %3833 = vmatmul.mubr.bf16.gmra.mrb[0].mxu0 %v3764
        %v3834 = vpop.f32.mrb[0].mxu0
        %v3835 = vadd.f32 0.0, %v3834
        %v3836 = vpop.f32.mrb[0].mxu0
        %v3837 = vpop.f32.mrb[0].mxu0
        %v3838 = vadd.f32 0.0, %v3837
        %v3839 = vpop.f32.mrb[0].mxu0
        %3840 = vmatprep.mubr.bf16.mxu0 0
        %3841 = vmatmul.mubr.bf16.gmra.mrb[0].mxu0 %v3767
        %v3842 = vpop.f32.mrb[0].mxu0
        %v3843 = vadd.f32 0.0, %v3842
        %v3844 = vpop.f32.mrb[0].mxu0
        %v3845 = vpop.f32.mrb[0].mxu0
        %v3846 = vadd.f32 0.0, %v3845
        %v3847 = vpop.f32.mrb[0].mxu0
        %3848 = vmatprep.mubr.bf16.mxu0 0
        %3849 = vmatmul.mubr.bf16.gmra.mrb[0].mxu0 %v3770
        %v3850 = vpop.f32.mrb[0].mxu0
        %v3851 = vpop.f32.mrb[0].mxu0
        %v3852 = vpop.f32.mrb[0].mxu0
        %v3853 = vpop.f32.mrb[0].mxu0
        %3854 = vmatprep.mubr.bf16.mxu0 0
        %3855 = vmatmul.mubr.bf16.gmra.mrb[0].mxu0 %v3773
        %v3856 = vpop.f32.mrb[0].mxu0
        %v3857 = vadd.f32 0.0, %v3856
        %v3858 = vpop.f32.mrb[0].mxu0
        %v3859 = vpop.f32.mrb[0].mxu0
        %v3860 = vadd.f32 0.0, %v3859
        %v3861 = vpop.f32.mrb[0].mxu0
        %3862 = vmatprep.mubr.bf16.mxu0 0
        %3863 = vmatmul.mubr.bf16.gmra.mrb[0].mxu0 %v3776
        %v3864 = vpop.f32.mrb[0].mxu0
        %v3865 = vadd.f32 0.0, %v3864
        %v3866 = vpop.f32.mrb[0].mxu0
        %v3867 = vpop.f32.mrb[0].mxu0
        %v3868 = vadd.f32 0.0, %v3867
        %v3869 = vpop.f32.mrb[0].mxu0
        %3870 = vmatprep.mubr.bf16.mxu0 0
        %3871 = vmatmul.mubr.bf16.gmra.mrb[0].mxu0 %v3779
        %v3872 = vpop.f32.mrb[0].mxu0
        %v3873 = vadd.f32 0.0, %v3872
        %v3874 = vpop.f32.mrb[0].mxu0
        %v3875 = vpop.f32.mrb[0].mxu0
        %v3876 = vadd.f32 0.0, %v3875
        %v3877 = vpop.f32.mrb[0].mxu0
        %3878 = vmatprep.mubr.bf16.mxu0 0
        %3879 = vmatmul.mubr.bf16.gmra.mrb[0].mxu0 %v3782
        %v3880 = vpop.f32.mrb[0].mxu0
        %v3881 = vadd.f32 0.0, %v3880
        %v3882 = vpop.f32.mrb[0].mxu0
        %v3883 = vpop.f32.mrb[0].mxu0
        %v3884 = vadd.f32 0.0, %v3883
        %v3885 = vpop.f32.mrb[0].mxu0
        %3886 = vdwg.mxu0
        %v3887 = vadd.f32 %v3694, %v3819
        %v3888 = vadd.f32 %v3695, %v3822
        %v3889 = vadd.f32 %v3696, %v3827
        %v3890 = vadd.f32 %v3697, %v3830
        %v3891 = vadd.f32 %v3698, %v3835
        %v3892 = vadd.f32 %v3699, %v3838
        %v3893 = vadd.f32 %v3700, %v3843
        %v3894 = vadd.f32 %v3701, %v3846
        %v3895 = vadd.f32 %v3702, %v3857
        %v3896 = vadd.f32 %v3703, %v3860
        %v3897 = vadd.f32 %v3704, %v3865
        %v3898 = vadd.f32 %v3705, %v3868
        %v3899 = vadd.f32 %v3706, %v3873
        %v3900 = vadd.f32 %v3707, %v3876
        %v3901 = vadd.f32 %v3708, %v3881
        %v3902 = vadd.f32 %v3709, %v3884
        %v3903 = vld [vmem:[#allocation3 + $0x48] sm:$0x1f]
        %s3904 = scalar_lea.vmem %s4, 32
        %v3905 = vld [vmem:[%s3904] sm:$0xf]
        %v3906 = vld [vmem:[%s3904 + $0x4] sm:$0xf]
        %v3907 = vld [vmem:[%s3904 + $0x8] sm:$0xf]
        %v3908 = vld [vmem:[%s3904 + $0xc] sm:$0xf]
        %v3910 = vshrl.u32 %v3710, 16
        %v3912 = vrot.slane %v3910, 4
        %v3913 = vshll.u32 %v3710, 16
        %v3915 = vrot.slane %v3913, 5
        %v3916 = vor.u32 %v3912, %v3915
        %v3917 = vrot.slane %v3472, 4
        %v3918 = vrot.slane %v3475, 5
        %v3919 = vor.u32 %v3917, %v3918
        %v3920 = vsel %vm1166, %v3916, %v3919
        %v3921 = vrot.slane %v3481, 4
        %v3922 = vrot.slane %v3484, 5
        %v3923 = vor.u32 %v3921, %v3922
        %v3924 = vsel %vm1166, %v3919, %v3923
        %v3925 = vrot.slane %v3490, 4
        %v3926 = vrot.slane %v3493, 5
        %v3927 = vor.u32 %v3925, %v3926
        %v3928 = vsel %vm1166, %v3923, %v3927
        %v3929 = vrot.slane %v3499, 4
        %v3930 = vrot.slane %v3502, 5
        %v3931 = vor.u32 %v3929, %v3930
        %v3932 = vsel %vm1166, %v3927, %v3931
        %v3933 = vrot.slane %v3508, 4
        %v3934 = vrot.slane %v3511, 5
        %v3935 = vor.u32 %v3933, %v3934
        %v3936 = vsel %vm1166, %v3931, %v3935
        %v3937 = vrot.slane %v3517, 4
        %v3938 = vrot.slane %v3520, 5
        %v3939 = vor.u32 %v3937, %v3938
        %v3940 = vsel %vm1166, %v3935, %v3939
        %v3941 = vrot.slane %v3526, 4
        %v3942 = vrot.slane %v3529, 5
        %v3943 = vor.u32 %v3941, %v3942
        %v3944 = vsel %vm1166, %v3939, %v3943
        %v3945 = vrot.slane %v3535, 4
        %v3946 = vrot.slane %v3538, 5
        %v3947 = vor.u32 %v3945, %v3946
        %v3948 = vsel %vm1166, %v3943, %v3947
        %v3950 = vshrl.u32 %v3903, 16
        %v3952 = vrot.slane %v3950, 4
        %v3953 = vshll.u32 %v3903, 16
        %v3955 = vrot.slane %v3953, 5
        %v3956 = vor.u32 %v3952, %v3955
        %v3957 = vsel %vm1166, %v3947, %v3956
        %v3962 = vunpack.c.l.b16 %v3905
        %v3963 = vunpack.c.l.b16 %v3906
        %v3964 = vunpack.c.l.b16 %v3907
        %v3965 = vunpack.c.l.b16 %v3908
        %v3966 = vpack.c.b16 %v3963, %v3962
        %v3967 = vpack.c.b16 %v3965, %v3964
        %v3971 = vsel %vm1071, %v3920, 0
        %v3974 = vsel %vm1071, %v3924, 0
        %v3977 = vsel %vm1071, %v3928, 0
        %v3980 = vsel %vm1071, %v3932, 0
        %v3983 = vsel %vm1071, %v3936, 0
        %v3986 = vsel %vm1071, %v3940, 0
        %v3989 = vsel %vm1071, %v3944, 0
        %v3992 = vsel %vm1071, %v3948, 0
        %v3995 = vsel %vm1071, %v3957, 0
        %3997 = vmatprep.subr.bf16.mxu0 0
        %3998 = vmatpush1.bf16.msra.mxu0 %v3966
        %3999 = vmatprep.subr.bf16.mxu0 0
        %4000 = vmatpush1.bf16.msra.mxu0 %v3967
        %4001 = vmatprep.subr.bf16.mxu0 0
        %4002 = vmatpush1.bf16.msra.mxu0 0
        %4003 = vmatprep.subr.bf16.mxu0 0
        %4004 = vmatpush1.bf16.msra.mxu0 0
        %4005 = vmatprep.subr.bf16.mxu0 0
        %4006 = vmatpush1.bf16.msra.mxu0 0
        %4007 = vmatprep.subr.bf16.mxu0 0
        %4008 = vmatpush1.bf16.msra.mxu0 0
        %4009 = vmatprep.subr.bf16.mxu0 0
        %4010 = vmatpush1.bf16.msra.mxu0 0
        %4011 = vmatprep.subr.bf16.mxu0 0
        %4012 = vmatpush1.bf16.msra.mxu0 0
        %4013 = vmatprep.subr.bf16.mxu0 0
        %4014 = vmatpush1.bf16.msra.mxu0 0
        %4015 = vmatprep.subr.bf16.mxu0 0
        %4016 = vmatpush1.bf16.msra.mxu0 0
        %4017 = vmatprep.subr.bf16.mxu0 0
        %4018 = vmatpush1.bf16.msra.mxu0 0
        %4019 = vmatprep.subr.bf16.mxu0 0
        %4020 = vmatpush1.bf16.msra.mxu0 0
        %4021 = vmatprep.subr.bf16.mxu0 0
        %4022 = vmatpush1.bf16.msra.mxu0 0
        %4023 = vmatprep.subr.bf16.mxu0 0
        %4024 = vmatpush1.bf16.msra.mxu0 0
        %4025 = vmatprep.subr.bf16.mxu0 0
        %4026 = vmatpush1.bf16.msra.mxu0 0
        %4027 = vmatprep.subr.bf16.mxu0 0
        %4028 = vmatpush1.bf16.msra.mxu0 0
        %4029 = vmatprep.mubr.bf16.mxu0 0
        %4030 = vmatmul.mubr.bf16.gmra.mrb[0].mxu0 %v3971
        %v4031 = vpop.f32.mrb[0].mxu0
        %v4032 = vadd.f32 0.0, %v4031
        %v4033 = vpop.f32.mrb[0].mxu0
        %v4034 = vpop.f32.mrb[0].mxu0
        %v4035 = vadd.f32 0.0, %v4034
        %v4036 = vpop.f32.mrb[0].mxu0
        %4037 = vmatprep.mubr.bf16.mxu0 0
        %4038 = vmatmul.mubr.bf16.gmra.mrb[0].mxu0 %v3974
        %v4039 = vpop.f32.mrb[0].mxu0
        %v4040 = vadd.f32 0.0, %v4039
        %v4041 = vpop.f32.mrb[0].mxu0
        %v4042 = vpop.f32.mrb[0].mxu0
        %v4043 = vadd.f32 0.0, %v4042
        %v4044 = vpop.f32.mrb[0].mxu0
        %4045 = vmatprep.mubr.bf16.mxu0 0
        %4046 = vmatmul.mubr.bf16.gmra.mrb[0].mxu0 %v3977
        %v4047 = vpop.f32.mrb[0].mxu0
        %v4048 = vadd.f32 0.0, %v4047
        %v4049 = vpop.f32.mrb[0].mxu0
        %v4050 = vpop.f32.mrb[0].mxu0
        %v4051 = vadd.f32 0.0, %v4050
        %v4052 = vpop.f32.mrb[0].mxu0
        %4053 = vmatprep.mubr.bf16.mxu0 0
        %4054 = vmatmul.mubr.bf16.gmra.mrb[0].mxu0 %v3980
        %v4055 = vpop.f32.mrb[0].mxu0
        %v4056 = vadd.f32 0.0, %v4055
        %v4057 = vpop.f32.mrb[0].mxu0
        %v4058 = vpop.f32.mrb[0].mxu0
        %v4059 = vadd.f32 0.0, %v4058
        %v4060 = vpop.f32.mrb[0].mxu0
        %4061 = vmatprep.mubr.bf16.mxu0 0
        %4062 = vmatmul.mubr.bf16.gmra.mrb[0].mxu0 %v3983
        %v4063 = vpop.f32.mrb[0].mxu0
        %v4064 = vpop.f32.mrb[0].mxu0
        %v4065 = vpop.f32.mrb[0].mxu0
        %v4066 = vpop.f32.mrb[0].mxu0
        %4067 = vmatprep.mubr.bf16.mxu0 0
        %4068 = vmatmul.mubr.bf16.gmra.mrb[0].mxu0 %v3986
        %v4069 = vpop.f32.mrb[0].mxu0
        %v4070 = vadd.f32 0.0, %v4069
        %v4071 = vpop.f32.mrb[0].mxu0
        %v4072 = vpop.f32.mrb[0].mxu0
        %v4073 = vadd.f32 0.0, %v4072
        %v4074 = vpop.f32.mrb[0].mxu0
        %4075 = vmatprep.mubr.bf16.mxu0 0
        %4076 = vmatmul.mubr.bf16.gmra.mrb[0].mxu0 %v3989
        %v4077 = vpop.f32.mrb[0].mxu0
        %v4078 = vadd.f32 0.0, %v4077
        %v4079 = vpop.f32.mrb[0].mxu0
        %v4080 = vpop.f32.mrb[0].mxu0
        %v4081 = vadd.f32 0.0, %v4080
        %v4082 = vpop.f32.mrb[0].mxu0
        %4083 = vmatprep.mubr.bf16.mxu0 0
        %4084 = vmatmul.mubr.bf16.gmra.mrb[0].mxu0 %v3992
        %v4085 = vpop.f32.mrb[0].mxu0
        %v4086 = vadd.f32 0.0, %v4085
        %v4087 = vpop.f32.mrb[0].mxu0
        %v4088 = vpop.f32.mrb[0].mxu0
        %v4089 = vadd.f32 0.0, %v4088
        %v4090 = vpop.f32.mrb[0].mxu0
        %4091 = vmatprep.mubr.bf16.mxu0 0
        %4092 = vmatmul.mubr.bf16.gmra.mrb[0].mxu0 %v3995
        %v4093 = vpop.f32.mrb[0].mxu0
        %v4094 = vadd.f32 0.0, %v4093
        %v4095 = vpop.f32.mrb[0].mxu0
        %v4096 = vpop.f32.mrb[0].mxu0
        %v4097 = vadd.f32 0.0, %v4096
        %v4098 = vpop.f32.mrb[0].mxu0
        %4099 = vdwg.mxu0
        %v4100 = vmul.f32 %v4032, %v1031
        %v4101 = vmul.f32 %v4035, %v1032
        %v4102 = vmul.f32 %v4040, %v1033
        %v4103 = vmul.f32 %v4043, %v1034
        %v4104 = vmul.f32 %v4048, %v1035
        %v4105 = vmul.f32 %v4051, %v1036
        %v4106 = vmul.f32 %v4056, %v1037
        %v4107 = vmul.f32 %v4059, %v1038
        %v4108 = vmul.f32 %v4070, %v1041
        %v4109 = vmul.f32 %v4073, %v1042
        %v4110 = vmul.f32 %v4078, %v1043
        %v4111 = vmul.f32 %v4081, %v1044
        %v4112 = vmul.f32 %v4086, %v1045
        %v4113 = vmul.f32 %v4089, %v1046
        %v4114 = vmul.f32 %v4094, %v1047
        %v4115 = vmul.f32 %v4097, %v1048
        %v4116 = vadd.f32 %v3887, %v4100
        %v4117 = vadd.f32 %v3888, %v4101
        %v4118 = vadd.f32 %v3889, %v4102
        %v4119 = vadd.f32 %v3890, %v4103
        %v4120 = vadd.f32 %v3891, %v4104
        %v4121 = vadd.f32 %v3892, %v4105
        %v4122 = vadd.f32 %v3893, %v4106
        %v4123 = vadd.f32 %v3894, %v4107
        %v4124 = vadd.f32 %v3895, %v4108
        %v4125 = vadd.f32 %v3896, %v4109
        %v4126 = vadd.f32 %v3897, %v4110
        %v4127 = vadd.f32 %v3898, %v4111
        %v4128 = vadd.f32 %v3899, %v4112
        %v4129 = vadd.f32 %v3900, %v4113
        %v4130 = vadd.f32 %v3901, %v4114
        %v4131 = vadd.f32 %v3902, %v4115
        %v4132 = vld [vmem:[#allocation3] sm:$0x80]
        %v4133 = vld [vmem:[#allocation3 + $0x48] sm:$0xff]
        %s4134 = scalar_lea.vmem %s4, 48
        %v4135 = vld [vmem:[%s4134] sm:$0xf]
        %v4136 = vld [vmem:[%s4134 + $0x4] sm:$0xf]
        %v4137 = vld [vmem:[%s4134 + $0x8] sm:$0xf]
        %v4138 = vld [vmem:[%s4134 + $0xc] sm:$0xf]
        %v4140 = vshrl.u32 %v4132, 16
        %v4142 = vrot.slane %v4140, 7
        %v4143 = vrot.slane %v3472, 7
        %v4144 = vor.u32 %v4143, %v3475
        %v4145 = vsel %vm2050, %v4142, %v4144
        %v4146 = vrot.slane %v3481, 7
        %v4147 = vor.u32 %v4146, %v3484
        %v4148 = vsel %vm2050, %v4143, %v4147
        %v4149 = vrot.slane %v3490, 7
        %v4150 = vor.u32 %v4149, %v3493
        %v4151 = vsel %vm2050, %v4146, %v4150
        %v4152 = vrot.slane %v3499, 7
        %v4153 = vor.u32 %v4152, %v3502
        %v4154 = vsel %vm2050, %v4149, %v4153
        %v4155 = vrot.slane %v3508, 7
        %v4156 = vor.u32 %v4155, %v3511
        %v4157 = vsel %vm2050, %v4152, %v4156
        %v4158 = vrot.slane %v3517, 7
        %v4159 = vor.u32 %v4158, %v3520
        %v4160 = vsel %vm2050, %v4155, %v4159
        %v4161 = vrot.slane %v3526, 7
        %v4162 = vor.u32 %v4161, %v3529
        %v4163 = vsel %vm2050, %v4158, %v4162
        %v4164 = vrot.slane %v3535, 7
        %v4165 = vor.u32 %v4164, %v3538
        %v4166 = vsel %vm2050, %v4161, %v4165
        %v4168 = vshrl.u32 %v4133, 16
        %v4170 = vrot.slane %v4168, 7
        %v4171 = vshll.u32 %v4133, 16
        %v4173 = vor.u32 %v4170, %v4171
        %v4174 = vsel %vm2050, %v4164, %v4173
        %v4179 = vunpack.c.l.b16 %v4135
        %v4180 = vunpack.c.l.b16 %v4136
        %v4181 = vunpack.c.l.b16 %v4137
        %v4182 = vunpack.c.l.b16 %v4138
        %v4183 = vpack.c.b16 %v4180, %v4179
        %v4184 = vpack.c.b16 %v4182, %v4181
        %v4188 = vsel %vm1071, %v4145, 0
        %v4191 = vsel %vm1071, %v4148, 0
        %v4194 = vsel %vm1071, %v4151, 0
        %v4197 = vsel %vm1071, %v4154, 0
        %v4200 = vsel %vm1071, %v4157, 0
        %v4203 = vsel %vm1071, %v4160, 0
        %v4206 = vsel %vm1071, %v4163, 0
        %v4209 = vsel %vm1071, %v4166, 0
        %v4212 = vsel %vm1071, %v4174, 0
        %4214 = vmatprep.subr.bf16.mxu0 0
        %4215 = vmatpush1.bf16.msra.mxu0 %v4183
        %4216 = vmatprep.subr.bf16.mxu0 0
        %4217 = vmatpush1.bf16.msra.mxu0 %v4184
        %4218 = vmatprep.subr.bf16.mxu0 0
        %4219 = vmatpush1.bf16.msra.mxu0 0
        %4220 = vmatprep.subr.bf16.mxu0 0
        %4221 = vmatpush1.bf16.msra.mxu0 0
        %4222 = vmatprep.subr.bf16.mxu0 0
        %4223 = vmatpush1.bf16.msra.mxu0 0
        %4224 = vmatprep.subr.bf16.mxu0 0
        %4225 = vmatpush1.bf16.msra.mxu0 0
        %4226 = vmatprep.subr.bf16.mxu0 0
        %4227 = vmatpush1.bf16.msra.mxu0 0
        %4228 = vmatprep.subr.bf16.mxu0 0
        %4229 = vmatpush1.bf16.msra.mxu0 0
        %4230 = vmatprep.subr.bf16.mxu0 0
        %4231 = vmatpush1.bf16.msra.mxu0 0
        %4232 = vmatprep.subr.bf16.mxu0 0
        %4233 = vmatpush1.bf16.msra.mxu0 0
        %4234 = vmatprep.subr.bf16.mxu0 0
        %4235 = vmatpush1.bf16.msra.mxu0 0
        %4236 = vmatprep.subr.bf16.mxu0 0
        %4237 = vmatpush1.bf16.msra.mxu0 0
        %4238 = vmatprep.subr.bf16.mxu0 0
        %4239 = vmatpush1.bf16.msra.mxu0 0
        %4240 = vmatprep.subr.bf16.mxu0 0
        %4241 = vmatpush1.bf16.msra.mxu0 0
        %4242 = vmatprep.subr.bf16.mxu0 0
        %4243 = vmatpush1.bf16.msra.mxu0 0
        %4244 = vmatprep.subr.bf16.mxu0 0
        %4245 = vmatpush1.bf16.msra.mxu0 0
        %4246 = vmatprep.mubr.bf16.mxu0 0
        %4247 = vmatmul.mubr.bf16.gmra.mrb[0].mxu0 %v4188
        %v4248 = vpop.f32.mrb[0].mxu0
        %v4249 = vadd.f32 0.0, %v4248
        %v4250 = vpop.f32.mrb[0].mxu0
        %v4251 = vpop.f32.mrb[0].mxu0
        %v4252 = vadd.f32 0.0, %v4251
        %v4253 = vpop.f32.mrb[0].mxu0
        %4254 = vmatprep.mubr.bf16.mxu0 0
        %4255 = vmatmul.mubr.bf16.gmra.mrb[0].mxu0 %v4191
        %v4256 = vpop.f32.mrb[0].mxu0
        %v4257 = vadd.f32 0.0, %v4256
        %v4258 = vpop.f32.mrb[0].mxu0
        %v4259 = vpop.f32.mrb[0].mxu0
        %v4260 = vadd.f32 0.0, %v4259
        %v4261 = vpop.f32.mrb[0].mxu0
        %4262 = vmatprep.mubr.bf16.mxu0 0
        %4263 = vmatmul.mubr.bf16.gmra.mrb[0].mxu0 %v4194
        %v4264 = vpop.f32.mrb[0].mxu0
        %v4265 = vadd.f32 0.0, %v4264
        %v4266 = vpop.f32.mrb[0].mxu0
        %v4267 = vpop.f32.mrb[0].mxu0
        %v4268 = vadd.f32 0.0, %v4267
        %v4269 = vpop.f32.mrb[0].mxu0
        %4270 = vmatprep.mubr.bf16.mxu0 0
        %4271 = vmatmul.mubr.bf16.gmra.mrb[0].mxu0 %v4197
        %v4272 = vpop.f32.mrb[0].mxu0
        %v4273 = vadd.f32 0.0, %v4272
        %v4274 = vpop.f32.mrb[0].mxu0
        %v4275 = vpop.f32.mrb[0].mxu0
        %v4276 = vadd.f32 0.0, %v4275
        %v4277 = vpop.f32.mrb[0].mxu0
        %4278 = vmatprep.mubr.bf16.mxu0 0
        %4279 = vmatmul.mubr.bf16.gmra.mrb[0].mxu0 %v4200
        %v4280 = vpop.f32.mrb[0].mxu0
        %v4281 = vpop.f32.mrb[0].mxu0
        %v4282 = vpop.f32.mrb[0].mxu0
        %v4283 = vpop.f32.mrb[0].mxu0
        %4284 = vmatprep.mubr.bf16.mxu0 0
        %4285 = vmatmul.mubr.bf16.gmra.mrb[0].mxu0 %v4203
        %v4286 = vpop.f32.mrb[0].mxu0
        %v4287 = vadd.f32 0.0, %v4286
        %v4288 = vpop.f32.mrb[0].mxu0
        %v4289 = vpop.f32.mrb[0].mxu0
        %v4290 = vadd.f32 0.0, %v4289
        %v4291 = vpop.f32.mrb[0].mxu0
        %4292 = vmatprep.mubr.bf16.mxu0 0
        %4293 = vmatmul.mubr.bf16.gmra.mrb[0].mxu0 %v4206
        %v4294 = vpop.f32.mrb[0].mxu0
        %v4295 = vadd.f32 0.0, %v4294
        %v4296 = vpop.f32.mrb[0].mxu0
        %v4297 = vpop.f32.mrb[0].mxu0
        %v4298 = vadd.f32 0.0, %v4297
        %v4299 = vpop.f32.mrb[0].mxu0
        %4300 = vmatprep.mubr.bf16.mxu0 0
        %4301 = vmatmul.mubr.bf16.gmra.mrb[0].mxu0 %v4209
        %v4302 = vpop.f32.mrb[0].mxu0
        %v4303 = vadd.f32 0.0, %v4302
        %v4304 = vpop.f32.mrb[0].mxu0
        %v4305 = vpop.f32.mrb[0].mxu0
        %v4306 = vadd.f32 0.0, %v4305
        %v4307 = vpop.f32.mrb[0].mxu0
        %4308 = vmatprep.mubr.bf16.mxu0 0
        %4309 = vmatmul.mubr.bf16.gmra.mrb[0].mxu0 %v4212
        %v4310 = vpop.f32.mrb[0].mxu0
        %v4311 = vadd.f32 0.0, %v4310
        %v4312 = vpop.f32.mrb[0].mxu0
        %v4313 = vpop.f32.mrb[0].mxu0
        %v4314 = vadd.f32 0.0, %v4313
        %v4315 = vpop.f32.mrb[0].mxu0
        %4316 = vdwg.mxu0
        %v4317 = vmul.f32 %v4249, %v977
        %v4318 = vmul.f32 %v4252, %v978
        %v4319 = vmul.f32 %v4257, %v979
        %v4320 = vmul.f32 %v4260, %v980
        %v4321 = vmul.f32 %v4265, %v981
        %v4322 = vmul.f32 %v4268, %v982
        %v4323 = vmul.f32 %v4273, %v983
        %v4324 = vmul.f32 %v4276, %v984
        %v4325 = vmul.f32 %v4287, %v987
        %v4326 = vmul.f32 %v4290, %v988
        %v4327 = vmul.f32 %v4295, %v989
        %v4328 = vmul.f32 %v4298, %v990
        %v4329 = vmul.f32 %v4303, %v991
        %v4330 = vmul.f32 %v4306, %v992
        %v4331 = vmul.f32 %v4311, %v993
        %v4332 = vmul.f32 %v4314, %v994
        %v4333 = vadd.f32 %v4116, %v4317
        %v4334 = vadd.f32 %v4117, %v4318
        %v4335 = vadd.f32 %v4118, %v4319
        %v4336 = vadd.f32 %v4119, %v4320
        %v4337 = vadd.f32 %v4120, %v4321
        %v4338 = vadd.f32 %v4121, %v4322
        %v4339 = vadd.f32 %v4122, %v4323
        %v4340 = vadd.f32 %v4123, %v4324
        %v4341 = vadd.f32 %v4124, %v4325
        %v4342 = vadd.f32 %v4125, %v4326
        %v4343 = vadd.f32 %v4126, %v4327
        %v4344 = vadd.f32 %v4127, %v4328
        %v4345 = vadd.f32 %v4128, %v4329
        %v4346 = vadd.f32 %v4129, %v4330
        %v4347 = vadd.f32 %v4130, %v4331
        %v4348 = vadd.f32 %v4131, %v4332
        %s4349 = scalar_lea.vmem %s4, 64
        %v4350 = vld [vmem:[%s4349] sm:$0xf]
        %v4351 = vld [vmem:[%s4349 + $0x4] sm:$0xf]
        %v4352 = vld [vmem:[%s4349 + $0x8] sm:$0xf]
        %v4353 = vld [vmem:[%s4349 + $0xc] sm:$0xf]
        %v4358 = vunpack.c.l.b16 %v4350
        %v4359 = vunpack.c.l.b16 %v4351
        %v4360 = vunpack.c.l.b16 %v4352
        %v4361 = vunpack.c.l.b16 %v4353
        %v4362 = vpack.c.b16 %v4359, %v4358
        %v4363 = vpack.c.b16 %v4361, %v4360
        %v4366 = vsel %vm1071, %v3450, 0
        %v4368 = vsel %vm1071, %v3451, 0
        %v4370 = vsel %vm1071, %v3452, 0
        %v4372 = vsel %vm1071, %v3453, 0
        %v4374 = vsel %vm1071, %v3454, 0
        %v4376 = vsel %vm1071, %v3455, 0
        %v4378 = vsel %vm1071, %v3456, 0
        %v4380 = vsel %vm1071, %v3457, 0
        %v4382 = vsel %vm1071, %v4133, 0
        %4384 = vmatprep.subr.bf16.mxu0 0
        %4385 = vmatpush1.bf16.msra.mxu0 %v4362
        %4386 = vmatprep.subr.bf16.mxu0 0
        %4387 = vmatpush1.bf16.msra.mxu0 %v4363
        %4388 = vmatprep.subr.bf16.mxu0 0
        %4389 = vmatpush1.bf16.msra.mxu0 0
        %4390 = vmatprep.subr.bf16.mxu0 0
        %4391 = vmatpush1.bf16.msra.mxu0 0
        %4392 = vmatprep.subr.bf16.mxu0 0
        %4393 = vmatpush1.bf16.msra.mxu0 0
        %4394 = vmatprep.subr.bf16.mxu0 0
        %4395 = vmatpush1.bf16.msra.mxu0 0
        %4396 = vmatprep.subr.bf16.mxu0 0
        %4397 = vmatpush1.bf16.msra.mxu0 0
        %4398 = vmatprep.subr.bf16.mxu0 0
        %4399 = vmatpush1.bf16.msra.mxu0 0
        %4400 = vmatprep.subr.bf16.mxu0 0
        %4401 = vmatpush1.bf16.msra.mxu0 0
        %4402 = vmatprep.subr.bf16.mxu0 0
        %4403 = vmatpush1.bf16.msra.mxu0 0
        %4404 = vmatprep.subr.bf16.mxu0 0
        %4405 = vmatpush1.bf16.msra.mxu0 0
        %4406 = vmatprep.subr.bf16.mxu0 0
        %4407 = vmatpush1.bf16.msra.mxu0 0
        %4408 = vmatprep.subr.bf16.mxu0 0
        %4409 = vmatpush1.bf16.msra.mxu0 0
        %4410 = vmatprep.subr.bf16.mxu0 0
        %4411 = vmatpush1.bf16.msra.mxu0 0
        %4412 = vmatprep.subr.bf16.mxu0 0
        %4413 = vmatpush1.bf16.msra.mxu0 0
        %4414 = vmatprep.subr.bf16.mxu0 0
        %4415 = vmatpush1.bf16.msra.mxu0 0
        %4416 = vmatprep.mubr.bf16.mxu0 0
        %4417 = vmatmul.mubr.bf16.gmra.mrb[0].mxu0 %v4366
        %v4418 = vpop.f32.mrb[0].mxu0
        %v4419 = vadd.f32 0.0, %v4418
        %v4420 = vpop.f32.mrb[0].mxu0
        %v4421 = vpop.f32.mrb[0].mxu0
        %v4422 = vadd.f32 0.0, %v4421
        %v4423 = vpop.f32.mrb[0].mxu0
        %4424 = vmatprep.mubr.bf16.mxu0 0
        %4425 = vmatmul.mubr.bf16.gmra.mrb[0].mxu0 %v4368
        %v4426 = vpop.f32.mrb[0].mxu0
        %v4427 = vadd.f32 0.0, %v4426
        %v4428 = vpop.f32.mrb[0].mxu0
        %v4429 = vpop.f32.mrb[0].mxu0
        %v4430 = vadd.f32 0.0, %v4429
        %v4431 = vpop.f32.mrb[0].mxu0
        %4432 = vmatprep.mubr.bf16.mxu0 0
        %4433 = vmatmul.mubr.bf16.gmra.mrb[0].mxu0 %v4370
        %v4434 = vpop.f32.mrb[0].mxu0
        %v4435 = vadd.f32 0.0, %v4434
        %v4436 = vpop.f32.mrb[0].mxu0
        %v4437 = vpop.f32.mrb[0].mxu0
        %v4438 = vadd.f32 0.0, %v4437
        %v4439 = vpop.f32.mrb[0].mxu0
        %4440 = vmatprep.mubr.bf16.mxu0 0
        %4441 = vmatmul.mubr.bf16.gmra.mrb[0].mxu0 %v4372
        %v4442 = vpop.f32.mrb[0].mxu0
        %v4443 = vadd.f32 0.0, %v4442
        %v4444 = vpop.f32.mrb[0].mxu0
        %v4445 = vpop.f32.mrb[0].mxu0
        %v4446 = vadd.f32 0.0, %v4445
        %v4447 = vpop.f32.mrb[0].mxu0
        %4448 = vmatprep.mubr.bf16.mxu0 0
        %4449 = vmatmul.mubr.bf16.gmra.mrb[0].mxu0 %v4374
        %v4450 = vpop.f32.mrb[0].mxu0
        %v4451 = vpop.f32.mrb[0].mxu0
        %v4452 = vpop.f32.mrb[0].mxu0
        %v4453 = vpop.f32.mrb[0].mxu0
        %4454 = vmatprep.mubr.bf16.mxu0 0
        %4455 = vmatmul.mubr.bf16.gmra.mrb[0].mxu0 %v4376
        %v4456 = vpop.f32.mrb[0].mxu0
        %v4457 = vadd.f32 0.0, %v4456
        %v4458 = vpop.f32.mrb[0].mxu0
        %v4459 = vpop.f32.mrb[0].mxu0
        %v4460 = vadd.f32 0.0, %v4459
        %v4461 = vpop.f32.mrb[0].mxu0
        %4462 = vmatprep.mubr.bf16.mxu0 0
        %4463 = vmatmul.mubr.bf16.gmra.mrb[0].mxu0 %v4378
        %v4464 = vpop.f32.mrb[0].mxu0
        %v4465 = vadd.f32 0.0, %v4464
        %v4466 = vpop.f32.mrb[0].mxu0
        %v4467 = vpop.f32.mrb[0].mxu0
        %v4468 = vadd.f32 0.0, %v4467
        %v4469 = vpop.f32.mrb[0].mxu0
        %4470 = vmatprep.mubr.bf16.mxu0 0
        %4471 = vmatmul.mubr.bf16.gmra.mrb[0].mxu0 %v4380
        %v4472 = vpop.f32.mrb[0].mxu0
        %v4473 = vadd.f32 0.0, %v4472
        %v4474 = vpop.f32.mrb[0].mxu0
        %v4475 = vpop.f32.mrb[0].mxu0
        %v4476 = vadd.f32 0.0, %v4475
        %v4477 = vpop.f32.mrb[0].mxu0
        %4478 = vmatprep.mubr.bf16.mxu0 0
        %4479 = vmatmul.mubr.bf16.gmra.mrb[0].mxu0 %v4382
        %v4480 = vpop.f32.mrb[0].mxu0
        %v4481 = vadd.f32 0.0, %v4480
        %v4482 = vpop.f32.mrb[0].mxu0
        %v4483 = vpop.f32.mrb[0].mxu0
        %v4484 = vadd.f32 0.0, %v4483
        %v4485 = vpop.f32.mrb[0].mxu0
        %4486 = vdwg.mxu0
        %v4487 = vadd.f32 %v4333, %v4419
        %v4488 = vadd.f32 %v4334, %v4422
        %v4489 = vadd.f32 %v4335, %v4427
        %v4490 = vadd.f32 %v4336, %v4430
        %v4491 = vadd.f32 %v4337, %v4435
        %v4492 = vadd.f32 %v4338, %v4438
        %v4493 = vadd.f32 %v4339, %v4443
        %v4494 = vadd.f32 %v4340, %v4446
        %v4495 = vadd.f32 %v4341, %v4457
        %v4496 = vadd.f32 %v4342, %v4460
        %v4497 = vadd.f32 %v4343, %v4465
        %v4498 = vadd.f32 %v4344, %v4468
        %v4499 = vadd.f32 %v4345, %v4473
        %v4500 = vadd.f32 %v4346, %v4476
        %v4501 = vadd.f32 %v4347, %v4481
        %v4502 = vadd.f32 %v4348, %v4484
        %v4503 = vld [vmem:[#allocation3 + $0x8] sm:$0xff]
        %v4504 = vld [vmem:[#allocation3 + $0x10] sm:$0xff]
        %v4505 = vld [vmem:[#allocation3 + $0x18] sm:$0xff]
        %v4506 = vld [vmem:[#allocation3 + $0x20] sm:$0xff]
        %v4507 = vld [vmem:[#allocation3 + $0x28] sm:$0xff]
        %v4508 = vld [vmem:[#allocation3 + $0x30] sm:$0xff]
        %v4509 = vld [vmem:[#allocation3 + $0x38] sm:$0xff]
        %v4510 = vld [vmem:[#allocation3 + $0x40] sm:$0xff]
        %v4511 = vld [vmem:[#allocation3 + $0x48] sm:$0xff]
        %v4512 = vld [vmem:[#allocation3 + $0x50] sm:$0x1]
        %s4513 = scalar_lea.vmem %s4, 80
        %v4514 = vld [vmem:[%s4513] sm:$0xf]
        %v4515 = vld [vmem:[%s4513 + $0x4] sm:$0xf]
        %v4516 = vld [vmem:[%s4513 + $0x8] sm:$0xf]
        %v4517 = vld [vmem:[%s4513 + $0xc] sm:$0xf]
        %v4519 = vshrl.u32 %v4503, 16
        %v4521 = vshll.u32 %v4503, 16
        %v4523 = vrot.slane %v4521, 1
        %v4524 = vor.u32 %v4519, %v4523
        %v4526 = vshll.u32 %v4504, 16
        %v4528 = vrot.slane %v4526, 1
        %v4529 = vsel %vm2001, %v4524, %v4528
        %v4530 = vshrl.u32 %v4504, 16
        %v4532 = vor.u32 %v4530, %v4528
        %v4534 = vshll.u32 %v4505, 16
        %v4536 = vrot.slane %v4534, 1
        %v4537 = vsel %vm2001, %v4532, %v4536
        %v4538 = vshrl.u32 %v4505, 16
        %v4540 = vor.u32 %v4538, %v4536
        %v4542 = vshll.u32 %v4506, 16
        %v4544 = vrot.slane %v4542, 1
        %v4545 = vsel %vm2001, %v4540, %v4544
        %v4546 = vshrl.u32 %v4506, 16
        %v4548 = vor.u32 %v4546, %v4544
        %v4550 = vshll.u32 %v4507, 16
        %v4552 = vrot.slane %v4550, 1
        %v4553 = vsel %vm2001, %v4548, %v4552
        %v4554 = vshrl.u32 %v4507, 16
        %v4556 = vor.u32 %v4554, %v4552
        %v4558 = vshll.u32 %v4508, 16
        %v4560 = vrot.slane %v4558, 1
        %v4561 = vsel %vm2001, %v4556, %v4560
        %v4562 = vshrl.u32 %v4508, 16
        %v4564 = vor.u32 %v4562, %v4560
        %v4566 = vshll.u32 %v4509, 16
        %v4568 = vrot.slane %v4566, 1
        %v4569 = vsel %vm2001, %v4564, %v4568
        %v4570 = vshrl.u32 %v4509, 16
        %v4572 = vor.u32 %v4570, %v4568
        %v4574 = vshll.u32 %v4510, 16
        %v4576 = vrot.slane %v4574, 1
        %v4577 = vsel %vm2001, %v4572, %v4576
        %v4578 = vshrl.u32 %v4510, 16
        %v4580 = vor.u32 %v4578, %v4576
        %v4582 = vshll.u32 %v4511, 16
        %v4584 = vrot.slane %v4582, 1
        %v4585 = vsel %vm2001, %v4580, %v4584
        %v4586 = vshrl.u32 %v4511, 16
        %v4588 = vor.u32 %v4586, %v4584
        %v4590 = vshll.u32 %v4512, 16
        %v4592 = vrot.slane %v4590, 1
        %v4593 = vsel %vm2001, %v4588, %v4592
        %v4598 = vunpack.c.l.b16 %v4514
        %v4599 = vunpack.c.l.b16 %v4515
        %v4600 = vunpack.c.l.b16 %v4516
        %v4601 = vunpack.c.l.b16 %v4517
        %v4602 = vpack.c.b16 %v4599, %v4598
        %v4603 = vpack.c.b16 %v4601, %v4600
        %v4607 = vsel %vm1071, %v4529, 0
        %v4610 = vsel %vm1071, %v4537, 0
        %v4613 = vsel %vm1071, %v4545, 0
        %v4616 = vsel %vm1071, %v4553, 0
        %v4619 = vsel %vm1071, %v4561, 0
        %v4622 = vsel %vm1071, %v4569, 0
        %v4625 = vsel %vm1071, %v4577, 0
        %v4628 = vsel %vm1071, %v4585, 0
        %v4631 = vsel %vm1071, %v4593, 0
        %4633 = vmatprep.subr.bf16.mxu0 0
        %4634 = vmatpush1.bf16.msra.mxu0 %v4602
        %4635 = vmatprep.subr.bf16.mxu0 0
        %4636 = vmatpush1.bf16.msra.mxu0 %v4603
        %4637 = vmatprep.subr.bf16.mxu0 0
        %4638 = vmatpush1.bf16.msra.mxu0 0
        %4639 = vmatprep.subr.bf16.mxu0 0
        %4640 = vmatpush1.bf16.msra.mxu0 0
        %4641 = vmatprep.subr.bf16.mxu0 0
        %4642 = vmatpush1.bf16.msra.mxu0 0
        %4643 = vmatprep.subr.bf16.mxu0 0
        %4644 = vmatpush1.bf16.msra.mxu0 0
        %4645 = vmatprep.subr.bf16.mxu0 0
        %4646 = vmatpush1.bf16.msra.mxu0 0
        %4647 = vmatprep.subr.bf16.mxu0 0
        %4648 = vmatpush1.bf16.msra.mxu0 0
        %4649 = vmatprep.subr.bf16.mxu0 0
        %4650 = vmatpush1.bf16.msra.mxu0 0
        %4651 = vmatprep.subr.bf16.mxu0 0
        %4652 = vmatpush1.bf16.msra.mxu0 0
        %4653 = vmatprep.subr.bf16.mxu0 0
        %4654 = vmatpush1.bf16.msra.mxu0 0
        %4655 = vmatprep.subr.bf16.mxu0 0
        %4656 = vmatpush1.bf16.msra.mxu0 0
        %4657 = vmatprep.subr.bf16.mxu0 0
        %4658 = vmatpush1.bf16.msra.mxu0 0
        %4659 = vmatprep.subr.bf16.mxu0 0
        %4660 = vmatpush1.bf16.msra.mxu0 0
        %4661 = vmatprep.subr.bf16.mxu0 0
        %4662 = vmatpush1.bf16.msra.mxu0 0
        %4663 = vmatprep.subr.bf16.mxu0 0
        %4664 = vmatpush1.bf16.msra.mxu0 0
        %4665 = vmatprep.mubr.bf16.mxu0 0
        %4666 = vmatmul.mubr.bf16.gmra.mrb[0].mxu0 %v4607
        %v4667 = vpop.f32.mrb[0].mxu0
        %v4668 = vadd.f32 0.0, %v4667
        %v4669 = vpop.f32.mrb[0].mxu0
        %v4670 = vpop.f32.mrb[0].mxu0
        %v4671 = vadd.f32 0.0, %v4670
        %v4672 = vpop.f32.mrb[0].mxu0
        %4673 = vmatprep.mubr.bf16.mxu0 0
        %4674 = vmatmul.mubr.bf16.gmra.mrb[0].mxu0 %v4610
        %v4675 = vpop.f32.mrb[0].mxu0
        %v4676 = vadd.f32 0.0, %v4675
        %v4677 = vpop.f32.mrb[0].mxu0
        %v4678 = vpop.f32.mrb[0].mxu0
        %v4679 = vadd.f32 0.0, %v4678
        %v4680 = vpop.f32.mrb[0].mxu0
        %4681 = vmatprep.mubr.bf16.mxu0 0
        %4682 = vmatmul.mubr.bf16.gmra.mrb[0].mxu0 %v4613
        %v4683 = vpop.f32.mrb[0].mxu0
        %v4684 = vadd.f32 0.0, %v4683
        %v4685 = vpop.f32.mrb[0].mxu0
        %v4686 = vpop.f32.mrb[0].mxu0
        %v4687 = vadd.f32 0.0, %v4686
        %v4688 = vpop.f32.mrb[0].mxu0
        %4689 = vmatprep.mubr.bf16.mxu0 0
        %4690 = vmatmul.mubr.bf16.gmra.mrb[0].mxu0 %v4616
        %v4691 = vpop.f32.mrb[0].mxu0
        %v4692 = vadd.f32 0.0, %v4691
        %v4693 = vpop.f32.mrb[0].mxu0
        %v4694 = vpop.f32.mrb[0].mxu0
        %v4695 = vadd.f32 0.0, %v4694
        %v4696 = vpop.f32.mrb[0].mxu0
        %4697 = vmatprep.mubr.bf16.mxu0 0
        %4698 = vmatmul.mubr.bf16.gmra.mrb[0].mxu0 %v4619
        %v4699 = vpop.f32.mrb[0].mxu0
        %v4700 = vpop.f32.mrb[0].mxu0
        %v4701 = vpop.f32.mrb[0].mxu0
        %v4702 = vpop.f32.mrb[0].mxu0
        %4703 = vmatprep.mubr.bf16.mxu0 0
        %4704 = vmatmul.mubr.bf16.gmra.mrb[0].mxu0 %v4622
        %v4705 = vpop.f32.mrb[0].mxu0
        %v4706 = vadd.f32 0.0, %v4705
        %v4707 = vpop.f32.mrb[0].mxu0
        %v4708 = vpop.f32.mrb[0].mxu0
        %v4709 = vadd.f32 0.0, %v4708
        %v4710 = vpop.f32.mrb[0].mxu0
        %4711 = vmatprep.mubr.bf16.mxu0 0
        %4712 = vmatmul.mubr.bf16.gmra.mrb[0].mxu0 %v4625
        %v4713 = vpop.f32.mrb[0].mxu0
        %v4714 = vadd.f32 0.0, %v4713
        %v4715 = vpop.f32.mrb[0].mxu0
        %v4716 = vpop.f32.mrb[0].mxu0
        %v4717 = vadd.f32 0.0, %v4716
        %v4718 = vpop.f32.mrb[0].mxu0
        %4719 = vmatprep.mubr.bf16.mxu0 0
        %4720 = vmatmul.mubr.bf16.gmra.mrb[0].mxu0 %v4628
        %v4721 = vpop.f32.mrb[0].mxu0
        %v4722 = vadd.f32 0.0, %v4721
        %v4723 = vpop.f32.mrb[0].mxu0
        %v4724 = vpop.f32.mrb[0].mxu0
        %v4725 = vadd.f32 0.0, %v4724
        %v4726 = vpop.f32.mrb[0].mxu0
        %4727 = vmatprep.mubr.bf16.mxu0 0
        %4728 = vmatmul.mubr.bf16.gmra.mrb[0].mxu0 %v4631
        %v4729 = vpop.f32.mrb[0].mxu0
        %v4730 = vadd.f32 0.0, %v4729
        %v4731 = vpop.f32.mrb[0].mxu0
        %v4732 = vpop.f32.mrb[0].mxu0
        %v4733 = vadd.f32 0.0, %v4732
        %v4734 = vpop.f32.mrb[0].mxu0
        %4735 = vdwg.mxu0
        %v4736 = vmul.f32 %v4668, %v1031
        %v4737 = vmul.f32 %v4671, %v1032
        %v4738 = vmul.f32 %v4676, %v1033
        %v4739 = vmul.f32 %v4679, %v1034
        %v4740 = vmul.f32 %v4684, %v1035
        %v4741 = vmul.f32 %v4687, %v1036
        %v4742 = vmul.f32 %v4692, %v1037
        %v4743 = vmul.f32 %v4695, %v1038
        %v4744 = vmul.f32 %v4706, %v1041
        %v4745 = vmul.f32 %v4709, %v1042
        %v4746 = vmul.f32 %v4714, %v1043
        %v4747 = vmul.f32 %v4717, %v1044
        %v4748 = vmul.f32 %v4722, %v1045
        %v4749 = vmul.f32 %v4725, %v1046
        %v4750 = vmul.f32 %v4730, %v1047
        %v4751 = vmul.f32 %v4733, %v1048
        %v4752 = vadd.f32 %v4487, %v4736
        %v4753 = vadd.f32 %v4488, %v4737
        %v4754 = vadd.f32 %v4489, %v4738
        %v4755 = vadd.f32 %v4490, %v4739
        %v4756 = vadd.f32 %v4491, %v4740
        %v4757 = vadd.f32 %v4492, %v4741
        %v4758 = vadd.f32 %v4493, %v4742
        %v4759 = vadd.f32 %v4494, %v4743
        %v4760 = vadd.f32 %v4495, %v4744
        %v4761 = vadd.f32 %v4496, %v4745
        %v4762 = vadd.f32 %v4497, %v4746
        %v4763 = vadd.f32 %v4498, %v4747
        %v4764 = vadd.f32 %v4499, %v4748
        %v4765 = vadd.f32 %v4500, %v4749
        %v4766 = vadd.f32 %v4501, %v4750
        %v4767 = vadd.f32 %v4502, %v4751
        %v4768 = vld [vmem:[#allocation3 + $0x8] sm:$0xf8]
        %v4769 = vld [vmem:[#allocation3 + $0x50] sm:$0xf]
        %s4770 = scalar_lea.vmem %s4, 96
        %v4771 = vld [vmem:[%s4770] sm:$0xf]
        %v4772 = vld [vmem:[%s4770 + $0x4] sm:$0xf]
        %v4773 = vld [vmem:[%s4770 + $0x8] sm:$0xf]
        %v4774 = vld [vmem:[%s4770 + $0xc] sm:$0xf]
        %v4776 = vshrl.u32 %v4768, 16
        %v4778 = vrot.slane %v4776, 3
        %v4779 = vshll.u32 %v4768, 16
        %v4781 = vrot.slane %v4779, 4
        %v4782 = vor.u32 %v4778, %v4781
        %v4783 = vrot.slane %v4530, 3
        %v4784 = vrot.slane %v4526, 4
        %v4785 = vor.u32 %v4783, %v4784
        %v4786 = vsel %vm1435, %v4782, %v4785
        %v4787 = vrot.slane %v4538, 3
        %v4788 = vrot.slane %v4534, 4
        %v4789 = vor.u32 %v4787, %v4788
        %v4790 = vsel %vm1435, %v4785, %v4789
        %v4791 = vrot.slane %v4546, 3
        %v4792 = vrot.slane %v4542, 4
        %v4793 = vor.u32 %v4791, %v4792
        %v4794 = vsel %vm1435, %v4789, %v4793
        %v4795 = vrot.slane %v4554, 3
        %v4796 = vrot.slane %v4550, 4
        %v4797 = vor.u32 %v4795, %v4796
        %v4798 = vsel %vm1435, %v4793, %v4797
        %v4799 = vrot.slane %v4562, 3
        %v4800 = vrot.slane %v4558, 4
        %v4801 = vor.u32 %v4799, %v4800
        %v4802 = vsel %vm1435, %v4797, %v4801
        %v4803 = vrot.slane %v4570, 3
        %v4804 = vrot.slane %v4566, 4
        %v4805 = vor.u32 %v4803, %v4804
        %v4806 = vsel %vm1435, %v4801, %v4805
        %v4807 = vrot.slane %v4578, 3
        %v4808 = vrot.slane %v4574, 4
        %v4809 = vor.u32 %v4807, %v4808
        %v4810 = vsel %vm1435, %v4805, %v4809
        %v4811 = vrot.slane %v4586, 3
        %v4812 = vrot.slane %v4582, 4
        %v4813 = vor.u32 %v4811, %v4812
        %v4814 = vsel %vm1435, %v4809, %v4813
        %v4816 = vshrl.u32 %v4769, 16
        %v4818 = vrot.slane %v4816, 3
        %v4819 = vshll.u32 %v4769, 16
        %v4821 = vrot.slane %v4819, 4
        %v4822 = vor.u32 %v4818, %v4821
        %v4823 = vsel %vm1435, %v4813, %v4822
        %v4828 = vunpack.c.l.b16 %v4771
        %v4829 = vunpack.c.l.b16 %v4772
        %v4830 = vunpack.c.l.b16 %v4773
        %v4831 = vunpack.c.l.b16 %v4774
        %v4832 = vpack.c.b16 %v4829, %v4828
        %v4833 = vpack.c.b16 %v4831, %v4830
        %v4837 = vsel %vm1071, %v4786, 0
        %v4840 = vsel %vm1071, %v4790, 0
        %v4843 = vsel %vm1071, %v4794, 0
        %v4846 = vsel %vm1071, %v4798, 0
        %v4849 = vsel %vm1071, %v4802, 0
        %v4852 = vsel %vm1071, %v4806, 0
        %v4855 = vsel %vm1071, %v4810, 0
        %v4858 = vsel %vm1071, %v4814, 0
        %v4861 = vsel %vm1071, %v4823, 0
        %4863 = vmatprep.subr.bf16.mxu0 0
        %4864 = vmatpush1.bf16.msra.mxu0 %v4832
        %4865 = vmatprep.subr.bf16.mxu0 0
        %4866 = vmatpush1.bf16.msra.mxu0 %v4833
        %4867 = vmatprep.subr.bf16.mxu0 0
        %4868 = vmatpush1.bf16.msra.mxu0 0
        %4869 = vmatprep.subr.bf16.mxu0 0
        %4870 = vmatpush1.bf16.msra.mxu0 0
        %4871 = vmatprep.subr.bf16.mxu0 0
        %4872 = vmatpush1.bf16.msra.mxu0 0
        %4873 = vmatprep.subr.bf16.mxu0 0
        %4874 = vmatpush1.bf16.msra.mxu0 0
        %4875 = vmatprep.subr.bf16.mxu0 0
        %4876 = vmatpush1.bf16.msra.mxu0 0
        %4877 = vmatprep.subr.bf16.mxu0 0
        %4878 = vmatpush1.bf16.msra.mxu0 0
        %4879 = vmatprep.subr.bf16.mxu0 0
        %4880 = vmatpush1.bf16.msra.mxu0 0
        %4881 = vmatprep.subr.bf16.mxu0 0
        %4882 = vmatpush1.bf16.msra.mxu0 0
        %4883 = vmatprep.subr.bf16.mxu0 0
        %4884 = vmatpush1.bf16.msra.mxu0 0
        %4885 = vmatprep.subr.bf16.mxu0 0
        %4886 = vmatpush1.bf16.msra.mxu0 0
        %4887 = vmatprep.subr.bf16.mxu0 0
        %4888 = vmatpush1.bf16.msra.mxu0 0
        %4889 = vmatprep.subr.bf16.mxu0 0
        %4890 = vmatpush1.bf16.msra.mxu0 0
        %4891 = vmatprep.subr.bf16.mxu0 0
        %4892 = vmatpush1.bf16.msra.mxu0 0
        %4893 = vmatprep.subr.bf16.mxu0 0
        %4894 = vmatpush1.bf16.msra.mxu0 0
        %4895 = vmatprep.mubr.bf16.mxu0 0
        %4896 = vmatmul.mubr.bf16.gmra.mrb[0].mxu0 %v4837
        %v4897 = vpop.f32.mrb[0].mxu0
        %v4898 = vadd.f32 0.0, %v4897
        %v4899 = vpop.f32.mrb[0].mxu0
        %v4900 = vpop.f32.mrb[0].mxu0
        %v4901 = vadd.f32 0.0, %v4900
        %v4902 = vpop.f32.mrb[0].mxu0
        %4903 = vmatprep.mubr.bf16.mxu0 0
        %4904 = vmatmul.mubr.bf16.gmra.mrb[0].mxu0 %v4840
        %v4905 = vpop.f32.mrb[0].mxu0
        %v4906 = vadd.f32 0.0, %v4905
        %v4907 = vpop.f32.mrb[0].mxu0
        %v4908 = vpop.f32.mrb[0].mxu0
        %v4909 = vadd.f32 0.0, %v4908
        %v4910 = vpop.f32.mrb[0].mxu0
        %4911 = vmatprep.mubr.bf16.mxu0 0
        %4912 = vmatmul.mubr.bf16.gmra.mrb[0].mxu0 %v4843
        %v4913 = vpop.f32.mrb[0].mxu0
        %v4914 = vadd.f32 0.0, %v4913
        %v4915 = vpop.f32.mrb[0].mxu0
        %v4916 = vpop.f32.mrb[0].mxu0
        %v4917 = vadd.f32 0.0, %v4916
        %v4918 = vpop.f32.mrb[0].mxu0
        %4919 = vmatprep.mubr.bf16.mxu0 0
        %4920 = vmatmul.mubr.bf16.gmra.mrb[0].mxu0 %v4846
        %v4921 = vpop.f32.mrb[0].mxu0
        %v4922 = vadd.f32 0.0, %v4921
        %v4923 = vpop.f32.mrb[0].mxu0
        %v4924 = vpop.f32.mrb[0].mxu0
        %v4925 = vadd.f32 0.0, %v4924
        %v4926 = vpop.f32.mrb[0].mxu0
        %4927 = vmatprep.mubr.bf16.mxu0 0
        %4928 = vmatmul.mubr.bf16.gmra.mrb[0].mxu0 %v4849
        %v4929 = vpop.f32.mrb[0].mxu0
        %v4930 = vpop.f32.mrb[0].mxu0
        %v4931 = vpop.f32.mrb[0].mxu0
        %v4932 = vpop.f32.mrb[0].mxu0
        %4933 = vmatprep.mubr.bf16.mxu0 0
        %4934 = vmatmul.mubr.bf16.gmra.mrb[0].mxu0 %v4852
        %v4935 = vpop.f32.mrb[0].mxu0
        %v4936 = vadd.f32 0.0, %v4935
        %v4937 = vpop.f32.mrb[0].mxu0
        %v4938 = vpop.f32.mrb[0].mxu0
        %v4939 = vadd.f32 0.0, %v4938
        %v4940 = vpop.f32.mrb[0].mxu0
        %4941 = vmatprep.mubr.bf16.mxu0 0
        %4942 = vmatmul.mubr.bf16.gmra.mrb[0].mxu0 %v4855
        %v4943 = vpop.f32.mrb[0].mxu0
        %v4944 = vadd.f32 0.0, %v4943
        %v4945 = vpop.f32.mrb[0].mxu0
        %v4946 = vpop.f32.mrb[0].mxu0
        %v4947 = vadd.f32 0.0, %v4946
        %v4948 = vpop.f32.mrb[0].mxu0
        %4949 = vmatprep.mubr.bf16.mxu0 0
        %4950 = vmatmul.mubr.bf16.gmra.mrb[0].mxu0 %v4858
        %v4951 = vpop.f32.mrb[0].mxu0
        %v4952 = vadd.f32 0.0, %v4951
        %v4953 = vpop.f32.mrb[0].mxu0
        %v4954 = vpop.f32.mrb[0].mxu0
        %v4955 = vadd.f32 0.0, %v4954
        %v4956 = vpop.f32.mrb[0].mxu0
        %4957 = vmatprep.mubr.bf16.mxu0 0
        %4958 = vmatmul.mubr.bf16.gmra.mrb[0].mxu0 %v4861
        %v4959 = vpop.f32.mrb[0].mxu0
        %v4960 = vadd.f32 0.0, %v4959
        %v4961 = vpop.f32.mrb[0].mxu0
        %v4962 = vpop.f32.mrb[0].mxu0
        %v4963 = vadd.f32 0.0, %v4962
        %v4964 = vpop.f32.mrb[0].mxu0
        %4965 = vdwg.mxu0
        %v4966 = vmul.f32 %v4898, %v977
        %v4967 = vmul.f32 %v4901, %v978
        %v4968 = vmul.f32 %v4906, %v979
        %v4969 = vmul.f32 %v4909, %v980
        %v4970 = vmul.f32 %v4914, %v981
        %v4971 = vmul.f32 %v4917, %v982
        %v4972 = vmul.f32 %v4922, %v983
        %v4973 = vmul.f32 %v4925, %v984
        %v4974 = vmul.f32 %v4936, %v987
        %v4975 = vmul.f32 %v4939, %v988
        %v4976 = vmul.f32 %v4944, %v989
        %v4977 = vmul.f32 %v4947, %v990
        %v4978 = vmul.f32 %v4952, %v991
        %v4979 = vmul.f32 %v4955, %v992
        %v4980 = vmul.f32 %v4960, %v993
        %v4981 = vmul.f32 %v4963, %v994
        %v4982 = vadd.f32 %v4752, %v4966
        %v4983 = vadd.f32 %v4753, %v4967
        %v4984 = vadd.f32 %v4754, %v4968
        %v4985 = vadd.f32 %v4755, %v4969
        %v4986 = vadd.f32 %v4756, %v4970
        %v4987 = vadd.f32 %v4757, %v4971
        %v4988 = vadd.f32 %v4758, %v4972
        %v4989 = vadd.f32 %v4759, %v4973
        %v4990 = vadd.f32 %v4760, %v4974
        %v4991 = vadd.f32 %v4761, %v4975
        %v4992 = vadd.f32 %v4762, %v4976
        %v4993 = vadd.f32 %v4763, %v4977
        %v4994 = vadd.f32 %v4764, %v4978
        %v4995 = vadd.f32 %v4765, %v4979
        %v4996 = vadd.f32 %v4766, %v4980
        %v4997 = vadd.f32 %v4767, %v4981
        %v4998 = vld [vmem:[#allocation3 + $0x8] sm:$0xf0]
        %s4999 = scalar_lea.vmem %s4, 112
        %v5000 = vld [vmem:[%s4999] sm:$0xf]
        %v5001 = vld [vmem:[%s4999 + $0x4] sm:$0xf]
        %v5002 = vld [vmem:[%s4999 + $0x8] sm:$0xf]
        %v5003 = vld [vmem:[%s4999 + $0xc] sm:$0xf]
        %v5014 = vrot.slane %v4998, 4
        %v5015 = vrot.slane %v4504, 4
        %v5016 = vsel %vm1281, %v5014, %v5015
        %v5017 = vrot.slane %v4505, 4
        %v5018 = vsel %vm1281, %v5015, %v5017
        %v5019 = vrot.slane %v4506, 4
        %v5020 = vsel %vm1281, %v5017, %v5019
        %v5021 = vrot.slane %v4507, 4
        %v5022 = vsel %vm1281, %v5019, %v5021
        %v5023 = vrot.slane %v4508, 4
        %v5024 = vsel %vm1281, %v5021, %v5023
        %v5025 = vrot.slane %v4509, 4
        %v5026 = vsel %vm1281, %v5023, %v5025
        %v5027 = vrot.slane %v4510, 4
        %v5028 = vsel %vm1281, %v5025, %v5027
        %v5029 = vrot.slane %v4511, 4
        %v5030 = vsel %vm1281, %v5027, %v5029
        %v5031 = vrot.slane %v4769, 4
        %v5032 = vsel %vm1281, %v5029, %v5031
        %v5037 = vunpack.c.l.b16 %v5000
        %v5038 = vunpack.c.l.b16 %v5001
        %v5039 = vunpack.c.l.b16 %v5002
        %v5040 = vunpack.c.l.b16 %v5003
        %v5041 = vpack.c.b16 %v5038, %v5037
        %v5042 = vpack.c.b16 %v5040, %v5039
        %v5046 = vsel %vm1071, %v5016, 0
        %v5049 = vsel %vm1071, %v5018, 0
        %v5052 = vsel %vm1071, %v5020, 0
        %v5055 = vsel %vm1071, %v5022, 0
        %v5058 = vsel %vm1071, %v5024, 0
        %v5061 = vsel %vm1071, %v5026, 0
        %v5064 = vsel %vm1071, %v5028, 0
        %v5067 = vsel %vm1071, %v5030, 0
        %v5070 = vsel %vm1071, %v5032, 0
        %5072 = vmatprep.subr.bf16.mxu0 0
        %5073 = vmatpush1.bf16.msra.mxu0 %v5041
        %5074 = vmatprep.subr.bf16.mxu0 0
        %5075 = vmatpush1.bf16.msra.mxu0 %v5042
        %5076 = vmatprep.subr.bf16.mxu0 0
        %5077 = vmatpush1.bf16.msra.mxu0 0
        %5078 = vmatprep.subr.bf16.mxu0 0
        %5079 = vmatpush1.bf16.msra.mxu0 0
        %5080 = vmatprep.subr.bf16.mxu0 0
        %5081 = vmatpush1.bf16.msra.mxu0 0
        %5082 = vmatprep.subr.bf16.mxu0 0
        %5083 = vmatpush1.bf16.msra.mxu0 0
        %5084 = vmatprep.subr.bf16.mxu0 0
        %5085 = vmatpush1.bf16.msra.mxu0 0
        %5086 = vmatprep.subr.bf16.mxu0 0
        %5087 = vmatpush1.bf16.msra.mxu0 0
        %5088 = vmatprep.subr.bf16.mxu0 0
        %5089 = vmatpush1.bf16.msra.mxu0 0
        %5090 = vmatprep.subr.bf16.mxu0 0
        %5091 = vmatpush1.bf16.msra.mxu0 0
        %5092 = vmatprep.subr.bf16.mxu0 0
        %5093 = vmatpush1.bf16.msra.mxu0 0
        %5094 = vmatprep.subr.bf16.mxu0 0
        %5095 = vmatpush1.bf16.msra.mxu0 0
        %5096 = vmatprep.subr.bf16.mxu0 0
        %5097 = vmatpush1.bf16.msra.mxu0 0
        %5098 = vmatprep.subr.bf16.mxu0 0
        %5099 = vmatpush1.bf16.msra.mxu0 0
        %5100 = vmatprep.subr.bf16.mxu0 0
        %5101 = vmatpush1.bf16.msra.mxu0 0
        %5102 = vmatprep.subr.bf16.mxu0 0
        %5103 = vmatpush1.bf16.msra.mxu0 0
        %5104 = vmatprep.mubr.bf16.mxu0 0
        %5105 = vmatmul.mubr.bf16.gmra.mrb[0].mxu0 %v5046
        %v5106 = vpop.f32.mrb[0].mxu0
        %v5107 = vadd.f32 0.0, %v5106
        %v5108 = vpop.f32.mrb[0].mxu0
        %v5109 = vpop.f32.mrb[0].mxu0
        %v5110 = vadd.f32 0.0, %v5109
        %v5111 = vpop.f32.mrb[0].mxu0
        %5112 = vmatprep.mubr.bf16.mxu0 0
        %5113 = vmatmul.mubr.bf16.gmra.mrb[0].mxu0 %v5049
        %v5114 = vpop.f32.mrb[0].mxu0
        %v5115 = vadd.f32 0.0, %v5114
        %v5116 = vpop.f32.mrb[0].mxu0
        %v5117 = vpop.f32.mrb[0].mxu0
        %v5118 = vadd.f32 0.0, %v5117
        %v5119 = vpop.f32.mrb[0].mxu0
        %5120 = vmatprep.mubr.bf16.mxu0 0
        %5121 = vmatmul.mubr.bf16.gmra.mrb[0].mxu0 %v5052
        %v5122 = vpop.f32.mrb[0].mxu0
        %v5123 = vadd.f32 0.0, %v5122
        %v5124 = vpop.f32.mrb[0].mxu0
        %v5125 = vpop.f32.mrb[0].mxu0
        %v5126 = vadd.f32 0.0, %v5125
        %v5127 = vpop.f32.mrb[0].mxu0
        %5128 = vmatprep.mubr.bf16.mxu0 0
        %5129 = vmatmul.mubr.bf16.gmra.mrb[0].mxu0 %v5055
        %v5130 = vpop.f32.mrb[0].mxu0
        %v5131 = vadd.f32 0.0, %v5130
        %v5132 = vpop.f32.mrb[0].mxu0
        %v5133 = vpop.f32.mrb[0].mxu0
        %v5134 = vadd.f32 0.0, %v5133
        %v5135 = vpop.f32.mrb[0].mxu0
        %5136 = vmatprep.mubr.bf16.mxu0 0
        %5137 = vmatmul.mubr.bf16.gmra.mrb[0].mxu0 %v5058
        %v5138 = vpop.f32.mrb[0].mxu0
        %v5139 = vpop.f32.mrb[0].mxu0
        %v5140 = vpop.f32.mrb[0].mxu0
        %v5141 = vpop.f32.mrb[0].mxu0
        %5142 = vmatprep.mubr.bf16.mxu0 0
        %5143 = vmatmul.mubr.bf16.gmra.mrb[0].mxu0 %v5061
        %v5144 = vpop.f32.mrb[0].mxu0
        %v5145 = vadd.f32 0.0, %v5144
        %v5146 = vpop.f32.mrb[0].mxu0
        %v5147 = vpop.f32.mrb[0].mxu0
        %v5148 = vadd.f32 0.0, %v5147
        %v5149 = vpop.f32.mrb[0].mxu0
        %5150 = vmatprep.mubr.bf16.mxu0 0
        %5151 = vmatmul.mubr.bf16.gmra.mrb[0].mxu0 %v5064
        %v5152 = vpop.f32.mrb[0].mxu0
        %v5153 = vadd.f32 0.0, %v5152
        %v5154 = vpop.f32.mrb[0].mxu0
        %v5155 = vpop.f32.mrb[0].mxu0
        %v5156 = vadd.f32 0.0, %v5155
        %v5157 = vpop.f32.mrb[0].mxu0
        %5158 = vmatprep.mubr.bf16.mxu0 0
        %5159 = vmatmul.mubr.bf16.gmra.mrb[0].mxu0 %v5067
        %v5160 = vpop.f32.mrb[0].mxu0
        %v5161 = vadd.f32 0.0, %v5160
        %v5162 = vpop.f32.mrb[0].mxu0
        %v5163 = vpop.f32.mrb[0].mxu0
        %v5164 = vadd.f32 0.0, %v5163
        %v5165 = vpop.f32.mrb[0].mxu0
        %5166 = vmatprep.mubr.bf16.mxu0 0
        %5167 = vmatmul.mubr.bf16.gmra.mrb[0].mxu0 %v5070
        %v5168 = vpop.f32.mrb[0].mxu0
        %v5169 = vadd.f32 0.0, %v5168
        %v5170 = vpop.f32.mrb[0].mxu0
        %v5171 = vpop.f32.mrb[0].mxu0
        %v5172 = vadd.f32 0.0, %v5171
        %v5173 = vpop.f32.mrb[0].mxu0
        %5174 = vdwg.mxu0
        %v5175 = vadd.f32 %v4982, %v5107
        %v5176 = vadd.f32 %v4983, %v5110
        %v5177 = vadd.f32 %v4984, %v5115
        %v5178 = vadd.f32 %v4985, %v5118
        %v5179 = vadd.f32 %v4986, %v5123
        %v5180 = vadd.f32 %v4987, %v5126
        %v5181 = vadd.f32 %v4988, %v5131
        %v5182 = vadd.f32 %v4989, %v5134
        %v5183 = vadd.f32 %v4990, %v5145
        %v5184 = vadd.f32 %v4991, %v5148
        %v5185 = vadd.f32 %v4992, %v5153
        %v5186 = vadd.f32 %v4993, %v5156
        %v5187 = vadd.f32 %v4994, %v5161
        %v5188 = vadd.f32 %v4995, %v5164
        %v5189 = vadd.f32 %v4996, %v5169
        %v5190 = vadd.f32 %v4997, %v5172
        %v5191 = vld [vmem:[#allocation3 + $0x50] sm:$0x1f]
        %s5192 = scalar_lea.vmem %s4, 128
        %v5193 = vld [vmem:[%s5192] sm:$0xf]
        %v5194 = vld [vmem:[%s5192 + $0x4] sm:$0xf]
        %v5195 = vld [vmem:[%s5192 + $0x8] sm:$0xf]
        %v5196 = vld [vmem:[%s5192 + $0xc] sm:$0xf]
        %v5198 = vshrl.u32 %v4998, 16
        %v5200 = vrot.slane %v5198, 4
        %v5201 = vshll.u32 %v4998, 16
        %v5203 = vrot.slane %v5201, 5
        %v5204 = vor.u32 %v5200, %v5203
        %v5205 = vrot.slane %v4530, 4
        %v5206 = vrot.slane %v4526, 5
        %v5207 = vor.u32 %v5205, %v5206
        %v5208 = vsel %vm1166, %v5204, %v5207
        %v5209 = vrot.slane %v4538, 4
        %v5210 = vrot.slane %v4534, 5
        %v5211 = vor.u32 %v5209, %v5210
        %v5212 = vsel %vm1166, %v5207, %v5211
        %v5213 = vrot.slane %v4546, 4
        %v5214 = vrot.slane %v4542, 5
        %v5215 = vor.u32 %v5213, %v5214
        %v5216 = vsel %vm1166, %v5211, %v5215
        %v5217 = vrot.slane %v4554, 4
        %v5218 = vrot.slane %v4550, 5
        %v5219 = vor.u32 %v5217, %v5218
        %v5220 = vsel %vm1166, %v5215, %v5219
        %v5221 = vrot.slane %v4562, 4
        %v5222 = vrot.slane %v4558, 5
        %v5223 = vor.u32 %v5221, %v5222
        %v5224 = vsel %vm1166, %v5219, %v5223
        %v5225 = vrot.slane %v4570, 4
        %v5226 = vrot.slane %v4566, 5
        %v5227 = vor.u32 %v5225, %v5226
        %v5228 = vsel %vm1166, %v5223, %v5227
        %v5229 = vrot.slane %v4578, 4
        %v5230 = vrot.slane %v4574, 5
        %v5231 = vor.u32 %v5229, %v5230
        %v5232 = vsel %vm1166, %v5227, %v5231
        %v5233 = vrot.slane %v4586, 4
        %v5234 = vrot.slane %v4582, 5
        %v5235 = vor.u32 %v5233, %v5234
        %v5236 = vsel %vm1166, %v5231, %v5235
        %v5238 = vshrl.u32 %v5191, 16
        %v5240 = vrot.slane %v5238, 4
        %v5241 = vshll.u32 %v5191, 16
        %v5243 = vrot.slane %v5241, 5
        %v5244 = vor.u32 %v5240, %v5243
        %v5245 = vsel %vm1166, %v5235, %v5244
        %v5250 = vunpack.c.l.b16 %v5193
        %v5251 = vunpack.c.l.b16 %v5194
        %v5252 = vunpack.c.l.b16 %v5195
        %v5253 = vunpack.c.l.b16 %v5196
        %v5254 = vpack.c.b16 %v5251, %v5250
        %v5255 = vpack.c.b16 %v5253, %v5252
        %v5259 = vsel %vm1071, %v5208, 0
        %v5262 = vsel %vm1071, %v5212, 0
        %v5265 = vsel %vm1071, %v5216, 0
        %v5268 = vsel %vm1071, %v5220, 0
        %v5271 = vsel %vm1071, %v5224, 0
        %v5274 = vsel %vm1071, %v5228, 0
        %v5277 = vsel %vm1071, %v5232, 0
        %v5280 = vsel %vm1071, %v5236, 0
        %v5283 = vsel %vm1071, %v5245, 0
        %5285 = vmatprep.subr.bf16.mxu0 0
        %5286 = vmatpush1.bf16.msra.mxu0 %v5254
        %5287 = vmatprep.subr.bf16.mxu0 0
        %5288 = vmatpush1.bf16.msra.mxu0 %v5255
        %5289 = vmatprep.subr.bf16.mxu0 0
        %5290 = vmatpush1.bf16.msra.mxu0 0
        %5291 = vmatprep.subr.bf16.mxu0 0
        %5292 = vmatpush1.bf16.msra.mxu0 0
        %5293 = vmatprep.subr.bf16.mxu0 0
        %5294 = vmatpush1.bf16.msra.mxu0 0
        %5295 = vmatprep.subr.bf16.mxu0 0
        %5296 = vmatpush1.bf16.msra.mxu0 0
        %5297 = vmatprep.subr.bf16.mxu0 0
        %5298 = vmatpush1.bf16.msra.mxu0 0
        %5299 = vmatprep.subr.bf16.mxu0 0
        %5300 = vmatpush1.bf16.msra.mxu0 0
        %5301 = vmatprep.subr.bf16.mxu0 0
        %5302 = vmatpush1.bf16.msra.mxu0 0
        %5303 = vmatprep.subr.bf16.mxu0 0
        %5304 = vmatpush1.bf16.msra.mxu0 0
        %5305 = vmatprep.subr.bf16.mxu0 0
        %5306 = vmatpush1.bf16.msra.mxu0 0
        %5307 = vmatprep.subr.bf16.mxu0 0
        %5308 = vmatpush1.bf16.msra.mxu0 0
        %5309 = vmatprep.subr.bf16.mxu0 0
        %5310 = vmatpush1.bf16.msra.mxu0 0
        %5311 = vmatprep.subr.bf16.mxu0 0
        %5312 = vmatpush1.bf16.msra.mxu0 0
        %5313 = vmatprep.subr.bf16.mxu0 0
        %5314 = vmatpush1.bf16.msra.mxu0 0
        %5315 = vmatprep.subr.bf16.mxu0 0
        %5316 = vmatpush1.bf16.msra.mxu0 0
        %5317 = vmatprep.mubr.bf16.mxu0 0
        %5318 = vmatmul.mubr.bf16.gmra.mrb[0].mxu0 %v5259
        %v5319 = vpop.f32.mrb[0].mxu0
        %v5320 = vadd.f32 0.0, %v5319
        %v5321 = vpop.f32.mrb[0].mxu0
        %v5322 = vpop.f32.mrb[0].mxu0
        %v5323 = vadd.f32 0.0, %v5322
        %v5324 = vpop.f32.mrb[0].mxu0
        %5325 = vmatprep.mubr.bf16.mxu0 0
        %5326 = vmatmul.mubr.bf16.gmra.mrb[0].mxu0 %v5262
        %v5327 = vpop.f32.mrb[0].mxu0
        %v5328 = vadd.f32 0.0, %v5327
        %v5329 = vpop.f32.mrb[0].mxu0
        %v5330 = vpop.f32.mrb[0].mxu0
        %v5331 = vadd.f32 0.0, %v5330
        %v5332 = vpop.f32.mrb[0].mxu0
        %5333 = vmatprep.mubr.bf16.mxu0 0
        %5334 = vmatmul.mubr.bf16.gmra.mrb[0].mxu0 %v5265
        %v5335 = vpop.f32.mrb[0].mxu0
        %v5336 = vadd.f32 0.0, %v5335
        %v5337 = vpop.f32.mrb[0].mxu0
        %v5338 = vpop.f32.mrb[0].mxu0
        %v5339 = vadd.f32 0.0, %v5338
        %v5340 = vpop.f32.mrb[0].mxu0
        %5341 = vmatprep.mubr.bf16.mxu0 0
        %5342 = vmatmul.mubr.bf16.gmra.mrb[0].mxu0 %v5268
        %v5343 = vpop.f32.mrb[0].mxu0
        %v5344 = vadd.f32 0.0, %v5343
        %v5345 = vpop.f32.mrb[0].mxu0
        %v5346 = vpop.f32.mrb[0].mxu0
        %v5347 = vadd.f32 0.0, %v5346
        %v5348 = vpop.f32.mrb[0].mxu0
        %5349 = vmatprep.mubr.bf16.mxu0 0
        %5350 = vmatmul.mubr.bf16.gmra.mrb[0].mxu0 %v5271
        %v5351 = vpop.f32.mrb[0].mxu0
        %v5352 = vpop.f32.mrb[0].mxu0
        %v5353 = vpop.f32.mrb[0].mxu0
        %v5354 = vpop.f32.mrb[0].mxu0
        %5355 = vmatprep.mubr.bf16.mxu0 0
        %5356 = vmatmul.mubr.bf16.gmra.mrb[0].mxu0 %v5274
        %v5357 = vpop.f32.mrb[0].mxu0
        %v5358 = vadd.f32 0.0, %v5357
        %v5359 = vpop.f32.mrb[0].mxu0
        %v5360 = vpop.f32.mrb[0].mxu0
        %v5361 = vadd.f32 0.0, %v5360
        %v5362 = vpop.f32.mrb[0].mxu0
        %5363 = vmatprep.mubr.bf16.mxu0 0
        %5364 = vmatmul.mubr.bf16.gmra.mrb[0].mxu0 %v5277
        %v5365 = vpop.f32.mrb[0].mxu0
        %v5366 = vadd.f32 0.0, %v5365
        %v5367 = vpop.f32.mrb[0].mxu0
        %v5368 = vpop.f32.mrb[0].mxu0
        %v5369 = vadd.f32 0.0, %v5368
        %v5370 = vpop.f32.mrb[0].mxu0
        %5371 = vmatprep.mubr.bf16.mxu0 0
        %5372 = vmatmul.mubr.bf16.gmra.mrb[0].mxu0 %v5280
        %v5373 = vpop.f32.mrb[0].mxu0
        %v5374 = vadd.f32 0.0, %v5373
        %v5375 = vpop.f32.mrb[0].mxu0
        %v5376 = vpop.f32.mrb[0].mxu0
        %v5377 = vadd.f32 0.0, %v5376
        %v5378 = vpop.f32.mrb[0].mxu0
        %5379 = vmatprep.mubr.bf16.mxu0 0
        %5380 = vmatmul.mubr.bf16.gmra.mrb[0].mxu0 %v5283
        %v5381 = vpop.f32.mrb[0].mxu0
        %v5382 = vadd.f32 0.0, %v5381
        %v5383 = vpop.f32.mrb[0].mxu0
        %v5384 = vpop.f32.mrb[0].mxu0
        %v5385 = vadd.f32 0.0, %v5384
        %v5386 = vpop.f32.mrb[0].mxu0
        %5387 = vdwg.mxu0
        %v5388 = vmul.f32 %v5320, %v1031
        %v5389 = vmul.f32 %v5323, %v1032
        %v5390 = vmul.f32 %v5328, %v1033
        %v5391 = vmul.f32 %v5331, %v1034
        %v5392 = vmul.f32 %v5336, %v1035
        %v5393 = vmul.f32 %v5339, %v1036
        %v5394 = vmul.f32 %v5344, %v1037
        %v5395 = vmul.f32 %v5347, %v1038
        %v5396 = vmul.f32 %v5358, %v1041
        %v5397 = vmul.f32 %v5361, %v1042
        %v5398 = vmul.f32 %v5366, %v1043
        %v5399 = vmul.f32 %v5369, %v1044
        %v5400 = vmul.f32 %v5374, %v1045
        %v5401 = vmul.f32 %v5377, %v1046
        %v5402 = vmul.f32 %v5382, %v1047
        %v5403 = vmul.f32 %v5385, %v1048
        %v5404 = vadd.f32 %v5175, %v5388
        %v5405 = vadd.f32 %v5176, %v5389
        %v5406 = vadd.f32 %v5177, %v5390
        %v5407 = vadd.f32 %v5178, %v5391
        %v5408 = vadd.f32 %v5179, %v5392
        %v5409 = vadd.f32 %v5180, %v5393
        %v5410 = vadd.f32 %v5181, %v5394
        %v5411 = vadd.f32 %v5182, %v5395
        %v5412 = vadd.f32 %v5183, %v5396
        %v5413 = vadd.f32 %v5184, %v5397
        %v5414 = vadd.f32 %v5185, %v5398
        %v5415 = vadd.f32 %v5186, %v5399
        %v5416 = vadd.f32 %v5187, %v5400
        %v5417 = vadd.f32 %v5188, %v5401
        %v5418 = vadd.f32 %v5189, %v5402
        %v5419 = vadd.f32 %v5190, %v5403
        %v5420 = vld [vmem:[%s5] sm:$0x1]
        %v5422 = vlaneseq
        %v5423 = vshrl.u32 %v5422, 7
        %v5424 = vsub.s32 0, %v5423
        %v5425 = vrot.slane %v5420, %v5424
        %v5427 = vadd.f32 %v5404, %v5425
        %v5428 = vadd.f32 %v5405, %v5425
        %v5429 = vadd.f32 %v5406, %v5425
        %v5430 = vadd.f32 %v5407, %v5425
        %v5431 = vadd.f32 %v5408, %v5425
        %v5432 = vadd.f32 %v5409, %v5425
        %v5433 = vadd.f32 %v5410, %v5425
        %v5434 = vadd.f32 %v5411, %v5425
        %v5435 = vadd.f32 %v5412, %v5425
        %v5436 = vadd.f32 %v5413, %v5425
        %v5437 = vadd.f32 %v5414, %v5425
        %v5438 = vadd.f32 %v5415, %v5425
        %v5439 = vadd.f32 %v5416, %v5425
        %v5440 = vadd.f32 %v5417, %v5425
        %v5441 = vadd.f32 %v5418, %v5425
        %v5442 = vadd.f32 %v5419, %v5425
        %v5443 = vmax.f32 %v5427, 0.0
        %v5444 = vmax.f32 %v5428, 0.0
        %v5445 = vmax.f32 %v5429, 0.0
        %v5446 = vmax.f32 %v5430, 0.0
        %v5447 = vmax.f32 %v5431, 0.0
        %v5448 = vmax.f32 %v5432, 0.0
        %v5449 = vmax.f32 %v5433, 0.0
        %v5450 = vmax.f32 %v5434, 0.0
        %v5451 = vmax.f32 %v5435, 0.0
        %v5452 = vmax.f32 %v5436, 0.0
        %v5453 = vmax.f32 %v5437, 0.0
        %v5454 = vmax.f32 %v5438, 0.0
        %v5455 = vmax.f32 %v5439, 0.0
        %v5456 = vmax.f32 %v5440, 0.0
        %v5457 = vmax.f32 %v5441, 0.0
        %v5458 = vmax.f32 %v5442, 0.0
        %v5459 = vpack.c.bf16 %v5444, %v5443
        %v5460 = vpack.c.bf16 %v5446, %v5445
        %v5461 = vpack.c.bf16 %v5448, %v5447
        %v5462 = vpack.c.bf16 %v5450, %v5449
        %5463 = vst.msk [vmem:[#allocation4 + $0x8] sm:$0xff] %vm1075, %v5459
        %5464 = vst.msk [vmem:[#allocation4 + $0x10] sm:$0xff] %vm1075, %v5460
        %5465 = vst.msk [vmem:[#allocation4 + $0x18] sm:$0xff] %vm1075, %v5461
        %5466 = vst.msk [vmem:[#allocation4 + $0x20] sm:$0xff] %vm1075, %v5462
        %v5467 = vpack.c.bf16 %v5452, %v5451
        %v5468 = vpack.c.bf16 %v5454, %v5453
        %v5469 = vpack.c.bf16 %v5456, %v5455
        %v5470 = vpack.c.bf16 %v5458, %v5457
        %5471 = vst.msk [vmem:[#allocation4 + $0x30] sm:$0xff] %vm1075, %v5467
        %5472 = vst.msk [vmem:[#allocation4 + $0x38] sm:$0xff] %vm1075, %v5468
        %5473 = vst.msk [vmem:[#allocation4 + $0x40] sm:$0xff] %vm1075, %v5469
        %5474 = vst.msk [vmem:[#allocation4 + $0x48] sm:$0xff] %vm1075, %v5470
        %v5475 = vld [vmem:[#allocation4] sm:$0xf8]
        %v5476 = vld [vmem:[#allocation4 + $0x8] sm:$0xff]
        %v5477 = vld [vmem:[#allocation4 + $0x10] sm:$0xff]
        %v5478 = vld [vmem:[#allocation4 + $0x18] sm:$0xff]
        %v5479 = vld [vmem:[#allocation4 + $0x20] sm:$0xff]
        %v5480 = vld [vmem:[#allocation4 + $0x28] sm:$0xff]
        %v5481 = vld [vmem:[#allocation4 + $0x30] sm:$0xff]
        %v5482 = vld [vmem:[#allocation4 + $0x38] sm:$0xff]
        %v5483 = vld [vmem:[#allocation4 + $0x40] sm:$0xff]
        %v5484 = vld [vmem:[#allocation4 + $0x48] sm:$0xf]
        %v5485 = vld [vmem:[%s6] sm:$0xf]
        %v5486 = vld [vmem:[%s6 + $0x4] sm:$0xf]
        %v5488 = vshrl.u32 %v5475, 16
        %v5490 = vrot.slane %v5488, 3
        %v5491 = vshll.u32 %v5475, 16
        %v5493 = vrot.slane %v5491, 4
        %v5494 = vor.u32 %v5490, %v5493
        %v5496 = vshrl.u32 %v5476, 16
        %v5498 = vrot.slane %v5496, 3
        %v5499 = vshll.u32 %v5476, 16
        %v5501 = vrot.slane %v5499, 4
        %v5502 = vor.u32 %v5498, %v5501
        %v5503 = vsel %vm1435, %v5494, %v5502
        %v5505 = vshrl.u32 %v5477, 16
        %v5507 = vrot.slane %v5505, 3
        %v5508 = vshll.u32 %v5477, 16
        %v5510 = vrot.slane %v5508, 4
        %v5511 = vor.u32 %v5507, %v5510
        %v5512 = vsel %vm1435, %v5502, %v5511
        %v5514 = vshrl.u32 %v5478, 16
        %v5516 = vrot.slane %v5514, 3
        %v5517 = vshll.u32 %v5478, 16
        %v5519 = vrot.slane %v5517, 4
        %v5520 = vor.u32 %v5516, %v5519
        %v5521 = vsel %vm1435, %v5511, %v5520
        %v5523 = vshrl.u32 %v5479, 16
        %v5525 = vrot.slane %v5523, 3
        %v5526 = vshll.u32 %v5479, 16
        %v5528 = vrot.slane %v5526, 4
        %v5529 = vor.u32 %v5525, %v5528
        %v5530 = vsel %vm1435, %v5520, %v5529
        %v5532 = vshrl.u32 %v5480, 16
        %v5534 = vrot.slane %v5532, 3
        %v5535 = vshll.u32 %v5480, 16
        %v5537 = vrot.slane %v5535, 4
        %v5538 = vor.u32 %v5534, %v5537
        %v5539 = vsel %vm1435, %v5529, %v5538
        %v5541 = vshrl.u32 %v5481, 16
        %v5543 = vrot.slane %v5541, 3
        %v5544 = vshll.u32 %v5481, 16
        %v5546 = vrot.slane %v5544, 4
        %v5547 = vor.u32 %v5543, %v5546
        %v5548 = vsel %vm1435, %v5538, %v5547
        %v5550 = vshrl.u32 %v5482, 16
        %v5552 = vrot.slane %v5550, 3
        %v5553 = vshll.u32 %v5482, 16
        %v5555 = vrot.slane %v5553, 4
        %v5556 = vor.u32 %v5552, %v5555
        %v5557 = vsel %vm1435, %v5547, %v5556
        %v5559 = vshrl.u32 %v5483, 16
        %v5561 = vrot.slane %v5559, 3
        %v5562 = vshll.u32 %v5483, 16
        %v5564 = vrot.slane %v5562, 4
        %v5565 = vor.u32 %v5561, %v5564
        %v5566 = vsel %vm1435, %v5556, %v5565
        %v5568 = vshrl.u32 %v5484, 16
        %v5570 = vrot.slane %v5568, 3
        %v5571 = vshll.u32 %v5484, 16
        %v5573 = vrot.slane %v5571, 4
        %v5574 = vor.u32 %v5570, %v5573
        %v5575 = vsel %vm1435, %v5565, %v5574
        %v5578 = vunpack.c.l.b16 %v5485
        %v5579 = vunpack.c.l.b16 %v5486
        %v5580 = vpack.c.b16 %v5579, %v5578
        %v5583 = vsel %vm1075, %v5503, 0
        %v5586 = vsel %vm1075, %v5512, 0
        %v5589 = vsel %vm1075, %v5521, 0
        %v5592 = vsel %vm1075, %v5530, 0
        %v5595 = vsel %vm1075, %v5539, 0
        %v5598 = vsel %vm1075, %v5548, 0
        %v5601 = vsel %vm1075, %v5557, 0
        %v5604 = vsel %vm1075, %v5566, 0
        %v5607 = vsel %vm1075, %v5575, 0
        %5609 = vmatprep.subr.bf16.mxu0 0
        %5610 = vmatpush1.bf16.msra.mxu0 %v5580
        %5611 = vmatprep.subr.bf16.mxu0 0
        %5612 = vmatpush1.bf16.msra.mxu0 0
        %5613 = vmatprep.subr.bf16.mxu0 0
        %5614 = vmatpush1.bf16.msra.mxu0 0
        %5615 = vmatprep.subr.bf16.mxu0 0
        %5616 = vmatpush1.bf16.msra.mxu0 0
        %5617 = vmatprep.subr.bf16.mxu0 0
        %5618 = vmatpush1.bf16.msra.mxu0 0
        %5619 = vmatprep.subr.bf16.mxu0 0
        %5620 = vmatpush1.bf16.msra.mxu0 0
        %5621 = vmatprep.subr.bf16.mxu0 0
        %5622 = vmatpush1.bf16.msra.mxu0 0
        %5623 = vmatprep.subr.bf16.mxu0 0
        %5624 = vmatpush1.bf16.msra.mxu0 0
        %5625 = vmatprep.subr.bf16.mxu0 0
        %5626 = vmatpush1.bf16.msra.mxu0 0
        %5627 = vmatprep.subr.bf16.mxu0 0
        %5628 = vmatpush1.bf16.msra.mxu0 0
        %5629 = vmatprep.subr.bf16.mxu0 0
        %5630 = vmatpush1.bf16.msra.mxu0 0
        %5631 = vmatprep.subr.bf16.mxu0 0
        %5632 = vmatpush1.bf16.msra.mxu0 0
        %5633 = vmatprep.subr.bf16.mxu0 0
        %5634 = vmatpush1.bf16.msra.mxu0 0
        %5635 = vmatprep.subr.bf16.mxu0 0
        %5636 = vmatpush1.bf16.msra.mxu0 0
        %5637 = vmatprep.subr.bf16.mxu0 0
        %5638 = vmatpush1.bf16.msra.mxu0 0
        %5639 = vmatprep.subr.bf16.mxu0 0
        %5640 = vmatpush1.bf16.msra.mxu0 0
        %5641 = vmatprep.mubr.bf16.mxu0 0
        %5642 = vmatmul.mubr.bf16.gmra.mrb[0].mxu0 %v5583
        %v5643 = vpop.f32.mrb[0].mxu0
        %v5644 = vadd.f32 0.0, %v5643
        %v5645 = vpop.f32.mrb[0].mxu0
        %v5646 = vpop.f32.mrb[0].mxu0
        %v5647 = vadd.f32 0.0, %v5646
        %v5648 = vpop.f32.mrb[0].mxu0
        %5649 = vmatprep.mubr.bf16.mxu0 0
        %5650 = vmatmul.mubr.bf16.gmra.mrb[0].mxu0 %v5586
        %v5651 = vpop.f32.mrb[0].mxu0
        %v5652 = vadd.f32 0.0, %v5651
        %v5653 = vpop.f32.mrb[0].mxu0
        %v5654 = vpop.f32.mrb[0].mxu0
        %v5655 = vadd.f32 0.0, %v5654
        %v5656 = vpop.f32.mrb[0].mxu0
        %5657 = vmatprep.mubr.bf16.mxu0 0
        %5658 = vmatmul.mubr.bf16.gmra.mrb[0].mxu0 %v5589
        %v5659 = vpop.f32.mrb[0].mxu0
        %v5660 = vadd.f32 0.0, %v5659
        %v5661 = vpop.f32.mrb[0].mxu0
        %v5662 = vpop.f32.mrb[0].mxu0
        %v5663 = vadd.f32 0.0, %v5662
        %v5664 = vpop.f32.mrb[0].mxu0
        %5665 = vmatprep.mubr.bf16.mxu0 0
        %5666 = vmatmul.mubr.bf16.gmra.mrb[0].mxu0 %v5592
        %v5667 = vpop.f32.mrb[0].mxu0
        %v5668 = vadd.f32 0.0, %v5667
        %v5669 = vpop.f32.mrb[0].mxu0
        %v5670 = vpop.f32.mrb[0].mxu0
        %v5671 = vadd.f32 0.0, %v5670
        %v5672 = vpop.f32.mrb[0].mxu0
        %5673 = vmatprep.mubr.bf16.mxu0 0
        %5674 = vmatmul.mubr.bf16.gmra.mrb[0].mxu0 %v5595
        %v5675 = vpop.f32.mrb[0].mxu0
        %v5676 = vpop.f32.mrb[0].mxu0
        %v5677 = vpop.f32.mrb[0].mxu0
        %v5678 = vpop.f32.mrb[0].mxu0
        %5679 = vmatprep.mubr.bf16.mxu0 0
        %5680 = vmatmul.mubr.bf16.gmra.mrb[0].mxu0 %v5598
        %v5681 = vpop.f32.mrb[0].mxu0
        %v5682 = vadd.f32 0.0, %v5681
        %v5683 = vpop.f32.mrb[0].mxu0
        %v5684 = vpop.f32.mrb[0].mxu0
        %v5685 = vadd.f32 0.0, %v5684
        %v5686 = vpop.f32.mrb[0].mxu0
        %5687 = vmatprep.mubr.bf16.mxu0 0
        %5688 = vmatmul.mubr.bf16.gmra.mrb[0].mxu0 %v5601
        %v5689 = vpop.f32.mrb[0].mxu0
        %v5690 = vadd.f32 0.0, %v5689
        %v5691 = vpop.f32.mrb[0].mxu0
        %v5692 = vpop.f32.mrb[0].mxu0
        %v5693 = vadd.f32 0.0, %v5692
        %v5694 = vpop.f32.mrb[0].mxu0
        %5695 = vmatprep.mubr.bf16.mxu0 0
        %5696 = vmatmul.mubr.bf16.gmra.mrb[0].mxu0 %v5604
        %v5697 = vpop.f32.mrb[0].mxu0
        %v5698 = vadd.f32 0.0, %v5697
        %v5699 = vpop.f32.mrb[0].mxu0
        %v5700 = vpop.f32.mrb[0].mxu0
        %v5701 = vadd.f32 0.0, %v5700
        %v5702 = vpop.f32.mrb[0].mxu0
        %5703 = vmatprep.mubr.bf16.mxu0 0
        %5704 = vmatmul.mubr.bf16.gmra.mrb[0].mxu0 %v5607
        %v5705 = vpop.f32.mrb[0].mxu0
        %v5706 = vadd.f32 0.0, %v5705
        %v5707 = vpop.f32.mrb[0].mxu0
        %v5708 = vpop.f32.mrb[0].mxu0
        %v5709 = vadd.f32 0.0, %v5708
        %v5710 = vpop.f32.mrb[0].mxu0
        %5711 = vdwg.mxu0
        %v5712 = vmul.f32 %v5644, %v977
        %v5713 = vmul.f32 %v5647, %v978
        %v5714 = vmul.f32 %v5652, %v979
        %v5715 = vmul.f32 %v5655, %v980
        %v5716 = vmul.f32 %v5660, %v981
        %v5717 = vmul.f32 %v5663, %v982
        %v5718 = vmul.f32 %v5668, %v983
        %v5719 = vmul.f32 %v5671, %v984
        %v5720 = vmul.f32 %v5682, %v987
        %v5721 = vmul.f32 %v5685, %v988
        %v5722 = vmul.f32 %v5690, %v989
        %v5723 = vmul.f32 %v5693, %v990
        %v5724 = vmul.f32 %v5698, %v991
        %v5725 = vmul.f32 %v5701, %v992
        %v5726 = vmul.f32 %v5706, %v993
        %v5727 = vmul.f32 %v5709, %v994
        %v5728 = vld [vmem:[#allocation4] sm:$0xf0]
        %s5729 = scalar_lea.vmem %s6, 8
        %v5730 = vld [vmem:[%s5729] sm:$0xf]
        %v5731 = vld [vmem:[%s5729 + $0x4] sm:$0xf]
        %v5742 = vrot.slane %v5728, 4
        %v5743 = vrot.slane %v5476, 4
        %v5744 = vsel %vm1281, %v5742, %v5743
        %v5745 = vrot.slane %v5477, 4
        %v5746 = vsel %vm1281, %v5743, %v5745
        %v5747 = vrot.slane %v5478, 4
        %v5748 = vsel %vm1281, %v5745, %v5747
        %v5749 = vrot.slane %v5479, 4
        %v5750 = vsel %vm1281, %v5747, %v5749
        %v5751 = vrot.slane %v5480, 4
        %v5752 = vsel %vm1281, %v5749, %v5751
        %v5753 = vrot.slane %v5481, 4
        %v5754 = vsel %vm1281, %v5751, %v5753
        %v5755 = vrot.slane %v5482, 4
        %v5756 = vsel %vm1281, %v5753, %v5755
        %v5757 = vrot.slane %v5483, 4
        %v5758 = vsel %vm1281, %v5755, %v5757
        %v5759 = vrot.slane %v5484, 4
        %v5760 = vsel %vm1281, %v5757, %v5759
        %v5763 = vunpack.c.l.b16 %v5730
        %v5764 = vunpack.c.l.b16 %v5731
        %v5765 = vpack.c.b16 %v5764, %v5763
        %v5768 = vsel %vm1075, %v5744, 0
        %v5771 = vsel %vm1075, %v5746, 0
        %v5774 = vsel %vm1075, %v5748, 0
        %v5777 = vsel %vm1075, %v5750, 0
        %v5780 = vsel %vm1075, %v5752, 0
        %v5783 = vsel %vm1075, %v5754, 0
        %v5786 = vsel %vm1075, %v5756, 0
        %v5789 = vsel %vm1075, %v5758, 0
        %v5792 = vsel %vm1075, %v5760, 0
        %5794 = vmatprep.subr.bf16.mxu0 0
        %5795 = vmatpush1.bf16.msra.mxu0 %v5765
        %5796 = vmatprep.subr.bf16.mxu0 0
        %5797 = vmatpush1.bf16.msra.mxu0 0
        %5798 = vmatprep.subr.bf16.mxu0 0
        %5799 = vmatpush1.bf16.msra.mxu0 0
        %5800 = vmatprep.subr.bf16.mxu0 0
        %5801 = vmatpush1.bf16.msra.mxu0 0
        %5802 = vmatprep.subr.bf16.mxu0 0
        %5803 = vmatpush1.bf16.msra.mxu0 0
        %5804 = vmatprep.subr.bf16.mxu0 0
        %5805 = vmatpush1.bf16.msra.mxu0 0
        %5806 = vmatprep.subr.bf16.mxu0 0
        %5807 = vmatpush1.bf16.msra.mxu0 0
        %5808 = vmatprep.subr.bf16.mxu0 0
        %5809 = vmatpush1.bf16.msra.mxu0 0
        %5810 = vmatprep.subr.bf16.mxu0 0
        %5811 = vmatpush1.bf16.msra.mxu0 0
        %5812 = vmatprep.subr.bf16.mxu0 0
        %5813 = vmatpush1.bf16.msra.mxu0 0
        %5814 = vmatprep.subr.bf16.mxu0 0
        %5815 = vmatpush1.bf16.msra.mxu0 0
        %5816 = vmatprep.subr.bf16.mxu0 0
        %5817 = vmatpush1.bf16.msra.mxu0 0
        %5818 = vmatprep.subr.bf16.mxu0 0
        %5819 = vmatpush1.bf16.msra.mxu0 0
        %5820 = vmatprep.subr.bf16.mxu0 0
        %5821 = vmatpush1.bf16.msra.mxu0 0
        %5822 = vmatprep.subr.bf16.mxu0 0
        %5823 = vmatpush1.bf16.msra.mxu0 0
        %5824 = vmatprep.subr.bf16.mxu0 0
        %5825 = vmatpush1.bf16.msra.mxu0 0
        %5826 = vmatprep.mubr.bf16.mxu0 0
        %5827 = vmatmul.mubr.bf16.gmra.mrb[0].mxu0 %v5768
        %v5828 = vpop.f32.mrb[0].mxu0
        %v5829 = vadd.f32 0.0, %v5828
        %v5830 = vpop.f32.mrb[0].mxu0
        %v5831 = vpop.f32.mrb[0].mxu0
        %v5832 = vadd.f32 0.0, %v5831
        %v5833 = vpop.f32.mrb[0].mxu0
        %5834 = vmatprep.mubr.bf16.mxu0 0
        %5835 = vmatmul.mubr.bf16.gmra.mrb[0].mxu0 %v5771
        %v5836 = vpop.f32.mrb[0].mxu0
        %v5837 = vadd.f32 0.0, %v5836
        %v5838 = vpop.f32.mrb[0].mxu0
        %v5839 = vpop.f32.mrb[0].mxu0
        %v5840 = vadd.f32 0.0, %v5839
        %v5841 = vpop.f32.mrb[0].mxu0
        %5842 = vmatprep.mubr.bf16.mxu0 0
        %5843 = vmatmul.mubr.bf16.gmra.mrb[0].mxu0 %v5774
        %v5844 = vpop.f32.mrb[0].mxu0
        %v5845 = vadd.f32 0.0, %v5844
        %v5846 = vpop.f32.mrb[0].mxu0
        %v5847 = vpop.f32.mrb[0].mxu0
        %v5848 = vadd.f32 0.0, %v5847
        %v5849 = vpop.f32.mrb[0].mxu0
        %5850 = vmatprep.mubr.bf16.mxu0 0
        %5851 = vmatmul.mubr.bf16.gmra.mrb[0].mxu0 %v5777
        %v5852 = vpop.f32.mrb[0].mxu0
        %v5853 = vadd.f32 0.0, %v5852
        %v5854 = vpop.f32.mrb[0].mxu0
        %v5855 = vpop.f32.mrb[0].mxu0
        %v5856 = vadd.f32 0.0, %v5855
        %v5857 = vpop.f32.mrb[0].mxu0
        %5858 = vmatprep.mubr.bf16.mxu0 0
        %5859 = vmatmul.mubr.bf16.gmra.mrb[0].mxu0 %v5780
        %v5860 = vpop.f32.mrb[0].mxu0
        %v5861 = vpop.f32.mrb[0].mxu0
        %v5862 = vpop.f32.mrb[0].mxu0
        %v5863 = vpop.f32.mrb[0].mxu0
        %5864 = vmatprep.mubr.bf16.mxu0 0
        %5865 = vmatmul.mubr.bf16.gmra.mrb[0].mxu0 %v5783
        %v5866 = vpop.f32.mrb[0].mxu0
        %v5867 = vadd.f32 0.0, %v5866
        %v5868 = vpop.f32.mrb[0].mxu0
        %v5869 = vpop.f32.mrb[0].mxu0
        %v5870 = vadd.f32 0.0, %v5869
        %v5871 = vpop.f32.mrb[0].mxu0
        %5872 = vmatprep.mubr.bf16.mxu0 0
        %5873 = vmatmul.mubr.bf16.gmra.mrb[0].mxu0 %v5786
        %v5874 = vpop.f32.mrb[0].mxu0
        %v5875 = vadd.f32 0.0, %v5874
        %v5876 = vpop.f32.mrb[0].mxu0
        %v5877 = vpop.f32.mrb[0].mxu0
        %v5878 = vadd.f32 0.0, %v5877
        %v5879 = vpop.f32.mrb[0].mxu0
        %5880 = vmatprep.mubr.bf16.mxu0 0
        %5881 = vmatmul.mubr.bf16.gmra.mrb[0].mxu0 %v5789
        %v5882 = vpop.f32.mrb[0].mxu0
        %v5883 = vadd.f32 0.0, %v5882
        %v5884 = vpop.f32.mrb[0].mxu0
        %v5885 = vpop.f32.mrb[0].mxu0
        %v5886 = vadd.f32 0.0, %v5885
        %v5887 = vpop.f32.mrb[0].mxu0
        %5888 = vmatprep.mubr.bf16.mxu0 0
        %5889 = vmatmul.mubr.bf16.gmra.mrb[0].mxu0 %v5792
        %v5890 = vpop.f32.mrb[0].mxu0
        %v5891 = vadd.f32 0.0, %v5890
        %v5892 = vpop.f32.mrb[0].mxu0
        %v5893 = vpop.f32.mrb[0].mxu0
        %v5894 = vadd.f32 0.0, %v5893
        %v5895 = vpop.f32.mrb[0].mxu0
        %5896 = vdwg.mxu0
        %v5897 = vadd.f32 %v5712, %v5829
        %v5898 = vadd.f32 %v5713, %v5832
        %v5899 = vadd.f32 %v5714, %v5837
        %v5900 = vadd.f32 %v5715, %v5840
        %v5901 = vadd.f32 %v5716, %v5845
        %v5902 = vadd.f32 %v5717, %v5848
        %v5903 = vadd.f32 %v5718, %v5853
        %v5904 = vadd.f32 %v5719, %v5856
        %v5905 = vadd.f32 %v5720, %v5867
        %v5906 = vadd.f32 %v5721, %v5870
        %v5907 = vadd.f32 %v5722, %v5875
        %v5908 = vadd.f32 %v5723, %v5878
        %v5909 = vadd.f32 %v5724, %v5883
        %v5910 = vadd.f32 %v5725, %v5886
        %v5911 = vadd.f32 %v5726, %v5891
        %v5912 = vadd.f32 %v5727, %v5894
        %v5913 = vld [vmem:[#allocation4 + $0x48] sm:$0x1f]
        %s5914 = scalar_lea.vmem %s6, 16
        %v5915 = vld [vmem:[%s5914] sm:$0xf]
        %v5916 = vld [vmem:[%s5914 + $0x4] sm:$0xf]
        %v5918 = vshrl.u32 %v5728, 16
        %v5920 = vrot.slane %v5918, 4
        %v5921 = vshll.u32 %v5728, 16
        %v5923 = vrot.slane %v5921, 5
        %v5924 = vor.u32 %v5920, %v5923
        %v5925 = vrot.slane %v5496, 4
        %v5926 = vrot.slane %v5499, 5
        %v5927 = vor.u32 %v5925, %v5926
        %v5928 = vsel %vm1166, %v5924, %v5927
        %v5929 = vrot.slane %v5505, 4
        %v5930 = vrot.slane %v5508, 5
        %v5931 = vor.u32 %v5929, %v5930
        %v5932 = vsel %vm1166, %v5927, %v5931
        %v5933 = vrot.slane %v5514, 4
        %v5934 = vrot.slane %v5517, 5
        %v5935 = vor.u32 %v5933, %v5934
        %v5936 = vsel %vm1166, %v5931, %v5935
        %v5937 = vrot.slane %v5523, 4
        %v5938 = vrot.slane %v5526, 5
        %v5939 = vor.u32 %v5937, %v5938
        %v5940 = vsel %vm1166, %v5935, %v5939
        %v5941 = vrot.slane %v5532, 4
        %v5942 = vrot.slane %v5535, 5
        %v5943 = vor.u32 %v5941, %v5942
        %v5944 = vsel %vm1166, %v5939, %v5943
        %v5945 = vrot.slane %v5541, 4
        %v5946 = vrot.slane %v5544, 5
        %v5947 = vor.u32 %v5945, %v5946
        %v5948 = vsel %vm1166, %v5943, %v5947
        %v5949 = vrot.slane %v5550, 4
        %v5950 = vrot.slane %v5553, 5
        %v5951 = vor.u32 %v5949, %v5950
        %v5952 = vsel %vm1166, %v5947, %v5951
        %v5953 = vrot.slane %v5559, 4
        %v5954 = vrot.slane %v5562, 5
        %v5955 = vor.u32 %v5953, %v5954
        %v5956 = vsel %vm1166, %v5951, %v5955
        %v5958 = vshrl.u32 %v5913, 16
        %v5960 = vrot.slane %v5958, 4
        %v5961 = vshll.u32 %v5913, 16
        %v5963 = vrot.slane %v5961, 5
        %v5964 = vor.u32 %v5960, %v5963
        %v5965 = vsel %vm1166, %v5955, %v5964
        %v5968 = vunpack.c.l.b16 %v5915
        %v5969 = vunpack.c.l.b16 %v5916
        %v5970 = vpack.c.b16 %v5969, %v5968
        %v5973 = vsel %vm1075, %v5928, 0
        %v5976 = vsel %vm1075, %v5932, 0
        %v5979 = vsel %vm1075, %v5936, 0
        %v5982 = vsel %vm1075, %v5940, 0
        %v5985 = vsel %vm1075, %v5944, 0
        %v5988 = vsel %vm1075, %v5948, 0
        %v5991 = vsel %vm1075, %v5952, 0
        %v5994 = vsel %vm1075, %v5956, 0
        %v5997 = vsel %vm1075, %v5965, 0
        %5999 = vmatprep.subr.bf16.mxu0 0
        %6000 = vmatpush1.bf16.msra.mxu0 %v5970
        %6001 = vmatprep.subr.bf16.mxu0 0
        %6002 = vmatpush1.bf16.msra.mxu0 0
        %6003 = vmatprep.subr.bf16.mxu0 0
        %6004 = vmatpush1.bf16.msra.mxu0 0
        %6005 = vmatprep.subr.bf16.mxu0 0
        %6006 = vmatpush1.bf16.msra.mxu0 0
        %6007 = vmatprep.subr.bf16.mxu0 0
        %6008 = vmatpush1.bf16.msra.mxu0 0
        %6009 = vmatprep.subr.bf16.mxu0 0
        %6010 = vmatpush1.bf16.msra.mxu0 0
        %6011 = vmatprep.subr.bf16.mxu0 0
        %6012 = vmatpush1.bf16.msra.mxu0 0
        %6013 = vmatprep.subr.bf16.mxu0 0
        %6014 = vmatpush1.bf16.msra.mxu0 0
        %6015 = vmatprep.subr.bf16.mxu0 0
        %6016 = vmatpush1.bf16.msra.mxu0 0
        %6017 = vmatprep.subr.bf16.mxu0 0
        %6018 = vmatpush1.bf16.msra.mxu0 0
        %6019 = vmatprep.subr.bf16.mxu0 0
        %6020 = vmatpush1.bf16.msra.mxu0 0
        %6021 = vmatprep.subr.bf16.mxu0 0
        %6022 = vmatpush1.bf16.msra.mxu0 0
        %6023 = vmatprep.subr.bf16.mxu0 0
        %6024 = vmatpush1.bf16.msra.mxu0 0
        %6025 = vmatprep.subr.bf16.mxu0 0
        %6026 = vmatpush1.bf16.msra.mxu0 0
        %6027 = vmatprep.subr.bf16.mxu0 0
        %6028 = vmatpush1.bf16.msra.mxu0 0
        %6029 = vmatprep.subr.bf16.mxu0 0
        %6030 = vmatpush1.bf16.msra.mxu0 0
        %6031 = vmatprep.mubr.bf16.mxu0 0
        %6032 = vmatmul.mubr.bf16.gmra.mrb[0].mxu0 %v5973
        %v6033 = vpop.f32.mrb[0].mxu0
        %v6034 = vadd.f32 0.0, %v6033
        %v6035 = vpop.f32.mrb[0].mxu0
        %v6036 = vpop.f32.mrb[0].mxu0
        %v6037 = vadd.f32 0.0, %v6036
        %v6038 = vpop.f32.mrb[0].mxu0
        %6039 = vmatprep.mubr.bf16.mxu0 0
        %6040 = vmatmul.mubr.bf16.gmra.mrb[0].mxu0 %v5976
        %v6041 = vpop.f32.mrb[0].mxu0
        %v6042 = vadd.f32 0.0, %v6041
        %v6043 = vpop.f32.mrb[0].mxu0
        %v6044 = vpop.f32.mrb[0].mxu0
        %v6045 = vadd.f32 0.0, %v6044
        %v6046 = vpop.f32.mrb[0].mxu0
        %6047 = vmatprep.mubr.bf16.mxu0 0
        %6048 = vmatmul.mubr.bf16.gmra.mrb[0].mxu0 %v5979
        %v6049 = vpop.f32.mrb[0].mxu0
        %v6050 = vadd.f32 0.0, %v6049
        %v6051 = vpop.f32.mrb[0].mxu0
        %v6052 = vpop.f32.mrb[0].mxu0
        %v6053 = vadd.f32 0.0, %v6052
        %v6054 = vpop.f32.mrb[0].mxu0
        %6055 = vmatprep.mubr.bf16.mxu0 0
        %6056 = vmatmul.mubr.bf16.gmra.mrb[0].mxu0 %v5982
        %v6057 = vpop.f32.mrb[0].mxu0
        %v6058 = vadd.f32 0.0, %v6057
        %v6059 = vpop.f32.mrb[0].mxu0
        %v6060 = vpop.f32.mrb[0].mxu0
        %v6061 = vadd.f32 0.0, %v6060
        %v6062 = vpop.f32.mrb[0].mxu0
        %6063 = vmatprep.mubr.bf16.mxu0 0
        %6064 = vmatmul.mubr.bf16.gmra.mrb[0].mxu0 %v5985
        %v6065 = vpop.f32.mrb[0].mxu0
        %v6066 = vpop.f32.mrb[0].mxu0
        %v6067 = vpop.f32.mrb[0].mxu0
        %v6068 = vpop.f32.mrb[0].mxu0
        %6069 = vmatprep.mubr.bf16.mxu0 0
        %6070 = vmatmul.mubr.bf16.gmra.mrb[0].mxu0 %v5988
        %v6071 = vpop.f32.mrb[0].mxu0
        %v6072 = vadd.f32 0.0, %v6071
        %v6073 = vpop.f32.mrb[0].mxu0
        %v6074 = vpop.f32.mrb[0].mxu0
        %v6075 = vadd.f32 0.0, %v6074
        %v6076 = vpop.f32.mrb[0].mxu0
        %6077 = vmatprep.mubr.bf16.mxu0 0
        %6078 = vmatmul.mubr.bf16.gmra.mrb[0].mxu0 %v5991
        %v6079 = vpop.f32.mrb[0].mxu0
        %v6080 = vadd.f32 0.0, %v6079
        %v6081 = vpop.f32.mrb[0].mxu0
        %v6082 = vpop.f32.mrb[0].mxu0
        %v6083 = vadd.f32 0.0, %v6082
        %v6084 = vpop.f32.mrb[0].mxu0
        %6085 = vmatprep.mubr.bf16.mxu0 0
        %6086 = vmatmul.mubr.bf16.gmra.mrb[0].mxu0 %v5994
        %v6087 = vpop.f32.mrb[0].mxu0
        %v6088 = vadd.f32 0.0, %v6087
        %v6089 = vpop.f32.mrb[0].mxu0
        %v6090 = vpop.f32.mrb[0].mxu0
        %v6091 = vadd.f32 0.0, %v6090
        %v6092 = vpop.f32.mrb[0].mxu0
        %6093 = vmatprep.mubr.bf16.mxu0 0
        %6094 = vmatmul.mubr.bf16.gmra.mrb[0].mxu0 %v5997
        %v6095 = vpop.f32.mrb[0].mxu0
        %v6096 = vadd.f32 0.0, %v6095
        %v6097 = vpop.f32.mrb[0].mxu0
        %v6098 = vpop.f32.mrb[0].mxu0
        %v6099 = vadd.f32 0.0, %v6098
        %v6100 = vpop.f32.mrb[0].mxu0
        %6101 = vdwg.mxu0
        %v6102 = vmul.f32 %v6034, %v1031
        %v6103 = vmul.f32 %v6037, %v1032
        %v6104 = vmul.f32 %v6042, %v1033
        %v6105 = vmul.f32 %v6045, %v1034
        %v6106 = vmul.f32 %v6050, %v1035
        %v6107 = vmul.f32 %v6053, %v1036
        %v6108 = vmul.f32 %v6058, %v1037
        %v6109 = vmul.f32 %v6061, %v1038
        %v6110 = vmul.f32 %v6072, %v1041
        %v6111 = vmul.f32 %v6075, %v1042
        %v6112 = vmul.f32 %v6080, %v1043
        %v6113 = vmul.f32 %v6083, %v1044
        %v6114 = vmul.f32 %v6088, %v1045
        %v6115 = vmul.f32 %v6091, %v1046
        %v6116 = vmul.f32 %v6096, %v1047
        %v6117 = vmul.f32 %v6099, %v1048
        %v6118 = vadd.f32 %v5897, %v6102
        %v6119 = vadd.f32 %v5898, %v6103
        %v6120 = vadd.f32 %v5899, %v6104
        %v6121 = vadd.f32 %v5900, %v6105
        %v6122 = vadd.f32 %v5901, %v6106
        %v6123 = vadd.f32 %v5902, %v6107
        %v6124 = vadd.f32 %v5903, %v6108
        %v6125 = vadd.f32 %v5904, %v6109
        %v6126 = vadd.f32 %v5905, %v6110
        %v6127 = vadd.f32 %v5906, %v6111
        %v6128 = vadd.f32 %v5907, %v6112
        %v6129 = vadd.f32 %v5908, %v6113
        %v6130 = vadd.f32 %v5909, %v6114
        %v6131 = vadd.f32 %v5910, %v6115
        %v6132 = vadd.f32 %v5911, %v6116
        %v6133 = vadd.f32 %v5912, %v6117
        %v6134 = vld [vmem:[#allocation4] sm:$0x80]
        %v6135 = vld [vmem:[#allocation4 + $0x48] sm:$0xff]
        %s6136 = scalar_lea.vmem %s6, 24
        %v6137 = vld [vmem:[%s6136] sm:$0xf]
        %v6138 = vld [vmem:[%s6136 + $0x4] sm:$0xf]
        %v6140 = vshrl.u32 %v6134, 16
        %v6142 = vrot.slane %v6140, 7
        %v6143 = vrot.slane %v5496, 7
        %v6144 = vor.u32 %v6143, %v5499
        %v6145 = vsel %vm2050, %v6142, %v6144
        %v6146 = vrot.slane %v5505, 7
        %v6147 = vor.u32 %v6146, %v5508
        %v6148 = vsel %vm2050, %v6143, %v6147
        %v6149 = vrot.slane %v5514, 7
        %v6150 = vor.u32 %v6149, %v5517
        %v6151 = vsel %vm2050, %v6146, %v6150
        %v6152 = vrot.slane %v5523, 7
        %v6153 = vor.u32 %v6152, %v5526
        %v6154 = vsel %vm2050, %v6149, %v6153
        %v6155 = vrot.slane %v5532, 7
        %v6156 = vor.u32 %v6155, %v5535
        %v6157 = vsel %vm2050, %v6152, %v6156
        %v6158 = vrot.slane %v5541, 7
        %v6159 = vor.u32 %v6158, %v5544
        %v6160 = vsel %vm2050, %v6155, %v6159
        %v6161 = vrot.slane %v5550, 7
        %v6162 = vor.u32 %v6161, %v5553
        %v6163 = vsel %vm2050, %v6158, %v6162
        %v6164 = vrot.slane %v5559, 7
        %v6165 = vor.u32 %v6164, %v5562
        %v6166 = vsel %vm2050, %v6161, %v6165
        %v6168 = vshrl.u32 %v6135, 16
        %v6170 = vrot.slane %v6168, 7
        %v6171 = vshll.u32 %v6135, 16
        %v6173 = vor.u32 %v6170, %v6171
        %v6174 = vsel %vm2050, %v6164, %v6173
        %v6177 = vunpack.c.l.b16 %v6137
        %v6178 = vunpack.c.l.b16 %v6138
        %v6179 = vpack.c.b16 %v6178, %v6177
        %v6182 = vsel %vm1075, %v6145, 0
        %v6185 = vsel %vm1075, %v6148, 0
        %v6188 = vsel %vm1075, %v6151, 0
        %v6191 = vsel %vm1075, %v6154, 0
        %v6194 = vsel %vm1075, %v6157, 0
        %v6197 = vsel %vm1075, %v6160, 0
        %v6200 = vsel %vm1075, %v6163, 0
        %v6203 = vsel %vm1075, %v6166, 0
        %v6206 = vsel %vm1075, %v6174, 0
        %6208 = vmatprep.subr.bf16.mxu0 0
        %6209 = vmatpush1.bf16.msra.mxu0 %v6179
        %6210 = vmatprep.subr.bf16.mxu0 0
        %6211 = vmatpush1.bf16.msra.mxu0 0
        %6212 = vmatprep.subr.bf16.mxu0 0
        %6213 = vmatpush1.bf16.msra.mxu0 0
        %6214 = vmatprep.subr.bf16.mxu0 0
        %6215 = vmatpush1.bf16.msra.mxu0 0
        %6216 = vmatprep.subr.bf16.mxu0 0
        %6217 = vmatpush1.bf16.msra.mxu0 0
        %6218 = vmatprep.subr.bf16.mxu0 0
        %6219 = vmatpush1.bf16.msra.mxu0 0
        %6220 = vmatprep.subr.bf16.mxu0 0
        %6221 = vmatpush1.bf16.msra.mxu0 0
        %6222 = vmatprep.subr.bf16.mxu0 0
        %6223 = vmatpush1.bf16.msra.mxu0 0
        %6224 = vmatprep.subr.bf16.mxu0 0
        %6225 = vmatpush1.bf16.msra.mxu0 0
        %6226 = vmatprep.subr.bf16.mxu0 0
        %6227 = vmatpush1.bf16.msra.mxu0 0
        %6228 = vmatprep.subr.bf16.mxu0 0
        %6229 = vmatpush1.bf16.msra.mxu0 0
        %6230 = vmatprep.subr.bf16.mxu0 0
        %6231 = vmatpush1.bf16.msra.mxu0 0
        %6232 = vmatprep.subr.bf16.mxu0 0
        %6233 = vmatpush1.bf16.msra.mxu0 0
        %6234 = vmatprep.subr.bf16.mxu0 0
        %6235 = vmatpush1.bf16.msra.mxu0 0
        %6236 = vmatprep.subr.bf16.mxu0 0
        %6237 = vmatpush1.bf16.msra.mxu0 0
        %6238 = vmatprep.subr.bf16.mxu0 0
        %6239 = vmatpush1.bf16.msra.mxu0 0
        %6240 = vmatprep.mubr.bf16.mxu0 0
        %6241 = vmatmul.mubr.bf16.gmra.mrb[0].mxu0 %v6182
        %v6242 = vpop.f32.mrb[0].mxu0
        %v6243 = vadd.f32 0.0, %v6242
        %v6244 = vpop.f32.mrb[0].mxu0
        %v6245 = vpop.f32.mrb[0].mxu0
        %v6246 = vadd.f32 0.0, %v6245
        %v6247 = vpop.f32.mrb[0].mxu0
        %6248 = vmatprep.mubr.bf16.mxu0 0
        %6249 = vmatmul.mubr.bf16.gmra.mrb[0].mxu0 %v6185
        %v6250 = vpop.f32.mrb[0].mxu0
        %v6251 = vadd.f32 0.0, %v6250
        %v6252 = vpop.f32.mrb[0].mxu0
        %v6253 = vpop.f32.mrb[0].mxu0
        %v6254 = vadd.f32 0.0, %v6253
        %v6255 = vpop.f32.mrb[0].mxu0
        %6256 = vmatprep.mubr.bf16.mxu0 0
        %6257 = vmatmul.mubr.bf16.gmra.mrb[0].mxu0 %v6188
        %v6258 = vpop.f32.mrb[0].mxu0
        %v6259 = vadd.f32 0.0, %v6258
        %v6260 = vpop.f32.mrb[0].mxu0
        %v6261 = vpop.f32.mrb[0].mxu0
        %v6262 = vadd.f32 0.0, %v6261
        %v6263 = vpop.f32.mrb[0].mxu0
        %6264 = vmatprep.mubr.bf16.mxu0 0
        %6265 = vmatmul.mubr.bf16.gmra.mrb[0].mxu0 %v6191
        %v6266 = vpop.f32.mrb[0].mxu0
        %v6267 = vadd.f32 0.0, %v6266
        %v6268 = vpop.f32.mrb[0].mxu0
        %v6269 = vpop.f32.mrb[0].mxu0
        %v6270 = vadd.f32 0.0, %v6269
        %v6271 = vpop.f32.mrb[0].mxu0
        %6272 = vmatprep.mubr.bf16.mxu0 0
        %6273 = vmatmul.mubr.bf16.gmra.mrb[0].mxu0 %v6194
        %v6274 = vpop.f32.mrb[0].mxu0
        %v6275 = vpop.f32.mrb[0].mxu0
        %v6276 = vpop.f32.mrb[0].mxu0
        %v6277 = vpop.f32.mrb[0].mxu0
        %6278 = vmatprep.mubr.bf16.mxu0 0
        %6279 = vmatmul.mubr.bf16.gmra.mrb[0].mxu0 %v6197
        %v6280 = vpop.f32.mrb[0].mxu0
        %v6281 = vadd.f32 0.0, %v6280
        %v6282 = vpop.f32.mrb[0].mxu0
        %v6283 = vpop.f32.mrb[0].mxu0
        %v6284 = vadd.f32 0.0, %v6283
        %v6285 = vpop.f32.mrb[0].mxu0
        %6286 = vmatprep.mubr.bf16.mxu0 0
        %6287 = vmatmul.mubr.bf16.gmra.mrb[0].mxu0 %v6200
        %v6288 = vpop.f32.mrb[0].mxu0
        %v6289 = vadd.f32 0.0, %v6288
        %v6290 = vpop.f32.mrb[0].mxu0
        %v6291 = vpop.f32.mrb[0].mxu0
        %v6292 = vadd.f32 0.0, %v6291
        %v6293 = vpop.f32.mrb[0].mxu0
        %6294 = vmatprep.mubr.bf16.mxu0 0
        %6295 = vmatmul.mubr.bf16.gmra.mrb[0].mxu0 %v6203
        %v6296 = vpop.f32.mrb[0].mxu0
        %v6297 = vadd.f32 0.0, %v6296
        %v6298 = vpop.f32.mrb[0].mxu0
        %v6299 = vpop.f32.mrb[0].mxu0
        %v6300 = vadd.f32 0.0, %v6299
        %v6301 = vpop.f32.mrb[0].mxu0
        %6302 = vmatprep.mubr.bf16.mxu0 0
        %6303 = vmatmul.mubr.bf16.gmra.mrb[0].mxu0 %v6206
        %v6304 = vpop.f32.mrb[0].mxu0
        %v6305 = vadd.f32 0.0, %v6304
        %v6306 = vpop.f32.mrb[0].mxu0
        %v6307 = vpop.f32.mrb[0].mxu0
        %v6308 = vadd.f32 0.0, %v6307
        %v6309 = vpop.f32.mrb[0].mxu0
        %6310 = vdwg.mxu0
        %v6311 = vmul.f32 %v6243, %v977
        %v6312 = vmul.f32 %v6246, %v978
        %v6313 = vmul.f32 %v6251, %v979
        %v6314 = vmul.f32 %v6254, %v980
        %v6315 = vmul.f32 %v6259, %v981
        %v6316 = vmul.f32 %v6262, %v982
        %v6317 = vmul.f32 %v6267, %v983
        %v6318 = vmul.f32 %v6270, %v984
        %v6319 = vmul.f32 %v6281, %v987
        %v6320 = vmul.f32 %v6284, %v988
        %v6321 = vmul.f32 %v6289, %v989
        %v6322 = vmul.f32 %v6292, %v990
        %v6323 = vmul.f32 %v6297, %v991
        %v6324 = vmul.f32 %v6300, %v992
        %v6325 = vmul.f32 %v6305, %v993
        %v6326 = vmul.f32 %v6308, %v994
        %v6327 = vadd.f32 %v6118, %v6311
        %v6328 = vadd.f32 %v6119, %v6312
        %v6329 = vadd.f32 %v6120, %v6313
        %v6330 = vadd.f32 %v6121, %v6314
        %v6331 = vadd.f32 %v6122, %v6315
        %v6332 = vadd.f32 %v6123, %v6316
        %v6333 = vadd.f32 %v6124, %v6317
        %v6334 = vadd.f32 %v6125, %v6318
        %v6335 = vadd.f32 %v6126, %v6319
        %v6336 = vadd.f32 %v6127, %v6320
        %v6337 = vadd.f32 %v6128, %v6321
        %v6338 = vadd.f32 %v6129, %v6322
        %v6339 = vadd.f32 %v6130, %v6323
        %v6340 = vadd.f32 %v6131, %v6324
        %v6341 = vadd.f32 %v6132, %v6325
        %v6342 = vadd.f32 %v6133, %v6326
        %s6343 = scalar_lea.vmem %s6, 32
        %v6344 = vld [vmem:[%s6343] sm:$0xf]
        %v6345 = vld [vmem:[%s6343 + $0x4] sm:$0xf]
        %v6348 = vunpack.c.l.b16 %v6344
        %v6349 = vunpack.c.l.b16 %v6345
        %v6350 = vpack.c.b16 %v6349, %v6348
        %v6352 = vsel %vm1075, %v5476, 0
        %v6354 = vsel %vm1075, %v5477, 0
        %v6356 = vsel %vm1075, %v5478, 0
        %v6358 = vsel %vm1075, %v5479, 0
        %v6360 = vsel %vm1075, %v5480, 0
        %v6362 = vsel %vm1075, %v5481, 0
        %v6364 = vsel %vm1075, %v5482, 0
        %v6366 = vsel %vm1075, %v5483, 0
        %v6368 = vsel %vm1075, %v6135, 0
        %6370 = vmatprep.subr.bf16.mxu0 0
        %6371 = vmatpush1.bf16.msra.mxu0 %v6350
        %6372 = vmatprep.subr.bf16.mxu0 0
        %6373 = vmatpush1.bf16.msra.mxu0 0
        %6374 = vmatprep.subr.bf16.mxu0 0
        %6375 = vmatpush1.bf16.msra.mxu0 0
        %6376 = vmatprep.subr.bf16.mxu0 0
        %6377 = vmatpush1.bf16.msra.mxu0 0
        %6378 = vmatprep.subr.bf16.mxu0 0
        %6379 = vmatpush1.bf16.msra.mxu0 0
        %6380 = vmatprep.subr.bf16.mxu0 0
        %6381 = vmatpush1.bf16.msra.mxu0 0
        %6382 = vmatprep.subr.bf16.mxu0 0
        %6383 = vmatpush1.bf16.msra.mxu0 0
        %6384 = vmatprep.subr.bf16.mxu0 0
        %6385 = vmatpush1.bf16.msra.mxu0 0
        %6386 = vmatprep.subr.bf16.mxu0 0
        %6387 = vmatpush1.bf16.msra.mxu0 0
        %6388 = vmatprep.subr.bf16.mxu0 0
        %6389 = vmatpush1.bf16.msra.mxu0 0
        %6390 = vmatprep.subr.bf16.mxu0 0
        %6391 = vmatpush1.bf16.msra.mxu0 0
        %6392 = vmatprep.subr.bf16.mxu0 0
        %6393 = vmatpush1.bf16.msra.mxu0 0
        %6394 = vmatprep.subr.bf16.mxu0 0
        %6395 = vmatpush1.bf16.msra.mxu0 0
        %6396 = vmatprep.subr.bf16.mxu0 0
        %6397 = vmatpush1.bf16.msra.mxu0 0
        %6398 = vmatprep.subr.bf16.mxu0 0
        %6399 = vmatpush1.bf16.msra.mxu0 0
        %6400 = vmatprep.subr.bf16.mxu0 0
        %6401 = vmatpush1.bf16.msra.mxu0 0
        %6402 = vmatprep.mubr.bf16.mxu0 0
        %6403 = vmatmul.mubr.bf16.gmra.mrb[0].mxu0 %v6352
        %v6404 = vpop.f32.mrb[0].mxu0
        %v6405 = vadd.f32 0.0, %v6404
        %v6406 = vpop.f32.mrb[0].mxu0
        %v6407 = vpop.f32.mrb[0].mxu0
        %v6408 = vadd.f32 0.0, %v6407
        %v6409 = vpop.f32.mrb[0].mxu0
        %6410 = vmatprep.mubr.bf16.mxu0 0
        %6411 = vmatmul.mubr.bf16.gmra.mrb[0].mxu0 %v6354
        %v6412 = vpop.f32.mrb[0].mxu0
        %v6413 = vadd.f32 0.0, %v6412
        %v6414 = vpop.f32.mrb[0].mxu0
        %v6415 = vpop.f32.mrb[0].mxu0
        %v6416 = vadd.f32 0.0, %v6415
        %v6417 = vpop.f32.mrb[0].mxu0
        %6418 = vmatprep.mubr.bf16.mxu0 0
        %6419 = vmatmul.mubr.bf16.gmra.mrb[0].mxu0 %v6356
        %v6420 = vpop.f32.mrb[0].mxu0
        %v6421 = vadd.f32 0.0, %v6420
        %v6422 = vpop.f32.mrb[0].mxu0
        %v6423 = vpop.f32.mrb[0].mxu0
        %v6424 = vadd.f32 0.0, %v6423
        %v6425 = vpop.f32.mrb[0].mxu0
        %6426 = vmatprep.mubr.bf16.mxu0 0
        %6427 = vmatmul.mubr.bf16.gmra.mrb[0].mxu0 %v6358
        %v6428 = vpop.f32.mrb[0].mxu0
        %v6429 = vadd.f32 0.0, %v6428
        %v6430 = vpop.f32.mrb[0].mxu0
        %v6431 = vpop.f32.mrb[0].mxu0
        %v6432 = vadd.f32 0.0, %v6431
        %v6433 = vpop.f32.mrb[0].mxu0
        %6434 = vmatprep.mubr.bf16.mxu0 0
        %6435 = vmatmul.mubr.bf16.gmra.mrb[0].mxu0 %v6360
        %v6436 = vpop.f32.mrb[0].mxu0
        %v6437 = vpop.f32.mrb[0].mxu0
        %v6438 = vpop.f32.mrb[0].mxu0
        %v6439 = vpop.f32.mrb[0].mxu0
        %6440 = vmatprep.mubr.bf16.mxu0 0
        %6441 = vmatmul.mubr.bf16.gmra.mrb[0].mxu0 %v6362
        %v6442 = vpop.f32.mrb[0].mxu0
        %v6443 = vadd.f32 0.0, %v6442
        %v6444 = vpop.f32.mrb[0].mxu0
        %v6445 = vpop.f32.mrb[0].mxu0
        %v6446 = vadd.f32 0.0, %v6445
        %v6447 = vpop.f32.mrb[0].mxu0
        %6448 = vmatprep.mubr.bf16.mxu0 0
        %6449 = vmatmul.mubr.bf16.gmra.mrb[0].mxu0 %v6364
        %v6450 = vpop.f32.mrb[0].mxu0
        %v6451 = vadd.f32 0.0, %v6450
        %v6452 = vpop.f32.mrb[0].mxu0
        %v6453 = vpop.f32.mrb[0].mxu0
        %v6454 = vadd.f32 0.0, %v6453
        %v6455 = vpop.f32.mrb[0].mxu0
        %6456 = vmatprep.mubr.bf16.mxu0 0
        %6457 = vmatmul.mubr.bf16.gmra.mrb[0].mxu0 %v6366
        %v6458 = vpop.f32.mrb[0].mxu0
        %v6459 = vadd.f32 0.0, %v6458
        %v6460 = vpop.f32.mrb[0].mxu0
        %v6461 = vpop.f32.mrb[0].mxu0
        %v6462 = vadd.f32 0.0, %v6461
        %v6463 = vpop.f32.mrb[0].mxu0
        %6464 = vmatprep.mubr.bf16.mxu0 0
        %6465 = vmatmul.mubr.bf16.gmra.mrb[0].mxu0 %v6368
        %v6466 = vpop.f32.mrb[0].mxu0
        %v6467 = vadd.f32 0.0, %v6466
        %v6468 = vpop.f32.mrb[0].mxu0
        %v6469 = vpop.f32.mrb[0].mxu0
        %v6470 = vadd.f32 0.0, %v6469
        %v6471 = vpop.f32.mrb[0].mxu0
        %6472 = vdwg.mxu0
        %v6473 = vadd.f32 %v6327, %v6405
        %v6474 = vadd.f32 %v6328, %v6408
        %v6475 = vadd.f32 %v6329, %v6413
        %v6476 = vadd.f32 %v6330, %v6416
        %v6477 = vadd.f32 %v6331, %v6421
        %v6478 = vadd.f32 %v6332, %v6424
        %v6479 = vadd.f32 %v6333, %v6429
        %v6480 = vadd.f32 %v6334, %v6432
        %v6481 = vadd.f32 %v6335, %v6443
        %v6482 = vadd.f32 %v6336, %v6446
        %v6483 = vadd.f32 %v6337, %v6451
        %v6484 = vadd.f32 %v6338, %v6454
        %v6485 = vadd.f32 %v6339, %v6459
        %v6486 = vadd.f32 %v6340, %v6462
        %v6487 = vadd.f32 %v6341, %v6467
        %v6488 = vadd.f32 %v6342, %v6470
        %v6489 = vld [vmem:[#allocation4 + $0x8] sm:$0xff]
        %v6490 = vld [vmem:[#allocation4 + $0x10] sm:$0xff]
        %v6491 = vld [vmem:[#allocation4 + $0x18] sm:$0xff]
        %v6492 = vld [vmem:[#allocation4 + $0x20] sm:$0xff]
        %v6493 = vld [vmem:[#allocation4 + $0x28] sm:$0xff]
        %v6494 = vld [vmem:[#allocation4 + $0x30] sm:$0xff]
        %v6495 = vld [vmem:[#allocation4 + $0x38] sm:$0xff]
        %v6496 = vld [vmem:[#allocation4 + $0x40] sm:$0xff]
        %v6497 = vld [vmem:[#allocation4 + $0x48] sm:$0xff]
        %v6498 = vld [vmem:[#allocation4 + $0x50] sm:$0x1]
        %s6499 = scalar_lea.vmem %s6, 40
        %v6500 = vld [vmem:[%s6499] sm:$0xf]
        %v6501 = vld [vmem:[%s6499 + $0x4] sm:$0xf]
        %v6503 = vshrl.u32 %v6489, 16
        %v6505 = vshll.u32 %v6489, 16
        %v6507 = vrot.slane %v6505, 1
        %v6508 = vor.u32 %v6503, %v6507
        %v6510 = vshll.u32 %v6490, 16
        %v6512 = vrot.slane %v6510, 1
        %v6513 = vsel %vm2001, %v6508, %v6512
        %v6514 = vshrl.u32 %v6490, 16
        %v6516 = vor.u32 %v6514, %v6512
        %v6518 = vshll.u32 %v6491, 16
        %v6520 = vrot.slane %v6518, 1
        %v6521 = vsel %vm2001, %v6516, %v6520
        %v6522 = vshrl.u32 %v6491, 16
        %v6524 = vor.u32 %v6522, %v6520
        %v6526 = vshll.u32 %v6492, 16
        %v6528 = vrot.slane %v6526, 1
        %v6529 = vsel %vm2001, %v6524, %v6528
        %v6530 = vshrl.u32 %v6492, 16
        %v6532 = vor.u32 %v6530, %v6528
        %v6534 = vshll.u32 %v6493, 16
        %v6536 = vrot.slane %v6534, 1
        %v6537 = vsel %vm2001, %v6532, %v6536
        %v6538 = vshrl.u32 %v6493, 16
        %v6540 = vor.u32 %v6538, %v6536
        %v6542 = vshll.u32 %v6494, 16
        %v6544 = vrot.slane %v6542, 1
        %v6545 = vsel %vm2001, %v6540, %v6544
        %v6546 = vshrl.u32 %v6494, 16
        %v6548 = vor.u32 %v6546, %v6544
        %v6550 = vshll.u32 %v6495, 16
        %v6552 = vrot.slane %v6550, 1
        %v6553 = vsel %vm2001, %v6548, %v6552
        %v6554 = vshrl.u32 %v6495, 16
        %v6556 = vor.u32 %v6554, %v6552
        %v6558 = vshll.u32 %v6496, 16
        %v6560 = vrot.slane %v6558, 1
        %v6561 = vsel %vm2001, %v6556, %v6560
        %v6562 = vshrl.u32 %v6496, 16
        %v6564 = vor.u32 %v6562, %v6560
        %v6566 = vshll.u32 %v6497, 16
        %v6568 = vrot.slane %v6566, 1
        %v6569 = vsel %vm2001, %v6564, %v6568
        %v6570 = vshrl.u32 %v6497, 16
        %v6572 = vor.u32 %v6570, %v6568
        %v6574 = vshll.u32 %v6498, 16
        %v6576 = vrot.slane %v6574, 1
        %v6577 = vsel %vm2001, %v6572, %v6576
        %v6580 = vunpack.c.l.b16 %v6500
        %v6581 = vunpack.c.l.b16 %v6501
        %v6582 = vpack.c.b16 %v6581, %v6580
        %v6585 = vsel %vm1075, %v6513, 0
        %v6588 = vsel %vm1075, %v6521, 0
        %v6591 = vsel %vm1075, %v6529, 0
        %v6594 = vsel %vm1075, %v6537, 0
        %v6597 = vsel %vm1075, %v6545, 0
        %v6600 = vsel %vm1075, %v6553, 0
        %v6603 = vsel %vm1075, %v6561, 0
        %v6606 = vsel %vm1075, %v6569, 0
        %v6609 = vsel %vm1075, %v6577, 0
        %6611 = vmatprep.subr.bf16.mxu0 0
        %6612 = vmatpush1.bf16.msra.mxu0 %v6582
        %6613 = vmatprep.subr.bf16.mxu0 0
        %6614 = vmatpush1.bf16.msra.mxu0 0
        %6615 = vmatprep.subr.bf16.mxu0 0
        %6616 = vmatpush1.bf16.msra.mxu0 0
        %6617 = vmatprep.subr.bf16.mxu0 0
        %6618 = vmatpush1.bf16.msra.mxu0 0
        %6619 = vmatprep.subr.bf16.mxu0 0
        %6620 = vmatpush1.bf16.msra.mxu0 0
        %6621 = vmatprep.subr.bf16.mxu0 0
        %6622 = vmatpush1.bf16.msra.mxu0 0
        %6623 = vmatprep.subr.bf16.mxu0 0
        %6624 = vmatpush1.bf16.msra.mxu0 0
        %6625 = vmatprep.subr.bf16.mxu0 0
        %6626 = vmatpush1.bf16.msra.mxu0 0
        %6627 = vmatprep.subr.bf16.mxu0 0
        %6628 = vmatpush1.bf16.msra.mxu0 0
        %6629 = vmatprep.subr.bf16.mxu0 0
        %6630 = vmatpush1.bf16.msra.mxu0 0
        %6631 = vmatprep.subr.bf16.mxu0 0
        %6632 = vmatpush1.bf16.msra.mxu0 0
        %6633 = vmatprep.subr.bf16.mxu0 0
        %6634 = vmatpush1.bf16.msra.mxu0 0
        %6635 = vmatprep.subr.bf16.mxu0 0
        %6636 = vmatpush1.bf16.msra.mxu0 0
        %6637 = vmatprep.subr.bf16.mxu0 0
        %6638 = vmatpush1.bf16.msra.mxu0 0
        %6639 = vmatprep.subr.bf16.mxu0 0
        %6640 = vmatpush1.bf16.msra.mxu0 0
        %6641 = vmatprep.subr.bf16.mxu0 0
        %6642 = vmatpush1.bf16.msra.mxu0 0
        %6643 = vmatprep.mubr.bf16.mxu0 0
        %6644 = vmatmul.mubr.bf16.gmra.mrb[0].mxu0 %v6585
        %v6645 = vpop.f32.mrb[0].mxu0
        %v6646 = vadd.f32 0.0, %v6645
        %v6647 = vpop.f32.mrb[0].mxu0
        %v6648 = vpop.f32.mrb[0].mxu0
        %v6649 = vadd.f32 0.0, %v6648
        %v6650 = vpop.f32.mrb[0].mxu0
        %6651 = vmatprep.mubr.bf16.mxu0 0
        %6652 = vmatmul.mubr.bf16.gmra.mrb[0].mxu0 %v6588
        %v6653 = vpop.f32.mrb[0].mxu0
        %v6654 = vadd.f32 0.0, %v6653
        %v6655 = vpop.f32.mrb[0].mxu0
        %v6656 = vpop.f32.mrb[0].mxu0
        %v6657 = vadd.f32 0.0, %v6656
        %v6658 = vpop.f32.mrb[0].mxu0
        %6659 = vmatprep.mubr.bf16.mxu0 0
        %6660 = vmatmul.mubr.bf16.gmra.mrb[0].mxu0 %v6591
        %v6661 = vpop.f32.mrb[0].mxu0
        %v6662 = vadd.f32 0.0, %v6661
        %v6663 = vpop.f32.mrb[0].mxu0
        %v6664 = vpop.f32.mrb[0].mxu0
        %v6665 = vadd.f32 0.0, %v6664
        %v6666 = vpop.f32.mrb[0].mxu0
        %6667 = vmatprep.mubr.bf16.mxu0 0
        %6668 = vmatmul.mubr.bf16.gmra.mrb[0].mxu0 %v6594
        %v6669 = vpop.f32.mrb[0].mxu0
        %v6670 = vadd.f32 0.0, %v6669
        %v6671 = vpop.f32.mrb[0].mxu0
        %v6672 = vpop.f32.mrb[0].mxu0
        %v6673 = vadd.f32 0.0, %v6672
        %v6674 = vpop.f32.mrb[0].mxu0
        %6675 = vmatprep.mubr.bf16.mxu0 0
        %6676 = vmatmul.mubr.bf16.gmra.mrb[0].mxu0 %v6597
        %v6677 = vpop.f32.mrb[0].mxu0
        %v6678 = vpop.f32.mrb[0].mxu0
        %v6679 = vpop.f32.mrb[0].mxu0
        %v6680 = vpop.f32.mrb[0].mxu0
        %6681 = vmatprep.mubr.bf16.mxu0 0
        %6682 = vmatmul.mubr.bf16.gmra.mrb[0].mxu0 %v6600
        %v6683 = vpop.f32.mrb[0].mxu0
        %v6684 = vadd.f32 0.0, %v6683
        %v6685 = vpop.f32.mrb[0].mxu0
        %v6686 = vpop.f32.mrb[0].mxu0
        %v6687 = vadd.f32 0.0, %v6686
        %v6688 = vpop.f32.mrb[0].mxu0
        %6689 = vmatprep.mubr.bf16.mxu0 0
        %6690 = vmatmul.mubr.bf16.gmra.mrb[0].mxu0 %v6603
        %v6691 = vpop.f32.mrb[0].mxu0
        %v6692 = vadd.f32 0.0, %v6691
        %v6693 = vpop.f32.mrb[0].mxu0
        %v6694 = vpop.f32.mrb[0].mxu0
        %v6695 = vadd.f32 0.0, %v6694
        %v6696 = vpop.f32.mrb[0].mxu0
        %6697 = vmatprep.mubr.bf16.mxu0 0
        %6698 = vmatmul.mubr.bf16.gmra.mrb[0].mxu0 %v6606
        %v6699 = vpop.f32.mrb[0].mxu0
        %v6700 = vadd.f32 0.0, %v6699
        %v6701 = vpop.f32.mrb[0].mxu0
        %v6702 = vpop.f32.mrb[0].mxu0
        %v6703 = vadd.f32 0.0, %v6702
        %v6704 = vpop.f32.mrb[0].mxu0
        %6705 = vmatprep.mubr.bf16.mxu0 0
        %6706 = vmatmul.mubr.bf16.gmra.mrb[0].mxu0 %v6609
        %v6707 = vpop.f32.mrb[0].mxu0
        %v6708 = vadd.f32 0.0, %v6707
        %v6709 = vpop.f32.mrb[0].mxu0
        %v6710 = vpop.f32.mrb[0].mxu0
        %v6711 = vadd.f32 0.0, %v6710
        %v6712 = vpop.f32.mrb[0].mxu0
        %6713 = vdwg.mxu0
        %v6714 = vmul.f32 %v6646, %v1031
        %v6715 = vmul.f32 %v6649, %v1032
        %v6716 = vmul.f32 %v6654, %v1033
        %v6717 = vmul.f32 %v6657, %v1034
        %v6718 = vmul.f32 %v6662, %v1035
        %v6719 = vmul.f32 %v6665, %v1036
        %v6720 = vmul.f32 %v6670, %v1037
        %v6721 = vmul.f32 %v6673, %v1038
        %v6722 = vmul.f32 %v6684, %v1041
        %v6723 = vmul.f32 %v6687, %v1042
        %v6724 = vmul.f32 %v6692, %v1043
        %v6725 = vmul.f32 %v6695, %v1044
        %v6726 = vmul.f32 %v6700, %v1045
        %v6727 = vmul.f32 %v6703, %v1046
        %v6728 = vmul.f32 %v6708, %v1047
        %v6729 = vmul.f32 %v6711, %v1048
        %v6730 = vadd.f32 %v6473, %v6714
        %v6731 = vadd.f32 %v6474, %v6715
        %v6732 = vadd.f32 %v6475, %v6716
        %v6733 = vadd.f32 %v6476, %v6717
        %v6734 = vadd.f32 %v6477, %v6718
        %v6735 = vadd.f32 %v6478, %v6719
        %v6736 = vadd.f32 %v6479, %v6720
        %v6737 = vadd.f32 %v6480, %v6721
        %v6738 = vadd.f32 %v6481, %v6722
        %v6739 = vadd.f32 %v6482, %v6723
        %v6740 = vadd.f32 %v6483, %v6724
        %v6741 = vadd.f32 %v6484, %v6725
        %v6742 = vadd.f32 %v6485, %v6726
        %v6743 = vadd.f32 %v6486, %v6727
        %v6744 = vadd.f32 %v6487, %v6728
        %v6745 = vadd.f32 %v6488, %v6729
        %v6746 = vld [vmem:[#allocation4 + $0x8] sm:$0xf8]
        %v6747 = vld [vmem:[#allocation4 + $0x50] sm:$0xf]
        %s6748 = scalar_lea.vmem %s6, 48
        %v6749 = vld [vmem:[%s6748] sm:$0xf]
        %v6750 = vld [vmem:[%s6748 + $0x4] sm:$0xf]
        %v6752 = vshrl.u32 %v6746, 16
        %v6754 = vrot.slane %v6752, 3
        %v6755 = vshll.u32 %v6746, 16
        %v6757 = vrot.slane %v6755, 4
        %v6758 = vor.u32 %v6754, %v6757
        %v6759 = vrot.slane %v6514, 3
        %v6760 = vrot.slane %v6510, 4
        %v6761 = vor.u32 %v6759, %v6760
        %v6762 = vsel %vm1435, %v6758, %v6761
        %v6763 = vrot.slane %v6522, 3
        %v6764 = vrot.slane %v6518, 4
        %v6765 = vor.u32 %v6763, %v6764
        %v6766 = vsel %vm1435, %v6761, %v6765
        %v6767 = vrot.slane %v6530, 3
        %v6768 = vrot.slane %v6526, 4
        %v6769 = vor.u32 %v6767, %v6768
        %v6770 = vsel %vm1435, %v6765, %v6769
        %v6771 = vrot.slane %v6538, 3
        %v6772 = vrot.slane %v6534, 4
        %v6773 = vor.u32 %v6771, %v6772
        %v6774 = vsel %vm1435, %v6769, %v6773
        %v6775 = vrot.slane %v6546, 3
        %v6776 = vrot.slane %v6542, 4
        %v6777 = vor.u32 %v6775, %v6776
        %v6778 = vsel %vm1435, %v6773, %v6777
        %v6779 = vrot.slane %v6554, 3
        %v6780 = vrot.slane %v6550, 4
        %v6781 = vor.u32 %v6779, %v6780
        %v6782 = vsel %vm1435, %v6777, %v6781
        %v6783 = vrot.slane %v6562, 3
        %v6784 = vrot.slane %v6558, 4
        %v6785 = vor.u32 %v6783, %v6784
        %v6786 = vsel %vm1435, %v6781, %v6785
        %v6787 = vrot.slane %v6570, 3
        %v6788 = vrot.slane %v6566, 4
        %v6789 = vor.u32 %v6787, %v6788
        %v6790 = vsel %vm1435, %v6785, %v6789
        %v6792 = vshrl.u32 %v6747, 16
        %v6794 = vrot.slane %v6792, 3
        %v6795 = vshll.u32 %v6747, 16
        %v6797 = vrot.slane %v6795, 4
        %v6798 = vor.u32 %v6794, %v6797
        %v6799 = vsel %vm1435, %v6789, %v6798
        %v6802 = vunpack.c.l.b16 %v6749
        %v6803 = vunpack.c.l.b16 %v6750
        %v6804 = vpack.c.b16 %v6803, %v6802
        %v6807 = vsel %vm1075, %v6762, 0
        %v6810 = vsel %vm1075, %v6766, 0
        %v6813 = vsel %vm1075, %v6770, 0
        %v6816 = vsel %vm1075, %v6774, 0
        %v6819 = vsel %vm1075, %v6778, 0
        %v6822 = vsel %vm1075, %v6782, 0
        %v6825 = vsel %vm1075, %v6786, 0
        %v6828 = vsel %vm1075, %v6790, 0
        %v6831 = vsel %vm1075, %v6799, 0
        %6833 = vmatprep.subr.bf16.mxu0 0
        %6834 = vmatpush1.bf16.msra.mxu0 %v6804
        %6835 = vmatprep.subr.bf16.mxu0 0
        %6836 = vmatpush1.bf16.msra.mxu0 0
        %6837 = vmatprep.subr.bf16.mxu0 0
        %6838 = vmatpush1.bf16.msra.mxu0 0
        %6839 = vmatprep.subr.bf16.mxu0 0
        %6840 = vmatpush1.bf16.msra.mxu0 0
        %6841 = vmatprep.subr.bf16.mxu0 0
        %6842 = vmatpush1.bf16.msra.mxu0 0
        %6843 = vmatprep.subr.bf16.mxu0 0
        %6844 = vmatpush1.bf16.msra.mxu0 0
        %6845 = vmatprep.subr.bf16.mxu0 0
        %6846 = vmatpush1.bf16.msra.mxu0 0
        %6847 = vmatprep.subr.bf16.mxu0 0
        %6848 = vmatpush1.bf16.msra.mxu0 0
        %6849 = vmatprep.subr.bf16.mxu0 0
        %6850 = vmatpush1.bf16.msra.mxu0 0
        %6851 = vmatprep.subr.bf16.mxu0 0
        %6852 = vmatpush1.bf16.msra.mxu0 0
        %6853 = vmatprep.subr.bf16.mxu0 0
        %6854 = vmatpush1.bf16.msra.mxu0 0
        %6855 = vmatprep.subr.bf16.mxu0 0
        %6856 = vmatpush1.bf16.msra.mxu0 0
        %6857 = vmatprep.subr.bf16.mxu0 0
        %6858 = vmatpush1.bf16.msra.mxu0 0
        %6859 = vmatprep.subr.bf16.mxu0 0
        %6860 = vmatpush1.bf16.msra.mxu0 0
        %6861 = vmatprep.subr.bf16.mxu0 0
        %6862 = vmatpush1.bf16.msra.mxu0 0
        %6863 = vmatprep.subr.bf16.mxu0 0
        %6864 = vmatpush1.bf16.msra.mxu0 0
        %6865 = vmatprep.mubr.bf16.mxu0 0
        %6866 = vmatmul.mubr.bf16.gmra.mrb[0].mxu0 %v6807
        %v6867 = vpop.f32.mrb[0].mxu0
        %v6868 = vadd.f32 0.0, %v6867
        %v6869 = vpop.f32.mrb[0].mxu0
        %v6870 = vpop.f32.mrb[0].mxu0
        %v6871 = vadd.f32 0.0, %v6870
        %v6872 = vpop.f32.mrb[0].mxu0
        %6873 = vmatprep.mubr.bf16.mxu0 0
        %6874 = vmatmul.mubr.bf16.gmra.mrb[0].mxu0 %v6810
        %v6875 = vpop.f32.mrb[0].mxu0
        %v6876 = vadd.f32 0.0, %v6875
        %v6877 = vpop.f32.mrb[0].mxu0
        %v6878 = vpop.f32.mrb[0].mxu0
        %v6879 = vadd.f32 0.0, %v6878
        %v6880 = vpop.f32.mrb[0].mxu0
        %6881 = vmatprep.mubr.bf16.mxu0 0
        %6882 = vmatmul.mubr.bf16.gmra.mrb[0].mxu0 %v6813
        %v6883 = vpop.f32.mrb[0].mxu0
        %v6884 = vadd.f32 0.0, %v6883
        %v6885 = vpop.f32.mrb[0].mxu0
        %v6886 = vpop.f32.mrb[0].mxu0
        %v6887 = vadd.f32 0.0, %v6886
        %v6888 = vpop.f32.mrb[0].mxu0
        %6889 = vmatprep.mubr.bf16.mxu0 0
        %6890 = vmatmul.mubr.bf16.gmra.mrb[0].mxu0 %v6816
        %v6891 = vpop.f32.mrb[0].mxu0
        %v6892 = vadd.f32 0.0, %v6891
        %v6893 = vpop.f32.mrb[0].mxu0
        %v6894 = vpop.f32.mrb[0].mxu0
        %v6895 = vadd.f32 0.0, %v6894
        %v6896 = vpop.f32.mrb[0].mxu0
        %6897 = vmatprep.mubr.bf16.mxu0 0
        %6898 = vmatmul.mubr.bf16.gmra.mrb[0].mxu0 %v6819
        %v6899 = vpop.f32.mrb[0].mxu0
        %v6900 = vpop.f32.mrb[0].mxu0
        %v6901 = vpop.f32.mrb[0].mxu0
        %v6902 = vpop.f32.mrb[0].mxu0
        %6903 = vmatprep.mubr.bf16.mxu0 0
        %6904 = vmatmul.mubr.bf16.gmra.mrb[0].mxu0 %v6822
        %v6905 = vpop.f32.mrb[0].mxu0
        %v6906 = vadd.f32 0.0, %v6905
        %v6907 = vpop.f32.mrb[0].mxu0
        %v6908 = vpop.f32.mrb[0].mxu0
        %v6909 = vadd.f32 0.0, %v6908
        %v6910 = vpop.f32.mrb[0].mxu0
        %6911 = vmatprep.mubr.bf16.mxu0 0
        %6912 = vmatmul.mubr.bf16.gmra.mrb[0].mxu0 %v6825
        %v6913 = vpop.f32.mrb[0].mxu0
        %v6914 = vadd.f32 0.0, %v6913
        %v6915 = vpop.f32.mrb[0].mxu0
        %v6916 = vpop.f32.mrb[0].mxu0
        %v6917 = vadd.f32 0.0, %v6916
        %v6918 = vpop.f32.mrb[0].mxu0
        %6919 = vmatprep.mubr.bf16.mxu0 0
        %6920 = vmatmul.mubr.bf16.gmra.mrb[0].mxu0 %v6828
        %v6921 = vpop.f32.mrb[0].mxu0
        %v6922 = vadd.f32 0.0, %v6921
        %v6923 = vpop.f32.mrb[0].mxu0
        %v6924 = vpop.f32.mrb[0].mxu0
        %v6925 = vadd.f32 0.0, %v6924
        %v6926 = vpop.f32.mrb[0].mxu0
        %6927 = vmatprep.mubr.bf16.mxu0 0
        %6928 = vmatmul.mubr.bf16.gmra.mrb[0].mxu0 %v6831
        %v6929 = vpop.f32.mrb[0].mxu0
        %v6930 = vadd.f32 0.0, %v6929
        %v6931 = vpop.f32.mrb[0].mxu0
        %v6932 = vpop.f32.mrb[0].mxu0
        %v6933 = vadd.f32 0.0, %v6932
        %v6934 = vpop.f32.mrb[0].mxu0
        %6935 = vdwg.mxu0
        %v6936 = vmul.f32 %v6868, %v977
        %v6937 = vmul.f32 %v6871, %v978
        %v6938 = vmul.f32 %v6876, %v979
        %v6939 = vmul.f32 %v6879, %v980
        %v6940 = vmul.f32 %v6884, %v981
        %v6941 = vmul.f32 %v6887, %v982
        %v6942 = vmul.f32 %v6892, %v983
        %v6943 = vmul.f32 %v6895, %v984
        %v6944 = vmul.f32 %v6906, %v987
        %v6945 = vmul.f32 %v6909, %v988
        %v6946 = vmul.f32 %v6914, %v989
        %v6947 = vmul.f32 %v6917, %v990
        %v6948 = vmul.f32 %v6922, %v991
        %v6949 = vmul.f32 %v6925, %v992
        %v6950 = vmul.f32 %v6930, %v993
        %v6951 = vmul.f32 %v6933, %v994
        %v6952 = vadd.f32 %v6730, %v6936
        %v6953 = vadd.f32 %v6731, %v6937
        %v6954 = vadd.f32 %v6732, %v6938
        %v6955 = vadd.f32 %v6733, %v6939
        %v6956 = vadd.f32 %v6734, %v6940
        %v6957 = vadd.f32 %v6735, %v6941
        %v6958 = vadd.f32 %v6736, %v6942
        %v6959 = vadd.f32 %v6737, %v6943
        %v6960 = vadd.f32 %v6738, %v6944
        %v6961 = vadd.f32 %v6739, %v6945
        %v6962 = vadd.f32 %v6740, %v6946
        %v6963 = vadd.f32 %v6741, %v6947
        %v6964 = vadd.f32 %v6742, %v6948
        %v6965 = vadd.f32 %v6743, %v6949
        %v6966 = vadd.f32 %v6744, %v6950
        %v6967 = vadd.f32 %v6745, %v6951
        %v6968 = vld [vmem:[#allocation4 + $0x8] sm:$0xf0]
        %s6969 = scalar_lea.vmem %s6, 56
        %v6970 = vld [vmem:[%s6969] sm:$0xf]
        %v6971 = vld [vmem:[%s6969 + $0x4] sm:$0xf]
        %v6982 = vrot.slane %v6968, 4
        %v6983 = vrot.slane %v6490, 4
        %v6984 = vsel %vm1281, %v6982, %v6983
        %v6985 = vrot.slane %v6491, 4
        %v6986 = vsel %vm1281, %v6983, %v6985
        %v6987 = vrot.slane %v6492, 4
        %v6988 = vsel %vm1281, %v6985, %v6987
        %v6989 = vrot.slane %v6493, 4
        %v6990 = vsel %vm1281, %v6987, %v6989
        %v6991 = vrot.slane %v6494, 4
        %v6992 = vsel %vm1281, %v6989, %v6991
        %v6993 = vrot.slane %v6495, 4
        %v6994 = vsel %vm1281, %v6991, %v6993
        %v6995 = vrot.slane %v6496, 4
        %v6996 = vsel %vm1281, %v6993, %v6995
        %v6997 = vrot.slane %v6497, 4
        %v6998 = vsel %vm1281, %v6995, %v6997
        %v6999 = vrot.slane %v6747, 4
        %v7000 = vsel %vm1281, %v6997, %v6999
        %v7003 = vunpack.c.l.b16 %v6970
        %v7004 = vunpack.c.l.b16 %v6971
        %v7005 = vpack.c.b16 %v7004, %v7003
        %v7008 = vsel %vm1075, %v6984, 0
        %v7011 = vsel %vm1075, %v6986, 0
        %v7014 = vsel %vm1075, %v6988, 0
        %v7017 = vsel %vm1075, %v6990, 0
        %v7020 = vsel %vm1075, %v6992, 0
        %v7023 = vsel %vm1075, %v6994, 0
        %v7026 = vsel %vm1075, %v6996, 0
        %v7029 = vsel %vm1075, %v6998, 0
        %v7032 = vsel %vm1075, %v7000, 0
        %7034 = vmatprep.subr.bf16.mxu0 0
        %7035 = vmatpush1.bf16.msra.mxu0 %v7005
        %7036 = vmatprep.subr.bf16.mxu0 0
        %7037 = vmatpush1.bf16.msra.mxu0 0
        %7038 = vmatprep.subr.bf16.mxu0 0
        %7039 = vmatpush1.bf16.msra.mxu0 0
        %7040 = vmatprep.subr.bf16.mxu0 0
        %7041 = vmatpush1.bf16.msra.mxu0 0
        %7042 = vmatprep.subr.bf16.mxu0 0
        %7043 = vmatpush1.bf16.msra.mxu0 0
        %7044 = vmatprep.subr.bf16.mxu0 0
        %7045 = vmatpush1.bf16.msra.mxu0 0
        %7046 = vmatprep.subr.bf16.mxu0 0
        %7047 = vmatpush1.bf16.msra.mxu0 0
        %7048 = vmatprep.subr.bf16.mxu0 0
        %7049 = vmatpush1.bf16.msra.mxu0 0
        %7050 = vmatprep.subr.bf16.mxu0 0
        %7051 = vmatpush1.bf16.msra.mxu0 0
        %7052 = vmatprep.subr.bf16.mxu0 0
        %7053 = vmatpush1.bf16.msra.mxu0 0
        %7054 = vmatprep.subr.bf16.mxu0 0
        %7055 = vmatpush1.bf16.msra.mxu0 0
        %7056 = vmatprep.subr.bf16.mxu0 0
        %7057 = vmatpush1.bf16.msra.mxu0 0
        %7058 = vmatprep.subr.bf16.mxu0 0
        %7059 = vmatpush1.bf16.msra.mxu0 0
        %7060 = vmatprep.subr.bf16.mxu0 0
        %7061 = vmatpush1.bf16.msra.mxu0 0
        %7062 = vmatprep.subr.bf16.mxu0 0
        %7063 = vmatpush1.bf16.msra.mxu0 0
        %7064 = vmatprep.subr.bf16.mxu0 0
        %7065 = vmatpush1.bf16.msra.mxu0 0
        %7066 = vmatprep.mubr.bf16.mxu0 0
        %7067 = vmatmul.mubr.bf16.gmra.mrb[0].mxu0 %v7008
        %v7068 = vpop.f32.mrb[0].mxu0
        %v7069 = vadd.f32 0.0, %v7068
        %v7070 = vpop.f32.mrb[0].mxu0
        %v7071 = vpop.f32.mrb[0].mxu0
        %v7072 = vadd.f32 0.0, %v7071
        %v7073 = vpop.f32.mrb[0].mxu0
        %7074 = vmatprep.mubr.bf16.mxu0 0
        %7075 = vmatmul.mubr.bf16.gmra.mrb[0].mxu0 %v7011
        %v7076 = vpop.f32.mrb[0].mxu0
        %v7077 = vadd.f32 0.0, %v7076
        %v7078 = vpop.f32.mrb[0].mxu0
        %v7079 = vpop.f32.mrb[0].mxu0
        %v7080 = vadd.f32 0.0, %v7079
        %v7081 = vpop.f32.mrb[0].mxu0
        %7082 = vmatprep.mubr.bf16.mxu0 0
        %7083 = vmatmul.mubr.bf16.gmra.mrb[0].mxu0 %v7014
        %v7084 = vpop.f32.mrb[0].mxu0
        %v7085 = vadd.f32 0.0, %v7084
        %v7086 = vpop.f32.mrb[0].mxu0
        %v7087 = vpop.f32.mrb[0].mxu0
        %v7088 = vadd.f32 0.0, %v7087
        %v7089 = vpop.f32.mrb[0].mxu0
        %7090 = vmatprep.mubr.bf16.mxu0 0
        %7091 = vmatmul.mubr.bf16.gmra.mrb[0].mxu0 %v7017
        %v7092 = vpop.f32.mrb[0].mxu0
        %v7093 = vadd.f32 0.0, %v7092
        %v7094 = vpop.f32.mrb[0].mxu0
        %v7095 = vpop.f32.mrb[0].mxu0
        %v7096 = vadd.f32 0.0, %v7095
        %v7097 = vpop.f32.mrb[0].mxu0
        %7098 = vmatprep.mubr.bf16.mxu0 0
        %7099 = vmatmul.mubr.bf16.gmra.mrb[0].mxu0 %v7020
        %v7100 = vpop.f32.mrb[0].mxu0
        %v7101 = vpop.f32.mrb[0].mxu0
        %v7102 = vpop.f32.mrb[0].mxu0
        %v7103 = vpop.f32.mrb[0].mxu0
        %7104 = vmatprep.mubr.bf16.mxu0 0
        %7105 = vmatmul.mubr.bf16.gmra.mrb[0].mxu0 %v7023
        %v7106 = vpop.f32.mrb[0].mxu0
        %v7107 = vadd.f32 0.0, %v7106
        %v7108 = vpop.f32.mrb[0].mxu0
        %v7109 = vpop.f32.mrb[0].mxu0
        %v7110 = vadd.f32 0.0, %v7109
        %v7111 = vpop.f32.mrb[0].mxu0
        %7112 = vmatprep.mubr.bf16.mxu0 0
        %7113 = vmatmul.mubr.bf16.gmra.mrb[0].mxu0 %v7026
        %v7114 = vpop.f32.mrb[0].mxu0
        %v7115 = vadd.f32 0.0, %v7114
        %v7116 = vpop.f32.mrb[0].mxu0
        %v7117 = vpop.f32.mrb[0].mxu0
        %v7118 = vadd.f32 0.0, %v7117
        %v7119 = vpop.f32.mrb[0].mxu0
        %7120 = vmatprep.mubr.bf16.mxu0 0
        %7121 = vmatmul.mubr.bf16.gmra.mrb[0].mxu0 %v7029
        %v7122 = vpop.f32.mrb[0].mxu0
        %v7123 = vadd.f32 0.0, %v7122
        %v7124 = vpop.f32.mrb[0].mxu0
        %v7125 = vpop.f32.mrb[0].mxu0
        %v7126 = vadd.f32 0.0, %v7125
        %v7127 = vpop.f32.mrb[0].mxu0
        %7128 = vmatprep.mubr.bf16.mxu0 0
        %7129 = vmatmul.mubr.bf16.gmra.mrb[0].mxu0 %v7032
        %v7130 = vpop.f32.mrb[0].mxu0
        %v7131 = vadd.f32 0.0, %v7130
        %v7132 = vpop.f32.mrb[0].mxu0
        %v7133 = vpop.f32.mrb[0].mxu0
        %v7134 = vadd.f32 0.0, %v7133
        %v7135 = vpop.f32.mrb[0].mxu0
        %7136 = vdwg.mxu0
        %v7137 = vadd.f32 %v6952, %v7069
        %v7138 = vadd.f32 %v6953, %v7072
        %v7139 = vadd.f32 %v6954, %v7077
        %v7140 = vadd.f32 %v6955, %v7080
        %v7141 = vadd.f32 %v6956, %v7085
        %v7142 = vadd.f32 %v6957, %v7088
        %v7143 = vadd.f32 %v6958, %v7093
        %v7144 = vadd.f32 %v6959, %v7096
        %v7145 = vadd.f32 %v6960, %v7107
        %v7146 = vadd.f32 %v6961, %v7110
        %v7147 = vadd.f32 %v6962, %v7115
        %v7148 = vadd.f32 %v6963, %v7118
        %v7149 = vadd.f32 %v6964, %v7123
        %v7150 = vadd.f32 %v6965, %v7126
        %v7151 = vadd.f32 %v6966, %v7131
        %v7152 = vadd.f32 %v6967, %v7134
        %v7153 = vld [vmem:[#allocation4 + $0x50] sm:$0x1f]
        %s7154 = scalar_lea.vmem %s6, 64
        %v7155 = vld [vmem:[%s7154] sm:$0xf]
        %v7156 = vld [vmem:[%s7154 + $0x4] sm:$0xf]
        %v7158 = vshrl.u32 %v6968, 16
        %v7160 = vrot.slane %v7158, 4
        %v7161 = vshll.u32 %v6968, 16
        %v7163 = vrot.slane %v7161, 5
        %v7164 = vor.u32 %v7160, %v7163
        %v7165 = vrot.slane %v6514, 4
        %v7166 = vrot.slane %v6510, 5
        %v7167 = vor.u32 %v7165, %v7166
        %v7168 = vsel %vm1166, %v7164, %v7167
        %v7169 = vrot.slane %v6522, 4
        %v7170 = vrot.slane %v6518, 5
        %v7171 = vor.u32 %v7169, %v7170
        %v7172 = vsel %vm1166, %v7167, %v7171
        %v7173 = vrot.slane %v6530, 4
        %v7174 = vrot.slane %v6526, 5
        %v7175 = vor.u32 %v7173, %v7174
        %v7176 = vsel %vm1166, %v7171, %v7175
        %v7177 = vrot.slane %v6538, 4
        %v7178 = vrot.slane %v6534, 5
        %v7179 = vor.u32 %v7177, %v7178
        %v7180 = vsel %vm1166, %v7175, %v7179
        %v7181 = vrot.slane %v6546, 4
        %v7182 = vrot.slane %v6542, 5
        %v7183 = vor.u32 %v7181, %v7182
        %v7184 = vsel %vm1166, %v7179, %v7183
        %v7185 = vrot.slane %v6554, 4
        %v7186 = vrot.slane %v6550, 5
        %v7187 = vor.u32 %v7185, %v7186
        %v7188 = vsel %vm1166, %v7183, %v7187
        %v7189 = vrot.slane %v6562, 4
        %v7190 = vrot.slane %v6558, 5
        %v7191 = vor.u32 %v7189, %v7190
        %v7192 = vsel %vm1166, %v7187, %v7191
        %v7193 = vrot.slane %v6570, 4
        %v7194 = vrot.slane %v6566, 5
        %v7195 = vor.u32 %v7193, %v7194
        %v7196 = vsel %vm1166, %v7191, %v7195
        %v7198 = vshrl.u32 %v7153, 16
        %v7200 = vrot.slane %v7198, 4
        %v7201 = vshll.u32 %v7153, 16
        %v7203 = vrot.slane %v7201, 5
        %v7204 = vor.u32 %v7200, %v7203
        %v7205 = vsel %vm1166, %v7195, %v7204
        %v7208 = vunpack.c.l.b16 %v7155
        %v7209 = vunpack.c.l.b16 %v7156
        %v7210 = vpack.c.b16 %v7209, %v7208
        %v7213 = vsel %vm1075, %v7168, 0
        %v7216 = vsel %vm1075, %v7172, 0
        %v7219 = vsel %vm1075, %v7176, 0
        %v7222 = vsel %vm1075, %v7180, 0
        %v7225 = vsel %vm1075, %v7184, 0
        %v7228 = vsel %vm1075, %v7188, 0
        %v7231 = vsel %vm1075, %v7192, 0
        %v7234 = vsel %vm1075, %v7196, 0
        %v7237 = vsel %vm1075, %v7205, 0
        %7239 = vmatprep.subr.bf16.mxu0 0
        %7240 = vmatpush1.bf16.msra.mxu0 %v7210
        %7241 = vmatprep.subr.bf16.mxu0 0
        %7242 = vmatpush1.bf16.msra.mxu0 0
        %7243 = vmatprep.subr.bf16.mxu0 0
        %7244 = vmatpush1.bf16.msra.mxu0 0
        %7245 = vmatprep.subr.bf16.mxu0 0
        %7246 = vmatpush1.bf16.msra.mxu0 0
        %7247 = vmatprep.subr.bf16.mxu0 0
        %7248 = vmatpush1.bf16.msra.mxu0 0
        %7249 = vmatprep.subr.bf16.mxu0 0
        %7250 = vmatpush1.bf16.msra.mxu0 0
        %7251 = vmatprep.subr.bf16.mxu0 0
        %7252 = vmatpush1.bf16.msra.mxu0 0
        %7253 = vmatprep.subr.bf16.mxu0 0
        %7254 = vmatpush1.bf16.msra.mxu0 0
        %7255 = vmatprep.subr.bf16.mxu0 0
        %7256 = vmatpush1.bf16.msra.mxu0 0
        %7257 = vmatprep.subr.bf16.mxu0 0
        %7258 = vmatpush1.bf16.msra.mxu0 0
        %7259 = vmatprep.subr.bf16.mxu0 0
        %7260 = vmatpush1.bf16.msra.mxu0 0
        %7261 = vmatprep.subr.bf16.mxu0 0
        %7262 = vmatpush1.bf16.msra.mxu0 0
        %7263 = vmatprep.subr.bf16.mxu0 0
        %7264 = vmatpush1.bf16.msra.mxu0 0
        %7265 = vmatprep.subr.bf16.mxu0 0
        %7266 = vmatpush1.bf16.msra.mxu0 0
        %7267 = vmatprep.subr.bf16.mxu0 0
        %7268 = vmatpush1.bf16.msra.mxu0 0
        %7269 = vmatprep.subr.bf16.mxu0 0
        %7270 = vmatpush1.bf16.msra.mxu0 0
        %7271 = vmatprep.mubr.bf16.mxu0 0
        %7272 = vmatmul.mubr.bf16.gmra.mrb[0].mxu0 %v7213
        %v7273 = vpop.f32.mrb[0].mxu0
        %v7274 = vadd.f32 0.0, %v7273
        %v7275 = vpop.f32.mrb[0].mxu0
        %v7276 = vpop.f32.mrb[0].mxu0
        %v7277 = vadd.f32 0.0, %v7276
        %v7278 = vpop.f32.mrb[0].mxu0
        %7279 = vmatprep.mubr.bf16.mxu0 0
        %7280 = vmatmul.mubr.bf16.gmra.mrb[0].mxu0 %v7216
        %v7281 = vpop.f32.mrb[0].mxu0
        %v7282 = vadd.f32 0.0, %v7281
        %v7283 = vpop.f32.mrb[0].mxu0
        %v7284 = vpop.f32.mrb[0].mxu0
        %v7285 = vadd.f32 0.0, %v7284
        %v7286 = vpop.f32.mrb[0].mxu0
        %7287 = vmatprep.mubr.bf16.mxu0 0
        %7288 = vmatmul.mubr.bf16.gmra.mrb[0].mxu0 %v7219
        %v7289 = vpop.f32.mrb[0].mxu0
        %v7290 = vadd.f32 0.0, %v7289
        %v7291 = vpop.f32.mrb[0].mxu0
        %v7292 = vpop.f32.mrb[0].mxu0
        %v7293 = vadd.f32 0.0, %v7292
        %v7294 = vpop.f32.mrb[0].mxu0
        %7295 = vmatprep.mubr.bf16.mxu0 0
        %7296 = vmatmul.mubr.bf16.gmra.mrb[0].mxu0 %v7222
        %v7297 = vpop.f32.mrb[0].mxu0
        %v7298 = vadd.f32 0.0, %v7297
        %v7299 = vpop.f32.mrb[0].mxu0
        %v7300 = vpop.f32.mrb[0].mxu0
        %v7301 = vadd.f32 0.0, %v7300
        %v7302 = vpop.f32.mrb[0].mxu0
        %7303 = vmatprep.mubr.bf16.mxu0 0
        %7304 = vmatmul.mubr.bf16.gmra.mrb[0].mxu0 %v7225
        %v7305 = vpop.f32.mrb[0].mxu0
        %v7306 = vpop.f32.mrb[0].mxu0
        %v7307 = vpop.f32.mrb[0].mxu0
        %v7308 = vpop.f32.mrb[0].mxu0
        %7309 = vmatprep.mubr.bf16.mxu0 0
        %7310 = vmatmul.mubr.bf16.gmra.mrb[0].mxu0 %v7228
        %v7311 = vpop.f32.mrb[0].mxu0
        %v7312 = vadd.f32 0.0, %v7311
        %v7313 = vpop.f32.mrb[0].mxu0
        %v7314 = vpop.f32.mrb[0].mxu0
        %v7315 = vadd.f32 0.0, %v7314
        %v7316 = vpop.f32.mrb[0].mxu0
        %7317 = vmatprep.mubr.bf16.mxu0 0
        %7318 = vmatmul.mubr.bf16.gmra.mrb[0].mxu0 %v7231
        %v7319 = vpop.f32.mrb[0].mxu0
        %v7320 = vadd.f32 0.0, %v7319
        %v7321 = vpop.f32.mrb[0].mxu0
        %v7322 = vpop.f32.mrb[0].mxu0
        %v7323 = vadd.f32 0.0, %v7322
        %v7324 = vpop.f32.mrb[0].mxu0
        %7325 = vmatprep.mubr.bf16.mxu0 0
        %7326 = vmatmul.mubr.bf16.gmra.mrb[0].mxu0 %v7234
        %v7327 = vpop.f32.mrb[0].mxu0
        %v7328 = vadd.f32 0.0, %v7327
        %v7329 = vpop.f32.mrb[0].mxu0
        %v7330 = vpop.f32.mrb[0].mxu0
        %v7331 = vadd.f32 0.0, %v7330
        %v7332 = vpop.f32.mrb[0].mxu0
        %7333 = vmatprep.mubr.bf16.mxu0 0
        %7334 = vmatmul.mubr.bf16.gmra.mrb[0].mxu0 %v7237
        %v7335 = vpop.f32.mrb[0].mxu0
        %v7336 = vadd.f32 0.0, %v7335
        %v7337 = vpop.f32.mrb[0].mxu0
        %v7338 = vpop.f32.mrb[0].mxu0
        %v7339 = vadd.f32 0.0, %v7338
        %v7340 = vpop.f32.mrb[0].mxu0
        %7341 = vdwg.mxu0
        %v7342 = vmul.f32 %v7274, %v1031
        %v7343 = vmul.f32 %v7277, %v1032
        %v7344 = vmul.f32 %v7282, %v1033
        %v7345 = vmul.f32 %v7285, %v1034
        %v7346 = vmul.f32 %v7290, %v1035
        %v7347 = vmul.f32 %v7293, %v1036
        %v7348 = vmul.f32 %v7298, %v1037
        %v7349 = vmul.f32 %v7301, %v1038
        %v7350 = vmul.f32 %v7312, %v1041
        %v7351 = vmul.f32 %v7315, %v1042
        %v7352 = vmul.f32 %v7320, %v1043
        %v7353 = vmul.f32 %v7323, %v1044
        %v7354 = vmul.f32 %v7328, %v1045
        %v7355 = vmul.f32 %v7331, %v1046
        %v7356 = vmul.f32 %v7336, %v1047
        %v7357 = vmul.f32 %v7339, %v1048
        %v7358 = vadd.f32 %v7137, %v7342
        %v7359 = vadd.f32 %v7138, %v7343
        %v7360 = vadd.f32 %v7139, %v7344
        %v7361 = vadd.f32 %v7140, %v7345
        %v7362 = vadd.f32 %v7141, %v7346
        %v7363 = vadd.f32 %v7142, %v7347
        %v7364 = vadd.f32 %v7143, %v7348
        %v7365 = vadd.f32 %v7144, %v7349
        %v7366 = vadd.f32 %v7145, %v7350
        %v7367 = vadd.f32 %v7146, %v7351
        %v7368 = vadd.f32 %v7147, %v7352
        %v7369 = vadd.f32 %v7148, %v7353
        %v7370 = vadd.f32 %v7149, %v7354
        %v7371 = vadd.f32 %v7150, %v7355
        %v7372 = vadd.f32 %v7151, %v7356
        %v7373 = vadd.f32 %v7152, %v7357
        %v7374 = vld [vmem:[%s7] sm:$0x1]
        %v7376 = vlaneseq
        %v7377 = vshrl.u32 %v7376, 7
        %v7378 = vsub.s32 0, %v7377
        %v7379 = vrot.slane %v7374, %v7378
        %v7381 = vadd.f32 %v7358, %v7379
        %v7382 = vadd.f32 %v7359, %v7379
        %v7383 = vadd.f32 %v7360, %v7379
        %v7384 = vadd.f32 %v7361, %v7379
        %v7385 = vadd.f32 %v7362, %v7379
        %v7386 = vadd.f32 %v7363, %v7379
        %v7387 = vadd.f32 %v7364, %v7379
        %v7388 = vadd.f32 %v7365, %v7379
        %v7389 = vadd.f32 %v7366, %v7379
        %v7390 = vadd.f32 %v7367, %v7379
        %v7391 = vadd.f32 %v7368, %v7379
        %v7392 = vadd.f32 %v7369, %v7379
        %v7393 = vadd.f32 %v7370, %v7379
        %v7394 = vadd.f32 %v7371, %v7379
        %v7395 = vadd.f32 %v7372, %v7379
        %v7396 = vadd.f32 %v7373, %v7379
        %v7397 = vmax.f32 %v7381, 0.0
        %v7398 = vmax.f32 %v7382, 0.0
        %v7399 = vmax.f32 %v7383, 0.0
        %v7400 = vmax.f32 %v7384, 0.0
        %v7401 = vmax.f32 %v7385, 0.0
        %v7402 = vmax.f32 %v7386, 0.0
        %v7403 = vmax.f32 %v7387, 0.0
        %v7404 = vmax.f32 %v7388, 0.0
        %v7405 = vmax.f32 %v7389, 0.0
        %v7406 = vmax.f32 %v7390, 0.0
        %v7407 = vmax.f32 %v7391, 0.0
        %v7408 = vmax.f32 %v7392, 0.0
        %v7409 = vmax.f32 %v7393, 0.0
        %v7410 = vmax.f32 %v7394, 0.0
        %v7411 = vmax.f32 %v7395, 0.0
        %v7412 = vmax.f32 %v7396, 0.0
        %v7413 = vpack.c.bf16 %v7398, %v7397
        %v7414 = vpack.c.bf16 %v7400, %v7399
        %v7415 = vpack.c.bf16 %v7402, %v7401
        %v7416 = vpack.c.bf16 %v7404, %v7403
        %7417 = vst.msk [vmem:[#allocation5 + $0x8] sm:$0xff] %vm1079, %v7413
        %7418 = vst.msk [vmem:[#allocation5 + $0x10] sm:$0xff] %vm1079, %v7414
        %7419 = vst.msk [vmem:[#allocation5 + $0x18] sm:$0xff] %vm1079, %v7415
        %7420 = vst.msk [vmem:[#allocation5 + $0x20] sm:$0xff] %vm1079, %v7416
        %v7421 = vpack.c.bf16 %v7406, %v7405
        %v7422 = vpack.c.bf16 %v7408, %v7407
        %v7423 = vpack.c.bf16 %v7410, %v7409
        %v7424 = vpack.c.bf16 %v7412, %v7411
        %7425 = vst.msk [vmem:[#allocation5 + $0x30] sm:$0xff] %vm1079, %v7421
        %7426 = vst.msk [vmem:[#allocation5 + $0x38] sm:$0xff] %vm1079, %v7422
        %7427 = vst.msk [vmem:[#allocation5 + $0x40] sm:$0xff] %vm1079, %v7423
        %7428 = vst.msk [vmem:[#allocation5 + $0x48] sm:$0xff] %vm1079, %v7424
        %v7429 = vld [vmem:[#allocation5] sm:$0xf8]
        %v7430 = vld [vmem:[#allocation5 + $0x8] sm:$0xff]
        %v7431 = vld [vmem:[#allocation5 + $0x10] sm:$0xff]
        %v7432 = vld [vmem:[#allocation5 + $0x18] sm:$0xff]
        %v7433 = vld [vmem:[#allocation5 + $0x20] sm:$0xff]
        %v7434 = vld [vmem:[#allocation5 + $0x28] sm:$0xff]
        %v7435 = vld [vmem:[#allocation5 + $0x30] sm:$0xff]
        %v7436 = vld [vmem:[#allocation5 + $0x38] sm:$0xff]
        %v7437 = vld [vmem:[#allocation5 + $0x40] sm:$0xff]
        %v7438 = vld [vmem:[#allocation5 + $0x48] sm:$0xf]
        %v7439 = vld [vmem:[%s8] sm:$0xf]
        %v7441 = vshrl.u32 %v7429, 16
        %v7443 = vrot.slane %v7441, 3
        %v7444 = vshll.u32 %v7429, 16
        %v7446 = vrot.slane %v7444, 4
        %v7447 = vor.u32 %v7443, %v7446
        %v7449 = vshrl.u32 %v7430, 16
        %v7451 = vrot.slane %v7449, 3
        %v7452 = vshll.u32 %v7430, 16
        %v7454 = vrot.slane %v7452, 4
        %v7455 = vor.u32 %v7451, %v7454
        %v7456 = vsel %vm1435, %v7447, %v7455
        %v7458 = vshrl.u32 %v7431, 16
        %v7460 = vrot.slane %v7458, 3
        %v7461 = vshll.u32 %v7431, 16
        %v7463 = vrot.slane %v7461, 4
        %v7464 = vor.u32 %v7460, %v7463
        %v7465 = vsel %vm1435, %v7455, %v7464
        %v7467 = vshrl.u32 %v7432, 16
        %v7469 = vrot.slane %v7467, 3
        %v7470 = vshll.u32 %v7432, 16
        %v7472 = vrot.slane %v7470, 4
        %v7473 = vor.u32 %v7469, %v7472
        %v7474 = vsel %vm1435, %v7464, %v7473
        %v7476 = vshrl.u32 %v7433, 16
        %v7478 = vrot.slane %v7476, 3
        %v7479 = vshll.u32 %v7433, 16
        %v7481 = vrot.slane %v7479, 4
        %v7482 = vor.u32 %v7478, %v7481
        %v7483 = vsel %vm1435, %v7473, %v7482
        %v7485 = vshrl.u32 %v7434, 16
        %v7487 = vrot.slane %v7485, 3
        %v7488 = vshll.u32 %v7434, 16
        %v7490 = vrot.slane %v7488, 4
        %v7491 = vor.u32 %v7487, %v7490
        %v7492 = vsel %vm1435, %v7482, %v7491
        %v7494 = vshrl.u32 %v7435, 16
        %v7496 = vrot.slane %v7494, 3
        %v7497 = vshll.u32 %v7435, 16
        %v7499 = vrot.slane %v7497, 4
        %v7500 = vor.u32 %v7496, %v7499
        %v7501 = vsel %vm1435, %v7491, %v7500
        %v7503 = vshrl.u32 %v7436, 16
        %v7505 = vrot.slane %v7503, 3
        %v7506 = vshll.u32 %v7436, 16
        %v7508 = vrot.slane %v7506, 4
        %v7509 = vor.u32 %v7505, %v7508
        %v7510 = vsel %vm1435, %v7500, %v7509
        %v7512 = vshrl.u32 %v7437, 16
        %v7514 = vrot.slane %v7512, 3
        %v7515 = vshll.u32 %v7437, 16
        %v7517 = vrot.slane %v7515, 4
        %v7518 = vor.u32 %v7514, %v7517
        %v7519 = vsel %vm1435, %v7509, %v7518
        %v7521 = vshrl.u32 %v7438, 16
        %v7523 = vrot.slane %v7521, 3
        %v7524 = vshll.u32 %v7438, 16
        %v7526 = vrot.slane %v7524, 4
        %v7527 = vor.u32 %v7523, %v7526
        %v7528 = vsel %vm1435, %v7518, %v7527
        %v7530 = vsel %vm1079, %v7456, 0
        %v7533 = vsel %vm1079, %v7465, 0
        %v7536 = vsel %vm1079, %v7474, 0
        %v7539 = vsel %vm1079, %v7483, 0
        %v7542 = vsel %vm1079, %v7492, 0
        %v7545 = vsel %vm1079, %v7501, 0
        %v7548 = vsel %vm1079, %v7510, 0
        %v7551 = vsel %vm1079, %v7519, 0
        %v7554 = vsel %vm1079, %v7528, 0
        %vm7556 = vcmask 1043456
        %v7558 = vsel %vm7556, %v7439, 0
        %7560 = vmatprep.subr.bf16.mxu0 0
        %7561 = vmatpush1.bf16.msra.mxu0 %v7558
        %7562 = vmatprep.subr.bf16.mxu0 0
        %7563 = vmatpush1.bf16.msra.mxu0 0
        %7564 = vmatprep.subr.bf16.mxu0 0
        %7565 = vmatpush1.bf16.msra.mxu0 0
        %7566 = vmatprep.subr.bf16.mxu0 0
        %7567 = vmatpush1.bf16.msra.mxu0 0
        %7568 = vmatprep.subr.bf16.mxu0 0
        %7569 = vmatpush1.bf16.msra.mxu0 0
        %7570 = vmatprep.subr.bf16.mxu0 0
        %7571 = vmatpush1.bf16.msra.mxu0 0
        %7572 = vmatprep.subr.bf16.mxu0 0
        %7573 = vmatpush1.bf16.msra.mxu0 0
        %7574 = vmatprep.subr.bf16.mxu0 0
        %7575 = vmatpush1.bf16.msra.mxu0 0
        %7576 = vmatprep.subr.bf16.mxu0 0
        %7577 = vmatpush1.bf16.msra.mxu0 0
        %7578 = vmatprep.subr.bf16.mxu0 0
        %7579 = vmatpush1.bf16.msra.mxu0 0
        %7580 = vmatprep.subr.bf16.mxu0 0
        %7581 = vmatpush1.bf16.msra.mxu0 0
        %7582 = vmatprep.subr.bf16.mxu0 0
        %7583 = vmatpush1.bf16.msra.mxu0 0
        %7584 = vmatprep.subr.bf16.mxu0 0
        %7585 = vmatpush1.bf16.msra.mxu0 0
        %7586 = vmatprep.subr.bf16.mxu0 0
        %7587 = vmatpush1.bf16.msra.mxu0 0
        %7588 = vmatprep.subr.bf16.mxu0 0
        %7589 = vmatpush1.bf16.msra.mxu0 0
        %7590 = vmatprep.subr.bf16.mxu0 0
        %7591 = vmatpush1.bf16.msra.mxu0 0
        %7592 = vmatprep.mubr.bf16.mxu0 0
        %7593 = vmatmul.mubr.bf16.gmra.mrb[0].mxu0 %v7530
        %v7594 = vpop.f32.mrb[0].mxu0
        %v7595 = vadd.f32 0.0, %v7594
        %v7596 = vpop.f32.mrb[0].mxu0
        %v7597 = vpop.f32.mrb[0].mxu0
        %v7598 = vadd.f32 0.0, %v7597
        %v7599 = vpop.f32.mrb[0].mxu0
        %7600 = vmatprep.mubr.bf16.mxu0 0
        %7601 = vmatmul.mubr.bf16.gmra.mrb[0].mxu0 %v7533
        %v7602 = vpop.f32.mrb[0].mxu0
        %v7603 = vadd.f32 0.0, %v7602
        %v7604 = vpop.f32.mrb[0].mxu0
        %v7605 = vpop.f32.mrb[0].mxu0
        %v7606 = vadd.f32 0.0, %v7605
        %v7607 = vpop.f32.mrb[0].mxu0
        %7608 = vmatprep.mubr.bf16.mxu0 0
        %7609 = vmatmul.mubr.bf16.gmra.mrb[0].mxu0 %v7536
        %v7610 = vpop.f32.mrb[0].mxu0
        %v7611 = vadd.f32 0.0, %v7610
        %v7612 = vpop.f32.mrb[0].mxu0
        %v7613 = vpop.f32.mrb[0].mxu0
        %v7614 = vadd.f32 0.0, %v7613
        %v7615 = vpop.f32.mrb[0].mxu0
        %7616 = vmatprep.mubr.bf16.mxu0 0
        %7617 = vmatmul.mubr.bf16.gmra.mrb[0].mxu0 %v7539
        %v7618 = vpop.f32.mrb[0].mxu0
        %v7619 = vadd.f32 0.0, %v7618
        %v7620 = vpop.f32.mrb[0].mxu0
        %v7621 = vpop.f32.mrb[0].mxu0
        %v7622 = vadd.f32 0.0, %v7621
        %v7623 = vpop.f32.mrb[0].mxu0
        %7624 = vmatprep.mubr.bf16.mxu0 0
        %7625 = vmatmul.mubr.bf16.gmra.mrb[0].mxu0 %v7542
        %v7626 = vpop.f32.mrb[0].mxu0
        %v7627 = vadd.f32 0.0, %v7626
        %v7628 = vpop.f32.mrb[0].mxu0
        %v7629 = vpop.f32.mrb[0].mxu0
        %v7630 = vadd.f32 0.0, %v7629
        %v7631 = vpop.f32.mrb[0].mxu0
        %7632 = vmatprep.mubr.bf16.mxu0 0
        %7633 = vmatmul.mubr.bf16.gmra.mrb[0].mxu0 %v7545
        %v7634 = vpop.f32.mrb[0].mxu0
        %v7635 = vadd.f32 0.0, %v7634
        %v7636 = vpop.f32.mrb[0].mxu0
        %v7637 = vpop.f32.mrb[0].mxu0
        %v7638 = vadd.f32 0.0, %v7637
        %v7639 = vpop.f32.mrb[0].mxu0
        %7640 = vmatprep.mubr.bf16.mxu0 0
        %7641 = vmatmul.mubr.bf16.gmra.mrb[0].mxu0 %v7548
        %v7642 = vpop.f32.mrb[0].mxu0
        %v7643 = vadd.f32 0.0, %v7642
        %v7644 = vpop.f32.mrb[0].mxu0
        %v7645 = vpop.f32.mrb[0].mxu0
        %v7646 = vadd.f32 0.0, %v7645
        %v7647 = vpop.f32.mrb[0].mxu0
        %7648 = vmatprep.mubr.bf16.mxu0 0
        %7649 = vmatmul.mubr.bf16.gmra.mrb[0].mxu0 %v7551
        %v7650 = vpop.f32.mrb[0].mxu0
        %v7651 = vadd.f32 0.0, %v7650
        %v7652 = vpop.f32.mrb[0].mxu0
        %v7653 = vpop.f32.mrb[0].mxu0
        %v7654 = vadd.f32 0.0, %v7653
        %v7655 = vpop.f32.mrb[0].mxu0
        %7656 = vmatprep.mubr.bf16.mxu0 0
        %7657 = vmatmul.mubr.bf16.gmra.mrb[0].mxu0 %v7554
        %v7658 = vpop.f32.mrb[0].mxu0
        %v7659 = vadd.f32 0.0, %v7658
        %v7660 = vpop.f32.mrb[0].mxu0
        %v7661 = vpop.f32.mrb[0].mxu0
        %v7662 = vadd.f32 0.0, %v7661
        %v7663 = vpop.f32.mrb[0].mxu0
        %7664 = vdwg.mxu0
        %v7665 = vmul.f32 %v7595, %v977
        %v7666 = vmul.f32 %v7598, %v978
        %v7667 = vmul.f32 %v7603, %v979
        %v7668 = vmul.f32 %v7606, %v980
        %v7669 = vmul.f32 %v7611, %v981
        %v7670 = vmul.f32 %v7614, %v982
        %v7671 = vmul.f32 %v7619, %v983
        %v7672 = vmul.f32 %v7622, %v984
        %v7673 = vmul.f32 %v7627, %v985
        %v7674 = vmul.f32 %v7630, %v986
        %v7675 = vmul.f32 %v7635, %v987
        %v7676 = vmul.f32 %v7638, %v988
        %v7677 = vmul.f32 %v7643, %v989
        %v7678 = vmul.f32 %v7646, %v990
        %v7679 = vmul.f32 %v7651, %v991
        %v7680 = vmul.f32 %v7654, %v992
        %v7681 = vmul.f32 %v7659, %v993
        %v7682 = vmul.f32 %v7662, %v994
        %v7683 = vld [vmem:[#allocation5] sm:$0xf0]
        %s7684 = scalar_lea.vmem %s8, 4
        %v7685 = vld [vmem:[%s7684] sm:$0xf]
        %v7696 = vrot.slane %v7683, 4
        %v7697 = vrot.slane %v7430, 4
        %v7698 = vsel %vm1281, %v7696, %v7697
        %v7699 = vrot.slane %v7431, 4
        %v7700 = vsel %vm1281, %v7697, %v7699
        %v7701 = vrot.slane %v7432, 4
        %v7702 = vsel %vm1281, %v7699, %v7701
        %v7703 = vrot.slane %v7433, 4
        %v7704 = vsel %vm1281, %v7701, %v7703
        %v7705 = vrot.slane %v7434, 4
        %v7706 = vsel %vm1281, %v7703, %v7705
        %v7707 = vrot.slane %v7435, 4
        %v7708 = vsel %vm1281, %v7705, %v7707
        %v7709 = vrot.slane %v7436, 4
        %v7710 = vsel %vm1281, %v7707, %v7709
        %v7711 = vrot.slane %v7437, 4
        %v7712 = vsel %vm1281, %v7709, %v7711
        %v7713 = vrot.slane %v7438, 4
        %v7714 = vsel %vm1281, %v7711, %v7713
        %v7716 = vsel %vm1079, %v7698, 0
        %v7719 = vsel %vm1079, %v7700, 0
        %v7722 = vsel %vm1079, %v7702, 0
        %v7725 = vsel %vm1079, %v7704, 0
        %v7728 = vsel %vm1079, %v7706, 0
        %v7731 = vsel %vm1079, %v7708, 0
        %v7734 = vsel %vm1079, %v7710, 0
        %v7737 = vsel %vm1079, %v7712, 0
        %v7740 = vsel %vm1079, %v7714, 0
        %v7743 = vsel %vm7556, %v7685, 0
        %7745 = vmatprep.subr.bf16.mxu0 0
        %7746 = vmatpush1.bf16.msra.mxu0 %v7743
        %7747 = vmatprep.subr.bf16.mxu0 0
        %7748 = vmatpush1.bf16.msra.mxu0 0
        %7749 = vmatprep.subr.bf16.mxu0 0
        %7750 = vmatpush1.bf16.msra.mxu0 0
        %7751 = vmatprep.subr.bf16.mxu0 0
        %7752 = vmatpush1.bf16.msra.mxu0 0
        %7753 = vmatprep.subr.bf16.mxu0 0
        %7754 = vmatpush1.bf16.msra.mxu0 0
        %7755 = vmatprep.subr.bf16.mxu0 0
        %7756 = vmatpush1.bf16.msra.mxu0 0
        %7757 = vmatprep.subr.bf16.mxu0 0
        %7758 = vmatpush1.bf16.msra.mxu0 0
        %7759 = vmatprep.subr.bf16.mxu0 0
        %7760 = vmatpush1.bf16.msra.mxu0 0
        %7761 = vmatprep.subr.bf16.mxu0 0
        %7762 = vmatpush1.bf16.msra.mxu0 0
        %7763 = vmatprep.subr.bf16.mxu0 0
        %7764 = vmatpush1.bf16.msra.mxu0 0
        %7765 = vmatprep.subr.bf16.mxu0 0
        %7766 = vmatpush1.bf16.msra.mxu0 0
        %7767 = vmatprep.subr.bf16.mxu0 0
        %7768 = vmatpush1.bf16.msra.mxu0 0
        %7769 = vmatprep.subr.bf16.mxu0 0
        %7770 = vmatpush1.bf16.msra.mxu0 0
        %7771 = vmatprep.subr.bf16.mxu0 0
        %7772 = vmatpush1.bf16.msra.mxu0 0
        %7773 = vmatprep.subr.bf16.mxu0 0
        %7774 = vmatpush1.bf16.msra.mxu0 0
        %7775 = vmatprep.subr.bf16.mxu0 0
        %7776 = vmatpush1.bf16.msra.mxu0 0
        %7777 = vmatprep.mubr.bf16.mxu0 0
        %7778 = vmatmul.mubr.bf16.gmra.mrb[0].mxu0 %v7716
        %v7779 = vpop.f32.mrb[0].mxu0
        %v7780 = vadd.f32 0.0, %v7779
        %v7781 = vpop.f32.mrb[0].mxu0
        %v7782 = vpop.f32.mrb[0].mxu0
        %v7783 = vadd.f32 0.0, %v7782
        %v7784 = vpop.f32.mrb[0].mxu0
        %7785 = vmatprep.mubr.bf16.mxu0 0
        %7786 = vmatmul.mubr.bf16.gmra.mrb[0].mxu0 %v7719
        %v7787 = vpop.f32.mrb[0].mxu0
        %v7788 = vadd.f32 0.0, %v7787
        %v7789 = vpop.f32.mrb[0].mxu0
        %v7790 = vpop.f32.mrb[0].mxu0
        %v7791 = vadd.f32 0.0, %v7790
        %v7792 = vpop.f32.mrb[0].mxu0
        %7793 = vmatprep.mubr.bf16.mxu0 0
        %7794 = vmatmul.mubr.bf16.gmra.mrb[0].mxu0 %v7722
        %v7795 = vpop.f32.mrb[0].mxu0
        %v7796 = vadd.f32 0.0, %v7795
        %v7797 = vpop.f32.mrb[0].mxu0
        %v7798 = vpop.f32.mrb[0].mxu0
        %v7799 = vadd.f32 0.0, %v7798
        %v7800 = vpop.f32.mrb[0].mxu0
        %7801 = vmatprep.mubr.bf16.mxu0 0
        %7802 = vmatmul.mubr.bf16.gmra.mrb[0].mxu0 %v7725
        %v7803 = vpop.f32.mrb[0].mxu0
        %v7804 = vadd.f32 0.0, %v7803
        %v7805 = vpop.f32.mrb[0].mxu0
        %v7806 = vpop.f32.mrb[0].mxu0
        %v7807 = vadd.f32 0.0, %v7806
        %v7808 = vpop.f32.mrb[0].mxu0
        %7809 = vmatprep.mubr.bf16.mxu0 0
        %7810 = vmatmul.mubr.bf16.gmra.mrb[0].mxu0 %v7728
        %v7811 = vpop.f32.mrb[0].mxu0
        %v7812 = vadd.f32 0.0, %v7811
        %v7813 = vpop.f32.mrb[0].mxu0
        %v7814 = vpop.f32.mrb[0].mxu0
        %v7815 = vadd.f32 0.0, %v7814
        %v7816 = vpop.f32.mrb[0].mxu0
        %7817 = vmatprep.mubr.bf16.mxu0 0
        %7818 = vmatmul.mubr.bf16.gmra.mrb[0].mxu0 %v7731
        %v7819 = vpop.f32.mrb[0].mxu0
        %v7820 = vadd.f32 0.0, %v7819
        %v7821 = vpop.f32.mrb[0].mxu0
        %v7822 = vpop.f32.mrb[0].mxu0
        %v7823 = vadd.f32 0.0, %v7822
        %v7824 = vpop.f32.mrb[0].mxu0
        %7825 = vmatprep.mubr.bf16.mxu0 0
        %7826 = vmatmul.mubr.bf16.gmra.mrb[0].mxu0 %v7734
        %v7827 = vpop.f32.mrb[0].mxu0
        %v7828 = vadd.f32 0.0, %v7827
        %v7829 = vpop.f32.mrb[0].mxu0
        %v7830 = vpop.f32.mrb[0].mxu0
        %v7831 = vadd.f32 0.0, %v7830
        %v7832 = vpop.f32.mrb[0].mxu0
        %7833 = vmatprep.mubr.bf16.mxu0 0
        %7834 = vmatmul.mubr.bf16.gmra.mrb[0].mxu0 %v7737
        %v7835 = vpop.f32.mrb[0].mxu0
        %v7836 = vadd.f32 0.0, %v7835
        %v7837 = vpop.f32.mrb[0].mxu0
        %v7838 = vpop.f32.mrb[0].mxu0
        %v7839 = vadd.f32 0.0, %v7838
        %v7840 = vpop.f32.mrb[0].mxu0
        %7841 = vmatprep.mubr.bf16.mxu0 0
        %7842 = vmatmul.mubr.bf16.gmra.mrb[0].mxu0 %v7740
        %v7843 = vpop.f32.mrb[0].mxu0
        %v7844 = vadd.f32 0.0, %v7843
        %v7845 = vpop.f32.mrb[0].mxu0
        %v7846 = vpop.f32.mrb[0].mxu0
        %v7847 = vadd.f32 0.0, %v7846
        %v7848 = vpop.f32.mrb[0].mxu0
        %7849 = vdwg.mxu0
        %v7850 = vadd.f32 %v7665, %v7780
        %v7851 = vadd.f32 %v7666, %v7783
        %v7852 = vadd.f32 %v7667, %v7788
        %v7853 = vadd.f32 %v7668, %v7791
        %v7854 = vadd.f32 %v7669, %v7796
        %v7855 = vadd.f32 %v7670, %v7799
        %v7856 = vadd.f32 %v7671, %v7804
        %v7857 = vadd.f32 %v7672, %v7807
        %v7858 = vadd.f32 %v7673, %v7812
        %v7859 = vadd.f32 %v7674, %v7815
        %v7860 = vadd.f32 %v7675, %v7820
        %v7861 = vadd.f32 %v7676, %v7823
        %v7862 = vadd.f32 %v7677, %v7828
        %v7863 = vadd.f32 %v7678, %v7831
        %v7864 = vadd.f32 %v7679, %v7836
        %v7865 = vadd.f32 %v7680, %v7839
        %v7866 = vadd.f32 %v7681, %v7844
        %v7867 = vadd.f32 %v7682, %v7847
        %v7868 = vld [vmem:[#allocation5 + $0x48] sm:$0x1f]
        %s7869 = scalar_lea.vmem %s8, 8
        %v7870 = vld [vmem:[%s7869] sm:$0xf]
        %v7872 = vshrl.u32 %v7683, 16
        %v7874 = vrot.slane %v7872, 4
        %v7875 = vshll.u32 %v7683, 16
        %v7877 = vrot.slane %v7875, 5
        %v7878 = vor.u32 %v7874, %v7877
        %v7879 = vrot.slane %v7449, 4
        %v7880 = vrot.slane %v7452, 5
        %v7881 = vor.u32 %v7879, %v7880
        %v7882 = vsel %vm1166, %v7878, %v7881
        %v7883 = vrot.slane %v7458, 4
        %v7884 = vrot.slane %v7461, 5
        %v7885 = vor.u32 %v7883, %v7884
        %v7886 = vsel %vm1166, %v7881, %v7885
        %v7887 = vrot.slane %v7467, 4
        %v7888 = vrot.slane %v7470, 5
        %v7889 = vor.u32 %v7887, %v7888
        %v7890 = vsel %vm1166, %v7885, %v7889
        %v7891 = vrot.slane %v7476, 4
        %v7892 = vrot.slane %v7479, 5
        %v7893 = vor.u32 %v7891, %v7892
        %v7894 = vsel %vm1166, %v7889, %v7893
        %v7895 = vrot.slane %v7485, 4
        %v7896 = vrot.slane %v7488, 5
        %v7897 = vor.u32 %v7895, %v7896
        %v7898 = vsel %vm1166, %v7893, %v7897
        %v7899 = vrot.slane %v7494, 4
        %v7900 = vrot.slane %v7497, 5
        %v7901 = vor.u32 %v7899, %v7900
        %v7902 = vsel %vm1166, %v7897, %v7901
        %v7903 = vrot.slane %v7503, 4
        %v7904 = vrot.slane %v7506, 5
        %v7905 = vor.u32 %v7903, %v7904
        %v7906 = vsel %vm1166, %v7901, %v7905
        %v7907 = vrot.slane %v7512, 4
        %v7908 = vrot.slane %v7515, 5
        %v7909 = vor.u32 %v7907, %v7908
        %v7910 = vsel %vm1166, %v7905, %v7909
        %v7912 = vshrl.u32 %v7868, 16
        %v7914 = vrot.slane %v7912, 4
        %v7915 = vshll.u32 %v7868, 16
        %v7917 = vrot.slane %v7915, 5
        %v7918 = vor.u32 %v7914, %v7917
        %v7919 = vsel %vm1166, %v7909, %v7918
        %v7921 = vsel %vm1079, %v7882, 0
        %v7924 = vsel %vm1079, %v7886, 0
        %v7927 = vsel %vm1079, %v7890, 0
        %v7930 = vsel %vm1079, %v7894, 0
        %v7933 = vsel %vm1079, %v7898, 0
        %v7936 = vsel %vm1079, %v7902, 0
        %v7939 = vsel %vm1079, %v7906, 0
        %v7942 = vsel %vm1079, %v7910, 0
        %v7945 = vsel %vm1079, %v7919, 0
        %v7948 = vsel %vm7556, %v7870, 0
        %7950 = vmatprep.subr.bf16.mxu0 0
        %7951 = vmatpush1.bf16.msra.mxu0 %v7948
        %7952 = vmatprep.subr.bf16.mxu0 0
        %7953 = vmatpush1.bf16.msra.mxu0 0
        %7954 = vmatprep.subr.bf16.mxu0 0
        %7955 = vmatpush1.bf16.msra.mxu0 0
        %7956 = vmatprep.subr.bf16.mxu0 0
        %7957 = vmatpush1.bf16.msra.mxu0 0
        %7958 = vmatprep.subr.bf16.mxu0 0
        %7959 = vmatpush1.bf16.msra.mxu0 0
        %7960 = vmatprep.subr.bf16.mxu0 0
        %7961 = vmatpush1.bf16.msra.mxu0 0
        %7962 = vmatprep.subr.bf16.mxu0 0
        %7963 = vmatpush1.bf16.msra.mxu0 0
        %7964 = vmatprep.subr.bf16.mxu0 0
        %7965 = vmatpush1.bf16.msra.mxu0 0
        %7966 = vmatprep.subr.bf16.mxu0 0
        %7967 = vmatpush1.bf16.msra.mxu0 0
        %7968 = vmatprep.subr.bf16.mxu0 0
        %7969 = vmatpush1.bf16.msra.mxu0 0
        %7970 = vmatprep.subr.bf16.mxu0 0
        %7971 = vmatpush1.bf16.msra.mxu0 0
        %7972 = vmatprep.subr.bf16.mxu0 0
        %7973 = vmatpush1.bf16.msra.mxu0 0
        %7974 = vmatprep.subr.bf16.mxu0 0
        %7975 = vmatpush1.bf16.msra.mxu0 0
        %7976 = vmatprep.subr.bf16.mxu0 0
        %7977 = vmatpush1.bf16.msra.mxu0 0
        %7978 = vmatprep.subr.bf16.mxu0 0
        %7979 = vmatpush1.bf16.msra.mxu0 0
        %7980 = vmatprep.subr.bf16.mxu0 0
        %7981 = vmatpush1.bf16.msra.mxu0 0
        %7982 = vmatprep.mubr.bf16.mxu0 0
        %7983 = vmatmul.mubr.bf16.gmra.mrb[0].mxu0 %v7921
        %v7984 = vpop.f32.mrb[0].mxu0
        %v7985 = vadd.f32 0.0, %v7984
        %v7986 = vpop.f32.mrb[0].mxu0
        %v7987 = vpop.f32.mrb[0].mxu0
        %v7988 = vadd.f32 0.0, %v7987
        %v7989 = vpop.f32.mrb[0].mxu0
        %7990 = vmatprep.mubr.bf16.mxu0 0
        %7991 = vmatmul.mubr.bf16.gmra.mrb[0].mxu0 %v7924
        %v7992 = vpop.f32.mrb[0].mxu0
        %v7993 = vadd.f32 0.0, %v7992
        %v7994 = vpop.f32.mrb[0].mxu0
        %v7995 = vpop.f32.mrb[0].mxu0
        %v7996 = vadd.f32 0.0, %v7995
        %v7997 = vpop.f32.mrb[0].mxu0
        %7998 = vmatprep.mubr.bf16.mxu0 0
        %7999 = vmatmul.mubr.bf16.gmra.mrb[0].mxu0 %v7927
        %v8000 = vpop.f32.mrb[0].mxu0
        %v8001 = vadd.f32 0.0, %v8000
        %v8002 = vpop.f32.mrb[0].mxu0
        %v8003 = vpop.f32.mrb[0].mxu0
        %v8004 = vadd.f32 0.0, %v8003
        %v8005 = vpop.f32.mrb[0].mxu0
        %8006 = vmatprep.mubr.bf16.mxu0 0
        %8007 = vmatmul.mubr.bf16.gmra.mrb[0].mxu0 %v7930
        %v8008 = vpop.f32.mrb[0].mxu0
        %v8009 = vadd.f32 0.0, %v8008
        %v8010 = vpop.f32.mrb[0].mxu0
        %v8011 = vpop.f32.mrb[0].mxu0
        %v8012 = vadd.f32 0.0, %v8011
        %v8013 = vpop.f32.mrb[0].mxu0
        %8014 = vmatprep.mubr.bf16.mxu0 0
        %8015 = vmatmul.mubr.bf16.gmra.mrb[0].mxu0 %v7933
        %v8016 = vpop.f32.mrb[0].mxu0
        %v8017 = vadd.f32 0.0, %v8016
        %v8018 = vpop.f32.mrb[0].mxu0
        %v8019 = vpop.f32.mrb[0].mxu0
        %v8020 = vadd.f32 0.0, %v8019
        %v8021 = vpop.f32.mrb[0].mxu0
        %8022 = vmatprep.mubr.bf16.mxu0 0
        %8023 = vmatmul.mubr.bf16.gmra.mrb[0].mxu0 %v7936
        %v8024 = vpop.f32.mrb[0].mxu0
        %v8025 = vadd.f32 0.0, %v8024
        %v8026 = vpop.f32.mrb[0].mxu0
        %v8027 = vpop.f32.mrb[0].mxu0
        %v8028 = vadd.f32 0.0, %v8027
        %v8029 = vpop.f32.mrb[0].mxu0
        %8030 = vmatprep.mubr.bf16.mxu0 0
        %8031 = vmatmul.mubr.bf16.gmra.mrb[0].mxu0 %v7939
        %v8032 = vpop.f32.mrb[0].mxu0
        %v8033 = vadd.f32 0.0, %v8032
        %v8034 = vpop.f32.mrb[0].mxu0
        %v8035 = vpop.f32.mrb[0].mxu0
        %v8036 = vadd.f32 0.0, %v8035
        %v8037 = vpop.f32.mrb[0].mxu0
        %8038 = vmatprep.mubr.bf16.mxu0 0
        %8039 = vmatmul.mubr.bf16.gmra.mrb[0].mxu0 %v7942
        %v8040 = vpop.f32.mrb[0].mxu0
        %v8041 = vadd.f32 0.0, %v8040
        %v8042 = vpop.f32.mrb[0].mxu0
        %v8043 = vpop.f32.mrb[0].mxu0
        %v8044 = vadd.f32 0.0, %v8043
        %v8045 = vpop.f32.mrb[0].mxu0
        %8046 = vmatprep.mubr.bf16.mxu0 0
        %8047 = vmatmul.mubr.bf16.gmra.mrb[0].mxu0 %v7945
        %v8048 = vpop.f32.mrb[0].mxu0
        %v8049 = vadd.f32 0.0, %v8048
        %v8050 = vpop.f32.mrb[0].mxu0
        %v8051 = vpop.f32.mrb[0].mxu0
        %v8052 = vadd.f32 0.0, %v8051
        %v8053 = vpop.f32.mrb[0].mxu0
        %8054 = vdwg.mxu0
        %v8055 = vmul.f32 %v7985, %v1031
        %v8056 = vmul.f32 %v7988, %v1032
        %v8057 = vmul.f32 %v7993, %v1033
        %v8058 = vmul.f32 %v7996, %v1034
        %v8059 = vmul.f32 %v8001, %v1035
        %v8060 = vmul.f32 %v8004, %v1036
        %v8061 = vmul.f32 %v8009, %v1037
        %v8062 = vmul.f32 %v8012, %v1038
        %v8063 = vmul.f32 %v8017, %v1039
        %v8064 = vmul.f32 %v8020, %v1040
        %v8065 = vmul.f32 %v8025, %v1041
        %v8066 = vmul.f32 %v8028, %v1042
        %v8067 = vmul.f32 %v8033, %v1043
        %v8068 = vmul.f32 %v8036, %v1044
        %v8069 = vmul.f32 %v8041, %v1045
        %v8070 = vmul.f32 %v8044, %v1046
        %v8071 = vmul.f32 %v8049, %v1047
        %v8072 = vmul.f32 %v8052, %v1048
        %v8073 = vadd.f32 %v7850, %v8055
        %v8074 = vadd.f32 %v7851, %v8056
        %v8075 = vadd.f32 %v7852, %v8057
        %v8076 = vadd.f32 %v7853, %v8058
        %v8077 = vadd.f32 %v7854, %v8059
        %v8078 = vadd.f32 %v7855, %v8060
        %v8079 = vadd.f32 %v7856, %v8061
        %v8080 = vadd.f32 %v7857, %v8062
        %v8081 = vadd.f32 %v7858, %v8063
        %v8082 = vadd.f32 %v7859, %v8064
        %v8083 = vadd.f32 %v7860, %v8065
        %v8084 = vadd.f32 %v7861, %v8066
        %v8085 = vadd.f32 %v7862, %v8067
        %v8086 = vadd.f32 %v7863, %v8068
        %v8087 = vadd.f32 %v7864, %v8069
        %v8088 = vadd.f32 %v7865, %v8070
        %v8089 = vadd.f32 %v7866, %v8071
        %v8090 = vadd.f32 %v7867, %v8072
        %v8091 = vld [vmem:[#allocation5] sm:$0x80]
        %v8092 = vld [vmem:[#allocation5 + $0x48] sm:$0xff]
        %s8093 = scalar_lea.vmem %s8, 12
        %v8094 = vld [vmem:[%s8093] sm:$0xf]
        %v8096 = vshrl.u32 %v8091, 16
        %v8098 = vrot.slane %v8096, 7
        %v8099 = vrot.slane %v7449, 7
        %v8100 = vor.u32 %v8099, %v7452
        %v8101 = vsel %vm2050, %v8098, %v8100
        %v8102 = vrot.slane %v7458, 7
        %v8103 = vor.u32 %v8102, %v7461
        %v8104 = vsel %vm2050, %v8099, %v8103
        %v8105 = vrot.slane %v7467, 7
        %v8106 = vor.u32 %v8105, %v7470
        %v8107 = vsel %vm2050, %v8102, %v8106
        %v8108 = vrot.slane %v7476, 7
        %v8109 = vor.u32 %v8108, %v7479
        %v8110 = vsel %vm2050, %v8105, %v8109
        %v8111 = vrot.slane %v7485, 7
        %v8112 = vor.u32 %v8111, %v7488
        %v8113 = vsel %vm2050, %v8108, %v8112
        %v8114 = vrot.slane %v7494, 7
        %v8115 = vor.u32 %v8114, %v7497
        %v8116 = vsel %vm2050, %v8111, %v8115
        %v8117 = vrot.slane %v7503, 7
        %v8118 = vor.u32 %v8117, %v7506
        %v8119 = vsel %vm2050, %v8114, %v8118
        %v8120 = vrot.slane %v7512, 7
        %v8121 = vor.u32 %v8120, %v7515
        %v8122 = vsel %vm2050, %v8117, %v8121
        %v8124 = vshrl.u32 %v8092, 16
        %v8126 = vrot.slane %v8124, 7
        %v8127 = vshll.u32 %v8092, 16
        %v8129 = vor.u32 %v8126, %v8127
        %v8130 = vsel %vm2050, %v8120, %v8129
        %v8132 = vsel %vm1079, %v8101, 0
        %v8135 = vsel %vm1079, %v8104, 0
        %v8138 = vsel %vm1079, %v8107, 0
        %v8141 = vsel %vm1079, %v8110, 0
        %v8144 = vsel %vm1079, %v8113, 0
        %v8147 = vsel %vm1079, %v8116, 0
        %v8150 = vsel %vm1079, %v8119, 0
        %v8153 = vsel %vm1079, %v8122, 0
        %v8156 = vsel %vm1079, %v8130, 0
        %v8159 = vsel %vm7556, %v8094, 0
        %8161 = vmatprep.subr.bf16.mxu0 0
        %8162 = vmatpush1.bf16.msra.mxu0 %v8159
        %8163 = vmatprep.subr.bf16.mxu0 0
        %8164 = vmatpush1.bf16.msra.mxu0 0
        %8165 = vmatprep.subr.bf16.mxu0 0
        %8166 = vmatpush1.bf16.msra.mxu0 0
        %8167 = vmatprep.subr.bf16.mxu0 0
        %8168 = vmatpush1.bf16.msra.mxu0 0
        %8169 = vmatprep.subr.bf16.mxu0 0
        %8170 = vmatpush1.bf16.msra.mxu0 0
        %8171 = vmatprep.subr.bf16.mxu0 0
        %8172 = vmatpush1.bf16.msra.mxu0 0
        %8173 = vmatprep.subr.bf16.mxu0 0
        %8174 = vmatpush1.bf16.msra.mxu0 0
        %8175 = vmatprep.subr.bf16.mxu0 0
        %8176 = vmatpush1.bf16.msra.mxu0 0
        %8177 = vmatprep.subr.bf16.mxu0 0
        %8178 = vmatpush1.bf16.msra.mxu0 0
        %8179 = vmatprep.subr.bf16.mxu0 0
        %8180 = vmatpush1.bf16.msra.mxu0 0
        %8181 = vmatprep.subr.bf16.mxu0 0
        %8182 = vmatpush1.bf16.msra.mxu0 0
        %8183 = vmatprep.subr.bf16.mxu0 0
        %8184 = vmatpush1.bf16.msra.mxu0 0
        %8185 = vmatprep.subr.bf16.mxu0 0
        %8186 = vmatpush1.bf16.msra.mxu0 0
        %8187 = vmatprep.subr.bf16.mxu0 0
        %8188 = vmatpush1.bf16.msra.mxu0 0
        %8189 = vmatprep.subr.bf16.mxu0 0
        %8190 = vmatpush1.bf16.msra.mxu0 0
        %8191 = vmatprep.subr.bf16.mxu0 0
        %8192 = vmatpush1.bf16.msra.mxu0 0
        %8193 = vmatprep.mubr.bf16.mxu0 0
        %8194 = vmatmul.mubr.bf16.gmra.mrb[0].mxu0 %v8132
        %v8195 = vpop.f32.mrb[0].mxu0
        %v8196 = vadd.f32 0.0, %v8195
        %v8197 = vpop.f32.mrb[0].mxu0
        %v8198 = vpop.f32.mrb[0].mxu0
        %v8199 = vadd.f32 0.0, %v8198
        %v8200 = vpop.f32.mrb[0].mxu0
        %8201 = vmatprep.mubr.bf16.mxu0 0
        %8202 = vmatmul.mubr.bf16.gmra.mrb[0].mxu0 %v8135
        %v8203 = vpop.f32.mrb[0].mxu0
        %v8204 = vadd.f32 0.0, %v8203
        %v8205 = vpop.f32.mrb[0].mxu0
        %v8206 = vpop.f32.mrb[0].mxu0
        %v8207 = vadd.f32 0.0, %v8206
        %v8208 = vpop.f32.mrb[0].mxu0
        %8209 = vmatprep.mubr.bf16.mxu0 0
        %8210 = vmatmul.mubr.bf16.gmra.mrb[0].mxu0 %v8138
        %v8211 = vpop.f32.mrb[0].mxu0
        %v8212 = vadd.f32 0.0, %v8211
        %v8213 = vpop.f32.mrb[0].mxu0
        %v8214 = vpop.f32.mrb[0].mxu0
        %v8215 = vadd.f32 0.0, %v8214
        %v8216 = vpop.f32.mrb[0].mxu0
        %8217 = vmatprep.mubr.bf16.mxu0 0
        %8218 = vmatmul.mubr.bf16.gmra.mrb[0].mxu0 %v8141
        %v8219 = vpop.f32.mrb[0].mxu0
        %v8220 = vadd.f32 0.0, %v8219
        %v8221 = vpop.f32.mrb[0].mxu0
        %v8222 = vpop.f32.mrb[0].mxu0
        %v8223 = vadd.f32 0.0, %v8222
        %v8224 = vpop.f32.mrb[0].mxu0
        %8225 = vmatprep.mubr.bf16.mxu0 0
        %8226 = vmatmul.mubr.bf16.gmra.mrb[0].mxu0 %v8144
        %v8227 = vpop.f32.mrb[0].mxu0
        %v8228 = vadd.f32 0.0, %v8227
        %v8229 = vpop.f32.mrb[0].mxu0
        %v8230 = vpop.f32.mrb[0].mxu0
        %v8231 = vadd.f32 0.0, %v8230
        %v8232 = vpop.f32.mrb[0].mxu0
        %8233 = vmatprep.mubr.bf16.mxu0 0
        %8234 = vmatmul.mubr.bf16.gmra.mrb[0].mxu0 %v8147
        %v8235 = vpop.f32.mrb[0].mxu0
        %v8236 = vadd.f32 0.0, %v8235
        %v8237 = vpop.f32.mrb[0].mxu0
        %v8238 = vpop.f32.mrb[0].mxu0
        %v8239 = vadd.f32 0.0, %v8238
        %v8240 = vpop.f32.mrb[0].mxu0
        %8241 = vmatprep.mubr.bf16.mxu0 0
        %8242 = vmatmul.mubr.bf16.gmra.mrb[0].mxu0 %v8150
        %v8243 = vpop.f32.mrb[0].mxu0
        %v8244 = vadd.f32 0.0, %v8243
        %v8245 = vpop.f32.mrb[0].mxu0
        %v8246 = vpop.f32.mrb[0].mxu0
        %v8247 = vadd.f32 0.0, %v8246
        %v8248 = vpop.f32.mrb[0].mxu0
        %8249 = vmatprep.mubr.bf16.mxu0 0
        %8250 = vmatmul.mubr.bf16.gmra.mrb[0].mxu0 %v8153
        %v8251 = vpop.f32.mrb[0].mxu0
        %v8252 = vadd.f32 0.0, %v8251
        %v8253 = vpop.f32.mrb[0].mxu0
        %v8254 = vpop.f32.mrb[0].mxu0
        %v8255 = vadd.f32 0.0, %v8254
        %v8256 = vpop.f32.mrb[0].mxu0
        %8257 = vmatprep.mubr.bf16.mxu0 0
        %8258 = vmatmul.mubr.bf16.gmra.mrb[0].mxu0 %v8156
        %v8259 = vpop.f32.mrb[0].mxu0
        %v8260 = vadd.f32 0.0, %v8259
        %v8261 = vpop.f32.mrb[0].mxu0
        %v8262 = vpop.f32.mrb[0].mxu0
        %v8263 = vadd.f32 0.0, %v8262
        %v8264 = vpop.f32.mrb[0].mxu0
        %8265 = vdwg.mxu0
        %v8266 = vmul.f32 %v8196, %v977
        %v8267 = vmul.f32 %v8199, %v978
        %v8268 = vmul.f32 %v8204, %v979
        %v8269 = vmul.f32 %v8207, %v980
        %v8270 = vmul.f32 %v8212, %v981
        %v8271 = vmul.f32 %v8215, %v982
        %v8272 = vmul.f32 %v8220, %v983
        %v8273 = vmul.f32 %v8223, %v984
        %v8274 = vmul.f32 %v8228, %v985
        %v8275 = vmul.f32 %v8231, %v986
        %v8276 = vmul.f32 %v8236, %v987
        %v8277 = vmul.f32 %v8239, %v988
        %v8278 = vmul.f32 %v8244, %v989
        %v8279 = vmul.f32 %v8247, %v990
        %v8280 = vmul.f32 %v8252, %v991
        %v8281 = vmul.f32 %v8255, %v992
        %v8282 = vmul.f32 %v8260, %v993
        %v8283 = vmul.f32 %v8263, %v994
        %v8284 = vadd.f32 %v8073, %v8266
        %v8285 = vadd.f32 %v8074, %v8267
        %v8286 = vadd.f32 %v8075, %v8268
        %v8287 = vadd.f32 %v8076, %v8269
        %v8288 = vadd.f32 %v8077, %v8270
        %v8289 = vadd.f32 %v8078, %v8271
        %v8290 = vadd.f32 %v8079, %v8272
        %v8291 = vadd.f32 %v8080, %v8273
        %v8292 = vadd.f32 %v8081, %v8274
        %v8293 = vadd.f32 %v8082, %v8275
        %v8294 = vadd.f32 %v8083, %v8276
        %v8295 = vadd.f32 %v8084, %v8277
        %v8296 = vadd.f32 %v8085, %v8278
        %v8297 = vadd.f32 %v8086, %v8279
        %v8298 = vadd.f32 %v8087, %v8280
        %v8299 = vadd.f32 %v8088, %v8281
        %v8300 = vadd.f32 %v8089, %v8282
        %v8301 = vadd.f32 %v8090, %v8283
        %s8302 = scalar_lea.vmem %s8, 16
        %v8303 = vld [vmem:[%s8302] sm:$0xf]
        %v8304 = vsel %vm1079, %v7430, 0
        %v8306 = vsel %vm1079, %v7431, 0
        %v8308 = vsel %vm1079, %v7432, 0
        %v8310 = vsel %vm1079, %v7433, 0
        %v8312 = vsel %vm1079, %v7434, 0
        %v8314 = vsel %vm1079, %v7435, 0
        %v8316 = vsel %vm1079, %v7436, 0
        %v8318 = vsel %vm1079, %v7437, 0
        %v8320 = vsel %vm1079, %v8092, 0
        %v8323 = vsel %vm7556, %v8303, 0
        %8325 = vmatprep.subr.bf16.mxu0 0
        %8326 = vmatpush1.bf16.msra.mxu0 %v8323
        %8327 = vmatprep.subr.bf16.mxu0 0
        %8328 = vmatpush1.bf16.msra.mxu0 0
        %8329 = vmatprep.subr.bf16.mxu0 0
        %8330 = vmatpush1.bf16.msra.mxu0 0
        %8331 = vmatprep.subr.bf16.mxu0 0
        %8332 = vmatpush1.bf16.msra.mxu0 0
        %8333 = vmatprep.subr.bf16.mxu0 0
        %8334 = vmatpush1.bf16.msra.mxu0 0
        %8335 = vmatprep.subr.bf16.mxu0 0
        %8336 = vmatpush1.bf16.msra.mxu0 0
        %8337 = vmatprep.subr.bf16.mxu0 0
        %8338 = vmatpush1.bf16.msra.mxu0 0
        %8339 = vmatprep.subr.bf16.mxu0 0
        %8340 = vmatpush1.bf16.msra.mxu0 0
        %8341 = vmatprep.subr.bf16.mxu0 0
        %8342 = vmatpush1.bf16.msra.mxu0 0
        %8343 = vmatprep.subr.bf16.mxu0 0
        %8344 = vmatpush1.bf16.msra.mxu0 0
        %8345 = vmatprep.subr.bf16.mxu0 0
        %8346 = vmatpush1.bf16.msra.mxu0 0
        %8347 = vmatprep.subr.bf16.mxu0 0
        %8348 = vmatpush1.bf16.msra.mxu0 0
        %8349 = vmatprep.subr.bf16.mxu0 0
        %8350 = vmatpush1.bf16.msra.mxu0 0
        %8351 = vmatprep.subr.bf16.mxu0 0
        %8352 = vmatpush1.bf16.msra.mxu0 0
        %8353 = vmatprep.subr.bf16.mxu0 0
        %8354 = vmatpush1.bf16.msra.mxu0 0
        %8355 = vmatprep.subr.bf16.mxu0 0
        %8356 = vmatpush1.bf16.msra.mxu0 0
        %8357 = vmatprep.mubr.bf16.mxu0 0
        %8358 = vmatmul.mubr.bf16.gmra.mrb[0].mxu0 %v8304
        %v8359 = vpop.f32.mrb[0].mxu0
        %v8360 = vadd.f32 0.0, %v8359
        %v8361 = vpop.f32.mrb[0].mxu0
        %v8362 = vpop.f32.mrb[0].mxu0
        %v8363 = vadd.f32 0.0, %v8362
        %v8364 = vpop.f32.mrb[0].mxu0
        %8365 = vmatprep.mubr.bf16.mxu0 0
        %8366 = vmatmul.mubr.bf16.gmra.mrb[0].mxu0 %v8306
        %v8367 = vpop.f32.mrb[0].mxu0
        %v8368 = vadd.f32 0.0, %v8367
        %v8369 = vpop.f32.mrb[0].mxu0
        %v8370 = vpop.f32.mrb[0].mxu0
        %v8371 = vadd.f32 0.0, %v8370
        %v8372 = vpop.f32.mrb[0].mxu0
        %8373 = vmatprep.mubr.bf16.mxu0 0
        %8374 = vmatmul.mubr.bf16.gmra.mrb[0].mxu0 %v8308
        %v8375 = vpop.f32.mrb[0].mxu0
        %v8376 = vadd.f32 0.0, %v8375
        %v8377 = vpop.f32.mrb[0].mxu0
        %v8378 = vpop.f32.mrb[0].mxu0
        %v8379 = vadd.f32 0.0, %v8378
        %v8380 = vpop.f32.mrb[0].mxu0
        %8381 = vmatprep.mubr.bf16.mxu0 0
        %8382 = vmatmul.mubr.bf16.gmra.mrb[0].mxu0 %v8310
        %v8383 = vpop.f32.mrb[0].mxu0
        %v8384 = vadd.f32 0.0, %v8383
        %v8385 = vpop.f32.mrb[0].mxu0
        %v8386 = vpop.f32.mrb[0].mxu0
        %v8387 = vadd.f32 0.0, %v8386
        %v8388 = vpop.f32.mrb[0].mxu0
        %8389 = vmatprep.mubr.bf16.mxu0 0
        %8390 = vmatmul.mubr.bf16.gmra.mrb[0].mxu0 %v8312
        %v8391 = vpop.f32.mrb[0].mxu0
        %v8392 = vadd.f32 0.0, %v8391
        %v8393 = vpop.f32.mrb[0].mxu0
        %v8394 = vpop.f32.mrb[0].mxu0
        %v8395 = vadd.f32 0.0, %v8394
        %v8396 = vpop.f32.mrb[0].mxu0
        %8397 = vmatprep.mubr.bf16.mxu0 0
        %8398 = vmatmul.mubr.bf16.gmra.mrb[0].mxu0 %v8314
        %v8399 = vpop.f32.mrb[0].mxu0
        %v8400 = vadd.f32 0.0, %v8399
        %v8401 = vpop.f32.mrb[0].mxu0
        %v8402 = vpop.f32.mrb[0].mxu0
        %v8403 = vadd.f32 0.0, %v8402
        %v8404 = vpop.f32.mrb[0].mxu0
        %8405 = vmatprep.mubr.bf16.mxu0 0
        %8406 = vmatmul.mubr.bf16.gmra.mrb[0].mxu0 %v8316
        %v8407 = vpop.f32.mrb[0].mxu0
        %v8408 = vadd.f32 0.0, %v8407
        %v8409 = vpop.f32.mrb[0].mxu0
        %v8410 = vpop.f32.mrb[0].mxu0
        %v8411 = vadd.f32 0.0, %v8410
        %v8412 = vpop.f32.mrb[0].mxu0
        %8413 = vmatprep.mubr.bf16.mxu0 0
        %8414 = vmatmul.mubr.bf16.gmra.mrb[0].mxu0 %v8318
        %v8415 = vpop.f32.mrb[0].mxu0
        %v8416 = vadd.f32 0.0, %v8415
        %v8417 = vpop.f32.mrb[0].mxu0
        %v8418 = vpop.f32.mrb[0].mxu0
        %v8419 = vadd.f32 0.0, %v8418
        %v8420 = vpop.f32.mrb[0].mxu0
        %8421 = vmatprep.mubr.bf16.mxu0 0
        %8422 = vmatmul.mubr.bf16.gmra.mrb[0].mxu0 %v8320
        %v8423 = vpop.f32.mrb[0].mxu0
        %v8424 = vadd.f32 0.0, %v8423
        %v8425 = vpop.f32.mrb[0].mxu0
        %v8426 = vpop.f32.mrb[0].mxu0
        %v8427 = vadd.f32 0.0, %v8426
        %v8428 = vpop.f32.mrb[0].mxu0
        %8429 = vdwg.mxu0
        %v8430 = vadd.f32 %v8284, %v8360
        %v8431 = vadd.f32 %v8285, %v8363
        %v8432 = vadd.f32 %v8286, %v8368
        %v8433 = vadd.f32 %v8287, %v8371
        %v8434 = vadd.f32 %v8288, %v8376
        %v8435 = vadd.f32 %v8289, %v8379
        %v8436 = vadd.f32 %v8290, %v8384
        %v8437 = vadd.f32 %v8291, %v8387
        %v8438 = vadd.f32 %v8292, %v8392
        %v8439 = vadd.f32 %v8293, %v8395
        %v8440 = vadd.f32 %v8294, %v8400
        %v8441 = vadd.f32 %v8295, %v8403
        %v8442 = vadd.f32 %v8296, %v8408
        %v8443 = vadd.f32 %v8297, %v8411
        %v8444 = vadd.f32 %v8298, %v8416
        %v8445 = vadd.f32 %v8299, %v8419
        %v8446 = vadd.f32 %v8300, %v8424
        %v8447 = vadd.f32 %v8301, %v8427
        %v8448 = vld [vmem:[#allocation5 + $0x8] sm:$0xff]
        %v8449 = vld [vmem:[#allocation5 + $0x10] sm:$0xff]
        %v8450 = vld [vmem:[#allocation5 + $0x18] sm:$0xff]
        %v8451 = vld [vmem:[#allocation5 + $0x20] sm:$0xff]
        %v8452 = vld [vmem:[#allocation5 + $0x28] sm:$0xff]
        %v8453 = vld [vmem:[#allocation5 + $0x30] sm:$0xff]
        %v8454 = vld [vmem:[#allocation5 + $0x38] sm:$0xff]
        %v8455 = vld [vmem:[#allocation5 + $0x40] sm:$0xff]
        %v8456 = vld [vmem:[#allocation5 + $0x48] sm:$0xff]
        %v8457 = vld [vmem:[#allocation5 + $0x50] sm:$0x1]
        %s8458 = scalar_lea.vmem %s8, 20
        %v8459 = vld [vmem:[%s8458] sm:$0xf]
        %v8461 = vshrl.u32 %v8448, 16
        %v8463 = vshll.u32 %v8448, 16
        %v8465 = vrot.slane %v8463, 1
        %v8466 = vor.u32 %v8461, %v8465
        %v8468 = vshll.u32 %v8449, 16
        %v8470 = vrot.slane %v8468, 1
        %v8471 = vsel %vm2001, %v8466, %v8470
        %v8472 = vshrl.u32 %v8449, 16
        %v8474 = vor.u32 %v8472, %v8470
        %v8476 = vshll.u32 %v8450, 16
        %v8478 = vrot.slane %v8476, 1
        %v8479 = vsel %vm2001, %v8474, %v8478
        %v8480 = vshrl.u32 %v8450, 16
        %v8482 = vor.u32 %v8480, %v8478
        %v8484 = vshll.u32 %v8451, 16
        %v8486 = vrot.slane %v8484, 1
        %v8487 = vsel %vm2001, %v8482, %v8486
        %v8488 = vshrl.u32 %v8451, 16
        %v8490 = vor.u32 %v8488, %v8486
        %v8492 = vshll.u32 %v8452, 16
        %v8494 = vrot.slane %v8492, 1
        %v8495 = vsel %vm2001, %v8490, %v8494
        %v8496 = vshrl.u32 %v8452, 16
        %v8498 = vor.u32 %v8496, %v8494
        %v8500 = vshll.u32 %v8453, 16
        %v8502 = vrot.slane %v8500, 1
        %v8503 = vsel %vm2001, %v8498, %v8502
        %v8504 = vshrl.u32 %v8453, 16
        %v8506 = vor.u32 %v8504, %v8502
        %v8508 = vshll.u32 %v8454, 16
        %v8510 = vrot.slane %v8508, 1
        %v8511 = vsel %vm2001, %v8506, %v8510
        %v8512 = vshrl.u32 %v8454, 16
        %v8514 = vor.u32 %v8512, %v8510
        %v8516 = vshll.u32 %v8455, 16
        %v8518 = vrot.slane %v8516, 1
        %v8519 = vsel %vm2001, %v8514, %v8518
        %v8520 = vshrl.u32 %v8455, 16
        %v8522 = vor.u32 %v8520, %v8518
        %v8524 = vshll.u32 %v8456, 16
        %v8526 = vrot.slane %v8524, 1
        %v8527 = vsel %vm2001, %v8522, %v8526
        %v8528 = vshrl.u32 %v8456, 16
        %v8530 = vor.u32 %v8528, %v8526
        %v8532 = vshll.u32 %v8457, 16
        %v8534 = vrot.slane %v8532, 1
        %v8535 = vsel %vm2001, %v8530, %v8534
        %v8537 = vsel %vm1079, %v8471, 0
        %v8540 = vsel %vm1079, %v8479, 0
        %v8543 = vsel %vm1079, %v8487, 0
        %v8546 = vsel %vm1079, %v8495, 0
        %v8549 = vsel %vm1079, %v8503, 0
        %v8552 = vsel %vm1079, %v8511, 0
        %v8555 = vsel %vm1079, %v8519, 0
        %v8558 = vsel %vm1079, %v8527, 0
        %v8561 = vsel %vm1079, %v8535, 0
        %v8564 = vsel %vm7556, %v8459, 0
        %8566 = vmatprep.subr.bf16.mxu0 0
        %8567 = vmatpush1.bf16.msra.mxu0 %v8564
        %8568 = vmatprep.subr.bf16.mxu0 0
        %8569 = vmatpush1.bf16.msra.mxu0 0
        %8570 = vmatprep.subr.bf16.mxu0 0
        %8571 = vmatpush1.bf16.msra.mxu0 0
        %8572 = vmatprep.subr.bf16.mxu0 0
        %8573 = vmatpush1.bf16.msra.mxu0 0
        %8574 = vmatprep.subr.bf16.mxu0 0
        %8575 = vmatpush1.bf16.msra.mxu0 0
        %8576 = vmatprep.subr.bf16.mxu0 0
        %8577 = vmatpush1.bf16.msra.mxu0 0
        %8578 = vmatprep.subr.bf16.mxu0 0
        %8579 = vmatpush1.bf16.msra.mxu0 0
        %8580 = vmatprep.subr.bf16.mxu0 0
        %8581 = vmatpush1.bf16.msra.mxu0 0
        %8582 = vmatprep.subr.bf16.mxu0 0
        %8583 = vmatpush1.bf16.msra.mxu0 0
        %8584 = vmatprep.subr.bf16.mxu0 0
        %8585 = vmatpush1.bf16.msra.mxu0 0
        %8586 = vmatprep.subr.bf16.mxu0 0
        %8587 = vmatpush1.bf16.msra.mxu0 0
        %8588 = vmatprep.subr.bf16.mxu0 0
        %8589 = vmatpush1.bf16.msra.mxu0 0
        %8590 = vmatprep.subr.bf16.mxu0 0
        %8591 = vmatpush1.bf16.msra.mxu0 0
        %8592 = vmatprep.subr.bf16.mxu0 0
        %8593 = vmatpush1.bf16.msra.mxu0 0
        %8594 = vmatprep.subr.bf16.mxu0 0
        %8595 = vmatpush1.bf16.msra.mxu0 0
        %8596 = vmatprep.subr.bf16.mxu0 0
        %8597 = vmatpush1.bf16.msra.mxu0 0
        %8598 = vmatprep.mubr.bf16.mxu0 0
        %8599 = vmatmul.mubr.bf16.gmra.mrb[0].mxu0 %v8537
        %v8600 = vpop.f32.mrb[0].mxu0
        %v8601 = vadd.f32 0.0, %v8600
        %v8602 = vpop.f32.mrb[0].mxu0
        %v8603 = vpop.f32.mrb[0].mxu0
        %v8604 = vadd.f32 0.0, %v8603
        %v8605 = vpop.f32.mrb[0].mxu0
        %8606 = vmatprep.mubr.bf16.mxu0 0
        %8607 = vmatmul.mubr.bf16.gmra.mrb[0].mxu0 %v8540
        %v8608 = vpop.f32.mrb[0].mxu0
        %v8609 = vadd.f32 0.0, %v8608
        %v8610 = vpop.f32.mrb[0].mxu0
        %v8611 = vpop.f32.mrb[0].mxu0
        %v8612 = vadd.f32 0.0, %v8611
        %v8613 = vpop.f32.mrb[0].mxu0
        %8614 = vmatprep.mubr.bf16.mxu0 0
        %8615 = vmatmul.mubr.bf16.gmra.mrb[0].mxu0 %v8543
        %v8616 = vpop.f32.mrb[0].mxu0
        %v8617 = vadd.f32 0.0, %v8616
        %v8618 = vpop.f32.mrb[0].mxu0
        %v8619 = vpop.f32.mrb[0].mxu0
        %v8620 = vadd.f32 0.0, %v8619
        %v8621 = vpop.f32.mrb[0].mxu0
        %8622 = vmatprep.mubr.bf16.mxu0 0
        %8623 = vmatmul.mubr.bf16.gmra.mrb[0].mxu0 %v8546
        %v8624 = vpop.f32.mrb[0].mxu0
        %v8625 = vadd.f32 0.0, %v8624
        %v8626 = vpop.f32.mrb[0].mxu0
        %v8627 = vpop.f32.mrb[0].mxu0
        %v8628 = vadd.f32 0.0, %v8627
        %v8629 = vpop.f32.mrb[0].mxu0
        %8630 = vmatprep.mubr.bf16.mxu0 0
        %8631 = vmatmul.mubr.bf16.gmra.mrb[0].mxu0 %v8549
        %v8632 = vpop.f32.mrb[0].mxu0
        %v8633 = vadd.f32 0.0, %v8632
        %v8634 = vpop.f32.mrb[0].mxu0
        %v8635 = vpop.f32.mrb[0].mxu0
        %v8636 = vadd.f32 0.0, %v8635
        %v8637 = vpop.f32.mrb[0].mxu0
        %8638 = vmatprep.mubr.bf16.mxu0 0
        %8639 = vmatmul.mubr.bf16.gmra.mrb[0].mxu0 %v8552
        %v8640 = vpop.f32.mrb[0].mxu0
        %v8641 = vadd.f32 0.0, %v8640
        %v8642 = vpop.f32.mrb[0].mxu0
        %v8643 = vpop.f32.mrb[0].mxu0
        %v8644 = vadd.f32 0.0, %v8643
        %v8645 = vpop.f32.mrb[0].mxu0
        %8646 = vmatprep.mubr.bf16.mxu0 0
        %8647 = vmatmul.mubr.bf16.gmra.mrb[0].mxu0 %v8555
        %v8648 = vpop.f32.mrb[0].mxu0
        %v8649 = vadd.f32 0.0, %v8648
        %v8650 = vpop.f32.mrb[0].mxu0
        %v8651 = vpop.f32.mrb[0].mxu0
        %v8652 = vadd.f32 0.0, %v8651
        %v8653 = vpop.f32.mrb[0].mxu0
        %8654 = vmatprep.mubr.bf16.mxu0 0
        %8655 = vmatmul.mubr.bf16.gmra.mrb[0].mxu0 %v8558
        %v8656 = vpop.f32.mrb[0].mxu0
        %v8657 = vadd.f32 0.0, %v8656
        %v8658 = vpop.f32.mrb[0].mxu0
        %v8659 = vpop.f32.mrb[0].mxu0
        %v8660 = vadd.f32 0.0, %v8659
        %v8661 = vpop.f32.mrb[0].mxu0
        %8662 = vmatprep.mubr.bf16.mxu0 0
        %8663 = vmatmul.mubr.bf16.gmra.mrb[0].mxu0 %v8561
        %v8664 = vpop.f32.mrb[0].mxu0
        %v8665 = vadd.f32 0.0, %v8664
        %v8666 = vpop.f32.mrb[0].mxu0
        %v8667 = vpop.f32.mrb[0].mxu0
        %v8668 = vadd.f32 0.0, %v8667
        %v8669 = vpop.f32.mrb[0].mxu0
        %8670 = vdwg.mxu0
        %v8671 = vmul.f32 %v8601, %v1031
        %v8672 = vmul.f32 %v8604, %v1032
        %v8673 = vmul.f32 %v8609, %v1033
        %v8674 = vmul.f32 %v8612, %v1034
        %v8675 = vmul.f32 %v8617, %v1035
        %v8676 = vmul.f32 %v8620, %v1036
        %v8677 = vmul.f32 %v8625, %v1037
        %v8678 = vmul.f32 %v8628, %v1038
        %v8679 = vmul.f32 %v8633, %v1039
        %v8680 = vmul.f32 %v8636, %v1040
        %v8681 = vmul.f32 %v8641, %v1041
        %v8682 = vmul.f32 %v8644, %v1042
        %v8683 = vmul.f32 %v8649, %v1043
        %v8684 = vmul.f32 %v8652, %v1044
        %v8685 = vmul.f32 %v8657, %v1045
        %v8686 = vmul.f32 %v8660, %v1046
        %v8687 = vmul.f32 %v8665, %v1047
        %v8688 = vmul.f32 %v8668, %v1048
        %v8689 = vadd.f32 %v8430, %v8671
        %v8690 = vadd.f32 %v8431, %v8672
        %v8691 = vadd.f32 %v8432, %v8673
        %v8692 = vadd.f32 %v8433, %v8674
        %v8693 = vadd.f32 %v8434, %v8675
        %v8694 = vadd.f32 %v8435, %v8676
        %v8695 = vadd.f32 %v8436, %v8677
        %v8696 = vadd.f32 %v8437, %v8678
        %v8697 = vadd.f32 %v8438, %v8679
        %v8698 = vadd.f32 %v8439, %v8680
        %v8699 = vadd.f32 %v8440, %v8681
        %v8700 = vadd.f32 %v8441, %v8682
        %v8701 = vadd.f32 %v8442, %v8683
        %v8702 = vadd.f32 %v8443, %v8684
        %v8703 = vadd.f32 %v8444, %v8685
        %v8704 = vadd.f32 %v8445, %v8686
        %v8705 = vadd.f32 %v8446, %v8687
        %v8706 = vadd.f32 %v8447, %v8688
        %v8707 = vld [vmem:[#allocation5 + $0x8] sm:$0xf8]
        %v8708 = vld [vmem:[#allocation5 + $0x50] sm:$0xf]
        %s8709 = scalar_lea.vmem %s8, 24
        %v8710 = vld [vmem:[%s8709] sm:$0xf]
        %v8712 = vshrl.u32 %v8707, 16
        %v8714 = vrot.slane %v8712, 3
        %v8715 = vshll.u32 %v8707, 16
        %v8717 = vrot.slane %v8715, 4
        %v8718 = vor.u32 %v8714, %v8717
        %v8719 = vrot.slane %v8472, 3
        %v8720 = vrot.slane %v8468, 4
        %v8721 = vor.u32 %v8719, %v8720
        %v8722 = vsel %vm1435, %v8718, %v8721
        %v8723 = vrot.slane %v8480, 3
        %v8724 = vrot.slane %v8476, 4
        %v8725 = vor.u32 %v8723, %v8724
        %v8726 = vsel %vm1435, %v8721, %v8725
        %v8727 = vrot.slane %v8488, 3
        %v8728 = vrot.slane %v8484, 4
        %v8729 = vor.u32 %v8727, %v8728
        %v8730 = vsel %vm1435, %v8725, %v8729
        %v8731 = vrot.slane %v8496, 3
        %v8732 = vrot.slane %v8492, 4
        %v8733 = vor.u32 %v8731, %v8732
        %v8734 = vsel %vm1435, %v8729, %v8733
        %v8735 = vrot.slane %v8504, 3
        %v8736 = vrot.slane %v8500, 4
        %v8737 = vor.u32 %v8735, %v8736
        %v8738 = vsel %vm1435, %v8733, %v8737
        %v8739 = vrot.slane %v8512, 3
        %v8740 = vrot.slane %v8508, 4
        %v8741 = vor.u32 %v8739, %v8740
        %v8742 = vsel %vm1435, %v8737, %v8741
        %v8743 = vrot.slane %v8520, 3
        %v8744 = vrot.slane %v8516, 4
        %v8745 = vor.u32 %v8743, %v8744
        %v8746 = vsel %vm1435, %v8741, %v8745
        %v8747 = vrot.slane %v8528, 3
        %v8748 = vrot.slane %v8524, 4
        %v8749 = vor.u32 %v8747, %v8748
        %v8750 = vsel %vm1435, %v8745, %v8749
        %v8752 = vshrl.u32 %v8708, 16
        %v8754 = vrot.slane %v8752, 3
        %v8755 = vshll.u32 %v8708, 16
        %v8757 = vrot.slane %v8755, 4
        %v8758 = vor.u32 %v8754, %v8757
        %v8759 = vsel %vm1435, %v8749, %v8758
        %v8761 = vsel %vm1079, %v8722, 0
        %v8764 = vsel %vm1079, %v8726, 0
        %v8767 = vsel %vm1079, %v8730, 0
        %v8770 = vsel %vm1079, %v8734, 0
        %v8773 = vsel %vm1079, %v8738, 0
        %v8776 = vsel %vm1079, %v8742, 0
        %v8779 = vsel %vm1079, %v8746, 0
        %v8782 = vsel %vm1079, %v8750, 0
        %v8785 = vsel %vm1079, %v8759, 0
        %v8788 = vsel %vm7556, %v8710, 0
        %8790 = vmatprep.subr.bf16.mxu0 0
        %8791 = vmatpush1.bf16.msra.mxu0 %v8788
        %8792 = vmatprep.subr.bf16.mxu0 0
        %8793 = vmatpush1.bf16.msra.mxu0 0
        %8794 = vmatprep.subr.bf16.mxu0 0
        %8795 = vmatpush1.bf16.msra.mxu0 0
        %8796 = vmatprep.subr.bf16.mxu0 0
        %8797 = vmatpush1.bf16.msra.mxu0 0
        %8798 = vmatprep.subr.bf16.mxu0 0
        %8799 = vmatpush1.bf16.msra.mxu0 0
        %8800 = vmatprep.subr.bf16.mxu0 0
        %8801 = vmatpush1.bf16.msra.mxu0 0
        %8802 = vmatprep.subr.bf16.mxu0 0
        %8803 = vmatpush1.bf16.msra.mxu0 0
        %8804 = vmatprep.subr.bf16.mxu0 0
        %8805 = vmatpush1.bf16.msra.mxu0 0
        %8806 = vmatprep.subr.bf16.mxu0 0
        %8807 = vmatpush1.bf16.msra.mxu0 0
        %8808 = vmatprep.subr.bf16.mxu0 0
        %8809 = vmatpush1.bf16.msra.mxu0 0
        %8810 = vmatprep.subr.bf16.mxu0 0
        %8811 = vmatpush1.bf16.msra.mxu0 0
        %8812 = vmatprep.subr.bf16.mxu0 0
        %8813 = vmatpush1.bf16.msra.mxu0 0
        %8814 = vmatprep.subr.bf16.mxu0 0
        %8815 = vmatpush1.bf16.msra.mxu0 0
        %8816 = vmatprep.subr.bf16.mxu0 0
        %8817 = vmatpush1.bf16.msra.mxu0 0
        %8818 = vmatprep.subr.bf16.mxu0 0
        %8819 = vmatpush1.bf16.msra.mxu0 0
        %8820 = vmatprep.subr.bf16.mxu0 0
        %8821 = vmatpush1.bf16.msra.mxu0 0
        %8822 = vmatprep.mubr.bf16.mxu0 0
        %8823 = vmatmul.mubr.bf16.gmra.mrb[0].mxu0 %v8761
        %v8824 = vpop.f32.mrb[0].mxu0
        %v8825 = vadd.f32 0.0, %v8824
        %v8826 = vpop.f32.mrb[0].mxu0
        %v8827 = vpop.f32.mrb[0].mxu0
        %v8828 = vadd.f32 0.0, %v8827
        %v8829 = vpop.f32.mrb[0].mxu0
        %8830 = vmatprep.mubr.bf16.mxu0 0
        %8831 = vmatmul.mubr.bf16.gmra.mrb[0].mxu0 %v8764
        %v8832 = vpop.f32.mrb[0].mxu0
        %v8833 = vadd.f32 0.0, %v8832
        %v8834 = vpop.f32.mrb[0].mxu0
        %v8835 = vpop.f32.mrb[0].mxu0
        %v8836 = vadd.f32 0.0, %v8835
        %v8837 = vpop.f32.mrb[0].mxu0
        %8838 = vmatprep.mubr.bf16.mxu0 0
        %8839 = vmatmul.mubr.bf16.gmra.mrb[0].mxu0 %v8767
        %v8840 = vpop.f32.mrb[0].mxu0
        %v8841 = vadd.f32 0.0, %v8840
        %v8842 = vpop.f32.mrb[0].mxu0
        %v8843 = vpop.f32.mrb[0].mxu0
        %v8844 = vadd.f32 0.0, %v8843
        %v8845 = vpop.f32.mrb[0].mxu0
        %8846 = vmatprep.mubr.bf16.mxu0 0
        %8847 = vmatmul.mubr.bf16.gmra.mrb[0].mxu0 %v8770
        %v8848 = vpop.f32.mrb[0].mxu0
        %v8849 = vadd.f32 0.0, %v8848
        %v8850 = vpop.f32.mrb[0].mxu0
        %v8851 = vpop.f32.mrb[0].mxu0
        %v8852 = vadd.f32 0.0, %v8851
        %v8853 = vpop.f32.mrb[0].mxu0
        %8854 = vmatprep.mubr.bf16.mxu0 0
        %8855 = vmatmul.mubr.bf16.gmra.mrb[0].mxu0 %v8773
        %v8856 = vpop.f32.mrb[0].mxu0
        %v8857 = vadd.f32 0.0, %v8856
        %v8858 = vpop.f32.mrb[0].mxu0
        %v8859 = vpop.f32.mrb[0].mxu0
        %v8860 = vadd.f32 0.0, %v8859
        %v8861 = vpop.f32.mrb[0].mxu0
        %8862 = vmatprep.mubr.bf16.mxu0 0
        %8863 = vmatmul.mubr.bf16.gmra.mrb[0].mxu0 %v8776
        %v8864 = vpop.f32.mrb[0].mxu0
        %v8865 = vadd.f32 0.0, %v8864
        %v8866 = vpop.f32.mrb[0].mxu0
        %v8867 = vpop.f32.mrb[0].mxu0
        %v8868 = vadd.f32 0.0, %v8867
        %v8869 = vpop.f32.mrb[0].mxu0
        %8870 = vmatprep.mubr.bf16.mxu0 0
        %8871 = vmatmul.mubr.bf16.gmra.mrb[0].mxu0 %v8779
        %v8872 = vpop.f32.mrb[0].mxu0
        %v8873 = vadd.f32 0.0, %v8872
        %v8874 = vpop.f32.mrb[0].mxu0
        %v8875 = vpop.f32.mrb[0].mxu0
        %v8876 = vadd.f32 0.0, %v8875
        %v8877 = vpop.f32.mrb[0].mxu0
        %8878 = vmatprep.mubr.bf16.mxu0 0
        %8879 = vmatmul.mubr.bf16.gmra.mrb[0].mxu0 %v8782
        %v8880 = vpop.f32.mrb[0].mxu0
        %v8881 = vadd.f32 0.0, %v8880
        %v8882 = vpop.f32.mrb[0].mxu0
        %v8883 = vpop.f32.mrb[0].mxu0
        %v8884 = vadd.f32 0.0, %v8883
        %v8885 = vpop.f32.mrb[0].mxu0
        %8886 = vmatprep.mubr.bf16.mxu0 0
        %8887 = vmatmul.mubr.bf16.gmra.mrb[0].mxu0 %v8785
        %v8888 = vpop.f32.mrb[0].mxu0
        %v8889 = vadd.f32 0.0, %v8888
        %v8890 = vpop.f32.mrb[0].mxu0
        %v8891 = vpop.f32.mrb[0].mxu0
        %v8892 = vadd.f32 0.0, %v8891
        %v8893 = vpop.f32.mrb[0].mxu0
        %8894 = vdwg.mxu0
        %v8895 = vmul.f32 %v8825, %v977
        %v8896 = vmul.f32 %v8828, %v978
        %v8897 = vmul.f32 %v8833, %v979
        %v8898 = vmul.f32 %v8836, %v980
        %v8899 = vmul.f32 %v8841, %v981
        %v8900 = vmul.f32 %v8844, %v982
        %v8901 = vmul.f32 %v8849, %v983
        %v8902 = vmul.f32 %v8852, %v984
        %v8903 = vmul.f32 %v8857, %v985
        %v8904 = vmul.f32 %v8860, %v986
        %v8905 = vmul.f32 %v8865, %v987
        %v8906 = vmul.f32 %v8868, %v988
        %v8907 = vmul.f32 %v8873, %v989
        %v8908 = vmul.f32 %v8876, %v990
        %v8909 = vmul.f32 %v8881, %v991
        %v8910 = vmul.f32 %v8884, %v992
        %v8911 = vmul.f32 %v8889, %v993
        %v8912 = vmul.f32 %v8892, %v994
        %v8913 = vadd.f32 %v8689, %v8895
        %v8914 = vadd.f32 %v8690, %v8896
        %v8915 = vadd.f32 %v8691, %v8897
        %v8916 = vadd.f32 %v8692, %v8898
        %v8917 = vadd.f32 %v8693, %v8899
        %v8918 = vadd.f32 %v8694, %v8900
        %v8919 = vadd.f32 %v8695, %v8901
        %v8920 = vadd.f32 %v8696, %v8902
        %v8921 = vadd.f32 %v8697, %v8903
        %v8922 = vadd.f32 %v8698, %v8904
        %v8923 = vadd.f32 %v8699, %v8905
        %v8924 = vadd.f32 %v8700, %v8906
        %v8925 = vadd.f32 %v8701, %v8907
        %v8926 = vadd.f32 %v8702, %v8908
        %v8927 = vadd.f32 %v8703, %v8909
        %v8928 = vadd.f32 %v8704, %v8910
        %v8929 = vadd.f32 %v8705, %v8911
        %v8930 = vadd.f32 %v8706, %v8912
        %v8931 = vld [vmem:[#allocation5 + $0x8] sm:$0xf0]
        %s8932 = scalar_lea.vmem %s8, 28
        %v8933 = vld [vmem:[%s8932] sm:$0xf]
        %v8944 = vrot.slane %v8931, 4
        %v8945 = vrot.slane %v8449, 4
        %v8946 = vsel %vm1281, %v8944, %v8945
        %v8947 = vrot.slane %v8450, 4
        %v8948 = vsel %vm1281, %v8945, %v8947
        %v8949 = vrot.slane %v8451, 4
        %v8950 = vsel %vm1281, %v8947, %v8949
        %v8951 = vrot.slane %v8452, 4
        %v8952 = vsel %vm1281, %v8949, %v8951
        %v8953 = vrot.slane %v8453, 4
        %v8954 = vsel %vm1281, %v8951, %v8953
        %v8955 = vrot.slane %v8454, 4
        %v8956 = vsel %vm1281, %v8953, %v8955
        %v8957 = vrot.slane %v8455, 4
        %v8958 = vsel %vm1281, %v8955, %v8957
        %v8959 = vrot.slane %v8456, 4
        %v8960 = vsel %vm1281, %v8957, %v8959
        %v8961 = vrot.slane %v8708, 4
        %v8962 = vsel %vm1281, %v8959, %v8961
        %v8964 = vsel %vm1079, %v8946, 0
        %v8967 = vsel %vm1079, %v8948, 0
        %v8970 = vsel %vm1079, %v8950, 0
        %v8973 = vsel %vm1079, %v8952, 0
        %v8976 = vsel %vm1079, %v8954, 0
        %v8979 = vsel %vm1079, %v8956, 0
        %v8982 = vsel %vm1079, %v8958, 0
        %v8985 = vsel %vm1079, %v8960, 0
        %v8988 = vsel %vm1079, %v8962, 0
        %v8991 = vsel %vm7556, %v8933, 0
        %8993 = vmatprep.subr.bf16.mxu0 0
        %8994 = vmatpush1.bf16.msra.mxu0 %v8991
        %8995 = vmatprep.subr.bf16.mxu0 0
        %8996 = vmatpush1.bf16.msra.mxu0 0
        %8997 = vmatprep.subr.bf16.mxu0 0
        %8998 = vmatpush1.bf16.msra.mxu0 0
        %8999 = vmatprep.subr.bf16.mxu0 0
        %9000 = vmatpush1.bf16.msra.mxu0 0
        %9001 = vmatprep.subr.bf16.mxu0 0
        %9002 = vmatpush1.bf16.msra.mxu0 0
        %9003 = vmatprep.subr.bf16.mxu0 0
        %9004 = vmatpush1.bf16.msra.mxu0 0
        %9005 = vmatprep.subr.bf16.mxu0 0
        %9006 = vmatpush1.bf16.msra.mxu0 0
        %9007 = vmatprep.subr.bf16.mxu0 0
        %9008 = vmatpush1.bf16.msra.mxu0 0
        %9009 = vmatprep.subr.bf16.mxu0 0
        %9010 = vmatpush1.bf16.msra.mxu0 0
        %9011 = vmatprep.subr.bf16.mxu0 0
        %9012 = vmatpush1.bf16.msra.mxu0 0
        %9013 = vmatprep.subr.bf16.mxu0 0
        %9014 = vmatpush1.bf16.msra.mxu0 0
        %9015 = vmatprep.subr.bf16.mxu0 0
        %9016 = vmatpush1.bf16.msra.mxu0 0
        %9017 = vmatprep.subr.bf16.mxu0 0
        %9018 = vmatpush1.bf16.msra.mxu0 0
        %9019 = vmatprep.subr.bf16.mxu0 0
        %9020 = vmatpush1.bf16.msra.mxu0 0
        %9021 = vmatprep.subr.bf16.mxu0 0
        %9022 = vmatpush1.bf16.msra.mxu0 0
        %9023 = vmatprep.subr.bf16.mxu0 0
        %9024 = vmatpush1.bf16.msra.mxu0 0
        %9025 = vmatprep.mubr.bf16.mxu0 0
        %9026 = vmatmul.mubr.bf16.gmra.mrb[0].mxu0 %v8964
        %v9027 = vpop.f32.mrb[0].mxu0
        %v9028 = vadd.f32 0.0, %v9027
        %v9029 = vpop.f32.mrb[0].mxu0
        %v9030 = vpop.f32.mrb[0].mxu0
        %v9031 = vadd.f32 0.0, %v9030
        %v9032 = vpop.f32.mrb[0].mxu0
        %9033 = vmatprep.mubr.bf16.mxu0 0
        %9034 = vmatmul.mubr.bf16.gmra.mrb[0].mxu0 %v8967
        %v9035 = vpop.f32.mrb[0].mxu0
        %v9036 = vadd.f32 0.0, %v9035
        %v9037 = vpop.f32.mrb[0].mxu0
        %v9038 = vpop.f32.mrb[0].mxu0
        %v9039 = vadd.f32 0.0, %v9038
        %v9040 = vpop.f32.mrb[0].mxu0
        %9041 = vmatprep.mubr.bf16.mxu0 0
        %9042 = vmatmul.mubr.bf16.gmra.mrb[0].mxu0 %v8970
        %v9043 = vpop.f32.mrb[0].mxu0
        %v9044 = vadd.f32 0.0, %v9043
        %v9045 = vpop.f32.mrb[0].mxu0
        %v9046 = vpop.f32.mrb[0].mxu0
        %v9047 = vadd.f32 0.0, %v9046
        %v9048 = vpop.f32.mrb[0].mxu0
        %9049 = vmatprep.mubr.bf16.mxu0 0
        %9050 = vmatmul.mubr.bf16.gmra.mrb[0].mxu0 %v8973
        %v9051 = vpop.f32.mrb[0].mxu0
        %v9052 = vadd.f32 0.0, %v9051
        %v9053 = vpop.f32.mrb[0].mxu0
        %v9054 = vpop.f32.mrb[0].mxu0
        %v9055 = vadd.f32 0.0, %v9054
        %v9056 = vpop.f32.mrb[0].mxu0
        %9057 = vmatprep.mubr.bf16.mxu0 0
        %9058 = vmatmul.mubr.bf16.gmra.mrb[0].mxu0 %v8976
        %v9059 = vpop.f32.mrb[0].mxu0
        %v9060 = vadd.f32 0.0, %v9059
        %v9061 = vpop.f32.mrb[0].mxu0
        %v9062 = vpop.f32.mrb[0].mxu0
        %v9063 = vadd.f32 0.0, %v9062
        %v9064 = vpop.f32.mrb[0].mxu0
        %9065 = vmatprep.mubr.bf16.mxu0 0
        %9066 = vmatmul.mubr.bf16.gmra.mrb[0].mxu0 %v8979
        %v9067 = vpop.f32.mrb[0].mxu0
        %v9068 = vadd.f32 0.0, %v9067
        %v9069 = vpop.f32.mrb[0].mxu0
        %v9070 = vpop.f32.mrb[0].mxu0
        %v9071 = vadd.f32 0.0, %v9070
        %v9072 = vpop.f32.mrb[0].mxu0
        %9073 = vmatprep.mubr.bf16.mxu0 0
        %9074 = vmatmul.mubr.bf16.gmra.mrb[0].mxu0 %v8982
        %v9075 = vpop.f32.mrb[0].mxu0
        %v9076 = vadd.f32 0.0, %v9075
        %v9077 = vpop.f32.mrb[0].mxu0
        %v9078 = vpop.f32.mrb[0].mxu0
        %v9079 = vadd.f32 0.0, %v9078
        %v9080 = vpop.f32.mrb[0].mxu0
        %9081 = vmatprep.mubr.bf16.mxu0 0
        %9082 = vmatmul.mubr.bf16.gmra.mrb[0].mxu0 %v8985
        %v9083 = vpop.f32.mrb[0].mxu0
        %v9084 = vadd.f32 0.0, %v9083
        %v9085 = vpop.f32.mrb[0].mxu0
        %v9086 = vpop.f32.mrb[0].mxu0
        %v9087 = vadd.f32 0.0, %v9086
        %v9088 = vpop.f32.mrb[0].mxu0
        %9089 = vmatprep.mubr.bf16.mxu0 0
        %9090 = vmatmul.mubr.bf16.gmra.mrb[0].mxu0 %v8988
        %v9091 = vpop.f32.mrb[0].mxu0
        %v9092 = vadd.f32 0.0, %v9091
        %v9093 = vpop.f32.mrb[0].mxu0
        %v9094 = vpop.f32.mrb[0].mxu0
        %v9095 = vadd.f32 0.0, %v9094
        %v9096 = vpop.f32.mrb[0].mxu0
        %9097 = vdwg.mxu0
        %v9098 = vadd.f32 %v8913, %v9028
        %v9099 = vadd.f32 %v8914, %v9031
        %v9100 = vadd.f32 %v8915, %v9036
        %v9101 = vadd.f32 %v8916, %v9039
        %v9102 = vadd.f32 %v8917, %v9044
        %v9103 = vadd.f32 %v8918, %v9047
        %v9104 = vadd.f32 %v8919, %v9052
        %v9105 = vadd.f32 %v8920, %v9055
        %v9106 = vadd.f32 %v8921, %v9060
        %v9107 = vadd.f32 %v8922, %v9063
        %v9108 = vadd.f32 %v8923, %v9068
        %v9109 = vadd.f32 %v8924, %v9071
        %v9110 = vadd.f32 %v8925, %v9076
        %v9111 = vadd.f32 %v8926, %v9079
        %v9112 = vadd.f32 %v8927, %v9084
        %v9113 = vadd.f32 %v8928, %v9087
        %v9114 = vadd.f32 %v8929, %v9092
        %v9115 = vadd.f32 %v8930, %v9095
        %v9116 = vld [vmem:[#allocation5 + $0x50] sm:$0x1f]
        %s9117 = scalar_lea.vmem %s8, 32
        %v9118 = vld [vmem:[%s9117] sm:$0xf]
        %v9120 = vshrl.u32 %v8931, 16
        %v9122 = vrot.slane %v9120, 4
        %v9123 = vshll.u32 %v8931, 16
        %v9125 = vrot.slane %v9123, 5
        %v9126 = vor.u32 %v9122, %v9125
        %v9127 = vrot.slane %v8472, 4
        %v9128 = vrot.slane %v8468, 5
        %v9129 = vor.u32 %v9127, %v9128
        %v9130 = vsel %vm1166, %v9126, %v9129
        %v9131 = vrot.slane %v8480, 4
        %v9132 = vrot.slane %v8476, 5
        %v9133 = vor.u32 %v9131, %v9132
        %v9134 = vsel %vm1166, %v9129, %v9133
        %v9135 = vrot.slane %v8488, 4
        %v9136 = vrot.slane %v8484, 5
        %v9137 = vor.u32 %v9135, %v9136
        %v9138 = vsel %vm1166, %v9133, %v9137
        %v9139 = vrot.slane %v8496, 4
        %v9140 = vrot.slane %v8492, 5
        %v9141 = vor.u32 %v9139, %v9140
        %v9142 = vsel %vm1166, %v9137, %v9141
        %v9143 = vrot.slane %v8504, 4
        %v9144 = vrot.slane %v8500, 5
        %v9145 = vor.u32 %v9143, %v9144
        %v9146 = vsel %vm1166, %v9141, %v9145
        %v9147 = vrot.slane %v8512, 4
        %v9148 = vrot.slane %v8508, 5
        %v9149 = vor.u32 %v9147, %v9148
        %v9150 = vsel %vm1166, %v9145, %v9149
        %v9151 = vrot.slane %v8520, 4
        %v9152 = vrot.slane %v8516, 5
        %v9153 = vor.u32 %v9151, %v9152
        %v9154 = vsel %vm1166, %v9149, %v9153
        %v9155 = vrot.slane %v8528, 4
        %v9156 = vrot.slane %v8524, 5
        %v9157 = vor.u32 %v9155, %v9156
        %v9158 = vsel %vm1166, %v9153, %v9157
        %v9160 = vshrl.u32 %v9116, 16
        %v9162 = vrot.slane %v9160, 4
        %v9163 = vshll.u32 %v9116, 16
        %v9165 = vrot.slane %v9163, 5
        %v9166 = vor.u32 %v9162, %v9165
        %v9167 = vsel %vm1166, %v9157, %v9166
        %v9169 = vsel %vm1079, %v9130, 0
        %v9172 = vsel %vm1079, %v9134, 0
        %v9175 = vsel %vm1079, %v9138, 0
        %v9178 = vsel %vm1079, %v9142, 0
        %v9181 = vsel %vm1079, %v9146, 0
        %v9184 = vsel %vm1079, %v9150, 0
        %v9187 = vsel %vm1079, %v9154, 0
        %v9190 = vsel %vm1079, %v9158, 0
        %v9193 = vsel %vm1079, %v9167, 0
        %v9196 = vsel %vm7556, %v9118, 0
        %9198 = vmatprep.subr.bf16.mxu0 0
        %9199 = vmatpush1.bf16.msra.mxu0 %v9196
        %9200 = vmatprep.subr.bf16.mxu0 0
        %9201 = vmatpush1.bf16.msra.mxu0 0
        %9202 = vmatprep.subr.bf16.mxu0 0
        %9203 = vmatpush1.bf16.msra.mxu0 0
        %9204 = vmatprep.subr.bf16.mxu0 0
        %9205 = vmatpush1.bf16.msra.mxu0 0
        %9206 = vmatprep.subr.bf16.mxu0 0
        %9207 = vmatpush1.bf16.msra.mxu0 0
        %9208 = vmatprep.subr.bf16.mxu0 0
        %9209 = vmatpush1.bf16.msra.mxu0 0
        %9210 = vmatprep.subr.bf16.mxu0 0
        %9211 = vmatpush1.bf16.msra.mxu0 0
        %9212 = vmatprep.subr.bf16.mxu0 0
        %9213 = vmatpush1.bf16.msra.mxu0 0
        %9214 = vmatprep.subr.bf16.mxu0 0
        %9215 = vmatpush1.bf16.msra.mxu0 0
        %9216 = vmatprep.subr.bf16.mxu0 0
        %9217 = vmatpush1.bf16.msra.mxu0 0
        %9218 = vmatprep.subr.bf16.mxu0 0
        %9219 = vmatpush1.bf16.msra.mxu0 0
        %9220 = vmatprep.subr.bf16.mxu0 0
        %9221 = vmatpush1.bf16.msra.mxu0 0
        %9222 = vmatprep.subr.bf16.mxu0 0
        %9223 = vmatpush1.bf16.msra.mxu0 0
        %9224 = vmatprep.subr.bf16.mxu0 0
        %9225 = vmatpush1.bf16.msra.mxu0 0
        %9226 = vmatprep.subr.bf16.mxu0 0
        %9227 = vmatpush1.bf16.msra.mxu0 0
        %9228 = vmatprep.subr.bf16.mxu0 0
        %9229 = vmatpush1.bf16.msra.mxu0 0
        %9230 = vmatprep.mubr.bf16.mxu0 0
        %9231 = vmatmul.mubr.bf16.gmra.mrb[0].mxu0 %v9169
        %v9232 = vpop.f32.mrb[0].mxu0
        %v9233 = vadd.f32 0.0, %v9232
        %v9234 = vpop.f32.mrb[0].mxu0
        %v9235 = vpop.f32.mrb[0].mxu0
        %v9236 = vadd.f32 0.0, %v9235
        %v9237 = vpop.f32.mrb[0].mxu0
        %9238 = vmatprep.mubr.bf16.mxu0 0
        %9239 = vmatmul.mubr.bf16.gmra.mrb[0].mxu0 %v9172
        %v9240 = vpop.f32.mrb[0].mxu0
        %v9241 = vadd.f32 0.0, %v9240
        %v9242 = vpop.f32.mrb[0].mxu0
        %v9243 = vpop.f32.mrb[0].mxu0
        %v9244 = vadd.f32 0.0, %v9243
        %v9245 = vpop.f32.mrb[0].mxu0
        %9246 = vmatprep.mubr.bf16.mxu0 0
        %9247 = vmatmul.mubr.bf16.gmra.mrb[0].mxu0 %v9175
        %v9248 = vpop.f32.mrb[0].mxu0
        %v9249 = vadd.f32 0.0, %v9248
        %v9250 = vpop.f32.mrb[0].mxu0
        %v9251 = vpop.f32.mrb[0].mxu0
        %v9252 = vadd.f32 0.0, %v9251
        %v9253 = vpop.f32.mrb[0].mxu0
        %9254 = vmatprep.mubr.bf16.mxu0 0
        %9255 = vmatmul.mubr.bf16.gmra.mrb[0].mxu0 %v9178
        %v9256 = vpop.f32.mrb[0].mxu0
        %v9257 = vadd.f32 0.0, %v9256
        %v9258 = vpop.f32.mrb[0].mxu0
        %v9259 = vpop.f32.mrb[0].mxu0
        %v9260 = vadd.f32 0.0, %v9259
        %v9261 = vpop.f32.mrb[0].mxu0
        %9262 = vmatprep.mubr.bf16.mxu0 0
        %9263 = vmatmul.mubr.bf16.gmra.mrb[0].mxu0 %v9181
        %v9264 = vpop.f32.mrb[0].mxu0
        %v9265 = vadd.f32 0.0, %v9264
        %v9266 = vpop.f32.mrb[0].mxu0
        %v9267 = vpop.f32.mrb[0].mxu0
        %v9268 = vadd.f32 0.0, %v9267
        %v9269 = vpop.f32.mrb[0].mxu0
        %9270 = vmatprep.mubr.bf16.mxu0 0
        %9271 = vmatmul.mubr.bf16.gmra.mrb[0].mxu0 %v9184
        %v9272 = vpop.f32.mrb[0].mxu0
        %v9273 = vadd.f32 0.0, %v9272
        %v9274 = vpop.f32.mrb[0].mxu0
        %v9275 = vpop.f32.mrb[0].mxu0
        %v9276 = vadd.f32 0.0, %v9275
        %v9277 = vpop.f32.mrb[0].mxu0
        %9278 = vmatprep.mubr.bf16.mxu0 0
        %9279 = vmatmul.mubr.bf16.gmra.mrb[0].mxu0 %v9187
        %v9280 = vpop.f32.mrb[0].mxu0
        %v9281 = vadd.f32 0.0, %v9280
        %v9282 = vpop.f32.mrb[0].mxu0
        %v9283 = vpop.f32.mrb[0].mxu0
        %v9284 = vadd.f32 0.0, %v9283
        %v9285 = vpop.f32.mrb[0].mxu0
        %9286 = vmatprep.mubr.bf16.mxu0 0
        %9287 = vmatmul.mubr.bf16.gmra.mrb[0].mxu0 %v9190
        %v9288 = vpop.f32.mrb[0].mxu0
        %v9289 = vadd.f32 0.0, %v9288
        %v9290 = vpop.f32.mrb[0].mxu0
        %v9291 = vpop.f32.mrb[0].mxu0
        %v9292 = vadd.f32 0.0, %v9291
        %v9293 = vpop.f32.mrb[0].mxu0
        %9294 = vmatprep.mubr.bf16.mxu0 0
        %9295 = vmatmul.mubr.bf16.gmra.mrb[0].mxu0 %v9193
        %v9296 = vpop.f32.mrb[0].mxu0
        %v9297 = vadd.f32 0.0, %v9296
        %v9298 = vpop.f32.mrb[0].mxu0
        %v9299 = vpop.f32.mrb[0].mxu0
        %v9300 = vadd.f32 0.0, %v9299
        %v9301 = vpop.f32.mrb[0].mxu0
        %9302 = vdwg.mxu0
        %v9303 = vmul.f32 %v9233, %v1031
        %v9304 = vmul.f32 %v9236, %v1032
        %v9305 = vmul.f32 %v9241, %v1033
        %v9306 = vmul.f32 %v9244, %v1034
        %v9307 = vmul.f32 %v9249, %v1035
        %v9308 = vmul.f32 %v9252, %v1036
        %v9309 = vmul.f32 %v9257, %v1037
        %v9310 = vmul.f32 %v9260, %v1038
        %v9311 = vmul.f32 %v9265, %v1039
        %v9312 = vmul.f32 %v9268, %v1040
        %v9313 = vmul.f32 %v9273, %v1041
        %v9314 = vmul.f32 %v9276, %v1042
        %v9315 = vmul.f32 %v9281, %v1043
        %v9316 = vmul.f32 %v9284, %v1044
        %v9317 = vmul.f32 %v9289, %v1045
        %v9318 = vmul.f32 %v9292, %v1046
        %v9319 = vmul.f32 %v9297, %v1047
        %v9320 = vmul.f32 %v9300, %v1048
        %v9321 = vadd.f32 %v9098, %v9303
        %v9322 = vadd.f32 %v9099, %v9304
        %v9323 = vadd.f32 %v9100, %v9305
        %v9324 = vadd.f32 %v9101, %v9306
        %v9325 = vadd.f32 %v9102, %v9307
        %v9326 = vadd.f32 %v9103, %v9308
        %v9327 = vadd.f32 %v9104, %v9309
        %v9328 = vadd.f32 %v9105, %v9310
        %v9329 = vadd.f32 %v9106, %v9311
        %v9330 = vadd.f32 %v9107, %v9312
        %v9331 = vadd.f32 %v9108, %v9313
        %v9332 = vadd.f32 %v9109, %v9314
        %v9333 = vadd.f32 %v9110, %v9315
        %v9334 = vadd.f32 %v9111, %v9316
        %v9335 = vadd.f32 %v9112, %v9317
        %v9336 = vadd.f32 %v9113, %v9318
        %v9337 = vadd.f32 %v9114, %v9319
        %v9338 = vadd.f32 %v9115, %v9320
        %v9339 = vld [vmem:[%s9] sm:$0x1]
        %v9341 = vlaneseq
        %v9342 = vshrl.u32 %v9341, 7
        %v9343 = vsub.s32 0, %v9342
        %v9344 = vrot.slane %v9339, %v9343
        %v9346 = vadd.f32 %v9321, %v9344
        %v9347 = vadd.f32 %v9322, %v9344
        %v9348 = vadd.f32 %v9323, %v9344
        %v9349 = vadd.f32 %v9324, %v9344
        %v9350 = vadd.f32 %v9325, %v9344
        %v9351 = vadd.f32 %v9326, %v9344
        %v9352 = vadd.f32 %v9327, %v9344
        %v9353 = vadd.f32 %v9328, %v9344
        %v9354 = vadd.f32 %v9329, %v9344
        %v9355 = vadd.f32 %v9330, %v9344
        %v9356 = vadd.f32 %v9331, %v9344
        %v9357 = vadd.f32 %v9332, %v9344
        %v9358 = vadd.f32 %v9333, %v9344
        %v9359 = vadd.f32 %v9334, %v9344
        %v9360 = vadd.f32 %v9335, %v9344
        %v9361 = vadd.f32 %v9336, %v9344
        %v9362 = vadd.f32 %v9337, %v9344
        %v9363 = vadd.f32 %v9338, %v9344
        %v9364 = vmax.f32 %v9346, 0.0
        %v9365 = vmax.f32 %v9347, 0.0
        %v9366 = vmax.f32 %v9348, 0.0
        %v9367 = vmax.f32 %v9349, 0.0
        %v9368 = vmax.f32 %v9350, 0.0
        %v9369 = vmax.f32 %v9351, 0.0
        %v9370 = vmax.f32 %v9352, 0.0
        %v9371 = vmax.f32 %v9353, 0.0
        %v9372 = vmax.f32 %v9354, 0.0
        %v9373 = vmax.f32 %v9355, 0.0
        %v9374 = vmax.f32 %v9356, 0.0
        %v9375 = vmax.f32 %v9357, 0.0
        %v9376 = vmax.f32 %v9358, 0.0
        %v9377 = vmax.f32 %v9359, 0.0
        %v9378 = vmax.f32 %v9360, 0.0
        %v9379 = vmax.f32 %v9361, 0.0
        %v9380 = vmax.f32 %v9362, 0.0
        %v9381 = vmax.f32 %v9363, 0.0
        %v9382 = vpack.c.bf16 %v9365, %v9364
        %v9383 = vpack.c.bf16 %v9367, %v9366
        %v9384 = vpack.c.bf16 %v9369, %v9368
        %v9385 = vpack.c.bf16 %v9371, %v9370
        %v9386 = vpack.c.bf16 %v9373, %v9372
        %v9387 = vpack.c.bf16 %v9375, %v9374
        %v9388 = vpack.c.bf16 %v9377, %v9376
        %v9389 = vpack.c.bf16 %v9379, %v9378
        %v9390 = vpack.c.bf16 %v9381, %v9380
        %v9391 = vld [vmem:[%s10] sm:$0x3]
        %v9392 = vld [vmem:[%s11] sm:$0x1]
        %v9394 = vlaneseq
        %v9395 = vshrl.u32 %v9394, 7
        %v9396 = vsub.s32 0, %v9395
        %v9397 = vrot.slane %v9392, %v9396
        %v9400 = vsel %vm1067, %v9382, 0
        %v9403 = vsel %vm1067, %v9383, 0
        %v9406 = vsel %vm1067, %v9384, 0
        %v9409 = vsel %vm1067, %v9385, 0
        %v9412 = vsel %vm1067, %v9386, 0
        %v9415 = vsel %vm1067, %v9387, 0
        %v9418 = vsel %vm1067, %v9388, 0
        %v9421 = vsel %vm1067, %v9389, 0
        %v9424 = vsel %vm1067, %v9390, 0
        %v9427 = vsel %vm1328, %v9391, 0
        %9429 = vmatprep.subr.bf16.mxu0 0
        %9430 = vmatpush1.bf16.msra.mxu0 %v9427
        %9431 = vmatprep.subr.bf16.mxu0 0
        %9432 = vmatpush1.bf16.msra.mxu0 0
        %9433 = vmatprep.subr.bf16.mxu0 0
        %9434 = vmatpush1.bf16.msra.mxu0 0
        %9435 = vmatprep.subr.bf16.mxu0 0
        %9436 = vmatpush1.bf16.msra.mxu0 0
        %9437 = vmatprep.subr.bf16.mxu0 0
        %9438 = vmatpush1.bf16.msra.mxu0 0
        %9439 = vmatprep.subr.bf16.mxu0 0
        %9440 = vmatpush1.bf16.msra.mxu0 0
        %9441 = vmatprep.subr.bf16.mxu0 0
        %9442 = vmatpush1.bf16.msra.mxu0 0
        %9443 = vmatprep.subr.bf16.mxu0 0
        %9444 = vmatpush1.bf16.msra.mxu0 0
        %9445 = vmatprep.subr.bf16.mxu0 0
        %9446 = vmatpush1.bf16.msra.mxu0 0
        %9447 = vmatprep.subr.bf16.mxu0 0
        %9448 = vmatpush1.bf16.msra.mxu0 0
        %9449 = vmatprep.subr.bf16.mxu0 0
        %9450 = vmatpush1.bf16.msra.mxu0 0
        %9451 = vmatprep.subr.bf16.mxu0 0
        %9452 = vmatpush1.bf16.msra.mxu0 0
        %9453 = vmatprep.subr.bf16.mxu0 0
        %9454 = vmatpush1.bf16.msra.mxu0 0
        %9455 = vmatprep.subr.bf16.mxu0 0
        %9456 = vmatpush1.bf16.msra.mxu0 0
        %9457 = vmatprep.subr.bf16.mxu0 0
        %9458 = vmatpush1.bf16.msra.mxu0 0
        %9459 = vmatprep.subr.bf16.mxu0 0
        %9460 = vmatpush1.bf16.msra.mxu0 0
        %9461 = vmatprep.mubr.bf16.mxu0 0
        %9462 = vmatmul.mubr.bf16.gmra.mrb[0].mxu0 %v9400
        %v9463 = vpop.f32.mrb[0].mxu0
        %v9464 = vadd.f32 %v9397, %v9463
        %v9465 = vpop.f32.mrb[0].mxu0
        %v9466 = vpop.f32.mrb[0].mxu0
        %v9467 = vadd.f32 %v9397, %v9466
        %v9468 = vpop.f32.mrb[0].mxu0
        %9469 = vmatprep.mubr.bf16.mxu0 0
        %9470 = vmatmul.mubr.bf16.gmra.mrb[0].mxu0 %v9403
        %v9471 = vpop.f32.mrb[0].mxu0
        %v9472 = vadd.f32 %v9397, %v9471
        %v9473 = vpop.f32.mrb[0].mxu0
        %v9474 = vpop.f32.mrb[0].mxu0
        %v9475 = vadd.f32 %v9397, %v9474
        %v9476 = vpop.f32.mrb[0].mxu0
        %9477 = vmatprep.mubr.bf16.mxu0 0
        %9478 = vmatmul.mubr.bf16.gmra.mrb[0].mxu0 %v9406
        %v9479 = vpop.f32.mrb[0].mxu0
        %v9480 = vadd.f32 %v9397, %v9479
        %v9481 = vpop.f32.mrb[0].mxu0
        %v9482 = vpop.f32.mrb[0].mxu0
        %v9483 = vadd.f32 %v9397, %v9482
        %v9484 = vpop.f32.mrb[0].mxu0
        %9485 = vmatprep.mubr.bf16.mxu0 0
        %9486 = vmatmul.mubr.bf16.gmra.mrb[0].mxu0 %v9409
        %v9487 = vpop.f32.mrb[0].mxu0
        %v9488 = vadd.f32 %v9397, %v9487
        %v9489 = vpop.f32.mrb[0].mxu0
        %v9490 = vpop.f32.mrb[0].mxu0
        %v9491 = vadd.f32 %v9397, %v9490
        %v9492 = vpop.f32.mrb[0].mxu0
        %9493 = vmatprep.mubr.bf16.mxu0 0
        %9494 = vmatmul.mubr.bf16.gmra.mrb[0].mxu0 %v9412
        %v9495 = vpop.f32.mrb[0].mxu0
        %v9496 = vpop.f32.mrb[0].mxu0
        %v9497 = vpop.f32.mrb[0].mxu0
        %v9498 = vpop.f32.mrb[0].mxu0
        %9499 = vmatprep.mubr.bf16.mxu0 0
        %9500 = vmatmul.mubr.bf16.gmra.mrb[0].mxu0 %v9415
        %v9501 = vpop.f32.mrb[0].mxu0
        %v9502 = vadd.f32 %v9397, %v9501
        %v9503 = vpop.f32.mrb[0].mxu0
        %v9504 = vpop.f32.mrb[0].mxu0
        %v9505 = vadd.f32 %v9397, %v9504
        %v9506 = vpop.f32.mrb[0].mxu0
        %9507 = vmatprep.mubr.bf16.mxu0 0
        %9508 = vmatmul.mubr.bf16.gmra.mrb[0].mxu0 %v9418
        %v9509 = vpop.f32.mrb[0].mxu0
        %v9510 = vadd.f32 %v9397, %v9509
        %v9511 = vpop.f32.mrb[0].mxu0
        %v9512 = vpop.f32.mrb[0].mxu0
        %v9513 = vadd.f32 %v9397, %v9512
        %v9514 = vpop.f32.mrb[0].mxu0
        %9515 = vmatprep.mubr.bf16.mxu0 0
        %9516 = vmatmul.mubr.bf16.gmra.mrb[0].mxu0 %v9421
        %v9517 = vpop.f32.mrb[0].mxu0
        %v9518 = vadd.f32 %v9397, %v9517
        %v9519 = vpop.f32.mrb[0].mxu0
        %v9520 = vpop.f32.mrb[0].mxu0
        %v9521 = vadd.f32 %v9397, %v9520
        %v9522 = vpop.f32.mrb[0].mxu0
        %9523 = vmatprep.mubr.bf16.mxu0 0
        %9524 = vmatmul.mubr.bf16.gmra.mrb[0].mxu0 %v9424
        %v9525 = vpop.f32.mrb[0].mxu0
        %v9526 = vadd.f32 %v9397, %v9525
        %v9527 = vpop.f32.mrb[0].mxu0
        %v9528 = vpop.f32.mrb[0].mxu0
        %v9529 = vadd.f32 %v9397, %v9528
        %v9530 = vpop.f32.mrb[0].mxu0
        %9531 = vdwg.mxu0
        %v9532 = vld [vmem:[%s1] sm:$0xff]
        %v9533 = vld [vmem:[%s1 + $0x8] sm:$0xff]
        %v9534 = vld [vmem:[%s1 + $0x10] sm:$0xff]
        %v9535 = vld [vmem:[%s1 + $0x18] sm:$0xff]
        %v9536 = vld [vmem:[%s1 + $0x20] sm:$0xff]
        %v9537 = vld [vmem:[%s1 + $0x28] sm:$0xff]
        %v9538 = vld [vmem:[%s1 + $0x30] sm:$0xff]
        %v9539 = vld [vmem:[%s1 + $0x38] sm:$0xff]
        %vm9540 = vcmask 15360
        %v9541 = vsel %vm9540, %v9464, -inf
        %v9542 = vsel %vm9540, %v9467, -inf
        %v9543 = vsel %vm9540, %v9472, -inf
        %v9544 = vsel %vm9540, %v9475, -inf
        %v9545 = vsel %vm9540, %v9480, -inf
        %v9546 = vmax.f32 %v9541, %v9545
        %v9547 = vsel %vm9540, %v9483, -inf
        %v9548 = vmax.f32 %v9542, %v9547
        %v9549 = vsel %vm9540, %v9488, -inf
        %v9550 = vmax.f32 %v9543, %v9549
        %v9551 = vsel %vm9540, %v9491, -inf
        %v9552 = vmax.f32 %v9544, %v9551
        %v9553 = vmax.f32 %v9546, %v9548
        %v9554 = vmax.f32 %v9550, %v9552
        %v9555 = vmax.f32 %v9553, %v9554
        %v9556 = vrot.slane %v9555, 4
        %v9557 = vmax.f32 %v9555, %v9556
        %v9558 = vrot.slane %v9557, 2
        %v9559 = vmax.f32 %v9557, %v9558
        %v9560 = vrot.slane %v9559, 1
        %v9561 = vmax.f32 %v9559, %v9560
        %v9562 = vsub.f32 %v9464, %v9561
        %v9563 = vsub.f32 %v9467, %v9561
        %v9564 = vsub.f32 %v9472, %v9561
        %v9565 = vsub.f32 %v9475, %v9561
        %v9566 = vsub.f32 %v9480, %v9561
        %v9567 = vsub.f32 %v9483, %v9561
        %v9568 = vsub.f32 %v9488, %v9561
        %v9569 = vsub.f32 %v9491, %v9561
        %v9570 = vmul.f32 %v9562, 1.442695
        %v9571 = vpow.pop %v9570
        %v9572 = vmul.f32 %v9563, 1.442695
        %v9573 = vpow.pop %v9572
        %v9574 = vmul.f32 %v9564, 1.442695
        %v9575 = vpow.pop %v9574
        %v9576 = vmul.f32 %v9565, 1.442695
        %v9577 = vpow.pop %v9576
        %v9578 = vmul.f32 %v9566, 1.442695
        %v9579 = vpow.pop %v9578
        %v9580 = vmul.f32 %v9567, 1.442695
        %v9581 = vpow.pop %v9580
        %v9582 = vmul.f32 %v9568, 1.442695
        %v9583 = vpow.pop %v9582
        %v9584 = vmul.f32 %v9569, 1.442695
        %v9585 = vpow.pop %v9584
        %v9586 = vsel %vm9540, %v9571, 0.0
        %v9587 = vsel %vm9540, %v9573, 0.0
        %v9588 = vadd.f32 %v9586, %v9587
        %v9589 = vsel %vm9540, %v9575, 0.0
        %v9590 = vadd.f32 %v9588, %v9589
        %v9591 = vsel %vm9540, %v9577, 0.0
        %v9592 = vadd.f32 %v9590, %v9591
        %v9593 = vsel %vm9540, %v9579, 0.0
        %v9594 = vadd.f32 %v9592, %v9593
        %v9595 = vsel %vm9540, %v9581, 0.0
        %v9596 = vadd.f32 %v9594, %v9595
        %v9597 = vsel %vm9540, %v9583, 0.0
        %v9598 = vadd.f32 %v9596, %v9597
        %v9599 = vsel %vm9540, %v9585, 0.0
        %v9600 = vadd.f32 %v9598, %v9599
        %v9601 = vrot.slane %v9600, 4
        %v9602 = vadd.f32 %v9600, %v9601
        %v9603 = vrot.slane %v9602, 2
        %v9604 = vadd.f32 %v9602, %v9603
        %v9605 = vrot.slane %v9604, 1
        %v9606 = vadd.f32 %v9604, %v9605
        %v9607 = vrcp.pop %v9606
        %v9608 = vmul.f32 1.0, %v9607
        %9610 = vset.pattern.permute.xlu0 0
        %9611 = vperm.xlu0 %9610, %v9571
        %v9612 = vpop.permute.xlu0 %9611
        %9615 = vset.pattern.permute.xlu0 0
        %9616 = vperm.xlu0 %9615, %v9573
        %v9617 = vpop.permute.xlu0 %9616
        %9620 = vset.pattern.permute.xlu0 0
        %9621 = vperm.xlu0 %9620, %v9575
        %v9622 = vpop.permute.xlu0 %9621
        %9625 = vset.pattern.permute.xlu0 0
        %9626 = vperm.xlu0 %9625, %v9577
        %v9627 = vpop.permute.xlu0 %9626
        %9630 = vset.pattern.permute.xlu0 0
        %9631 = vperm.xlu0 %9630, %v9579
        %v9632 = vpop.permute.xlu0 %9631
        %9635 = vset.pattern.permute.xlu0 0
        %9636 = vperm.xlu0 %9635, %v9581
        %v9637 = vpop.permute.xlu0 %9636
        %9640 = vset.pattern.permute.xlu0 0
        %9641 = vperm.xlu0 %9640, %v9583
        %v9642 = vpop.permute.xlu0 %9641
        %9645 = vset.pattern.permute.xlu0 0
        %9646 = vperm.xlu0 %9645, %v9585
        %v9647 = vpop.permute.xlu0 %9646
        %v9649 = vmul.f32 %v9532, %v9612
        %v9650 = vmul.f32 %v9533, %v9617
        %v9651 = vmul.f32 %v9534, %v9622
        %v9652 = vmul.f32 %v9535, %v9627
        %v9653 = vmul.f32 %v9536, %v9632
        %v9654 = vmul.f32 %v9537, %v9637
        %v9655 = vmul.f32 %v9538, %v9642
        %v9656 = vmul.f32 %v9539, %v9647
        %v9657 = vsel %vm9540, %v9649, 0.0
        %v9658 = vsel %vm9540, %v9650, 0.0
        %v9659 = vadd.f32 %v9657, %v9658
        %v9660 = vsel %vm9540, %v9651, 0.0
        %v9661 = vadd.f32 %v9659, %v9660
        %v9662 = vsel %vm9540, %v9652, 0.0
        %v9663 = vadd.f32 %v9661, %v9662
        %v9664 = vsel %vm9540, %v9653, 0.0
        %v9665 = vadd.f32 %v9663, %v9664
        %v9666 = vsel %vm9540, %v9654, 0.0
        %v9667 = vadd.f32 %v9665, %v9666
        %v9668 = vsel %vm9540, %v9655, 0.0
        %v9669 = vadd.f32 %v9667, %v9668
        %v9670 = vsel %vm9540, %v9656, 0.0
        %v9671 = vadd.f32 %v9669, %v9670
        %v9672 = vrot.slane %v9671, 4
        %v9673 = vadd.f32 %v9671, %v9672
        %v9674 = vrot.slane %v9673, 2
        %v9675 = vadd.f32 %v9673, %v9674
        %v9676 = vrot.slane %v9675, 1
        %v9677 = vadd.f32 %v9675, %v9676
        %9678 = vset.pattern.permute.xlu0 1
        %9679 = vperm.xlu0 %9678, %v9571
        %v9680 = vpop.permute.xlu0 %9679
        %9682 = vset.pattern.permute.xlu0 1
        %9683 = vperm.xlu0 %9682, %v9573
        %v9684 = vpop.permute.xlu0 %9683
        %9686 = vset.pattern.permute.xlu0 1
        %9687 = vperm.xlu0 %9686, %v9575
        %v9688 = vpop.permute.xlu0 %9687
        %9690 = vset.pattern.permute.xlu0 1
        %9691 = vperm.xlu0 %9690, %v9577
        %v9692 = vpop.permute.xlu0 %9691
        %9694 = vset.pattern.permute.xlu0 1
        %9695 = vperm.xlu0 %9694, %v9579
        %v9696 = vpop.permute.xlu0 %9695
        %9698 = vset.pattern.permute.xlu0 1
        %9699 = vperm.xlu0 %9698, %v9581
        %v9700 = vpop.permute.xlu0 %9699
        %9702 = vset.pattern.permute.xlu0 1
        %9703 = vperm.xlu0 %9702, %v9583
        %v9704 = vpop.permute.xlu0 %9703
        %9706 = vset.pattern.permute.xlu0 1
        %9707 = vperm.xlu0 %9706, %v9585
        %v9708 = vpop.permute.xlu0 %9707
        %v9710 = vmul.f32 %v9532, %v9680
        %v9711 = vmul.f32 %v9533, %v9684
        %v9712 = vmul.f32 %v9534, %v9688
        %v9713 = vmul.f32 %v9535, %v9692
        %v9714 = vmul.f32 %v9536, %v9696
        %v9715 = vmul.f32 %v9537, %v9700
        %v9716 = vmul.f32 %v9538, %v9704
        %v9717 = vmul.f32 %v9539, %v9708
        %vm9718 = vcmask 31760
        %v9719 = vsel %vm9718, %v9710, 0.0
        %v9720 = vsel %vm9718, %v9711, 0.0
        %v9721 = vadd.f32 %v9719, %v9720
        %v9722 = vsel %vm9718, %v9712, 0.0
        %v9723 = vadd.f32 %v9721, %v9722
        %v9724 = vsel %vm9718, %v9713, 0.0
        %v9725 = vadd.f32 %v9723, %v9724
        %v9726 = vsel %vm9718, %v9714, 0.0
        %v9727 = vadd.f32 %v9725, %v9726
        %v9728 = vsel %vm9718, %v9715, 0.0
        %v9729 = vadd.f32 %v9727, %v9728
        %v9730 = vsel %vm9718, %v9716, 0.0
        %v9731 = vadd.f32 %v9729, %v9730
        %v9732 = vsel %vm9718, %v9717, 0.0
        %v9733 = vadd.f32 %v9731, %v9732
        %v9734 = vrot.slane %v9733, 4
        %v9735 = vadd.f32 %v9733, %v9734
        %v9736 = vrot.slane %v9735, 2
        %v9737 = vadd.f32 %v9735, %v9736
        %v9738 = vrot.slane %v9737, 1
        %v9739 = vadd.f32 %v9737, %v9738
        %9741 = vset.pattern.permute.xlu0 0
        %9742 = vperm.xlu0 %9741, %v9608
        %v9743 = vpop.permute.xlu0 %9742
        %v9745 = vmul.f32 %v9677, %v9743
        %9746 = vset.pattern.permute.xlu0 1
        %9747 = vperm.xlu0 %9746, %v9608
        %v9748 = vpop.permute.xlu0 %9747
        %v9750 = vmul.f32 %v9739, %v9748
        %v9751 = vsel %vm9540, %v9745, %v9750
        %v9752 = vmul.f32 %v9751, 0.0078125
        %v9753 = vsel %vm9540, %v9502, -inf
        %v9754 = vsel %vm9540, %v9505, -inf
        %v9755 = vsel %vm9540, %v9510, -inf
        %v9756 = vsel %vm9540, %v9513, -inf
        %v9757 = vsel %vm9540, %v9518, -inf
        %v9758 = vmax.f32 %v9753, %v9757
        %v9759 = vsel %vm9540, %v9521, -inf
        %v9760 = vmax.f32 %v9754, %v9759
        %v9761 = vsel %vm9540, %v9526, -inf
        %v9762 = vmax.f32 %v9755, %v9761
        %v9763 = vsel %vm9540, %v9529, -inf
        %v9764 = vmax.f32 %v9756, %v9763
        %v9765 = vmax.f32 %v9758, %v9760
        %v9766 = vmax.f32 %v9762, %v9764
        %v9767 = vmax.f32 %v9765, %v9766
        %v9768 = vrot.slane %v9767, 4
        %v9769 = vmax.f32 %v9767, %v9768
        %v9770 = vrot.slane %v9769, 2
        %v9771 = vmax.f32 %v9769, %v9770
        %v9772 = vrot.slane %v9771, 1
        %v9773 = vmax.f32 %v9771, %v9772
        %v9774 = vsub.f32 %v9502, %v9773
        %v9775 = vsub.f32 %v9505, %v9773
        %v9776 = vsub.f32 %v9510, %v9773
        %v9777 = vsub.f32 %v9513, %v9773
        %v9778 = vsub.f32 %v9518, %v9773
        %v9779 = vsub.f32 %v9521, %v9773
        %v9780 = vsub.f32 %v9526, %v9773
        %v9781 = vsub.f32 %v9529, %v9773
        %v9782 = vmul.f32 %v9774, 1.442695
        %v9783 = vpow.pop %v9782
        %v9784 = vmul.f32 %v9775, 1.442695
        %v9785 = vpow.pop %v9784
        %v9786 = vmul.f32 %v9776, 1.442695
        %v9787 = vpow.pop %v9786
        %v9788 = vmul.f32 %v9777, 1.442695
        %v9789 = vpow.pop %v9788
        %v9790 = vmul.f32 %v9778, 1.442695
        %v9791 = vpow.pop %v9790
        %v9792 = vmul.f32 %v9779, 1.442695
        %v9793 = vpow.pop %v9792
        %v9794 = vmul.f32 %v9780, 1.442695
        %v9795 = vpow.pop %v9794
        %v9796 = vmul.f32 %v9781, 1.442695
        %v9797 = vpow.pop %v9796
        %v9798 = vsel %vm9540, %v9783, 0.0
        %v9799 = vsel %vm9540, %v9785, 0.0
        %v9800 = vadd.f32 %v9798, %v9799
        %v9801 = vsel %vm9540, %v9787, 0.0
        %v9802 = vadd.f32 %v9800, %v9801
        %v9803 = vsel %vm9540, %v9789, 0.0
        %v9804 = vadd.f32 %v9802, %v9803
        %v9805 = vsel %vm9540, %v9791, 0.0
        %v9806 = vadd.f32 %v9804, %v9805
        %v9807 = vsel %vm9540, %v9793, 0.0
        %v9808 = vadd.f32 %v9806, %v9807
        %v9809 = vsel %vm9540, %v9795, 0.0
        %v9810 = vadd.f32 %v9808, %v9809
        %v9811 = vsel %vm9540, %v9797, 0.0
        %v9812 = vadd.f32 %v9810, %v9811
        %v9813 = vrot.slane %v9812, 4
        %v9814 = vadd.f32 %v9812, %v9813
        %v9815 = vrot.slane %v9814, 2
        %v9816 = vadd.f32 %v9814, %v9815
        %v9817 = vrot.slane %v9816, 1
        %v9818 = vadd.f32 %v9816, %v9817
        %v9819 = vrcp.pop %v9818
        %v9820 = vmul.f32 1.0, %v9819
        %9822 = vset.pattern.permute.xlu0 0
        %9823 = vperm.xlu0 %9822, %v9783
        %v9824 = vpop.permute.xlu0 %9823
        %9827 = vset.pattern.permute.xlu0 0
        %9828 = vperm.xlu0 %9827, %v9785
        %v9829 = vpop.permute.xlu0 %9828
        %9832 = vset.pattern.permute.xlu0 0
        %9833 = vperm.xlu0 %9832, %v9787
        %v9834 = vpop.permute.xlu0 %9833
        %9837 = vset.pattern.permute.xlu0 0
        %9838 = vperm.xlu0 %9837, %v9789
        %v9839 = vpop.permute.xlu0 %9838
        %9842 = vset.pattern.permute.xlu0 0
        %9843 = vperm.xlu0 %9842, %v9791
        %v9844 = vpop.permute.xlu0 %9843
        %9847 = vset.pattern.permute.xlu0 0
        %9848 = vperm.xlu0 %9847, %v9793
        %v9849 = vpop.permute.xlu0 %9848
        %9852 = vset.pattern.permute.xlu0 0
        %9853 = vperm.xlu0 %9852, %v9795
        %v9854 = vpop.permute.xlu0 %9853
        %9857 = vset.pattern.permute.xlu0 0
        %9858 = vperm.xlu0 %9857, %v9797
        %v9859 = vpop.permute.xlu0 %9858
        %v9861 = vmul.f32 %v9532, %v9824
        %v9862 = vmul.f32 %v9533, %v9829
        %v9863 = vmul.f32 %v9534, %v9834
        %v9864 = vmul.f32 %v9535, %v9839
        %v9865 = vmul.f32 %v9536, %v9844
        %v9866 = vmul.f32 %v9537, %v9849
        %v9867 = vmul.f32 %v9538, %v9854
        %v9868 = vmul.f32 %v9539, %v9859
        %v9869 = vsel %vm9540, %v9861, 0.0
        %v9870 = vsel %vm9540, %v9862, 0.0
        %v9871 = vadd.f32 %v9869, %v9870
        %v9872 = vsel %vm9540, %v9863, 0.0
        %v9873 = vadd.f32 %v9871, %v9872
        %v9874 = vsel %vm9540, %v9864, 0.0
        %v9875 = vadd.f32 %v9873, %v9874
        %v9876 = vsel %vm9540, %v9865, 0.0
        %v9877 = vadd.f32 %v9875, %v9876
        %v9878 = vsel %vm9540, %v9866, 0.0
        %v9879 = vadd.f32 %v9877, %v9878
        %v9880 = vsel %vm9540, %v9867, 0.0
        %v9881 = vadd.f32 %v9879, %v9880
        %v9882 = vsel %vm9540, %v9868, 0.0
        %v9883 = vadd.f32 %v9881, %v9882
        %v9884 = vrot.slane %v9883, 4
        %v9885 = vadd.f32 %v9883, %v9884
        %v9886 = vrot.slane %v9885, 2
        %v9887 = vadd.f32 %v9885, %v9886
        %v9888 = vrot.slane %v9887, 1
        %v9889 = vadd.f32 %v9887, %v9888
        %9890 = vset.pattern.permute.xlu0 1
        %9891 = vperm.xlu0 %9890, %v9783
        %v9892 = vpop.permute.xlu0 %9891
        %9894 = vset.pattern.permute.xlu0 1
        %9895 = vperm.xlu0 %9894, %v9785
        %v9896 = vpop.permute.xlu0 %9895
        %9898 = vset.pattern.permute.xlu0 1
        %9899 = vperm.xlu0 %9898, %v9787
        %v9900 = vpop.permute.xlu0 %9899
        %9902 = vset.pattern.permute.xlu0 1
        %9903 = vperm.xlu0 %9902, %v9789
        %v9904 = vpop.permute.xlu0 %9903
        %9906 = vset.pattern.permute.xlu0 1
        %9907 = vperm.xlu0 %9906, %v9791
        %v9908 = vpop.permute.xlu0 %9907
        %9910 = vset.pattern.permute.xlu0 1
        %9911 = vperm.xlu0 %9910, %v9793
        %v9912 = vpop.permute.xlu0 %9911
        %9914 = vset.pattern.permute.xlu0 1
        %9915 = vperm.xlu0 %9914, %v9795
        %v9916 = vpop.permute.xlu0 %9915
        %9918 = vset.pattern.permute.xlu0 1
        %9919 = vperm.xlu0 %9918, %v9797
        %v9920 = vpop.permute.xlu0 %9919
        %v9922 = vmul.f32 %v9532, %v9892
        %v9923 = vmul.f32 %v9533, %v9896
        %v9924 = vmul.f32 %v9534, %v9900
        %v9925 = vmul.f32 %v9535, %v9904
        %v9926 = vmul.f32 %v9536, %v9908
        %v9927 = vmul.f32 %v9537, %v9912
        %v9928 = vmul.f32 %v9538, %v9916
        %v9929 = vmul.f32 %v9539, %v9920
        %v9930 = vsel %vm9718, %v9922, 0.0
        %v9931 = vsel %vm9718, %v9923, 0.0
        %v9932 = vadd.f32 %v9930, %v9931
        %v9933 = vsel %vm9718, %v9924, 0.0
        %v9934 = vadd.f32 %v9932, %v9933
        %v9935 = vsel %vm9718, %v9925, 0.0
        %v9936 = vadd.f32 %v9934, %v9935
        %v9937 = vsel %vm9718, %v9926, 0.0
        %v9938 = vadd.f32 %v9936, %v9937
        %v9939 = vsel %vm9718, %v9927, 0.0
        %v9940 = vadd.f32 %v9938, %v9939
        %v9941 = vsel %vm9718, %v9928, 0.0
        %v9942 = vadd.f32 %v9940, %v9941
        %v9943 = vsel %vm9718, %v9929, 0.0
        %v9944 = vadd.f32 %v9942, %v9943
        %v9945 = vrot.slane %v9944, 4
        %v9946 = vadd.f32 %v9944, %v9945
        %v9947 = vrot.slane %v9946, 2
        %v9948 = vadd.f32 %v9946, %v9947
        %v9949 = vrot.slane %v9948, 1
        %v9950 = vadd.f32 %v9948, %v9949
        %9952 = vset.pattern.permute.xlu0 0
        %9953 = vperm.xlu0 %9952, %v9820
        %v9954 = vpop.permute.xlu0 %9953
        %v9956 = vmul.f32 %v9889, %v9954
        %9957 = vset.pattern.permute.xlu0 1
        %9958 = vperm.xlu0 %9957, %v9820
        %v9959 = vpop.permute.xlu0 %9958
        %v9961 = vmul.f32 %v9950, %v9959
        %v9962 = vsel %vm9540, %v9956, %v9961
        %v9963 = vmul.f32 %v9962, 0.0078125
        %v9965 = vrot.slane %v9963, 7
        %vm9967 = vcmask 1040384
        %v9968 = vsel %vm9967, %v9752, %v9965
        %vm9969 = vcmask 25600
        %9970 = vst.msk [vmem:[%s409] sm:$0x3] %vm9969, %v9968
        %s9971 = sand.u32 %s291, 1
        %s9972 = scalar_lea.sflag [#allocation7], %s9971
        %s9973 = sand.u32 %s291, 1
        %s9974 = smul.addr %s9973, 2
        %s9975 = scalar_lea.vmem [#allocation6], %s9974
        // Predicated region
        $region69: #{corner_predictor_v3_forward.1} parent=67 // pred_check
          %p9976 = pneg %p301
        $region70: #{corner_predictor_v3_forward.1} parent=67 // pred_check_branch
          %9978 = sbr.rel (%p9976) target = $region72
        $region71: #{corner_predictor_v3_forward.1} parent=67 // pred_region
          %s9980 = ssub.s32 32, 32
          %9981 = vsyncadd %s9972, %s9980
          %s9982 = smul.addr %s26, 32
          %s9983 = scalar_lea.hbm %s12, %s9982
          %s9985 = sshll.u32 %s9975, 4
          %s9986 = int_to_ptr.vmem [resolvable:$true] %s9985
          %9988 = dma.vmem_to_hbm [thread:$0]  %s9986, 32, %s9983, %s9972
        $region72: #{corner_predictor_v3_forward.1} parent=67 // pred_fallthru
          _
      $region68: #{corner_predictor_v3_forward.1} parent=5 // pred_fallthru
        _
      %p9989 = scmp.le.s32.totalorder 2, %s21
      // Predicated region
      $region73: #{corner_predictor_v3_forward.1} parent=5 // pred_check
        %p9990 = pneg %p9989
      $region74: #{corner_predictor_v3_forward.1} parent=5 // pred_check_branch
        %9992 = sbr.rel (%p9990) target = $region76
      $region75: #{corner_predictor_v3_forward.1} parent=5 // pred_region
        %s9993 = ssub.s32 %s21, 2
        // Predicated region
        $region77: #{corner_predictor_v3_forward.1} parent=75 // pred_check
          %p9994 = pneg %p307
        $region78: #{corner_predictor_v3_forward.1} parent=75 // pred_check_branch
          %9996 = sbr.rel (%p9994) target = $region80
        $region79: #{corner_predictor_v3_forward.1} parent=75 // pred_region
          %s9997 = sand.u32 %s292, 1
          %s9998 = scalar_lea.sflag [#allocation7], %s9997
          %s9999 = sand.u32 %s292, 1
          %s10000 = smul.addr %s9999, 2
          %s10001 = scalar_lea.vmem [#allocation6], %s10000
          %10002 = dma.done %s9998, 32
        $region80: #{corner_predictor_v3_forward.1} parent=75 // pred_fallthru
          _
      $region76: #{corner_predictor_v3_forward.1} parent=5 // pred_fallthru
        _
    $region6: #{corner_predictor_v3_forward.1} parent=1 // loop_footer
      %s25 = sadd.s32 1, %s21
    $region7: #{corner_predictor_v3_forward.1} parent=1 // loop_footer_branch
      %20 = sbr.rel target = $region3
    $region8: #{corner_predictor_v3_forward.1} parent=1 // loop_exit
      _
    %10003 = vsyncpa [#allocation7], 1
    %s10004 = scalar_lea.sflag [#allocation7], 1
    %10005 = vsyncpa %s10004, 1

</llo_original>
